<compile_context>
chip_gen: v7x
topology: tpu7x:2x2x1
jax: 0.10.0
libtpu: 0.0.40
codegen_flags: <defaults>
</compile_context>

<pallas_src>
import jax
import jax.numpy as jnp
from jax.experimental import pallas as pl
from jax.experimental.pallas import tpu as pltpu

NOISE_DIM = 100
NOISE_DIM_PAD = 128          # lane-aligned padding of the 100-dim noise
H1, H2, H3 = 256, 512, 1024
OUT = 28 * 28                # 784 (true output width, stored directly)
OUT_PAD = 896                # 7 * 128, lane-aligned N dim used only for w4's matmul
BN_EPS = 1e-5


def _bn_relu(h, gamma, beta):
    """Training-mode BatchNorm1d + ReLU with one-pass statistics.

    sum / sum-of-squares over the batch axis, biased variance
    (var = E[x^2] - mean^2, clamped at 0), fused affine scale+shift.
    All math stays in f32 (v5e has no bf16 VPU/EUP).
    """
    inv_n = 1.0 / h.shape[0]
    s = jnp.sum(h, axis=0, keepdims=True)
    s2 = jnp.sum(h * h, axis=0, keepdims=True)
    mean = s * inv_n
    var = jnp.maximum(s2 * inv_n - mean * mean, 0.0)
    scale = gamma * jax.lax.rsqrt(var + BN_EPS)
    shift = beta - mean * scale
    return jnp.maximum(h * scale + shift, 0.0)      # ReLU


def _generator_kernel(z_ref,
                      w1_hbm, w2_hbm, w3_hbm, w4_hbm,
                      g1_ref, be1_ref, g2_ref, be2_ref, g3_ref, be3_ref,
                      b4_ref,
                      out_ref,
                      w1_v, w2_v, w3_v, w4_v, sems):
    """Entire generator forward for one batch; BN sees the full batch.

    z_ref:   (B, 128) bf16 (zero-padded noise), VMEM
    w*_hbm:  bf16 pre-transposed (in, out) weights, left in HBM
    g*/be*:  (1, H) f32 BatchNorm gamma/beta, VMEM
    b4:      (1, 784) f32, VMEM
    out:     (B, 784) f32, VMEM
    w*_v:    VMEM scratch buffers the weights are DMA'd into
    sems:    (4,) DMA semaphores
    """
    # Kick off all four weight DMAs immediately; wait on each just before use
    # so w2/w3/w4 transfers hide under earlier layers' compute.
    cp1 = pltpu.make_async_copy(w1_hbm, w1_v, sems.at[0])
    cp2 = pltpu.make_async_copy(w2_hbm, w2_v, sems.at[1])
    cp3 = pltpu.make_async_copy(w3_hbm, w3_v, sems.at[2])
    cp4 = pltpu.make_async_copy(w4_hbm, w4_v, sems.at[3])
    cp1.start()
    cp2.start()
    cp3.start()
    cp4.start()

    # Layer 1 (bias dropped: cancelled by BN mean subtraction)
    cp1.wait()
    h = jnp.dot(z_ref[...], w1_v[...], preferred_element_type=jnp.float32)
    h = _bn_relu(h, g1_ref[...], be1_ref[...])

    # Layer 2
    cp2.wait()
    h = jnp.dot(h.astype(jnp.bfloat16), w2_v[...],
                preferred_element_type=jnp.float32)
    h = _bn_relu(h, g2_ref[...], be2_ref[...])

    # Layer 3
    cp3.wait()
    h = jnp.dot(h.astype(jnp.bfloat16), w3_v[...],
                preferred_element_type=jnp.float32)
    h = _bn_relu(h, g3_ref[...], be3_ref[...])

    # Layer 4 + Tanh (bias kept: no BN afterwards).  Matmul runs at the
    # lane-aligned padded width 896; padded lanes are dropped before the
    # bias/tanh so no EUP work or stores are wasted on them.
    cp4.wait()
    y = jnp.dot(h.astype(jnp.bfloat16), w4_v[...],
                preferred_element_type=jnp.float32)
    y = y[:, :OUT] + b4_ref[...]
    out_ref[...] = jnp.tanh(y)


def _weight_param_bytes():
    w_bytes = 2 * (NOISE_DIM_PAD * H1 + H1 * H2 + H2 * H3 + H3 * OUT_PAD)  # bf16
    p_bytes = 4 * (2 * (H1 + H2 + H3) + OUT)                               # f32
    return w_bytes, p_bytes


def _vmem_limit_bytes(batch):
    """Gen-aware scoped-VMEM budget: <= 75% of this chip's physical VMEM."""
    try:
        cap = int(pltpu.get_tpu_info().vmem_capacity_bytes)
    except Exception:                       # fall back to the smallest (v7x)
        cap = 64 << 20
    w_bytes, p_bytes = _weight_param_bytes()
    act_row = 4 * (H1 + H2 + H3 + OUT_PAD) + 2 * NOISE_DIM_PAD
    need = w_bytes + p_bytes + 6 * batch * act_row + (8 << 20)  # temporaries headroom
    return int(min(max(need, 32 << 20), (cap * 3) // 4))


@jax.jit
def generator_forward(z, params):
    """z: (B, NOISE_DIM) f32 -> (B, 1, 28, 28) f32 (training-mode BatchNorm)."""
    batch = z.shape[0]

    # Zero-pad the noise to a lane-aligned width and cast to the MXU dtype.
    z_pad = jnp.pad(z.astype(jnp.bfloat16),
                    ((0, 0), (0, NOISE_DIM_PAD - NOISE_DIM)))

    flat_args = (
        z_pad,
        params["w1"], params["w2"], params["w3"], params["w4"],
        params["g1"], params["be1"],
        params["g2"], params["be2"],
        params["g3"], params["be3"],
        params["b4"],
    )

    vmem = pl.BlockSpec(memory_space=pltpu.MemorySpace.VMEM)
    hbm = pl.BlockSpec(memory_space=pl.ANY)      # weights: manual overlapped DMA
    in_specs = [vmem, hbm, hbm, hbm, hbm] + [vmem] * 7

    w_bytes, p_bytes = _weight_param_bytes()
    flops = 2 * batch * (NOISE_DIM_PAD * H1 + H1 * H2 + H2 * H3 + H3 * OUT_PAD)
    bytes_accessed = (w_bytes + p_bytes
                      + batch * (2 * NOISE_DIM_PAD + 4 * OUT))

    out = pl.pallas_call(
        _generator_kernel,
        out_shape=jax.ShapeDtypeStruct((batch, OUT), jnp.float32),
        in_specs=in_specs,
        out_specs=vmem,
        scratch_shapes=[
            pltpu.VMEM((NOISE_DIM_PAD, H1), jnp.bfloat16),
            pltpu.VMEM((H1, H2), jnp.bfloat16),
            pltpu.VMEM((H2, H3), jnp.bfloat16),
            pltpu.VMEM((H3, OUT_PAD), jnp.bfloat16),
            pltpu.SemaphoreType.DMA((4,)),
        ],
        compiler_params=pltpu.CompilerParams(
            vmem_limit_bytes=_vmem_limit_bytes(batch)),
        cost_estimate=pl.CostEstimate(
            flops=flops,
            transcendentals=batch * OUT + (H1 + H2 + H3),
            bytes_accessed=bytes_accessed),
    )(*flat_args)

    # PyTorch's .view(-1, 1, 28, 28): contiguous, metadata-only reshape.
    return out.reshape(-1, 1, 28, 28)


def init_params(key):
    """PyTorch-default-style init (U(-1/sqrt(fan_in), +bound)), then pad + cast.

    Weights are stored pre-transposed (in, out), zero-padded to lane-aligned
    shapes (w1 rows 100->128, w4 cols 784->896) and cast to bf16; padded
    rows/cols are zero so they never leak into real outputs.  b1-b3 omitted
    (cancelled by training-mode BN); b4 kept at its true width (1, 784).
    """
    dims = [(NOISE_DIM, H1), (H1, H2), (H2, H3), (H3, OUT)]
    params = {}
    for i, (fan_in, fan_out) in enumerate(dims, start=1):
        key, kw, kb = jax.random.split(key, 3)
        bound = 1.0 / jnp.sqrt(float(fan_in))
        w = jax.random.uniform(kw, (fan_in, fan_out), jnp.float32, -bound, bound)
        if i == 1:   # pad input dim 100 -> 128 with zero rows
            w = jnp.pad(w, ((0, NOISE_DIM_PAD - NOISE_DIM), (0, 0)))
        if i == 4:   # pad output dim 784 -> 896 with zero cols (matmul only)
            w = jnp.pad(w, ((0, 0), (0, OUT_PAD - OUT)))
        params[f"w{i}"] = w.astype(jnp.bfloat16)
        if i < 4:
            params[f"g{i}"] = jnp.ones((1, fan_out), jnp.float32)
            params[f"be{i}"] = jnp.zeros((1, fan_out), jnp.float32)
        else:
            params["b4"] = jax.random.uniform(kb, (1, fan_out), jnp.float32,
                                              -bound, bound)
    return params


if __name__ == "__main__":
    key = jax.random.PRNGKey(0)
    key_p, key_z = jax.random.split(key)
    params = init_params(key_p)

    # 256 = one full MXU M-tile on v6e/v7x; use B >= 512-1024 for throughput.
    batch = 256
    z = jax.random.normal(key_z, (batch, NOISE_DIM), jnp.float32)

    imgs = generator_forward(z, params)
    jax.block_until_ready(imgs)

    assert imgs.shape == (batch, 1, 28, 28), imgs.shape
    assert bool(jnp.all(jnp.isfinite(imgs)))
    assert bool(jnp.max(jnp.abs(imgs)) <= 1.0 + 1e-6)  # tanh range

    print("KERNEL_OK")
</pallas_src>

<mosaic_0001>
module attributes {stable_mosaic.version = 11 : i64} {
  func.func @_generator_kernel(%arg0: memref<256x128xbf16, #tpu.memory_space<vmem>>, %arg1: memref<128x256xbf16, #tpu.memory_space<any>>, %arg2: memref<256x512xbf16, #tpu.memory_space<any>>, %arg3: memref<512x1024xbf16, #tpu.memory_space<any>>, %arg4: memref<1024x896xbf16, #tpu.memory_space<any>>, %arg5: memref<1x256xf32, #tpu.memory_space<vmem>>, %arg6: memref<1x256xf32, #tpu.memory_space<vmem>>, %arg7: memref<1x512xf32, #tpu.memory_space<vmem>>, %arg8: memref<1x512xf32, #tpu.memory_space<vmem>>, %arg9: memref<1x1024xf32, #tpu.memory_space<vmem>>, %arg10: memref<1x1024xf32, #tpu.memory_space<vmem>>, %arg11: memref<1x784xf32, #tpu.memory_space<vmem>>, %arg12: memref<256x784xf32, #tpu.memory_space<vmem>>, %arg13: memref<128x256xbf16, #tpu.memory_space<vmem>>, %arg14: memref<256x512xbf16, #tpu.memory_space<vmem>>, %arg15: memref<512x1024xbf16, #tpu.memory_space<vmem>>, %arg16: memref<1024x896xbf16, #tpu.memory_space<vmem>>, %arg17: memref<4x!tpu.dma_semaphore, #tpu.memory_space<semaphore_mem>>) attributes {dimension_semantics = [], scalar_prefetch = 0 : i64, scratch_operands = 5 : i64, tpu.core_type = #tpu.core_type<tc>} {
    %c0_i32 = arith.constant 0 : i32
    %0 = tpu.memref_slice %arg17[%c0_i32] : memref<4x!tpu.dma_semaphore, #tpu.memory_space<semaphore_mem>> -> memref<1x!tpu.dma_semaphore, #tpu.memory_space<semaphore_mem>>
    %1 = tpu.memref_squeeze %0 : memref<1x!tpu.dma_semaphore, #tpu.memory_space<semaphore_mem>> -> memref<!tpu.dma_semaphore, #tpu.memory_space<semaphore_mem>>
    tpu.enqueue_dma source(%arg1 : memref<128x256xbf16, #tpu.memory_space<any>>) target(%arg13 : memref<128x256xbf16, #tpu.memory_space<vmem>>) target_semaphore(%1 : memref<!tpu.dma_semaphore, #tpu.memory_space<semaphore_mem>>)
    %c1_i32 = arith.constant 1 : i32
    %2 = tpu.memref_slice %arg17[%c1_i32] : memref<4x!tpu.dma_semaphore, #tpu.memory_space<semaphore_mem>> -> memref<1x!tpu.dma_semaphore, #tpu.memory_space<semaphore_mem>>
    %3 = tpu.memref_squeeze %2 : memref<1x!tpu.dma_semaphore, #tpu.memory_space<semaphore_mem>> -> memref<!tpu.dma_semaphore, #tpu.memory_space<semaphore_mem>>
    tpu.enqueue_dma source(%arg2 : memref<256x512xbf16, #tpu.memory_space<any>>) target(%arg14 : memref<256x512xbf16, #tpu.memory_space<vmem>>) target_semaphore(%3 : memref<!tpu.dma_semaphore, #tpu.memory_space<semaphore_mem>>)
    %c2_i32 = arith.constant 2 : i32
    %4 = tpu.memref_slice %arg17[%c2_i32] : memref<4x!tpu.dma_semaphore, #tpu.memory_space<semaphore_mem>> -> memref<1x!tpu.dma_semaphore, #tpu.memory_space<semaphore_mem>>
    %5 = tpu.memref_squeeze %4 : memref<1x!tpu.dma_semaphore, #tpu.memory_space<semaphore_mem>> -> memref<!tpu.dma_semaphore, #tpu.memory_space<semaphore_mem>>
    tpu.enqueue_dma source(%arg3 : memref<512x1024xbf16, #tpu.memory_space<any>>) target(%arg15 : memref<512x1024xbf16, #tpu.memory_space<vmem>>) target_semaphore(%5 : memref<!tpu.dma_semaphore, #tpu.memory_space<semaphore_mem>>)
    %c3_i32 = arith.constant 3 : i32
    %6 = tpu.memref_slice %arg17[%c3_i32] : memref<4x!tpu.dma_semaphore, #tpu.memory_space<semaphore_mem>> -> memref<1x!tpu.dma_semaphore, #tpu.memory_space<semaphore_mem>>
    %7 = tpu.memref_squeeze %6 : memref<1x!tpu.dma_semaphore, #tpu.memory_space<semaphore_mem>> -> memref<!tpu.dma_semaphore, #tpu.memory_space<semaphore_mem>>
    tpu.enqueue_dma source(%arg4 : memref<1024x896xbf16, #tpu.memory_space<any>>) target(%arg16 : memref<1024x896xbf16, #tpu.memory_space<vmem>>) target_semaphore(%7 : memref<!tpu.dma_semaphore, #tpu.memory_space<semaphore_mem>>)
    %c0_i32_0 = arith.constant 0 : i32
    %8 = tpu.memref_slice %arg17[%c0_i32_0] : memref<4x!tpu.dma_semaphore, #tpu.memory_space<semaphore_mem>> -> memref<1x!tpu.dma_semaphore, #tpu.memory_space<semaphore_mem>>
    %9 = tpu.memref_squeeze %8 : memref<1x!tpu.dma_semaphore, #tpu.memory_space<semaphore_mem>> -> memref<!tpu.dma_semaphore, #tpu.memory_space<semaphore_mem>>
    tpu.wait_dma2 semaphore(%9 : memref<!tpu.dma_semaphore, #tpu.memory_space<semaphore_mem>>) src(%arg1 : memref<128x256xbf16, #tpu.memory_space<any>>) dst(%arg13 : memref<128x256xbf16, #tpu.memory_space<vmem>>)
    %c0 = arith.constant 0 : index
    %c0_1 = arith.constant 0 : index
    %10 = vector.load %arg0[%c0, %c0_1] : memref<256x128xbf16, #tpu.memory_space<vmem>>, vector<256x128xbf16>
    %c0_2 = arith.constant 0 : index
    %c0_3 = arith.constant 0 : index
    %11 = vector.load %arg13[%c0_2, %c0_3] : memref<128x256xbf16, #tpu.memory_space<vmem>>, vector<128x256xbf16>
    %cst = arith.constant dense<0.000000e+00> : vector<256x256xf32>
    %12 = tpu.matmul %10, %11, %cst {dimension_numbers = #tpu.dot_dimension_numbers<[1], [0], [0], [1], [0, 0, 1, 1], [], []>} : vector<256x128xbf16>, vector<128x256xbf16>, vector<256x256xf32> -> vector<256x256xf32>
    %c0_4 = arith.constant 0 : index
    %c0_5 = arith.constant 0 : index
    %13 = vector.load %arg5[%c0_4, %c0_5] : memref<1x256xf32, #tpu.memory_space<vmem>>, vector<1x256xf32>
    %c0_6 = arith.constant 0 : index
    %c0_7 = arith.constant 0 : index
    %14 = vector.load %arg6[%c0_6, %c0_7] : memref<1x256xf32, #tpu.memory_space<vmem>>, vector<1x256xf32>
    %cst_8 = arith.constant dense<0.000000e+00> : vector<256xf32>
    %15 = vector.multi_reduction <add>, %12, %cst_8 [0] : vector<256x256xf32> to vector<256xf32>
    %16 = vector.shape_cast %15 : vector<256xf32> to vector<1x256xf32>
    %17 = arith.mulf %12, %12 : vector<256x256xf32>
    %cst_9 = arith.constant dense<0.000000e+00> : vector<256xf32>
    %18 = vector.multi_reduction <add>, %17, %cst_9 [0] : vector<256x256xf32> to vector<256xf32>
    %19 = vector.shape_cast %18 : vector<256xf32> to vector<1x256xf32>
    %cst_10 = arith.constant 3.906250e-03 : f32
    %20 = vector.broadcast %cst_10 : f32 to vector<1x256xf32>
    %21 = arith.mulf %16, %20 : vector<1x256xf32>
    %cst_11 = arith.constant 3.906250e-03 : f32
    %22 = vector.broadcast %cst_11 : f32 to vector<1x256xf32>
    %23 = arith.mulf %19, %22 : vector<1x256xf32>
    %24 = arith.mulf %21, %21 : vector<1x256xf32>
    %25 = arith.subf %23, %24 : vector<1x256xf32>
    %cst_12 = arith.constant 0.000000e+00 : f32
    %26 = vector.broadcast %cst_12 : f32 to vector<1x256xf32>
    %27 = arith.maximumf %25, %26 : vector<1x256xf32>
    %cst_13 = arith.constant 9.99999974E-6 : f32
    %28 = vector.broadcast %cst_13 : f32 to vector<1x256xf32>
    %29 = arith.addf %27, %28 : vector<1x256xf32>
    %30 = math.rsqrt %29 : vector<1x256xf32>
    %31 = arith.mulf %13, %30 : vector<1x256xf32>
    %32 = arith.mulf %21, %31 : vector<1x256xf32>
    %33 = arith.subf %14, %32 : vector<1x256xf32>
    %34 = vector.broadcast %31 : vector<1x256xf32> to vector<256x256xf32>
    %35 = arith.mulf %12, %34 : vector<256x256xf32>
    %36 = vector.broadcast %33 : vector<1x256xf32> to vector<256x256xf32>
    %37 = arith.addf %35, %36 : vector<256x256xf32>
    %cst_14 = arith.constant 0.000000e+00 : f32
    %38 = vector.broadcast %cst_14 : f32 to vector<256x256xf32>
    %39 = arith.maximumf %37, %38 : vector<256x256xf32>
    %c1_i32_15 = arith.constant 1 : i32
    %40 = tpu.memref_slice %arg17[%c1_i32_15] : memref<4x!tpu.dma_semaphore, #tpu.memory_space<semaphore_mem>> -> memref<1x!tpu.dma_semaphore, #tpu.memory_space<semaphore_mem>>
    %41 = tpu.memref_squeeze %40 : memref<1x!tpu.dma_semaphore, #tpu.memory_space<semaphore_mem>> -> memref<!tpu.dma_semaphore, #tpu.memory_space<semaphore_mem>>
    tpu.wait_dma2 semaphore(%41 : memref<!tpu.dma_semaphore, #tpu.memory_space<semaphore_mem>>) src(%arg2 : memref<256x512xbf16, #tpu.memory_space<any>>) dst(%arg14 : memref<256x512xbf16, #tpu.memory_space<vmem>>)
    %42 = arith.truncf %39 : vector<256x256xf32> to vector<256x256xbf16>
    %c0_16 = arith.constant 0 : index
    %c0_17 = arith.constant 0 : index
    %43 = vector.load %arg14[%c0_16, %c0_17] : memref<256x512xbf16, #tpu.memory_space<vmem>>, vector<256x512xbf16>
    %cst_18 = arith.constant dense<0.000000e+00> : vector<256x512xf32>
    %44 = tpu.matmul %42, %43, %cst_18 {dimension_numbers = #tpu.dot_dimension_numbers<[1], [0], [0], [1], [0, 0, 1, 1], [], []>} : vector<256x256xbf16>, vector<256x512xbf16>, vector<256x512xf32> -> vector<256x512xf32>
    %c0_19 = arith.constant 0 : index
    %c0_20 = arith.constant 0 : index
    %45 = vector.load %arg7[%c0_19, %c0_20] : memref<1x512xf32, #tpu.memory_space<vmem>>, vector<1x512xf32>
    %c0_21 = arith.constant 0 : index
    %c0_22 = arith.constant 0 : index
    %46 = vector.load %arg8[%c0_21, %c0_22] : memref<1x512xf32, #tpu.memory_space<vmem>>, vector<1x512xf32>
    %cst_23 = arith.constant dense<0.000000e+00> : vector<512xf32>
    %47 = vector.multi_reduction <add>, %44, %cst_23 [0] : vector<256x512xf32> to vector<512xf32>
    %48 = vector.shape_cast %47 : vector<512xf32> to vector<1x512xf32>
    %49 = arith.mulf %44, %44 : vector<256x512xf32>
    %cst_24 = arith.constant dense<0.000000e+00> : vector<512xf32>
    %50 = vector.multi_reduction <add>, %49, %cst_24 [0] : vector<256x512xf32> to vector<512xf32>
    %51 = vector.shape_cast %50 : vector<512xf32> to vector<1x512xf32>
    %cst_25 = arith.constant 3.906250e-03 : f32
    %52 = vector.broadcast %cst_25 : f32 to vector<1x512xf32>
    %53 = arith.mulf %48, %52 : vector<1x512xf32>
    %cst_26 = arith.constant 3.906250e-03 : f32
    %54 = vector.broadcast %cst_26 : f32 to vector<1x512xf32>
    %55 = arith.mulf %51, %54 : vector<1x512xf32>
    %56 = arith.mulf %53, %53 : vector<1x512xf32>
    %57 = arith.subf %55, %56 : vector<1x512xf32>
    %cst_27 = arith.constant 0.000000e+00 : f32
    %58 = vector.broadcast %cst_27 : f32 to vector<1x512xf32>
    %59 = arith.maximumf %57, %58 : vector<1x512xf32>
    %cst_28 = arith.constant 9.99999974E-6 : f32
    %60 = vector.broadcast %cst_28 : f32 to vector<1x512xf32>
    %61 = arith.addf %59, %60 : vector<1x512xf32>
    %62 = math.rsqrt %61 : vector<1x512xf32>
    %63 = arith.mulf %45, %62 : vector<1x512xf32>
    %64 = arith.mulf %53, %63 : vector<1x512xf32>
    %65 = arith.subf %46, %64 : vector<1x512xf32>
    %66 = vector.broadcast %63 : vector<1x512xf32> to vector<256x512xf32>
    %67 = arith.mulf %44, %66 : vector<256x512xf32>
    %68 = vector.broadcast %65 : vector<1x512xf32> to vector<256x512xf32>
    %69 = arith.addf %67, %68 : vector<256x512xf32>
    %cst_29 = arith.constant 0.000000e+00 : f32
    %70 = vector.broadcast %cst_29 : f32 to vector<256x512xf32>
    %71 = arith.maximumf %69, %70 : vector<256x512xf32>
    %c2_i32_30 = arith.constant 2 : i32
    %72 = tpu.memref_slice %arg17[%c2_i32_30] : memref<4x!tpu.dma_semaphore, #tpu.memory_space<semaphore_mem>> -> memref<1x!tpu.dma_semaphore, #tpu.memory_space<semaphore_mem>>
    %73 = tpu.memref_squeeze %72 : memref<1x!tpu.dma_semaphore, #tpu.memory_space<semaphore_mem>> -> memref<!tpu.dma_semaphore, #tpu.memory_space<semaphore_mem>>
    tpu.wait_dma2 semaphore(%73 : memref<!tpu.dma_semaphore, #tpu.memory_space<semaphore_mem>>) src(%arg3 : memref<512x1024xbf16, #tpu.memory_space<any>>) dst(%arg15 : memref<512x1024xbf16, #tpu.memory_space<vmem>>)
    %74 = arith.truncf %71 : vector<256x512xf32> to vector<256x512xbf16>
    %c0_31 = arith.constant 0 : index
    %c0_32 = arith.constant 0 : index
    %75 = vector.load %arg15[%c0_31, %c0_32] : memref<512x1024xbf16, #tpu.memory_space<vmem>>, vector<512x1024xbf16>
    %cst_33 = arith.constant dense<0.000000e+00> : vector<256x1024xf32>
    %76 = tpu.matmul %74, %75, %cst_33 {dimension_numbers = #tpu.dot_dimension_numbers<[1], [0], [0], [1], [0, 0, 1, 1], [], []>} : vector<256x512xbf16>, vector<512x1024xbf16>, vector<256x1024xf32> -> vector<256x1024xf32>
    %c0_34 = arith.constant 0 : index
    %c0_35 = arith.constant 0 : index
    %77 = vector.load %arg9[%c0_34, %c0_35] : memref<1x1024xf32, #tpu.memory_space<vmem>>, vector<1x1024xf32>
    %c0_36 = arith.constant 0 : index
    %c0_37 = arith.constant 0 : index
    %78 = vector.load %arg10[%c0_36, %c0_37] : memref<1x1024xf32, #tpu.memory_space<vmem>>, vector<1x1024xf32>
    %cst_38 = arith.constant dense<0.000000e+00> : vector<1024xf32>
    %79 = vector.multi_reduction <add>, %76, %cst_38 [0] : vector<256x1024xf32> to vector<1024xf32>
    %80 = vector.shape_cast %79 : vector<1024xf32> to vector<1x1024xf32>
    %81 = arith.mulf %76, %76 : vector<256x1024xf32>
    %cst_39 = arith.constant dense<0.000000e+00> : vector<1024xf32>
    %82 = vector.multi_reduction <add>, %81, %cst_39 [0] : vector<256x1024xf32> to vector<1024xf32>
    %83 = vector.shape_cast %82 : vector<1024xf32> to vector<1x1024xf32>
    %cst_40 = arith.constant 3.906250e-03 : f32
    %84 = vector.broadcast %cst_40 : f32 to vector<1x1024xf32>
    %85 = arith.mulf %80, %84 : vector<1x1024xf32>
    %cst_41 = arith.constant 3.906250e-03 : f32
    %86 = vector.broadcast %cst_41 : f32 to vector<1x1024xf32>
    %87 = arith.mulf %83, %86 : vector<1x1024xf32>
    %88 = arith.mulf %85, %85 : vector<1x1024xf32>
    %89 = arith.subf %87, %88 : vector<1x1024xf32>
    %cst_42 = arith.constant 0.000000e+00 : f32
    %90 = vector.broadcast %cst_42 : f32 to vector<1x1024xf32>
    %91 = arith.maximumf %89, %90 : vector<1x1024xf32>
    %cst_43 = arith.constant 9.99999974E-6 : f32
    %92 = vector.broadcast %cst_43 : f32 to vector<1x1024xf32>
    %93 = arith.addf %91, %92 : vector<1x1024xf32>
    %94 = math.rsqrt %93 : vector<1x1024xf32>
    %95 = arith.mulf %77, %94 : vector<1x1024xf32>
    %96 = arith.mulf %85, %95 : vector<1x1024xf32>
    %97 = arith.subf %78, %96 : vector<1x1024xf32>
    %98 = vector.broadcast %95 : vector<1x1024xf32> to vector<256x1024xf32>
    %99 = arith.mulf %76, %98 : vector<256x1024xf32>
    %100 = vector.broadcast %97 : vector<1x1024xf32> to vector<256x1024xf32>
    %101 = arith.addf %99, %100 : vector<256x1024xf32>
    %cst_44 = arith.constant 0.000000e+00 : f32
    %102 = vector.broadcast %cst_44 : f32 to vector<256x1024xf32>
    %103 = arith.maximumf %101, %102 : vector<256x1024xf32>
    %c3_i32_45 = arith.constant 3 : i32
    %104 = tpu.memref_slice %arg17[%c3_i32_45] : memref<4x!tpu.dma_semaphore, #tpu.memory_space<semaphore_mem>> -> memref<1x!tpu.dma_semaphore, #tpu.memory_space<semaphore_mem>>
    %105 = tpu.memref_squeeze %104 : memref<1x!tpu.dma_semaphore, #tpu.memory_space<semaphore_mem>> -> memref<!tpu.dma_semaphore, #tpu.memory_space<semaphore_mem>>
    tpu.wait_dma2 semaphore(%105 : memref<!tpu.dma_semaphore, #tpu.memory_space<semaphore_mem>>) src(%arg4 : memref<1024x896xbf16, #tpu.memory_space<any>>) dst(%arg16 : memref<1024x896xbf16, #tpu.memory_space<vmem>>)
    %106 = arith.truncf %103 : vector<256x1024xf32> to vector<256x1024xbf16>
    %c0_46 = arith.constant 0 : index
    %c0_47 = arith.constant 0 : index
    %107 = vector.load %arg16[%c0_46, %c0_47] : memref<1024x896xbf16, #tpu.memory_space<vmem>>, vector<1024x896xbf16>
    %cst_48 = arith.constant dense<0.000000e+00> : vector<256x896xf32>
    %108 = tpu.matmul %106, %107, %cst_48 {dimension_numbers = #tpu.dot_dimension_numbers<[1], [0], [0], [1], [0, 0, 1, 1], [], []>} : vector<256x1024xbf16>, vector<1024x896xbf16>, vector<256x896xf32> -> vector<256x896xf32>
    %109 = vector.extract_strided_slice %108 {offsets = [0, 0], sizes = [256, 784], strides = [1, 1]} : vector<256x896xf32> to vector<256x784xf32>
    %c0_49 = arith.constant 0 : index
    %c0_50 = arith.constant 0 : index
    %110 = vector.load %arg11[%c0_49, %c0_50] : memref<1x784xf32, #tpu.memory_space<vmem>>, vector<1x784xf32>
    %111 = vector.broadcast %110 : vector<1x784xf32> to vector<256x784xf32>
    %112 = arith.addf %109, %111 : vector<256x784xf32>
    %113 = math.tanh %112 : vector<256x784xf32>
    %c0_51 = arith.constant 0 : index
    %c0_52 = arith.constant 0 : index
    %114 = vector.load %arg12[%c0_51, %c0_52] : memref<256x784xf32, #tpu.memory_space<vmem>>, vector<256x784xf32>
    tpu.vector_store %arg12[%c0_51, %c0_52], %113 {strides = array<i32>} : memref<256x784xf32, #tpu.memory_space<vmem>>, vector<256x784xf32>,
    return
  }
}

</mosaic_0001>

<llo_original>
// kernel: generator_forward.1
$region0: #{generator_forward.1}
  #allocation0 [shape = 'u32[]', space=smem, size = 0x4, offset = 0x4, fixed_abs, tag = 'smem constant byte address 0x4 - core index']
  #allocation1 [shape = 'u32[144,128]{1,0:T(1,128)}', space=vmem, size = 0x12000, scoped, tag = 'internal scratch']
  #allocation2 [shape = 'bf16[128,256]{1,0:T(16,128)(2,1)}', space=vmem, size = 0x10000, scoped, tag = 'scratch operand']
  #allocation3 [shape = 'bf16[256,512]{1,0:T(16,128)(2,1)}', space=vmem, size = 0x40000, scoped, tag = 'scratch operand']
  #allocation4 [shape = 'bf16[512,1024]{1,0:T(16,128)(2,1)}', space=vmem, size = 0x100000, scoped, tag = 'scratch operand']
  #allocation5 [shape = 'bf16[1024,896]{1,0:T(16,128)(2,1)}', space=vmem, size = 0x1c0000, scoped, tag = 'scratch operand']
  #allocation6 [shape = 's32[4]{0}', space=sflag, size = 0x10, scoped, tag = 'scratch operand']
  #allocation18 [shape = 's32[]', space=sflag, size = 0x4, offset = 0, fixed_abs, tag = 'sflag constant byte address 0x0 - dummy sync flag']
  #allocation20 [shape = 's32[]', space=sflag, size = 0x4, offset = 0, fixed_abs, tag = 'sflag constant byte address 0x0 - dummy sync flag']
  #allocation22 [shape = 's32[]', space=sflag, size = 0x4, offset = 0, fixed_abs, tag = 'sflag constant byte address 0x0 - dummy sync flag']
  #allocation24 [shape = 's32[]', space=sflag, size = 0x4, offset = 0, fixed_abs, tag = 'sflag constant byte address 0x0 - dummy sync flag']
  %s0 = inlined_call_operand.vmem [shape: bf16[256,128], index: 0, kind: input, shape index: {}]
  %s1 = inlined_call_operand.hbm [shape: bf16[128,256], index: 1, kind: input, shape index: {}]
  %s2 = inlined_call_operand.hbm [shape: bf16[256,512], index: 2, kind: input, shape index: {}]
  %s3 = inlined_call_operand.hbm [shape: bf16[512,1024], index: 3, kind: input, shape index: {}]
  %s4 = inlined_call_operand.hbm [shape: bf16[1024,896], index: 4, kind: input, shape index: {}]
  %s5 = inlined_call_operand.hbm [shape: f32[1,256], index: 5, kind: input, shape index: {}]
  %s6 = inlined_call_operand.hbm [shape: f32[1,256], index: 6, kind: input, shape index: {}]
  %s7 = inlined_call_operand.hbm [shape: f32[1,512], index: 7, kind: input, shape index: {}]
  %s8 = inlined_call_operand.hbm [shape: f32[1,512], index: 8, kind: input, shape index: {}]
  %s9 = inlined_call_operand.hbm [shape: f32[1,1024], index: 9, kind: input, shape index: {}]
  %s10 = inlined_call_operand.hbm [shape: f32[1,1024], index: 10, kind: input, shape index: {}]
  %s11 = inlined_call_operand.hbm [shape: f32[1,784], index: 11, kind: input, shape index: {}]
  %s12 = inlined_call_operand.vmem [shape: f32[256,784], index: 12, kind: output, shape index: {}]
  %s13 = sld [smem:[#allocation0]]
  $region70: #{generator_forward.1} parent=0
    _
  %s15 = ssub.s32 1, %s13
  %s16 = scalar_select 0, %s15, %s13
  $region1: #{generator_forward.1} parent=0
    #allocation7 [shape = 'u8[1024]{0}', space=vmem, size = 0x400, scoped, tag = 'input window, operand 5, single buffered']
    #allocation8 [shape = 's32[1]{0}', space=sflag, size = 0x4, scoped, tag = 'scoped memory for generator_forward.1']
    #allocation9 [shape = 'u8[1024]{0}', space=vmem, size = 0x400, scoped, tag = 'input window, operand 6, single buffered']
    #allocation10 [shape = 's32[1]{0}', space=sflag, size = 0x4, scoped, tag = 'scoped memory for generator_forward.1']
    #allocation11 [shape = 'u8[2048]{0}', space=vmem, size = 0x800, scoped, tag = 'input window, operand 7, single buffered']
    #allocation12 [shape = 'u8[2048]{0}', space=vmem, size = 0x800, scoped, tag = 'input window, operand 8, single buffered']
    #allocation13 [shape = 's32[1]{0}', space=sflag, size = 0x4, scoped, tag = 'scoped memory for generator_forward.1']
    #allocation14 [shape = 'u8[4096]{0}', space=vmem, size = 0x1000, scoped, tag = 'input window, operand 9, single buffered']
    #allocation15 [shape = 'u8[4096]{0}', space=vmem, size = 0x1000, scoped, tag = 'input window, operand 10, single buffered']
    #allocation16 [shape = 's32[1]{0}', space=sflag, size = 0x4, scoped, tag = 'scoped memory for generator_forward.1']
    #allocation17 [shape = 'u8[3584]{0}', space=vmem, size = 0x1000, scoped, tag = 'input window, operand 11, single buffered']
    #allocation19 [shape = 'u32[9]{0}', space=smem, size = 0x24, scoped, tag = 'DMA stride descriptor']
    #allocation21 [shape = 'u32[9]{0}', space=smem, size = 0x24, scoped, tag = 'DMA stride descriptor']
    #allocation23 [shape = 'u32[9]{0}', space=smem, size = 0x24, scoped, tag = 'DMA stride descriptor']
    #allocation25 [shape = 'u32[9]{0}', space=smem, size = 0x24, scoped, tag = 'DMA stride descriptor']
    %17 = vsyncpa [#allocation8], 0
    %18 = vsyncpa [#allocation10], 0
    %19 = vsyncpa [#allocation13], 0
    %20 = vsyncpa [#allocation16], 0
    // Predicated region
    $region2: #{generator_forward.1} parent=1 // pred_check
      _
    $region3: #{generator_forward.1} parent=1 // pred_check_branch
      %22 = sbr.rel (0) target = $region5
    $region4: #{generator_forward.1} parent=1 // pred_region
      _
    $region5: #{generator_forward.1} parent=1 // pred_fallthru
      _
    // Predicated region
    $region6: #{generator_forward.1} parent=1 // pred_check
      _
    $region7: #{generator_forward.1} parent=1 // pred_check_branch
      %24 = sbr.rel (0) target = $region9
    $region8: #{generator_forward.1} parent=1 // pred_region
      %s26 = ssub.s32 32, 32
      %27 = vsyncadd [#allocation8], %s26
      %s29 = sshll.u32 [#allocation7], 4
      %s30 = int_to_ptr.vmem [resolvable:$true] %s29
      %32 = dma.hbm_to_vmem [thread:$0]  %s5, 32, %s30, [#allocation8]
    $region9: #{generator_forward.1} parent=1 // pred_fallthru
      _
    // Predicated region
    $region10: #{generator_forward.1} parent=1 // pred_check
      _
    $region11: #{generator_forward.1} parent=1 // pred_check_branch
      %34 = sbr.rel (0) target = $region13
    $region12: #{generator_forward.1} parent=1 // pred_region
      %s36 = ssub.s32 32, 32
      %37 = vsyncadd [#allocation10], %s36
      %s39 = sshll.u32 [#allocation9], 4
      %s40 = int_to_ptr.vmem [resolvable:$true] %s39
      %42 = dma.hbm_to_vmem [thread:$0]  %s6, 32, %s40, [#allocation10]
    $region13: #{generator_forward.1} parent=1 // pred_fallthru
      _
    // Predicated region
    $region14: #{generator_forward.1} parent=1 // pred_check
      _
    $region15: #{generator_forward.1} parent=1 // pred_check_branch
      %44 = sbr.rel (0) target = $region17
    $region16: #{generator_forward.1} parent=1 // pred_region
      %s46 = ssub.s32 64, 64
      %47 = vsyncadd [#allocation10], %s46
      %s49 = sshll.u32 [#allocation11], 4
      %s50 = int_to_ptr.vmem [resolvable:$true] %s49
      %52 = dma.hbm_to_vmem [thread:$0]  %s7, 64, %s50, [#allocation10]
    $region17: #{generator_forward.1} parent=1 // pred_fallthru
      _
    // Predicated region
    $region18: #{generator_forward.1} parent=1 // pred_check
      _
    $region19: #{generator_forward.1} parent=1 // pred_check_branch
      %54 = sbr.rel (0) target = $region21
    $region20: #{generator_forward.1} parent=1 // pred_region
      %s56 = ssub.s32 64, 64
      %57 = vsyncadd [#allocation13], %s56
      %s59 = sshll.u32 [#allocation12], 4
      %s60 = int_to_ptr.vmem [resolvable:$true] %s59
      %62 = dma.hbm_to_vmem [thread:$0]  %s8, 64, %s60, [#allocation13]
    $region21: #{generator_forward.1} parent=1 // pred_fallthru
      _
    // Predicated region
    $region22: #{generator_forward.1} parent=1 // pred_check
      _
    $region23: #{generator_forward.1} parent=1 // pred_check_branch
      %64 = sbr.rel (0) target = $region25
    $region24: #{generator_forward.1} parent=1 // pred_region
      %s66 = ssub.s32 128, 128
      %67 = vsyncadd [#allocation13], %s66
      %s69 = sshll.u32 [#allocation14], 4
      %s70 = int_to_ptr.vmem [resolvable:$true] %s69
      %72 = dma.hbm_to_vmem [thread:$0]  %s9, 128, %s70, [#allocation13]
    $region25: #{generator_forward.1} parent=1 // pred_fallthru
      _
    // Predicated region
    $region26: #{generator_forward.1} parent=1 // pred_check
      _
    $region27: #{generator_forward.1} parent=1 // pred_check_branch
      %74 = sbr.rel (0) target = $region29
    $region28: #{generator_forward.1} parent=1 // pred_region
      %s76 = ssub.s32 128, 128
      %77 = vsyncadd [#allocation16], %s76
      %s79 = sshll.u32 [#allocation15], 4
      %s80 = int_to_ptr.vmem [resolvable:$true] %s79
      %82 = dma.hbm_to_vmem [thread:$0]  %s10, 128, %s80, [#allocation16]
    $region29: #{generator_forward.1} parent=1 // pred_fallthru
      _
    // Predicated region
    $region30: #{generator_forward.1} parent=1 // pred_check
      _
    $region31: #{generator_forward.1} parent=1 // pred_check_branch
      %84 = sbr.rel (0) target = $region33
    $region32: #{generator_forward.1} parent=1 // pred_region
      %s86 = ssub.s32 112, 112
      %87 = vsyncadd [#allocation16], %s86
      %s89 = sshll.u32 [#allocation17], 4
      %s90 = int_to_ptr.vmem [resolvable:$true] %s89
      %92 = dma.hbm_to_vmem [thread:$0]  %s11, 112, %s90, [#allocation16]
    $region33: #{generator_forward.1} parent=1 // pred_fallthru
      _
    // Predicated region
    $region34: #{generator_forward.1} parent=1 // pred_check
      _
    $region35: #{generator_forward.1} parent=1 // pred_check_branch
      %94 = sbr.rel (0) target = $region37
    $region36: #{generator_forward.1} parent=1 // pred_region
      %95 = dma.done [#allocation8], 32
    $region37: #{generator_forward.1} parent=1 // pred_fallthru
      _
    // Predicated region
    $region38: #{generator_forward.1} parent=1 // pred_check
      _
    $region39: #{generator_forward.1} parent=1 // pred_check_branch
      %97 = sbr.rel (0) target = $region41
    $region40: #{generator_forward.1} parent=1 // pred_region
      %98 = dma.done [#allocation10], 32
    $region41: #{generator_forward.1} parent=1 // pred_fallthru
      _
    // Predicated region
    $region42: #{generator_forward.1} parent=1 // pred_check
      _
    $region43: #{generator_forward.1} parent=1 // pred_check_branch
      %100 = sbr.rel (0) target = $region45
    $region44: #{generator_forward.1} parent=1 // pred_region
      %101 = dma.done [#allocation10], 64
    $region45: #{generator_forward.1} parent=1 // pred_fallthru
      _
    // Predicated region
    $region46: #{generator_forward.1} parent=1 // pred_check
      _
    $region47: #{generator_forward.1} parent=1 // pred_check_branch
      %103 = sbr.rel (0) target = $region49
    $region48: #{generator_forward.1} parent=1 // pred_region
      %104 = dma.done [#allocation13], 64
    $region49: #{generator_forward.1} parent=1 // pred_fallthru
      _
    // Predicated region
    $region50: #{generator_forward.1} parent=1 // pred_check
      _
    $region51: #{generator_forward.1} parent=1 // pred_check_branch
      %106 = sbr.rel (0) target = $region53
    $region52: #{generator_forward.1} parent=1 // pred_region
      %107 = dma.done [#allocation13], 128
    $region53: #{generator_forward.1} parent=1 // pred_fallthru
      _
    // Predicated region
    $region54: #{generator_forward.1} parent=1 // pred_check
      _
    $region55: #{generator_forward.1} parent=1 // pred_check_branch
      %109 = sbr.rel (0) target = $region57
    $region56: #{generator_forward.1} parent=1 // pred_region
      %110 = dma.done [#allocation16], 128
    $region57: #{generator_forward.1} parent=1 // pred_fallthru
      _
    // Predicated region
    $region58: #{generator_forward.1} parent=1 // pred_check
      _
    $region59: #{generator_forward.1} parent=1 // pred_check_branch
      %112 = sbr.rel (0) target = $region61
    $region60: #{generator_forward.1} parent=1 // pred_region
      %113 = dma.done [#allocation16], 112
    $region61: #{generator_forward.1} parent=1 // pred_fallthru
      _
    %s116 = sshll.u32 1, 14
    %s117 = sxor.u32 4294967295, %s116
    %s119 = sld [smem:[#allocation0]]
    %s120 = sadd.s32 2, %s119
    %s122 = sshll.u32 7, 26
    %s123 = sxor.u32 4294967295, %s122
    %s124 = sand.u32 0, %s123
    %s125 = sshll.u32 %s120, 26
    %s126 = sor.u32 %s124, %s125
    %s127 = sshll.u32 [#allocation2], 4
    %s128 = int_to_ptr.vmem [resolvable:$true] %s127
    %131 = sst [smem:[#allocation19]] 256
    %s132 = scalar_lea.smem [#allocation19], 1
    %133 = sst [smem:[%s132]] 256
    %s134 = scalar_lea.smem [#allocation19], 2
    %135 = sst [smem:[%s134]] 2
    %s136 = scalar_lea.smem [#allocation19], 3
    %137 = sst [smem:[%s136]] 64
    %s138 = scalar_lea.smem [#allocation19], 4
    %139 = sst [smem:[%s138]] 128
    %s140 = scalar_lea.smem [#allocation19], 5
    %141 = sst [smem:[%s140]] 2
    %s142 = scalar_lea.smem [#allocation19], 6
    %143 = sst [smem:[%s142]] 128
    %s144 = scalar_lea.smem [#allocation19], 7
    %145 = sst [smem:[%s144]] 64
    %s146 = scalar_lea.smem [#allocation19], 8
    %147 = sst [smem:[%s146]] 4
    %149 = dma.general %s1, 2048, %s128, [#allocation6], [#allocation18], [#allocation19], %s126, 0
    %s150 = scalar_lea.sflag [#allocation6], 1
    %s152 = sshll.u32 1, 14
    %s153 = sxor.u32 4294967295, %s152
    %s155 = sadd.s32 2, %s119
    %s157 = sshll.u32 7, 26
    %s158 = sxor.u32 4294967295, %s157
    %s159 = sand.u32 0, %s158
    %s160 = sshll.u32 %s155, 26
    %s161 = sor.u32 %s159, %s160
    %s162 = sshll.u32 [#allocation3], 4
    %s163 = int_to_ptr.vmem [resolvable:$true] %s162
    %166 = sst [smem:[#allocation21]] 512
    %s167 = scalar_lea.smem [#allocation21], 1
    %168 = sst [smem:[%s167]] 512
    %s169 = scalar_lea.smem [#allocation21], 2
    %170 = sst [smem:[%s169]] 4
    %s171 = scalar_lea.smem [#allocation21], 3
    %172 = sst [smem:[%s171]] 64
    %s173 = scalar_lea.smem [#allocation21], 4
    %174 = sst [smem:[%s173]] 128
    %s175 = scalar_lea.smem [#allocation21], 5
    %176 = sst [smem:[%s175]] 2
    %s177 = scalar_lea.smem [#allocation21], 6
    %178 = sst [smem:[%s177]] 256
    %s179 = scalar_lea.smem [#allocation21], 7
    %180 = sst [smem:[%s179]] 64
    %s181 = scalar_lea.smem [#allocation21], 8
    %182 = sst [smem:[%s181]] 4
    %184 = dma.general %s2, 8192, %s163, %s150, [#allocation20], [#allocation21], %s161, 0
    %s185 = scalar_lea.sflag [#allocation6], 2
    %s187 = sshll.u32 1, 14
    %s188 = sxor.u32 4294967295, %s187
    %s190 = sadd.s32 2, %s119
    %s192 = sshll.u32 7, 26
    %s193 = sxor.u32 4294967295, %s192
    %s194 = sand.u32 0, %s193
    %s195 = sshll.u32 %s190, 26
    %s196 = sor.u32 %s194, %s195
    %s197 = sshll.u32 [#allocation4], 4
    %s198 = int_to_ptr.vmem [resolvable:$true] %s197
    %201 = sst [smem:[#allocation23]] 1024
    %s202 = scalar_lea.smem [#allocation23], 1
    %203 = sst [smem:[%s202]] 1024
    %s204 = scalar_lea.smem [#allocation23], 2
    %205 = sst [smem:[%s204]] 8
    %s206 = scalar_lea.smem [#allocation23], 3
    %207 = sst [smem:[%s206]] 64
    %s208 = scalar_lea.smem [#allocation23], 4
    %209 = sst [smem:[%s208]] 128
    %s210 = scalar_lea.smem [#allocation23], 5
    %211 = sst [smem:[%s210]] 2
    %s212 = scalar_lea.smem [#allocation23], 6
    %213 = sst [smem:[%s212]] 512
    %s214 = scalar_lea.smem [#allocation23], 7
    %215 = sst [smem:[%s214]] 64
    %s216 = scalar_lea.smem [#allocation23], 8
    %217 = sst [smem:[%s216]] 4
    %219 = dma.general %s3, 32768, %s198, %s185, [#allocation22], [#allocation23], %s196, 0
    %s220 = scalar_lea.sflag [#allocation6], 3
    %s222 = sshll.u32 1, 14
    %s223 = sxor.u32 4294967295, %s222
    %s225 = sadd.s32 2, %s119
    %s227 = sshll.u32 7, 26
    %s228 = sxor.u32 4294967295, %s227
    %s229 = sand.u32 0, %s228
    %s230 = sshll.u32 %s225, 26
    %s231 = sor.u32 %s229, %s230
    %s232 = sshll.u32 [#allocation5], 4
    %s233 = int_to_ptr.vmem [resolvable:$true] %s232
    %236 = sst [smem:[#allocation25]] 896
    %s237 = scalar_lea.smem [#allocation25], 1
    %238 = sst [smem:[%s237]] 896
    %s239 = scalar_lea.smem [#allocation25], 2
    %240 = sst [smem:[%s239]] 7
    %s241 = scalar_lea.smem [#allocation25], 3
    %242 = sst [smem:[%s241]] 64
    %s243 = scalar_lea.smem [#allocation25], 4
    %244 = sst [smem:[%s243]] 128
    %s245 = scalar_lea.smem [#allocation25], 5
    %246 = sst [smem:[%s245]] 2
    %s247 = scalar_lea.smem [#allocation25], 6
    %248 = sst [smem:[%s247]] 448
    %s249 = scalar_lea.smem [#allocation25], 7
    %250 = sst [smem:[%s249]] 64
    %s251 = scalar_lea.smem [#allocation25], 8
    %252 = sst [smem:[%s251]] 4
    %254 = dma.general %s4, 57344, %s233, %s220, [#allocation24], [#allocation25], %s231, 0
    %s255 = smul.u32 4, 16
    %s256 = smul.u32 %s255, 2
    %s257 = sshll.u32 %s256, 4
    %258 = dma.done [#allocation6], %s257
    %v259 = vld [vmem:[%s0] sm:$0xf]
    %v260 = vld [vmem:[%s0 + $0x4] sm:$0xf]
    %v261 = vld [vmem:[%s0 + $0x8] sm:$0xf]
    %v262 = vld [vmem:[%s0 + $0xc] sm:$0xf]
    %v263 = vld [vmem:[%s0 + $0x10] sm:$0xf]
    %v264 = vld [vmem:[%s0 + $0x14] sm:$0xf]
    %v265 = vld [vmem:[%s0 + $0x18] sm:$0xf]
    %v266 = vld [vmem:[%s0 + $0x1c] sm:$0xf]
    %v267 = vld [vmem:[%s0 + $0x20] sm:$0xf]
    %v268 = vld [vmem:[%s0 + $0x24] sm:$0xf]
    %v269 = vld [vmem:[%s0 + $0x28] sm:$0xf]
    %v270 = vld [vmem:[%s0 + $0x2c] sm:$0xf]
    %v271 = vld [vmem:[%s0 + $0x30] sm:$0xf]
    %v272 = vld [vmem:[%s0 + $0x34] sm:$0xf]
    %v273 = vld [vmem:[%s0 + $0x38] sm:$0xf]
    %v274 = vld [vmem:[%s0 + $0x3c] sm:$0xf]
    %v275 = vld [vmem:[%s0 + $0x40] sm:$0xf]
    %v276 = vld [vmem:[%s0 + $0x44] sm:$0xf]
    %v277 = vld [vmem:[%s0 + $0x48] sm:$0xf]
    %v278 = vld [vmem:[%s0 + $0x4c] sm:$0xf]
    %v279 = vld [vmem:[%s0 + $0x50] sm:$0xf]
    %v280 = vld [vmem:[%s0 + $0x54] sm:$0xf]
    %v281 = vld [vmem:[%s0 + $0x58] sm:$0xf]
    %v282 = vld [vmem:[%s0 + $0x5c] sm:$0xf]
    %v283 = vld [vmem:[%s0 + $0x60] sm:$0xf]
    %v284 = vld [vmem:[%s0 + $0x64] sm:$0xf]
    %v285 = vld [vmem:[%s0 + $0x68] sm:$0xf]
    %v286 = vld [vmem:[%s0 + $0x6c] sm:$0xf]
    %v287 = vld [vmem:[%s0 + $0x70] sm:$0xf]
    %v288 = vld [vmem:[%s0 + $0x74] sm:$0xf]
    %v289 = vld [vmem:[%s0 + $0x78] sm:$0xf]
    %v290 = vld [vmem:[%s0 + $0x7c] sm:$0xf]
    %v291 = vld [vmem:[#allocation2] sm:$0xff]
    %v292 = vld [vmem:[#allocation2 + $0x8] sm:$0xff]
    %v293 = vld [vmem:[#allocation2 + $0x10] sm:$0xff]
    %v294 = vld [vmem:[#allocation2 + $0x18] sm:$0xff]
    %v295 = vld [vmem:[#allocation2 + $0x20] sm:$0xff]
    %v296 = vld [vmem:[#allocation2 + $0x28] sm:$0xff]
    %v297 = vld [vmem:[#allocation2 + $0x30] sm:$0xff]
    %v298 = vld [vmem:[#allocation2 + $0x38] sm:$0xff]
    %v299 = vld [vmem:[#allocation2 + $0x40] sm:$0xff]
    %v300 = vld [vmem:[#allocation2 + $0x48] sm:$0xff]
    %v301 = vld [vmem:[#allocation2 + $0x50] sm:$0xff]
    %v302 = vld [vmem:[#allocation2 + $0x58] sm:$0xff]
    %v303 = vld [vmem:[#allocation2 + $0x60] sm:$0xff]
    %v304 = vld [vmem:[#allocation2 + $0x68] sm:$0xff]
    %v305 = vld [vmem:[#allocation2 + $0x70] sm:$0xff]
    %v306 = vld [vmem:[#allocation2 + $0x78] sm:$0xff]
    %v339 = vunpack.c.l.b16 %v259
    %v340 = vunpack.c.l.b16 %v260
    %v341 = vunpack.c.l.b16 %v261
    %v342 = vunpack.c.l.b16 %v262
    %v343 = vunpack.c.l.b16 %v263
    %v344 = vunpack.c.l.b16 %v264
    %v345 = vunpack.c.l.b16 %v265
    %v346 = vunpack.c.l.b16 %v266
    %v347 = vunpack.c.l.b16 %v267
    %v348 = vunpack.c.l.b16 %v268
    %v349 = vunpack.c.l.b16 %v269
    %v350 = vunpack.c.l.b16 %v270
    %v351 = vunpack.c.l.b16 %v271
    %v352 = vunpack.c.l.b16 %v272
    %v353 = vunpack.c.l.b16 %v273
    %v354 = vunpack.c.l.b16 %v274
    %v355 = vunpack.c.l.b16 %v275
    %v356 = vunpack.c.l.b16 %v276
    %v357 = vunpack.c.l.b16 %v277
    %v358 = vunpack.c.l.b16 %v278
    %v359 = vunpack.c.l.b16 %v279
    %v360 = vunpack.c.l.b16 %v280
    %v361 = vunpack.c.l.b16 %v281
    %v362 = vunpack.c.l.b16 %v282
    %v363 = vunpack.c.l.b16 %v283
    %v364 = vunpack.c.l.b16 %v284
    %v365 = vunpack.c.l.b16 %v285
    %v366 = vunpack.c.l.b16 %v286
    %v367 = vunpack.c.l.b16 %v287
    %v368 = vunpack.c.l.b16 %v288
    %v369 = vunpack.c.l.b16 %v289
    %v370 = vunpack.c.l.b16 %v290
    %v371 = vpack.c.b16 %v340, %v339
    %v372 = vpack.c.b16 %v342, %v341
    %v373 = vpack.c.b16 %v344, %v343
    %v374 = vpack.c.b16 %v346, %v345
    %v375 = vpack.c.b16 %v348, %v347
    %v376 = vpack.c.b16 %v350, %v349
    %v377 = vpack.c.b16 %v352, %v351
    %v378 = vpack.c.b16 %v354, %v353
    %v379 = vpack.c.b16 %v356, %v355
    %v380 = vpack.c.b16 %v358, %v357
    %v381 = vpack.c.b16 %v360, %v359
    %v382 = vpack.c.b16 %v362, %v361
    %v383 = vpack.c.b16 %v364, %v363
    %v384 = vpack.c.b16 %v366, %v365
    %v385 = vpack.c.b16 %v368, %v367
    %v386 = vpack.c.b16 %v370, %v369
    %403 = vmatprep.subr.bf16.mxu0 %v292
    %404 = vmatpush1.bf16.msra.mxu0 %v291
    %405 = vmatprep.subr.bf16.mxu0 %v294
    %406 = vmatpush1.bf16.msra.mxu0 %v293
    %407 = vmatprep.subr.bf16.mxu0 %v296
    %408 = vmatpush1.bf16.msra.mxu0 %v295
    %409 = vmatprep.subr.bf16.mxu0 %v298
    %410 = vmatpush1.bf16.msra.mxu0 %v297
    %411 = vmatprep.subr.bf16.mxu0 %v300
    %412 = vmatpush1.bf16.msra.mxu0 %v299
    %413 = vmatprep.subr.bf16.mxu0 %v302
    %414 = vmatpush1.bf16.msra.mxu0 %v301
    %415 = vmatprep.subr.bf16.mxu0 %v304
    %416 = vmatpush1.bf16.msra.mxu0 %v303
    %417 = vmatprep.subr.bf16.mxu0 %v306
    %418 = vmatpush1.bf16.msra.mxu0 %v305
    %419 = vmatprep.subr.bf16.mxu0 0
    %420 = vmatpush1.bf16.msra.mxu0 0
    %421 = vmatprep.subr.bf16.mxu0 0
    %422 = vmatpush1.bf16.msra.mxu0 0
    %423 = vmatprep.subr.bf16.mxu0 0
    %424 = vmatpush1.bf16.msra.mxu0 0
    %425 = vmatprep.subr.bf16.mxu0 0
    %426 = vmatpush1.bf16.msra.mxu0 0
    %427 = vmatprep.subr.bf16.mxu0 0
    %428 = vmatpush1.bf16.msra.mxu0 0
    %429 = vmatprep.subr.bf16.mxu0 0
    %430 = vmatpush1.bf16.msra.mxu0 0
    %431 = vmatprep.subr.bf16.mxu0 0
    %432 = vmatpush1.bf16.msra.mxu0 0
    %433 = vmatprep.subr.bf16.mxu0 0
    %434 = vmatpush1.bf16.msra.mxu0 0
    %435 = vmatprep.mubr.bf16.mxu0 0
    %436 = vmatmul.mubr.bf16.gmra.mrb[0].mxu0 %v371
    %v437 = vpop.f32.mrb[0].mxu0
    %v438 = vadd.f32 0.0, %v437
    %v439 = vpop.f32.mrb[0].mxu0
    %v440 = vadd.f32 0.0, %v439
    %v441 = vpop.f32.mrb[0].mxu0
    %v442 = vadd.f32 0.0, %v441
    %v443 = vpop.f32.mrb[0].mxu0
    %v444 = vadd.f32 0.0, %v443
    %445 = vmatprep.mubr.bf16.mxu0 0
    %446 = vmatmul.mubr.bf16.gmra.mrb[0].mxu0 %v372
    %v447 = vpop.f32.mrb[0].mxu0
    %v448 = vadd.f32 0.0, %v447
    %v449 = vpop.f32.mrb[0].mxu0
    %v450 = vadd.f32 0.0, %v449
    %v451 = vpop.f32.mrb[0].mxu0
    %v452 = vadd.f32 0.0, %v451
    %v453 = vpop.f32.mrb[0].mxu0
    %v454 = vadd.f32 0.0, %v453
    %455 = vmatprep.mubr.bf16.mxu0 0
    %456 = vmatmul.mubr.bf16.gmra.mrb[0].mxu0 %v373
    %v457 = vpop.f32.mrb[0].mxu0
    %v458 = vadd.f32 0.0, %v457
    %v459 = vpop.f32.mrb[0].mxu0
    %v460 = vadd.f32 0.0, %v459
    %v461 = vpop.f32.mrb[0].mxu0
    %v462 = vadd.f32 0.0, %v461
    %v463 = vpop.f32.mrb[0].mxu0
    %v464 = vadd.f32 0.0, %v463
    %465 = vmatprep.mubr.bf16.mxu0 0
    %466 = vmatmul.mubr.bf16.gmra.mrb[0].mxu0 %v374
    %v467 = vpop.f32.mrb[0].mxu0
    %v468 = vadd.f32 0.0, %v467
    %v469 = vpop.f32.mrb[0].mxu0
    %v470 = vadd.f32 0.0, %v469
    %v471 = vpop.f32.mrb[0].mxu0
    %v472 = vadd.f32 0.0, %v471
    %v473 = vpop.f32.mrb[0].mxu0
    %v474 = vadd.f32 0.0, %v473
    %475 = vmatprep.mubr.bf16.mxu0 0
    %476 = vmatmul.mubr.bf16.gmra.mrb[0].mxu0 %v375
    %v477 = vpop.f32.mrb[0].mxu0
    %v478 = vadd.f32 0.0, %v477
    %v479 = vpop.f32.mrb[0].mxu0
    %v480 = vadd.f32 0.0, %v479
    %v481 = vpop.f32.mrb[0].mxu0
    %v482 = vadd.f32 0.0, %v481
    %v483 = vpop.f32.mrb[0].mxu0
    %v484 = vadd.f32 0.0, %v483
    %485 = vmatprep.mubr.bf16.mxu0 0
    %486 = vmatmul.mubr.bf16.gmra.mrb[0].mxu0 %v376
    %v487 = vpop.f32.mrb[0].mxu0
    %v488 = vadd.f32 0.0, %v487
    %v489 = vpop.f32.mrb[0].mxu0
    %v490 = vadd.f32 0.0, %v489
    %v491 = vpop.f32.mrb[0].mxu0
    %v492 = vadd.f32 0.0, %v491
    %v493 = vpop.f32.mrb[0].mxu0
    %v494 = vadd.f32 0.0, %v493
    %495 = vmatprep.mubr.bf16.mxu0 0
    %496 = vmatmul.mubr.bf16.gmra.mrb[0].mxu0 %v377
    %v497 = vpop.f32.mrb[0].mxu0
    %v498 = vadd.f32 0.0, %v497
    %v499 = vpop.f32.mrb[0].mxu0
    %v500 = vadd.f32 0.0, %v499
    %v501 = vpop.f32.mrb[0].mxu0
    %v502 = vadd.f32 0.0, %v501
    %v503 = vpop.f32.mrb[0].mxu0
    %v504 = vadd.f32 0.0, %v503
    %505 = vmatprep.mubr.bf16.mxu0 0
    %506 = vmatmul.mubr.bf16.gmra.mrb[0].mxu0 %v378
    %v507 = vpop.f32.mrb[0].mxu0
    %v508 = vadd.f32 0.0, %v507
    %v509 = vpop.f32.mrb[0].mxu0
    %v510 = vadd.f32 0.0, %v509
    %v511 = vpop.f32.mrb[0].mxu0
    %v512 = vadd.f32 0.0, %v511
    %v513 = vpop.f32.mrb[0].mxu0
    %v514 = vadd.f32 0.0, %v513
    %515 = vmatprep.mubr.bf16.mxu0 0
    %516 = vmatmul.mubr.bf16.gmra.mrb[0].mxu0 %v379
    %v517 = vpop.f32.mrb[0].mxu0
    %v518 = vadd.f32 0.0, %v517
    %v519 = vpop.f32.mrb[0].mxu0
    %v520 = vadd.f32 0.0, %v519
    %v521 = vpop.f32.mrb[0].mxu0
    %v522 = vadd.f32 0.0, %v521
    %v523 = vpop.f32.mrb[0].mxu0
    %v524 = vadd.f32 0.0, %v523
    %525 = vmatprep.mubr.bf16.mxu0 0
    %526 = vmatmul.mubr.bf16.gmra.mrb[0].mxu0 %v380
    %v527 = vpop.f32.mrb[0].mxu0
    %v528 = vadd.f32 0.0, %v527
    %v529 = vpop.f32.mrb[0].mxu0
    %v530 = vadd.f32 0.0, %v529
    %v531 = vpop.f32.mrb[0].mxu0
    %v532 = vadd.f32 0.0, %v531
    %v533 = vpop.f32.mrb[0].mxu0
    %v534 = vadd.f32 0.0, %v533
    %535 = vmatprep.mubr.bf16.mxu0 0
    %536 = vmatmul.mubr.bf16.gmra.mrb[0].mxu0 %v381
    %v537 = vpop.f32.mrb[0].mxu0
    %v538 = vadd.f32 0.0, %v537
    %v539 = vpop.f32.mrb[0].mxu0
    %v540 = vadd.f32 0.0, %v539
    %v541 = vpop.f32.mrb[0].mxu0
    %v542 = vadd.f32 0.0, %v541
    %v543 = vpop.f32.mrb[0].mxu0
    %v544 = vadd.f32 0.0, %v543
    %545 = vmatprep.mubr.bf16.mxu0 0
    %546 = vmatmul.mubr.bf16.gmra.mrb[0].mxu0 %v382
    %v547 = vpop.f32.mrb[0].mxu0
    %v548 = vadd.f32 0.0, %v547
    %v549 = vpop.f32.mrb[0].mxu0
    %v550 = vadd.f32 0.0, %v549
    %v551 = vpop.f32.mrb[0].mxu0
    %v552 = vadd.f32 0.0, %v551
    %v553 = vpop.f32.mrb[0].mxu0
    %v554 = vadd.f32 0.0, %v553
    %555 = vmatprep.mubr.bf16.mxu0 0
    %556 = vmatmul.mubr.bf16.gmra.mrb[0].mxu0 %v383
    %v557 = vpop.f32.mrb[0].mxu0
    %v558 = vadd.f32 0.0, %v557
    %v559 = vpop.f32.mrb[0].mxu0
    %v560 = vadd.f32 0.0, %v559
    %v561 = vpop.f32.mrb[0].mxu0
    %v562 = vadd.f32 0.0, %v561
    %v563 = vpop.f32.mrb[0].mxu0
    %v564 = vadd.f32 0.0, %v563
    %565 = vmatprep.mubr.bf16.mxu0 0
    %566 = vmatmul.mubr.bf16.gmra.mrb[0].mxu0 %v384
    %v567 = vpop.f32.mrb[0].mxu0
    %v568 = vadd.f32 0.0, %v567
    %v569 = vpop.f32.mrb[0].mxu0
    %v570 = vadd.f32 0.0, %v569
    %v571 = vpop.f32.mrb[0].mxu0
    %v572 = vadd.f32 0.0, %v571
    %v573 = vpop.f32.mrb[0].mxu0
    %v574 = vadd.f32 0.0, %v573
    %575 = vmatprep.mubr.bf16.mxu0 0
    %576 = vmatmul.mubr.bf16.gmra.mrb[0].mxu0 %v385
    %v577 = vpop.f32.mrb[0].mxu0
    %v578 = vadd.f32 0.0, %v577
    %v579 = vpop.f32.mrb[0].mxu0
    %v580 = vadd.f32 0.0, %v579
    %v581 = vpop.f32.mrb[0].mxu0
    %v582 = vadd.f32 0.0, %v581
    %v583 = vpop.f32.mrb[0].mxu0
    %v584 = vadd.f32 0.0, %v583
    %585 = vmatprep.mubr.bf16.mxu0 0
    %586 = vmatmul.mubr.bf16.gmra.mrb[0].mxu0 %v386
    %v587 = vpop.f32.mrb[0].mxu0
    %v588 = vadd.f32 0.0, %v587
    %v589 = vpop.f32.mrb[0].mxu0
    %v590 = vadd.f32 0.0, %v589
    %v591 = vpop.f32.mrb[0].mxu0
    %v592 = vadd.f32 0.0, %v591
    %v593 = vpop.f32.mrb[0].mxu0
    %v594 = vadd.f32 0.0, %v593
    %595 = vdwg.mxu0
    %v596 = vld [vmem:[#allocation7] sm:$0x3]
    %v597 = vld [vmem:[#allocation9] sm:$0x3]
    %v598 = vadd.f32 %v438, %v442
    %v599 = vadd.f32 %v598, %v448
    %v600 = vadd.f32 %v599, %v452
    %v601 = vadd.f32 %v600, %v458
    %v602 = vadd.f32 %v601, %v462
    %v603 = vadd.f32 %v602, %v468
    %v604 = vadd.f32 %v603, %v472
    %v605 = vadd.f32 %v604, %v478
    %v606 = vadd.f32 %v605, %v482
    %v607 = vadd.f32 %v606, %v488
    %v608 = vadd.f32 %v607, %v492
    %v609 = vadd.f32 %v608, %v498
    %v610 = vadd.f32 %v609, %v502
    %v611 = vadd.f32 %v610, %v508
    %v612 = vadd.f32 %v611, %v512
    %v613 = vadd.f32 %v612, %v518
    %v614 = vadd.f32 %v613, %v522
    %v615 = vadd.f32 %v614, %v528
    %v616 = vadd.f32 %v615, %v532
    %v617 = vadd.f32 %v616, %v538
    %v618 = vadd.f32 %v617, %v542
    %v619 = vadd.f32 %v618, %v548
    %v620 = vadd.f32 %v619, %v552
    %v621 = vadd.f32 %v620, %v558
    %v622 = vadd.f32 %v621, %v562
    %v623 = vadd.f32 %v622, %v568
    %v624 = vadd.f32 %v623, %v572
    %v625 = vadd.f32 %v624, %v578
    %v626 = vadd.f32 %v625, %v582
    %v627 = vadd.f32 %v626, %v588
    %v628 = vadd.f32 %v627, %v592
    %v629 = vrot.slane %v628, 4
    %v630 = vadd.f32 %v628, %v629
    %v631 = vrot.slane %v630, 2
    %v632 = vadd.f32 %v630, %v631
    %v633 = vrot.slane %v632, 1
    %v634 = vadd.f32 %v632, %v633
    %v635 = vadd.f32 %v440, %v444
    %v636 = vadd.f32 %v635, %v450
    %v637 = vadd.f32 %v636, %v454
    %v638 = vadd.f32 %v637, %v460
    %v639 = vadd.f32 %v638, %v464
    %v640 = vadd.f32 %v639, %v470
    %v641 = vadd.f32 %v640, %v474
    %v642 = vadd.f32 %v641, %v480
    %v643 = vadd.f32 %v642, %v484
    %v644 = vadd.f32 %v643, %v490
    %v645 = vadd.f32 %v644, %v494
    %v646 = vadd.f32 %v645, %v500
    %v647 = vadd.f32 %v646, %v504
    %v648 = vadd.f32 %v647, %v510
    %v649 = vadd.f32 %v648, %v514
    %v650 = vadd.f32 %v649, %v520
    %v651 = vadd.f32 %v650, %v524
    %v652 = vadd.f32 %v651, %v530
    %v653 = vadd.f32 %v652, %v534
    %v654 = vadd.f32 %v653, %v540
    %v655 = vadd.f32 %v654, %v544
    %v656 = vadd.f32 %v655, %v550
    %v657 = vadd.f32 %v656, %v554
    %v658 = vadd.f32 %v657, %v560
    %v659 = vadd.f32 %v658, %v564
    %v660 = vadd.f32 %v659, %v570
    %v661 = vadd.f32 %v660, %v574
    %v662 = vadd.f32 %v661, %v580
    %v663 = vadd.f32 %v662, %v584
    %v664 = vadd.f32 %v663, %v590
    %v665 = vadd.f32 %v664, %v594
    %v666 = vrot.slane %v665, 4
    %v667 = vadd.f32 %v665, %v666
    %v668 = vrot.slane %v667, 2
    %v669 = vadd.f32 %v667, %v668
    %v670 = vrot.slane %v669, 1
    %v671 = vadd.f32 %v669, %v670
    %v672 = vmul.f32 %v438, %v438
    %v673 = vmul.f32 %v440, %v440
    %v674 = vmul.f32 %v442, %v442
    %v675 = vmul.f32 %v444, %v444
    %v676 = vmul.f32 %v448, %v448
    %v677 = vmul.f32 %v450, %v450
    %v678 = vmul.f32 %v452, %v452
    %v679 = vmul.f32 %v454, %v454
    %v680 = vmul.f32 %v458, %v458
    %v681 = vmul.f32 %v460, %v460
    %v682 = vmul.f32 %v462, %v462
    %v683 = vmul.f32 %v464, %v464
    %v684 = vmul.f32 %v468, %v468
    %v685 = vmul.f32 %v470, %v470
    %v686 = vmul.f32 %v472, %v472
    %v687 = vmul.f32 %v474, %v474
    %v688 = vmul.f32 %v478, %v478
    %v689 = vmul.f32 %v480, %v480
    %v690 = vmul.f32 %v482, %v482
    %v691 = vmul.f32 %v484, %v484
    %v692 = vmul.f32 %v488, %v488
    %v693 = vmul.f32 %v490, %v490
    %v694 = vmul.f32 %v492, %v492
    %v695 = vmul.f32 %v494, %v494
    %v696 = vmul.f32 %v498, %v498
    %v697 = vmul.f32 %v500, %v500
    %v698 = vmul.f32 %v502, %v502
    %v699 = vmul.f32 %v504, %v504
    %v700 = vmul.f32 %v508, %v508
    %v701 = vmul.f32 %v510, %v510
    %v702 = vmul.f32 %v512, %v512
    %v703 = vmul.f32 %v514, %v514
    %v704 = vmul.f32 %v518, %v518
    %v705 = vmul.f32 %v520, %v520
    %v706 = vmul.f32 %v522, %v522
    %v707 = vmul.f32 %v524, %v524
    %v708 = vmul.f32 %v528, %v528
    %v709 = vmul.f32 %v530, %v530
    %v710 = vmul.f32 %v532, %v532
    %v711 = vmul.f32 %v534, %v534
    %v712 = vmul.f32 %v538, %v538
    %v713 = vmul.f32 %v540, %v540
    %v714 = vmul.f32 %v542, %v542
    %v715 = vmul.f32 %v544, %v544
    %v716 = vmul.f32 %v548, %v548
    %v717 = vmul.f32 %v550, %v550
    %v718 = vmul.f32 %v552, %v552
    %v719 = vmul.f32 %v554, %v554
    %v720 = vmul.f32 %v558, %v558
    %v721 = vmul.f32 %v560, %v560
    %v722 = vmul.f32 %v562, %v562
    %v723 = vmul.f32 %v564, %v564
    %v724 = vmul.f32 %v568, %v568
    %v725 = vmul.f32 %v570, %v570
    %v726 = vmul.f32 %v572, %v572
    %v727 = vmul.f32 %v574, %v574
    %v728 = vmul.f32 %v578, %v578
    %v729 = vmul.f32 %v580, %v580
    %v730 = vmul.f32 %v582, %v582
    %v731 = vmul.f32 %v584, %v584
    %v732 = vmul.f32 %v588, %v588
    %v733 = vmul.f32 %v590, %v590
    %v734 = vmul.f32 %v592, %v592
    %v735 = vmul.f32 %v594, %v594
    %v736 = vadd.f32 %v672, %v674
    %v737 = vadd.f32 %v736, %v676
    %v738 = vadd.f32 %v737, %v678
    %v739 = vadd.f32 %v738, %v680
    %v740 = vadd.f32 %v739, %v682
    %v741 = vadd.f32 %v740, %v684
    %v742 = vadd.f32 %v741, %v686
    %v743 = vadd.f32 %v742, %v688
    %v744 = vadd.f32 %v743, %v690
    %v745 = vadd.f32 %v744, %v692
    %v746 = vadd.f32 %v745, %v694
    %v747 = vadd.f32 %v746, %v696
    %v748 = vadd.f32 %v747, %v698
    %v749 = vadd.f32 %v748, %v700
    %v750 = vadd.f32 %v749, %v702
    %v751 = vadd.f32 %v750, %v704
    %v752 = vadd.f32 %v751, %v706
    %v753 = vadd.f32 %v752, %v708
    %v754 = vadd.f32 %v753, %v710
    %v755 = vadd.f32 %v754, %v712
    %v756 = vadd.f32 %v755, %v714
    %v757 = vadd.f32 %v756, %v716
    %v758 = vadd.f32 %v757, %v718
    %v759 = vadd.f32 %v758, %v720
    %v760 = vadd.f32 %v759, %v722
    %v761 = vadd.f32 %v760, %v724
    %v762 = vadd.f32 %v761, %v726
    %v763 = vadd.f32 %v762, %v728
    %v764 = vadd.f32 %v763, %v730
    %v765 = vadd.f32 %v764, %v732
    %v766 = vadd.f32 %v765, %v734
    %v767 = vrot.slane %v766, 4
    %v768 = vadd.f32 %v766, %v767
    %v769 = vrot.slane %v768, 2
    %v770 = vadd.f32 %v768, %v769
    %v771 = vrot.slane %v770, 1
    %v772 = vadd.f32 %v770, %v771
    %v773 = vadd.f32 %v673, %v675
    %v774 = vadd.f32 %v773, %v677
    %v775 = vadd.f32 %v774, %v679
    %v776 = vadd.f32 %v775, %v681
    %v777 = vadd.f32 %v776, %v683
    %v778 = vadd.f32 %v777, %v685
    %v779 = vadd.f32 %v778, %v687
    %v780 = vadd.f32 %v779, %v689
    %v781 = vadd.f32 %v780, %v691
    %v782 = vadd.f32 %v781, %v693
    %v783 = vadd.f32 %v782, %v695
    %v784 = vadd.f32 %v783, %v697
    %v785 = vadd.f32 %v784, %v699
    %v786 = vadd.f32 %v785, %v701
    %v787 = vadd.f32 %v786, %v703
    %v788 = vadd.f32 %v787, %v705
    %v789 = vadd.f32 %v788, %v707
    %v790 = vadd.f32 %v789, %v709
    %v791 = vadd.f32 %v790, %v711
    %v792 = vadd.f32 %v791, %v713
    %v793 = vadd.f32 %v792, %v715
    %v794 = vadd.f32 %v793, %v717
    %v795 = vadd.f32 %v794, %v719
    %v796 = vadd.f32 %v795, %v721
    %v797 = vadd.f32 %v796, %v723
    %v798 = vadd.f32 %v797, %v725
    %v799 = vadd.f32 %v798, %v727
    %v800 = vadd.f32 %v799, %v729
    %v801 = vadd.f32 %v800, %v731
    %v802 = vadd.f32 %v801, %v733
    %v803 = vadd.f32 %v802, %v735
    %v804 = vrot.slane %v803, 4
    %v805 = vadd.f32 %v803, %v804
    %v806 = vrot.slane %v805, 2
    %v807 = vadd.f32 %v805, %v806
    %v808 = vrot.slane %v807, 1
    %v809 = vadd.f32 %v807, %v808
    %v810 = vmul.f32 %v634, 0.00390625
    %v811 = vmul.f32 %v671, 0.00390625
    %v812 = vmul.f32 %v772, 0.00390625
    %v813 = vmul.f32 %v809, 0.00390625
    %v814 = vmul.f32 %v810, %v810
    %v815 = vmul.f32 %v811, %v811
    %v816 = vsub.f32 %v812, %v814
    %v817 = vsub.f32 %v813, %v815
    %v818 = vmax.f32 %v816, 0.0
    %v819 = vmax.f32 %v817, 0.0
    %v820 = vadd.f32 %v818, 1e-05
    %v821 = vadd.f32 %v819, 1e-05
    %v822 = vrsqrt.pop %v820
    %v823 = vrsqrt.pop %v821
    %v826 = vcombine.low %v822, %v823
    %v828 = vunpack.c.l.s4 1966171168
    %v829 = vunpack.c.0.s8 %v828
    %v830 = vlaneseq
    %v831 = vshrl.u32 %v830, 7
    %v832 = vsub.s32 %v829, %v831
    %v833 = vrot.slane %v826, %v832
    %v835 = vunpack.c.l.s4 1966171168
    %v836 = vunpack.c.0.s8 %v835
    %v837 = vlaneseq
    %v838 = vshrl.u32 %v837, 7
    %v839 = vsub.s32 %v836, %v838
    %v840 = vrot.slane %v833, %v839
    %v842 = vmul.f32 %v596, %v840
    %v844 = vlaneseq
    %v845 = vshrl.u32 %v844, 7
    %v846 = vsub.s32 0, %v845
    %v847 = vrot.slane %v842, %v846
    %v848 = vlaneseq
    %v849 = vshrl.u32 %v848, 7
    %v850 = vsub.s32 1, %v849
    %v851 = vrot.slane %v842, %v850
    %v854 = vmul.f32 %v810, %v847
    %v855 = vmul.f32 %v811, %v851
    %v858 = vcombine.low %v854, %v855
    %v860 = vunpack.c.l.s4 1966171168
    %v861 = vunpack.c.0.s8 %v860
    %v862 = vlaneseq
    %v863 = vshrl.u32 %v862, 7
    %v864 = vsub.s32 %v861, %v863
    %v865 = vrot.slane %v858, %v864
    %v867 = vunpack.c.l.s4 1966171168
    %v868 = vunpack.c.0.s8 %v867
    %v869 = vlaneseq
    %v870 = vshrl.u32 %v869, 7
    %v871 = vsub.s32 %v868, %v870
    %v872 = vrot.slane %v865, %v871
    %v874 = vsub.f32 %v597, %v872
    %v875 = vmul.f32 %v438, %v847
    %v876 = vmul.f32 %v440, %v851
    %v877 = vmul.f32 %v442, %v847
    %v878 = vmul.f32 %v444, %v851
    %v879 = vmul.f32 %v448, %v847
    %v880 = vmul.f32 %v450, %v851
    %v881 = vmul.f32 %v452, %v847
    %v882 = vmul.f32 %v454, %v851
    %v883 = vmul.f32 %v458, %v847
    %v884 = vmul.f32 %v460, %v851
    %v885 = vmul.f32 %v462, %v847
    %v886 = vmul.f32 %v464, %v851
    %v887 = vmul.f32 %v468, %v847
    %v888 = vmul.f32 %v470, %v851
    %v889 = vmul.f32 %v472, %v847
    %v890 = vmul.f32 %v474, %v851
    %v891 = vmul.f32 %v478, %v847
    %v892 = vmul.f32 %v480, %v851
    %v893 = vmul.f32 %v482, %v847
    %v894 = vmul.f32 %v484, %v851
    %v895 = vmul.f32 %v488, %v847
    %v896 = vmul.f32 %v490, %v851
    %v897 = vmul.f32 %v492, %v847
    %v898 = vmul.f32 %v494, %v851
    %v899 = vmul.f32 %v498, %v847
    %v900 = vmul.f32 %v500, %v851
    %v901 = vmul.f32 %v502, %v847
    %v902 = vmul.f32 %v504, %v851
    %v903 = vmul.f32 %v508, %v847
    %v904 = vmul.f32 %v510, %v851
    %v905 = vmul.f32 %v512, %v847
    %v906 = vmul.f32 %v514, %v851
    %v907 = vmul.f32 %v518, %v847
    %v908 = vmul.f32 %v520, %v851
    %v909 = vmul.f32 %v522, %v847
    %v910 = vmul.f32 %v524, %v851
    %v911 = vmul.f32 %v528, %v847
    %v912 = vmul.f32 %v530, %v851
    %v913 = vmul.f32 %v532, %v847
    %v914 = vmul.f32 %v534, %v851
    %v915 = vmul.f32 %v538, %v847
    %v916 = vmul.f32 %v540, %v851
    %v917 = vmul.f32 %v542, %v847
    %v918 = vmul.f32 %v544, %v851
    %v919 = vmul.f32 %v548, %v847
    %v920 = vmul.f32 %v550, %v851
    %v921 = vmul.f32 %v552, %v847
    %v922 = vmul.f32 %v554, %v851
    %v923 = vmul.f32 %v558, %v847
    %v924 = vmul.f32 %v560, %v851
    %v925 = vmul.f32 %v562, %v847
    %v926 = vmul.f32 %v564, %v851
    %v927 = vmul.f32 %v568, %v847
    %v928 = vmul.f32 %v570, %v851
    %v929 = vmul.f32 %v572, %v847
    %v930 = vmul.f32 %v574, %v851
    %v931 = vmul.f32 %v578, %v847
    %v932 = vmul.f32 %v580, %v851
    %v933 = vmul.f32 %v582, %v847
    %v934 = vmul.f32 %v584, %v851
    %v935 = vmul.f32 %v588, %v847
    %v936 = vmul.f32 %v590, %v851
    %v937 = vmul.f32 %v592, %v847
    %v938 = vmul.f32 %v594, %v851
    %v940 = vlaneseq
    %v941 = vshrl.u32 %v940, 7
    %v942 = vsub.s32 0, %v941
    %v943 = vrot.slane %v874, %v942
    %v944 = vlaneseq
    %v945 = vshrl.u32 %v944, 7
    %v946 = vsub.s32 1, %v945
    %v947 = vrot.slane %v874, %v946
    %v950 = vadd.f32 %v875, %v943
    %v951 = vadd.f32 %v876, %v947
    %v952 = vadd.f32 %v877, %v943
    %v953 = vadd.f32 %v878, %v947
    %v954 = vadd.f32 %v879, %v943
    %v955 = vadd.f32 %v880, %v947
    %v956 = vadd.f32 %v881, %v943
    %v957 = vadd.f32 %v882, %v947
    %v958 = vadd.f32 %v883, %v943
    %v959 = vadd.f32 %v884, %v947
    %v960 = vadd.f32 %v885, %v943
    %v961 = vadd.f32 %v886, %v947
    %v962 = vadd.f32 %v887, %v943
    %v963 = vadd.f32 %v888, %v947
    %v964 = vadd.f32 %v889, %v943
    %v965 = vadd.f32 %v890, %v947
    %v966 = vadd.f32 %v891, %v943
    %v967 = vadd.f32 %v892, %v947
    %v968 = vadd.f32 %v893, %v943
    %v969 = vadd.f32 %v894, %v947
    %v970 = vadd.f32 %v895, %v943
    %v971 = vadd.f32 %v896, %v947
    %v972 = vadd.f32 %v897, %v943
    %v973 = vadd.f32 %v898, %v947
    %v974 = vadd.f32 %v899, %v943
    %v975 = vadd.f32 %v900, %v947
    %v976 = vadd.f32 %v901, %v943
    %v977 = vadd.f32 %v902, %v947
    %v978 = vadd.f32 %v903, %v943
    %v979 = vadd.f32 %v904, %v947
    %v980 = vadd.f32 %v905, %v943
    %v981 = vadd.f32 %v906, %v947
    %v982 = vadd.f32 %v907, %v943
    %v983 = vadd.f32 %v908, %v947
    %v984 = vadd.f32 %v909, %v943
    %v985 = vadd.f32 %v910, %v947
    %v986 = vadd.f32 %v911, %v943
    %v987 = vadd.f32 %v912, %v947
    %v988 = vadd.f32 %v913, %v943
    %v989 = vadd.f32 %v914, %v947
    %v990 = vadd.f32 %v915, %v943
    %v991 = vadd.f32 %v916, %v947
    %v992 = vadd.f32 %v917, %v943
    %v993 = vadd.f32 %v918, %v947
    %v994 = vadd.f32 %v919, %v943
    %v995 = vadd.f32 %v920, %v947
    %v996 = vadd.f32 %v921, %v943
    %v997 = vadd.f32 %v922, %v947
    %v998 = vadd.f32 %v923, %v943
    %v999 = vadd.f32 %v924, %v947
    %v1000 = vadd.f32 %v925, %v943
    %v1001 = vadd.f32 %v926, %v947
    %v1002 = vadd.f32 %v927, %v943
    %v1003 = vadd.f32 %v928, %v947
    %v1004 = vadd.f32 %v929, %v943
    %v1005 = vadd.f32 %v930, %v947
    %v1006 = vadd.f32 %v931, %v943
    %v1007 = vadd.f32 %v932, %v947
    %v1008 = vadd.f32 %v933, %v943
    %v1009 = vadd.f32 %v934, %v947
    %v1010 = vadd.f32 %v935, %v943
    %v1011 = vadd.f32 %v936, %v947
    %v1012 = vadd.f32 %v937, %v943
    %v1013 = vadd.f32 %v938, %v947
    %v1014 = vmax.f32 %v950, 0.0
    %v1015 = vmax.f32 %v951, 0.0
    %v1016 = vmax.f32 %v952, 0.0
    %v1017 = vmax.f32 %v953, 0.0
    %v1018 = vmax.f32 %v954, 0.0
    %v1019 = vmax.f32 %v955, 0.0
    %v1020 = vmax.f32 %v956, 0.0
    %v1021 = vmax.f32 %v957, 0.0
    %v1022 = vmax.f32 %v958, 0.0
    %v1023 = vmax.f32 %v959, 0.0
    %v1024 = vmax.f32 %v960, 0.0
    %v1025 = vmax.f32 %v961, 0.0
    %v1026 = vmax.f32 %v962, 0.0
    %v1027 = vmax.f32 %v963, 0.0
    %v1028 = vmax.f32 %v964, 0.0
    %v1029 = vmax.f32 %v965, 0.0
    %v1030 = vmax.f32 %v966, 0.0
    %v1031 = vmax.f32 %v967, 0.0
    %v1032 = vmax.f32 %v968, 0.0
    %v1033 = vmax.f32 %v969, 0.0
    %v1034 = vmax.f32 %v970, 0.0
    %v1035 = vmax.f32 %v971, 0.0
    %v1036 = vmax.f32 %v972, 0.0
    %v1037 = vmax.f32 %v973, 0.0
    %v1038 = vmax.f32 %v974, 0.0
    %v1039 = vmax.f32 %v975, 0.0
    %v1040 = vmax.f32 %v976, 0.0
    %v1041 = vmax.f32 %v977, 0.0
    %v1042 = vmax.f32 %v978, 0.0
    %v1043 = vmax.f32 %v979, 0.0
    %v1044 = vmax.f32 %v980, 0.0
    %v1045 = vmax.f32 %v981, 0.0
    %v1046 = vmax.f32 %v982, 0.0
    %v1047 = vmax.f32 %v983, 0.0
    %v1048 = vmax.f32 %v984, 0.0
    %v1049 = vmax.f32 %v985, 0.0
    %v1050 = vmax.f32 %v986, 0.0
    %v1051 = vmax.f32 %v987, 0.0
    %v1052 = vmax.f32 %v988, 0.0
    %v1053 = vmax.f32 %v989, 0.0
    %v1054 = vmax.f32 %v990, 0.0
    %v1055 = vmax.f32 %v991, 0.0
    %v1056 = vmax.f32 %v992, 0.0
    %v1057 = vmax.f32 %v993, 0.0
    %v1058 = vmax.f32 %v994, 0.0
    %v1059 = vmax.f32 %v995, 0.0
    %v1060 = vmax.f32 %v996, 0.0
    %v1061 = vmax.f32 %v997, 0.0
    %v1062 = vmax.f32 %v998, 0.0
    %v1063 = vmax.f32 %v999, 0.0
    %v1064 = vmax.f32 %v1000, 0.0
    %v1065 = vmax.f32 %v1001, 0.0
    %v1066 = vmax.f32 %v1002, 0.0
    %v1067 = vmax.f32 %v1003, 0.0
    %v1068 = vmax.f32 %v1004, 0.0
    %v1069 = vmax.f32 %v1005, 0.0
    %v1070 = vmax.f32 %v1006, 0.0
    %v1071 = vmax.f32 %v1007, 0.0
    %v1072 = vmax.f32 %v1008, 0.0
    %v1073 = vmax.f32 %v1009, 0.0
    %v1074 = vmax.f32 %v1010, 0.0
    %v1075 = vmax.f32 %v1011, 0.0
    %v1076 = vmax.f32 %v1012, 0.0
    %v1077 = vmax.f32 %v1013, 0.0
    %s1078 = smul.u32 4, 32
    %s1079 = smul.u32 %s1078, 4
    %s1080 = sshll.u32 %s1079, 4
    %1081 = dma.done %s150, %s1080
    %v1082 = vpack.c.bf16 %v1016, %v1014
    %v1083 = vpack.c.bf16 %v1017, %v1015
    %v1084 = vpack.c.bf16 %v1020, %v1018
    %v1085 = vpack.c.bf16 %v1021, %v1019
    %v1086 = vpack.c.bf16 %v1024, %v1022
    %v1087 = vpack.c.bf16 %v1025, %v1023
    %v1088 = vpack.c.bf16 %v1028, %v1026
    %v1089 = vpack.c.bf16 %v1029, %v1027
    %v1090 = vpack.c.bf16 %v1032, %v1030
    %v1091 = vpack.c.bf16 %v1033, %v1031
    %v1092 = vpack.c.bf16 %v1036, %v1034
    %v1093 = vpack.c.bf16 %v1037, %v1035
    %v1094 = vpack.c.bf16 %v1040, %v1038
    %v1095 = vpack.c.bf16 %v1041, %v1039
    %v1096 = vpack.c.bf16 %v1044, %v1042
    %v1097 = vpack.c.bf16 %v1045, %v1043
    %v1098 = vpack.c.bf16 %v1048, %v1046
    %v1099 = vpack.c.bf16 %v1049, %v1047
    %v1100 = vpack.c.bf16 %v1052, %v1050
    %v1101 = vpack.c.bf16 %v1053, %v1051
    %v1102 = vpack.c.bf16 %v1056, %v1054
    %v1103 = vpack.c.bf16 %v1057, %v1055
    %v1104 = vpack.c.bf16 %v1060, %v1058
    %v1105 = vpack.c.bf16 %v1061, %v1059
    %v1106 = vpack.c.bf16 %v1064, %v1062
    %v1107 = vpack.c.bf16 %v1065, %v1063
    %v1108 = vpack.c.bf16 %v1068, %v1066
    %v1109 = vpack.c.bf16 %v1069, %v1067
    %v1110 = vpack.c.bf16 %v1072, %v1070
    %v1111 = vpack.c.bf16 %v1073, %v1071
    %v1112 = vpack.c.bf16 %v1076, %v1074
    %v1113 = vpack.c.bf16 %v1077, %v1075
    %v1114 = vld [vmem:[#allocation3] sm:$0xff]
    %v1115 = vld [vmem:[#allocation3 + $0x8] sm:$0xff]
    %v1116 = vld [vmem:[#allocation3 + $0x10] sm:$0xff]
    %v1117 = vld [vmem:[#allocation3 + $0x18] sm:$0xff]
    %v1118 = vld [vmem:[#allocation3 + $0x20] sm:$0xff]
    %v1119 = vld [vmem:[#allocation3 + $0x28] sm:$0xff]
    %v1120 = vld [vmem:[#allocation3 + $0x30] sm:$0xff]
    %v1121 = vld [vmem:[#allocation3 + $0x38] sm:$0xff]
    %v1122 = vld [vmem:[#allocation3 + $0x40] sm:$0xff]
    %v1123 = vld [vmem:[#allocation3 + $0x48] sm:$0xff]
    %v1124 = vld [vmem:[#allocation3 + $0x50] sm:$0xff]
    %v1125 = vld [vmem:[#allocation3 + $0x58] sm:$0xff]
    %v1126 = vld [vmem:[#allocation3 + $0x60] sm:$0xff]
    %v1127 = vld [vmem:[#allocation3 + $0x68] sm:$0xff]
    %v1128 = vld [vmem:[#allocation3 + $0x70] sm:$0xff]
    %v1129 = vld [vmem:[#allocation3 + $0x78] sm:$0xff]
    %v1130 = vld [vmem:[#allocation3 + $0x80] sm:$0xff]
    %v1131 = vld [vmem:[#allocation3 + $0x88] sm:$0xff]
    %v1132 = vld [vmem:[#allocation3 + $0x90] sm:$0xff]
    %v1133 = vld [vmem:[#allocation3 + $0x98] sm:$0xff]
    %v1134 = vld [vmem:[#allocation3 + $0xa0] sm:$0xff]
    %v1135 = vld [vmem:[#allocation3 + $0xa8] sm:$0xff]
    %v1136 = vld [vmem:[#allocation3 + $0xb0] sm:$0xff]
    %v1137 = vld [vmem:[#allocation3 + $0xb8] sm:$0xff]
    %v1138 = vld [vmem:[#allocation3 + $0xc0] sm:$0xff]
    %v1139 = vld [vmem:[#allocation3 + $0xc8] sm:$0xff]
    %v1140 = vld [vmem:[#allocation3 + $0xd0] sm:$0xff]
    %v1141 = vld [vmem:[#allocation3 + $0xd8] sm:$0xff]
    %v1142 = vld [vmem:[#allocation3 + $0xe0] sm:$0xff]
    %v1143 = vld [vmem:[#allocation3 + $0xe8] sm:$0xff]
    %v1144 = vld [vmem:[#allocation3 + $0xf0] sm:$0xff]
    %v1145 = vld [vmem:[#allocation3 + $0xf8] sm:$0xff]
    %v1146 = vld [vmem:[#allocation3 + $0x100] sm:$0xff]
    %v1147 = vld [vmem:[#allocation3 + $0x108] sm:$0xff]
    %v1148 = vld [vmem:[#allocation3 + $0x110] sm:$0xff]
    %v1149 = vld [vmem:[#allocation3 + $0x118] sm:$0xff]
    %v1150 = vld [vmem:[#allocation3 + $0x120] sm:$0xff]
    %v1151 = vld [vmem:[#allocation3 + $0x128] sm:$0xff]
    %v1152 = vld [vmem:[#allocation3 + $0x130] sm:$0xff]
    %v1153 = vld [vmem:[#allocation3 + $0x138] sm:$0xff]
    %v1154 = vld [vmem:[#allocation3 + $0x140] sm:$0xff]
    %v1155 = vld [vmem:[#allocation3 + $0x148] sm:$0xff]
    %v1156 = vld [vmem:[#allocation3 + $0x150] sm:$0xff]
    %v1157 = vld [vmem:[#allocation3 + $0x158] sm:$0xff]
    %v1158 = vld [vmem:[#allocation3 + $0x160] sm:$0xff]
    %v1159 = vld [vmem:[#allocation3 + $0x168] sm:$0xff]
    %v1160 = vld [vmem:[#allocation3 + $0x170] sm:$0xff]
    %v1161 = vld [vmem:[#allocation3 + $0x178] sm:$0xff]
    %v1162 = vld [vmem:[#allocation3 + $0x180] sm:$0xff]
    %v1163 = vld [vmem:[#allocation3 + $0x188] sm:$0xff]
    %v1164 = vld [vmem:[#allocation3 + $0x190] sm:$0xff]
    %v1165 = vld [vmem:[#allocation3 + $0x198] sm:$0xff]
    %v1166 = vld [vmem:[#allocation3 + $0x1a0] sm:$0xff]
    %v1167 = vld [vmem:[#allocation3 + $0x1a8] sm:$0xff]
    %v1168 = vld [vmem:[#allocation3 + $0x1b0] sm:$0xff]
    %v1169 = vld [vmem:[#allocation3 + $0x1b8] sm:$0xff]
    %v1170 = vld [vmem:[#allocation3 + $0x1c0] sm:$0xff]
    %v1171 = vld [vmem:[#allocation3 + $0x1c8] sm:$0xff]
    %v1172 = vld [vmem:[#allocation3 + $0x1d0] sm:$0xff]
    %v1173 = vld [vmem:[#allocation3 + $0x1d8] sm:$0xff]
    %v1174 = vld [vmem:[#allocation3 + $0x1e0] sm:$0xff]
    %v1175 = vld [vmem:[#allocation3 + $0x1e8] sm:$0xff]
    %v1176 = vld [vmem:[#allocation3 + $0x1f0] sm:$0xff]
    %v1177 = vld [vmem:[#allocation3 + $0x1f8] sm:$0xff]
    %1178 = vmatprep.subr.bf16.mxu0 %v1115
    %1179 = vmatpush1.bf16.msra.mxu0 %v1114
    %1180 = vmatprep.subr.bf16.mxu0 %v1119
    %1181 = vmatpush1.bf16.msra.mxu0 %v1118
    %1182 = vmatprep.subr.bf16.mxu0 %v1123
    %1183 = vmatpush1.bf16.msra.mxu0 %v1122
    %1184 = vmatprep.subr.bf16.mxu0 %v1127
    %1185 = vmatpush1.bf16.msra.mxu0 %v1126
    %1186 = vmatprep.subr.bf16.mxu0 %v1131
    %1187 = vmatpush1.bf16.msra.mxu0 %v1130
    %1188 = vmatprep.subr.bf16.mxu0 %v1135
    %1189 = vmatpush1.bf16.msra.mxu0 %v1134
    %1190 = vmatprep.subr.bf16.mxu0 %v1139
    %1191 = vmatpush1.bf16.msra.mxu0 %v1138
    %1192 = vmatprep.subr.bf16.mxu0 %v1143
    %1193 = vmatpush1.bf16.msra.mxu0 %v1142
    %1194 = vmatprep.subr.bf16.mxu0 %v1147
    %1195 = vmatpush1.bf16.msra.mxu0 %v1146
    %1196 = vmatprep.subr.bf16.mxu0 %v1151
    %1197 = vmatpush1.bf16.msra.mxu0 %v1150
    %1198 = vmatprep.subr.bf16.mxu0 %v1155
    %1199 = vmatpush1.bf16.msra.mxu0 %v1154
    %1200 = vmatprep.subr.bf16.mxu0 %v1159
    %1201 = vmatpush1.bf16.msra.mxu0 %v1158
    %1202 = vmatprep.subr.bf16.mxu0 %v1163
    %1203 = vmatpush1.bf16.msra.mxu0 %v1162
    %1204 = vmatprep.subr.bf16.mxu0 %v1167
    %1205 = vmatpush1.bf16.msra.mxu0 %v1166
    %1206 = vmatprep.subr.bf16.mxu0 %v1171
    %1207 = vmatpush1.bf16.msra.mxu0 %v1170
    %1208 = vmatprep.subr.bf16.mxu0 %v1175
    %1209 = vmatpush1.bf16.msra.mxu0 %v1174
    %1210 = vmatprep.mubr.bf16.mxu0 %v1083
    %1211 = vmatmul.mubr.bf16.gmra.mrb[0].mxu0 %v1082
    %v1212 = vpop.f32.mrb[0].mxu0
    %v1213 = vadd.f32 0.0, %v1212
    %v1214 = vpop.f32.mrb[0].mxu0
    %v1215 = vadd.f32 0.0, %v1214
    %v1216 = vpop.f32.mrb[0].mxu0
    %v1217 = vadd.f32 0.0, %v1216
    %v1218 = vpop.f32.mrb[0].mxu0
    %v1219 = vadd.f32 0.0, %v1218
    %1220 = vmatprep.mubr.bf16.mxu0 %v1085
    %1221 = vmatmul.mubr.bf16.gmra.mrb[0].mxu0 %v1084
    %v1222 = vpop.f32.mrb[0].mxu0
    %v1223 = vadd.f32 0.0, %v1222
    %v1224 = vpop.f32.mrb[0].mxu0
    %v1225 = vadd.f32 0.0, %v1224
    %v1226 = vpop.f32.mrb[0].mxu0
    %v1227 = vadd.f32 0.0, %v1226
    %v1228 = vpop.f32.mrb[0].mxu0
    %v1229 = vadd.f32 0.0, %v1228
    %1230 = vmatprep.mubr.bf16.mxu0 %v1087
    %1231 = vmatmul.mubr.bf16.gmra.mrb[0].mxu0 %v1086
    %v1232 = vpop.f32.mrb[0].mxu0
    %v1233 = vadd.f32 0.0, %v1232
    %v1234 = vpop.f32.mrb[0].mxu0
    %v1235 = vadd.f32 0.0, %v1234
    %v1236 = vpop.f32.mrb[0].mxu0
    %v1237 = vadd.f32 0.0, %v1236
    %v1238 = vpop.f32.mrb[0].mxu0
    %v1239 = vadd.f32 0.0, %v1238
    %1240 = vmatprep.mubr.bf16.mxu0 %v1089
    %1241 = vmatmul.mubr.bf16.gmra.mrb[0].mxu0 %v1088
    %v1242 = vpop.f32.mrb[0].mxu0
    %v1243 = vadd.f32 0.0, %v1242
    %v1244 = vpop.f32.mrb[0].mxu0
    %v1245 = vadd.f32 0.0, %v1244
    %v1246 = vpop.f32.mrb[0].mxu0
    %v1247 = vadd.f32 0.0, %v1246
    %v1248 = vpop.f32.mrb[0].mxu0
    %v1249 = vadd.f32 0.0, %v1248
    %1250 = vmatprep.mubr.bf16.mxu0 %v1091
    %1251 = vmatmul.mubr.bf16.gmra.mrb[0].mxu0 %v1090
    %v1252 = vpop.f32.mrb[0].mxu0
    %v1253 = vadd.f32 0.0, %v1252
    %v1254 = vpop.f32.mrb[0].mxu0
    %v1255 = vadd.f32 0.0, %v1254
    %v1256 = vpop.f32.mrb[0].mxu0
    %v1257 = vadd.f32 0.0, %v1256
    %v1258 = vpop.f32.mrb[0].mxu0
    %v1259 = vadd.f32 0.0, %v1258
    %1260 = vmatprep.mubr.bf16.mxu0 %v1093
    %1261 = vmatmul.mubr.bf16.gmra.mrb[0].mxu0 %v1092
    %v1262 = vpop.f32.mrb[0].mxu0
    %v1263 = vadd.f32 0.0, %v1262
    %v1264 = vpop.f32.mrb[0].mxu0
    %v1265 = vadd.f32 0.0, %v1264
    %v1266 = vpop.f32.mrb[0].mxu0
    %v1267 = vadd.f32 0.0, %v1266
    %v1268 = vpop.f32.mrb[0].mxu0
    %v1269 = vadd.f32 0.0, %v1268
    %1270 = vmatprep.mubr.bf16.mxu0 %v1095
    %1271 = vmatmul.mubr.bf16.gmra.mrb[0].mxu0 %v1094
    %v1272 = vpop.f32.mrb[0].mxu0
    %v1273 = vadd.f32 0.0, %v1272
    %v1274 = vpop.f32.mrb[0].mxu0
    %v1275 = vadd.f32 0.0, %v1274
    %v1276 = vpop.f32.mrb[0].mxu0
    %v1277 = vadd.f32 0.0, %v1276
    %v1278 = vpop.f32.mrb[0].mxu0
    %v1279 = vadd.f32 0.0, %v1278
    %1280 = vmatprep.mubr.bf16.mxu0 %v1097
    %1281 = vmatmul.mubr.bf16.gmra.mrb[0].mxu0 %v1096
    %v1282 = vpop.f32.mrb[0].mxu0
    %v1283 = vadd.f32 0.0, %v1282
    %v1284 = vpop.f32.mrb[0].mxu0
    %v1285 = vadd.f32 0.0, %v1284
    %v1286 = vpop.f32.mrb[0].mxu0
    %v1287 = vadd.f32 0.0, %v1286
    %v1288 = vpop.f32.mrb[0].mxu0
    %v1289 = vadd.f32 0.0, %v1288
    %1290 = vmatprep.mubr.bf16.mxu0 %v1099
    %1291 = vmatmul.mubr.bf16.gmra.mrb[0].mxu0 %v1098
    %v1292 = vpop.f32.mrb[0].mxu0
    %v1293 = vadd.f32 0.0, %v1292
    %v1294 = vpop.f32.mrb[0].mxu0
    %v1295 = vadd.f32 0.0, %v1294
    %v1296 = vpop.f32.mrb[0].mxu0
    %v1297 = vadd.f32 0.0, %v1296
    %v1298 = vpop.f32.mrb[0].mxu0
    %v1299 = vadd.f32 0.0, %v1298
    %1300 = vmatprep.mubr.bf16.mxu0 %v1101
    %1301 = vmatmul.mubr.bf16.gmra.mrb[0].mxu0 %v1100
    %v1302 = vpop.f32.mrb[0].mxu0
    %v1303 = vadd.f32 0.0, %v1302
    %v1304 = vpop.f32.mrb[0].mxu0
    %v1305 = vadd.f32 0.0, %v1304
    %v1306 = vpop.f32.mrb[0].mxu0
    %v1307 = vadd.f32 0.0, %v1306
    %v1308 = vpop.f32.mrb[0].mxu0
    %v1309 = vadd.f32 0.0, %v1308
    %1310 = vmatprep.mubr.bf16.mxu0 %v1103
    %1311 = vmatmul.mubr.bf16.gmra.mrb[0].mxu0 %v1102
    %v1312 = vpop.f32.mrb[0].mxu0
    %v1313 = vadd.f32 0.0, %v1312
    %v1314 = vpop.f32.mrb[0].mxu0
    %v1315 = vadd.f32 0.0, %v1314
    %v1316 = vpop.f32.mrb[0].mxu0
    %v1317 = vadd.f32 0.0, %v1316
    %v1318 = vpop.f32.mrb[0].mxu0
    %v1319 = vadd.f32 0.0, %v1318
    %1320 = vmatprep.mubr.bf16.mxu0 %v1105
    %1321 = vmatmul.mubr.bf16.gmra.mrb[0].mxu0 %v1104
    %v1322 = vpop.f32.mrb[0].mxu0
    %v1323 = vadd.f32 0.0, %v1322
    %v1324 = vpop.f32.mrb[0].mxu0
    %v1325 = vadd.f32 0.0, %v1324
    %v1326 = vpop.f32.mrb[0].mxu0
    %v1327 = vadd.f32 0.0, %v1326
    %v1328 = vpop.f32.mrb[0].mxu0
    %v1329 = vadd.f32 0.0, %v1328
    %1330 = vmatprep.mubr.bf16.mxu0 %v1107
    %1331 = vmatmul.mubr.bf16.gmra.mrb[0].mxu0 %v1106
    %v1332 = vpop.f32.mrb[0].mxu0
    %v1333 = vadd.f32 0.0, %v1332
    %v1334 = vpop.f32.mrb[0].mxu0
    %v1335 = vadd.f32 0.0, %v1334
    %v1336 = vpop.f32.mrb[0].mxu0
    %v1337 = vadd.f32 0.0, %v1336
    %v1338 = vpop.f32.mrb[0].mxu0
    %v1339 = vadd.f32 0.0, %v1338
    %1340 = vmatprep.mubr.bf16.mxu0 %v1109
    %1341 = vmatmul.mubr.bf16.gmra.mrb[0].mxu0 %v1108
    %v1342 = vpop.f32.mrb[0].mxu0
    %v1343 = vadd.f32 0.0, %v1342
    %v1344 = vpop.f32.mrb[0].mxu0
    %v1345 = vadd.f32 0.0, %v1344
    %v1346 = vpop.f32.mrb[0].mxu0
    %v1347 = vadd.f32 0.0, %v1346
    %v1348 = vpop.f32.mrb[0].mxu0
    %v1349 = vadd.f32 0.0, %v1348
    %1350 = vmatprep.mubr.bf16.mxu0 %v1111
    %1351 = vmatmul.mubr.bf16.gmra.mrb[0].mxu0 %v1110
    %v1352 = vpop.f32.mrb[0].mxu0
    %v1353 = vadd.f32 0.0, %v1352
    %v1354 = vpop.f32.mrb[0].mxu0
    %v1355 = vadd.f32 0.0, %v1354
    %v1356 = vpop.f32.mrb[0].mxu0
    %v1357 = vadd.f32 0.0, %v1356
    %v1358 = vpop.f32.mrb[0].mxu0
    %v1359 = vadd.f32 0.0, %v1358
    %1360 = vmatprep.mubr.bf16.mxu0 %v1113
    %1361 = vmatmul.mubr.bf16.gmra.mrb[0].mxu0 %v1112
    %v1362 = vpop.f32.mrb[0].mxu0
    %v1363 = vadd.f32 0.0, %v1362
    %v1364 = vpop.f32.mrb[0].mxu0
    %v1365 = vadd.f32 0.0, %v1364
    %v1366 = vpop.f32.mrb[0].mxu0
    %v1367 = vadd.f32 0.0, %v1366
    %v1368 = vpop.f32.mrb[0].mxu0
    %v1369 = vadd.f32 0.0, %v1368
    %1370 = vdwg.mxu0
    %1371 = vmatprep.subr.bf16.mxu0 %v1117
    %1372 = vmatpush1.bf16.msra.mxu0 %v1116
    %1373 = vmatprep.subr.bf16.mxu0 %v1121
    %1374 = vmatpush1.bf16.msra.mxu0 %v1120
    %1375 = vmatprep.subr.bf16.mxu0 %v1125
    %1376 = vmatpush1.bf16.msra.mxu0 %v1124
    %1377 = vmatprep.subr.bf16.mxu0 %v1129
    %1378 = vmatpush1.bf16.msra.mxu0 %v1128
    %1379 = vmatprep.subr.bf16.mxu0 %v1133
    %1380 = vmatpush1.bf16.msra.mxu0 %v1132
    %1381 = vmatprep.subr.bf16.mxu0 %v1137
    %1382 = vmatpush1.bf16.msra.mxu0 %v1136
    %1383 = vmatprep.subr.bf16.mxu0 %v1141
    %1384 = vmatpush1.bf16.msra.mxu0 %v1140
    %1385 = vmatprep.subr.bf16.mxu0 %v1145
    %1386 = vmatpush1.bf16.msra.mxu0 %v1144
    %1387 = vmatprep.subr.bf16.mxu0 %v1149
    %1388 = vmatpush1.bf16.msra.mxu0 %v1148
    %1389 = vmatprep.subr.bf16.mxu0 %v1153
    %1390 = vmatpush1.bf16.msra.mxu0 %v1152
    %1391 = vmatprep.subr.bf16.mxu0 %v1157
    %1392 = vmatpush1.bf16.msra.mxu0 %v1156
    %1393 = vmatprep.subr.bf16.mxu0 %v1161
    %1394 = vmatpush1.bf16.msra.mxu0 %v1160
    %1395 = vmatprep.subr.bf16.mxu0 %v1165
    %1396 = vmatpush1.bf16.msra.mxu0 %v1164
    %1397 = vmatprep.subr.bf16.mxu0 %v1169
    %1398 = vmatpush1.bf16.msra.mxu0 %v1168
    %1399 = vmatprep.subr.bf16.mxu0 %v1173
    %1400 = vmatpush1.bf16.msra.mxu0 %v1172
    %1401 = vmatprep.subr.bf16.mxu0 %v1177
    %1402 = vmatpush1.bf16.msra.mxu0 %v1176
    %1403 = vmatprep.mubr.bf16.mxu0 %v1083
    %1404 = vmatmul.mubr.bf16.gmra.mrb[0].mxu0 %v1082
    %v1405 = vpop.f32.mrb[0].mxu0
    %v1406 = vadd.f32 0.0, %v1405
    %v1407 = vpop.f32.mrb[0].mxu0
    %v1408 = vadd.f32 0.0, %v1407
    %v1409 = vpop.f32.mrb[0].mxu0
    %v1410 = vadd.f32 0.0, %v1409
    %v1411 = vpop.f32.mrb[0].mxu0
    %v1412 = vadd.f32 0.0, %v1411
    %1413 = vmatprep.mubr.bf16.mxu0 %v1085
    %1414 = vmatmul.mubr.bf16.gmra.mrb[0].mxu0 %v1084
    %v1415 = vpop.f32.mrb[0].mxu0
    %v1416 = vadd.f32 0.0, %v1415
    %v1417 = vpop.f32.mrb[0].mxu0
    %v1418 = vadd.f32 0.0, %v1417
    %v1419 = vpop.f32.mrb[0].mxu0
    %v1420 = vadd.f32 0.0, %v1419
    %v1421 = vpop.f32.mrb[0].mxu0
    %v1422 = vadd.f32 0.0, %v1421
    %1423 = vmatprep.mubr.bf16.mxu0 %v1087
    %1424 = vmatmul.mubr.bf16.gmra.mrb[0].mxu0 %v1086
    %v1425 = vpop.f32.mrb[0].mxu0
    %v1426 = vadd.f32 0.0, %v1425
    %v1427 = vpop.f32.mrb[0].mxu0
    %v1428 = vadd.f32 0.0, %v1427
    %v1429 = vpop.f32.mrb[0].mxu0
    %v1430 = vadd.f32 0.0, %v1429
    %v1431 = vpop.f32.mrb[0].mxu0
    %v1432 = vadd.f32 0.0, %v1431
    %1433 = vmatprep.mubr.bf16.mxu0 %v1089
    %1434 = vmatmul.mubr.bf16.gmra.mrb[0].mxu0 %v1088
    %v1435 = vpop.f32.mrb[0].mxu0
    %v1436 = vadd.f32 0.0, %v1435
    %v1437 = vpop.f32.mrb[0].mxu0
    %v1438 = vadd.f32 0.0, %v1437
    %v1439 = vpop.f32.mrb[0].mxu0
    %v1440 = vadd.f32 0.0, %v1439
    %v1441 = vpop.f32.mrb[0].mxu0
    %v1442 = vadd.f32 0.0, %v1441
    %1443 = vmatprep.mubr.bf16.mxu0 %v1091
    %1444 = vmatmul.mubr.bf16.gmra.mrb[0].mxu0 %v1090
    %v1445 = vpop.f32.mrb[0].mxu0
    %v1446 = vadd.f32 0.0, %v1445
    %v1447 = vpop.f32.mrb[0].mxu0
    %v1448 = vadd.f32 0.0, %v1447
    %v1449 = vpop.f32.mrb[0].mxu0
    %v1450 = vadd.f32 0.0, %v1449
    %v1451 = vpop.f32.mrb[0].mxu0
    %v1452 = vadd.f32 0.0, %v1451
    %1453 = vmatprep.mubr.bf16.mxu0 %v1093
    %1454 = vmatmul.mubr.bf16.gmra.mrb[0].mxu0 %v1092
    %v1455 = vpop.f32.mrb[0].mxu0
    %v1456 = vadd.f32 0.0, %v1455
    %v1457 = vpop.f32.mrb[0].mxu0
    %v1458 = vadd.f32 0.0, %v1457
    %v1459 = vpop.f32.mrb[0].mxu0
    %v1460 = vadd.f32 0.0, %v1459
    %v1461 = vpop.f32.mrb[0].mxu0
    %v1462 = vadd.f32 0.0, %v1461
    %1463 = vmatprep.mubr.bf16.mxu0 %v1095
    %1464 = vmatmul.mubr.bf16.gmra.mrb[0].mxu0 %v1094
    %v1465 = vpop.f32.mrb[0].mxu0
    %v1466 = vadd.f32 0.0, %v1465
    %v1467 = vpop.f32.mrb[0].mxu0
    %v1468 = vadd.f32 0.0, %v1467
    %v1469 = vpop.f32.mrb[0].mxu0
    %v1470 = vadd.f32 0.0, %v1469
    %v1471 = vpop.f32.mrb[0].mxu0
    %v1472 = vadd.f32 0.0, %v1471
    %1473 = vmatprep.mubr.bf16.mxu0 %v1097
    %1474 = vmatmul.mubr.bf16.gmra.mrb[0].mxu0 %v1096
    %v1475 = vpop.f32.mrb[0].mxu0
    %v1476 = vadd.f32 0.0, %v1475
    %v1477 = vpop.f32.mrb[0].mxu0
    %v1478 = vadd.f32 0.0, %v1477
    %v1479 = vpop.f32.mrb[0].mxu0
    %v1480 = vadd.f32 0.0, %v1479
    %v1481 = vpop.f32.mrb[0].mxu0
    %v1482 = vadd.f32 0.0, %v1481
    %1483 = vmatprep.mubr.bf16.mxu0 %v1099
    %1484 = vmatmul.mubr.bf16.gmra.mrb[0].mxu0 %v1098
    %v1485 = vpop.f32.mrb[0].mxu0
    %v1486 = vadd.f32 0.0, %v1485
    %v1487 = vpop.f32.mrb[0].mxu0
    %v1488 = vadd.f32 0.0, %v1487
    %v1489 = vpop.f32.mrb[0].mxu0
    %v1490 = vadd.f32 0.0, %v1489
    %v1491 = vpop.f32.mrb[0].mxu0
    %v1492 = vadd.f32 0.0, %v1491
    %1493 = vmatprep.mubr.bf16.mxu0 %v1101
    %1494 = vmatmul.mubr.bf16.gmra.mrb[0].mxu0 %v1100
    %v1495 = vpop.f32.mrb[0].mxu0
    %v1496 = vadd.f32 0.0, %v1495
    %v1497 = vpop.f32.mrb[0].mxu0
    %v1498 = vadd.f32 0.0, %v1497
    %v1499 = vpop.f32.mrb[0].mxu0
    %v1500 = vadd.f32 0.0, %v1499
    %v1501 = vpop.f32.mrb[0].mxu0
    %v1502 = vadd.f32 0.0, %v1501
    %1503 = vmatprep.mubr.bf16.mxu0 %v1103
    %1504 = vmatmul.mubr.bf16.gmra.mrb[0].mxu0 %v1102
    %v1505 = vpop.f32.mrb[0].mxu0
    %v1506 = vadd.f32 0.0, %v1505
    %v1507 = vpop.f32.mrb[0].mxu0
    %v1508 = vadd.f32 0.0, %v1507
    %v1509 = vpop.f32.mrb[0].mxu0
    %v1510 = vadd.f32 0.0, %v1509
    %v1511 = vpop.f32.mrb[0].mxu0
    %v1512 = vadd.f32 0.0, %v1511
    %1513 = vmatprep.mubr.bf16.mxu0 %v1105
    %1514 = vmatmul.mubr.bf16.gmra.mrb[0].mxu0 %v1104
    %v1515 = vpop.f32.mrb[0].mxu0
    %v1516 = vadd.f32 0.0, %v1515
    %v1517 = vpop.f32.mrb[0].mxu0
    %v1518 = vadd.f32 0.0, %v1517
    %v1519 = vpop.f32.mrb[0].mxu0
    %v1520 = vadd.f32 0.0, %v1519
    %v1521 = vpop.f32.mrb[0].mxu0
    %v1522 = vadd.f32 0.0, %v1521
    %1523 = vmatprep.mubr.bf16.mxu0 %v1107
    %1524 = vmatmul.mubr.bf16.gmra.mrb[0].mxu0 %v1106
    %v1525 = vpop.f32.mrb[0].mxu0
    %v1526 = vadd.f32 0.0, %v1525
    %v1527 = vpop.f32.mrb[0].mxu0
    %v1528 = vadd.f32 0.0, %v1527
    %v1529 = vpop.f32.mrb[0].mxu0
    %v1530 = vadd.f32 0.0, %v1529
    %v1531 = vpop.f32.mrb[0].mxu0
    %v1532 = vadd.f32 0.0, %v1531
    %1533 = vmatprep.mubr.bf16.mxu0 %v1109
    %1534 = vmatmul.mubr.bf16.gmra.mrb[0].mxu0 %v1108
    %v1535 = vpop.f32.mrb[0].mxu0
    %v1536 = vadd.f32 0.0, %v1535
    %v1537 = vpop.f32.mrb[0].mxu0
    %v1538 = vadd.f32 0.0, %v1537
    %v1539 = vpop.f32.mrb[0].mxu0
    %v1540 = vadd.f32 0.0, %v1539
    %v1541 = vpop.f32.mrb[0].mxu0
    %v1542 = vadd.f32 0.0, %v1541
    %1543 = vmatprep.mubr.bf16.mxu0 %v1111
    %1544 = vmatmul.mubr.bf16.gmra.mrb[0].mxu0 %v1110
    %v1545 = vpop.f32.mrb[0].mxu0
    %v1546 = vadd.f32 0.0, %v1545
    %v1547 = vpop.f32.mrb[0].mxu0
    %v1548 = vadd.f32 0.0, %v1547
    %v1549 = vpop.f32.mrb[0].mxu0
    %v1550 = vadd.f32 0.0, %v1549
    %v1551 = vpop.f32.mrb[0].mxu0
    %v1552 = vadd.f32 0.0, %v1551
    %1553 = vmatprep.mubr.bf16.mxu0 %v1113
    %1554 = vmatmul.mubr.bf16.gmra.mrb[0].mxu0 %v1112
    %v1555 = vpop.f32.mrb[0].mxu0
    %v1556 = vadd.f32 0.0, %v1555
    %v1557 = vpop.f32.mrb[0].mxu0
    %v1558 = vadd.f32 0.0, %v1557
    %v1559 = vpop.f32.mrb[0].mxu0
    %v1560 = vadd.f32 0.0, %v1559
    %v1561 = vpop.f32.mrb[0].mxu0
    %v1562 = vadd.f32 0.0, %v1561
    %1563 = vdwg.mxu0
    %v1564 = vld [vmem:[#allocation11] sm:$0xf]
    %v1565 = vld [vmem:[#allocation12] sm:$0xf]
    %v1566 = vadd.f32 %v1213, %v1217
    %v1567 = vadd.f32 %v1566, %v1223
    %v1568 = vadd.f32 %v1567, %v1227
    %v1569 = vadd.f32 %v1568, %v1233
    %v1570 = vadd.f32 %v1569, %v1237
    %v1571 = vadd.f32 %v1570, %v1243
    %v1572 = vadd.f32 %v1571, %v1247
    %v1573 = vadd.f32 %v1572, %v1253
    %v1574 = vadd.f32 %v1573, %v1257
    %v1575 = vadd.f32 %v1574, %v1263
    %v1576 = vadd.f32 %v1575, %v1267
    %v1577 = vadd.f32 %v1576, %v1273
    %v1578 = vadd.f32 %v1577, %v1277
    %v1579 = vadd.f32 %v1578, %v1283
    %v1580 = vadd.f32 %v1579, %v1287
    %v1581 = vadd.f32 %v1580, %v1293
    %v1582 = vadd.f32 %v1581, %v1297
    %v1583 = vadd.f32 %v1582, %v1303
    %v1584 = vadd.f32 %v1583, %v1307
    %v1585 = vadd.f32 %v1584, %v1313
    %v1586 = vadd.f32 %v1585, %v1317
    %v1587 = vadd.f32 %v1586, %v1323
    %v1588 = vadd.f32 %v1587, %v1327
    %v1589 = vadd.f32 %v1588, %v1333
    %v1590 = vadd.f32 %v1589, %v1337
    %v1591 = vadd.f32 %v1590, %v1343
    %v1592 = vadd.f32 %v1591, %v1347
    %v1593 = vadd.f32 %v1592, %v1353
    %v1594 = vadd.f32 %v1593, %v1357
    %v1595 = vadd.f32 %v1594, %v1363
    %v1596 = vadd.f32 %v1595, %v1367
    %v1597 = vrot.slane %v1596, 4
    %v1598 = vadd.f32 %v1596, %v1597
    %v1599 = vrot.slane %v1598, 2
    %v1600 = vadd.f32 %v1598, %v1599
    %v1601 = vrot.slane %v1600, 1
    %v1602 = vadd.f32 %v1600, %v1601
    %v1603 = vadd.f32 %v1215, %v1219
    %v1604 = vadd.f32 %v1603, %v1225
    %v1605 = vadd.f32 %v1604, %v1229
    %v1606 = vadd.f32 %v1605, %v1235
    %v1607 = vadd.f32 %v1606, %v1239
    %v1608 = vadd.f32 %v1607, %v1245
    %v1609 = vadd.f32 %v1608, %v1249
    %v1610 = vadd.f32 %v1609, %v1255
    %v1611 = vadd.f32 %v1610, %v1259
    %v1612 = vadd.f32 %v1611, %v1265
    %v1613 = vadd.f32 %v1612, %v1269
    %v1614 = vadd.f32 %v1613, %v1275
    %v1615 = vadd.f32 %v1614, %v1279
    %v1616 = vadd.f32 %v1615, %v1285
    %v1617 = vadd.f32 %v1616, %v1289
    %v1618 = vadd.f32 %v1617, %v1295
    %v1619 = vadd.f32 %v1618, %v1299
    %v1620 = vadd.f32 %v1619, %v1305
    %v1621 = vadd.f32 %v1620, %v1309
    %v1622 = vadd.f32 %v1621, %v1315
    %v1623 = vadd.f32 %v1622, %v1319
    %v1624 = vadd.f32 %v1623, %v1325
    %v1625 = vadd.f32 %v1624, %v1329
    %v1626 = vadd.f32 %v1625, %v1335
    %v1627 = vadd.f32 %v1626, %v1339
    %v1628 = vadd.f32 %v1627, %v1345
    %v1629 = vadd.f32 %v1628, %v1349
    %v1630 = vadd.f32 %v1629, %v1355
    %v1631 = vadd.f32 %v1630, %v1359
    %v1632 = vadd.f32 %v1631, %v1365
    %v1633 = vadd.f32 %v1632, %v1369
    %v1634 = vrot.slane %v1633, 4
    %v1635 = vadd.f32 %v1633, %v1634
    %v1636 = vrot.slane %v1635, 2
    %v1637 = vadd.f32 %v1635, %v1636
    %v1638 = vrot.slane %v1637, 1
    %v1639 = vadd.f32 %v1637, %v1638
    %v1640 = vadd.f32 %v1406, %v1410
    %v1641 = vadd.f32 %v1640, %v1416
    %v1642 = vadd.f32 %v1641, %v1420
    %v1643 = vadd.f32 %v1642, %v1426
    %v1644 = vadd.f32 %v1643, %v1430
    %v1645 = vadd.f32 %v1644, %v1436
    %v1646 = vadd.f32 %v1645, %v1440
    %v1647 = vadd.f32 %v1646, %v1446
    %v1648 = vadd.f32 %v1647, %v1450
    %v1649 = vadd.f32 %v1648, %v1456
    %v1650 = vadd.f32 %v1649, %v1460
    %v1651 = vadd.f32 %v1650, %v1466
    %v1652 = vadd.f32 %v1651, %v1470
    %v1653 = vadd.f32 %v1652, %v1476
    %v1654 = vadd.f32 %v1653, %v1480
    %v1655 = vadd.f32 %v1654, %v1486
    %v1656 = vadd.f32 %v1655, %v1490
    %v1657 = vadd.f32 %v1656, %v1496
    %v1658 = vadd.f32 %v1657, %v1500
    %v1659 = vadd.f32 %v1658, %v1506
    %v1660 = vadd.f32 %v1659, %v1510
    %v1661 = vadd.f32 %v1660, %v1516
    %v1662 = vadd.f32 %v1661, %v1520
    %v1663 = vadd.f32 %v1662, %v1526
    %v1664 = vadd.f32 %v1663, %v1530
    %v1665 = vadd.f32 %v1664, %v1536
    %v1666 = vadd.f32 %v1665, %v1540
    %v1667 = vadd.f32 %v1666, %v1546
    %v1668 = vadd.f32 %v1667, %v1550
    %v1669 = vadd.f32 %v1668, %v1556
    %v1670 = vadd.f32 %v1669, %v1560
    %v1671 = vrot.slane %v1670, 4
    %v1672 = vadd.f32 %v1670, %v1671
    %v1673 = vrot.slane %v1672, 2
    %v1674 = vadd.f32 %v1672, %v1673
    %v1675 = vrot.slane %v1674, 1
    %v1676 = vadd.f32 %v1674, %v1675
    %v1677 = vadd.f32 %v1408, %v1412
    %v1678 = vadd.f32 %v1677, %v1418
    %v1679 = vadd.f32 %v1678, %v1422
    %v1680 = vadd.f32 %v1679, %v1428
    %v1681 = vadd.f32 %v1680, %v1432
    %v1682 = vadd.f32 %v1681, %v1438
    %v1683 = vadd.f32 %v1682, %v1442
    %v1684 = vadd.f32 %v1683, %v1448
    %v1685 = vadd.f32 %v1684, %v1452
    %v1686 = vadd.f32 %v1685, %v1458
    %v1687 = vadd.f32 %v1686, %v1462
    %v1688 = vadd.f32 %v1687, %v1468
    %v1689 = vadd.f32 %v1688, %v1472
    %v1690 = vadd.f32 %v1689, %v1478
    %v1691 = vadd.f32 %v1690, %v1482
    %v1692 = vadd.f32 %v1691, %v1488
    %v1693 = vadd.f32 %v1692, %v1492
    %v1694 = vadd.f32 %v1693, %v1498
    %v1695 = vadd.f32 %v1694, %v1502
    %v1696 = vadd.f32 %v1695, %v1508
    %v1697 = vadd.f32 %v1696, %v1512
    %v1698 = vadd.f32 %v1697, %v1518
    %v1699 = vadd.f32 %v1698, %v1522
    %v1700 = vadd.f32 %v1699, %v1528
    %v1701 = vadd.f32 %v1700, %v1532
    %v1702 = vadd.f32 %v1701, %v1538
    %v1703 = vadd.f32 %v1702, %v1542
    %v1704 = vadd.f32 %v1703, %v1548
    %v1705 = vadd.f32 %v1704, %v1552
    %v1706 = vadd.f32 %v1705, %v1558
    %v1707 = vadd.f32 %v1706, %v1562
    %v1708 = vrot.slane %v1707, 4
    %v1709 = vadd.f32 %v1707, %v1708
    %v1710 = vrot.slane %v1709, 2
    %v1711 = vadd.f32 %v1709, %v1710
    %v1712 = vrot.slane %v1711, 1
    %v1713 = vadd.f32 %v1711, %v1712
    %v1714 = vmul.f32 %v1213, %v1213
    %v1715 = vmul.f32 %v1215, %v1215
    %v1716 = vmul.f32 %v1406, %v1406
    %v1717 = vmul.f32 %v1408, %v1408
    %v1718 = vmul.f32 %v1217, %v1217
    %v1719 = vmul.f32 %v1219, %v1219
    %v1720 = vmul.f32 %v1410, %v1410
    %v1721 = vmul.f32 %v1412, %v1412
    %v1722 = vmul.f32 %v1223, %v1223
    %v1723 = vmul.f32 %v1225, %v1225
    %v1724 = vmul.f32 %v1416, %v1416
    %v1725 = vmul.f32 %v1418, %v1418
    %v1726 = vmul.f32 %v1227, %v1227
    %v1727 = vmul.f32 %v1229, %v1229
    %v1728 = vmul.f32 %v1420, %v1420
    %v1729 = vmul.f32 %v1422, %v1422
    %v1730 = vmul.f32 %v1233, %v1233
    %v1731 = vmul.f32 %v1235, %v1235
    %v1732 = vmul.f32 %v1426, %v1426
    %v1733 = vmul.f32 %v1428, %v1428
    %v1734 = vmul.f32 %v1237, %v1237
    %v1735 = vmul.f32 %v1239, %v1239
    %v1736 = vmul.f32 %v1430, %v1430
    %v1737 = vmul.f32 %v1432, %v1432
    %v1738 = vmul.f32 %v1243, %v1243
    %v1739 = vmul.f32 %v1245, %v1245
    %v1740 = vmul.f32 %v1436, %v1436
    %v1741 = vmul.f32 %v1438, %v1438
    %v1742 = vmul.f32 %v1247, %v1247
    %v1743 = vmul.f32 %v1249, %v1249
    %v1744 = vmul.f32 %v1440, %v1440
    %v1745 = vmul.f32 %v1442, %v1442
    %v1746 = vmul.f32 %v1253, %v1253
    %v1747 = vmul.f32 %v1255, %v1255
    %v1748 = vmul.f32 %v1446, %v1446
    %v1749 = vmul.f32 %v1448, %v1448
    %v1750 = vmul.f32 %v1257, %v1257
    %v1751 = vmul.f32 %v1259, %v1259
    %v1752 = vmul.f32 %v1450, %v1450
    %v1753 = vmul.f32 %v1452, %v1452
    %v1754 = vmul.f32 %v1263, %v1263
    %v1755 = vmul.f32 %v1265, %v1265
    %v1756 = vmul.f32 %v1456, %v1456
    %v1757 = vmul.f32 %v1458, %v1458
    %v1758 = vmul.f32 %v1267, %v1267
    %v1759 = vmul.f32 %v1269, %v1269
    %v1760 = vmul.f32 %v1460, %v1460
    %v1761 = vmul.f32 %v1462, %v1462
    %v1762 = vmul.f32 %v1273, %v1273
    %v1763 = vmul.f32 %v1275, %v1275
    %v1764 = vmul.f32 %v1466, %v1466
    %v1765 = vmul.f32 %v1468, %v1468
    %v1766 = vmul.f32 %v1277, %v1277
    %v1767 = vmul.f32 %v1279, %v1279
    %v1768 = vmul.f32 %v1470, %v1470
    %v1769 = vmul.f32 %v1472, %v1472
    %v1770 = vmul.f32 %v1283, %v1283
    %v1771 = vmul.f32 %v1285, %v1285
    %v1772 = vmul.f32 %v1476, %v1476
    %v1773 = vmul.f32 %v1478, %v1478
    %v1774 = vmul.f32 %v1287, %v1287
    %v1775 = vmul.f32 %v1289, %v1289
    %v1776 = vmul.f32 %v1480, %v1480
    %v1777 = vmul.f32 %v1482, %v1482
    %v1778 = vmul.f32 %v1293, %v1293
    %v1779 = vmul.f32 %v1295, %v1295
    %v1780 = vmul.f32 %v1486, %v1486
    %v1781 = vmul.f32 %v1488, %v1488
    %v1782 = vmul.f32 %v1297, %v1297
    %v1783 = vmul.f32 %v1299, %v1299
    %v1784 = vmul.f32 %v1490, %v1490
    %v1785 = vmul.f32 %v1492, %v1492
    %v1786 = vmul.f32 %v1303, %v1303
    %v1787 = vmul.f32 %v1305, %v1305
    %v1788 = vmul.f32 %v1496, %v1496
    %v1789 = vmul.f32 %v1498, %v1498
    %v1790 = vmul.f32 %v1307, %v1307
    %v1791 = vmul.f32 %v1309, %v1309
    %v1792 = vmul.f32 %v1500, %v1500
    %v1793 = vmul.f32 %v1502, %v1502
    %v1794 = vmul.f32 %v1313, %v1313
    %v1795 = vmul.f32 %v1315, %v1315
    %v1796 = vmul.f32 %v1506, %v1506
    %v1797 = vmul.f32 %v1508, %v1508
    %v1798 = vmul.f32 %v1317, %v1317
    %v1799 = vmul.f32 %v1319, %v1319
    %v1800 = vmul.f32 %v1510, %v1510
    %v1801 = vmul.f32 %v1512, %v1512
    %v1802 = vmul.f32 %v1323, %v1323
    %v1803 = vmul.f32 %v1325, %v1325
    %v1804 = vmul.f32 %v1516, %v1516
    %v1805 = vmul.f32 %v1518, %v1518
    %v1806 = vmul.f32 %v1327, %v1327
    %v1807 = vmul.f32 %v1329, %v1329
    %v1808 = vmul.f32 %v1520, %v1520
    %v1809 = vmul.f32 %v1522, %v1522
    %v1810 = vmul.f32 %v1333, %v1333
    %v1811 = vmul.f32 %v1335, %v1335
    %v1812 = vmul.f32 %v1526, %v1526
    %v1813 = vmul.f32 %v1528, %v1528
    %v1814 = vmul.f32 %v1337, %v1337
    %v1815 = vmul.f32 %v1339, %v1339
    %v1816 = vmul.f32 %v1530, %v1530
    %v1817 = vmul.f32 %v1532, %v1532
    %v1818 = vmul.f32 %v1343, %v1343
    %v1819 = vmul.f32 %v1345, %v1345
    %v1820 = vmul.f32 %v1536, %v1536
    %v1821 = vmul.f32 %v1538, %v1538
    %v1822 = vmul.f32 %v1347, %v1347
    %v1823 = vmul.f32 %v1349, %v1349
    %v1824 = vmul.f32 %v1540, %v1540
    %v1825 = vmul.f32 %v1542, %v1542
    %v1826 = vmul.f32 %v1353, %v1353
    %v1827 = vmul.f32 %v1355, %v1355
    %v1828 = vmul.f32 %v1546, %v1546
    %v1829 = vmul.f32 %v1548, %v1548
    %v1830 = vmul.f32 %v1357, %v1357
    %v1831 = vmul.f32 %v1359, %v1359
    %v1832 = vmul.f32 %v1550, %v1550
    %v1833 = vmul.f32 %v1552, %v1552
    %v1834 = vmul.f32 %v1363, %v1363
    %v1835 = vmul.f32 %v1365, %v1365
    %v1836 = vmul.f32 %v1556, %v1556
    %v1837 = vmul.f32 %v1558, %v1558
    %v1838 = vmul.f32 %v1367, %v1367
    %v1839 = vmul.f32 %v1369, %v1369
    %v1840 = vmul.f32 %v1560, %v1560
    %v1841 = vmul.f32 %v1562, %v1562
    %v1842 = vadd.f32 %v1714, %v1718
    %v1843 = vadd.f32 %v1842, %v1722
    %v1844 = vadd.f32 %v1843, %v1726
    %v1845 = vadd.f32 %v1844, %v1730
    %v1846 = vadd.f32 %v1845, %v1734
    %v1847 = vadd.f32 %v1846, %v1738
    %v1848 = vadd.f32 %v1847, %v1742
    %v1849 = vadd.f32 %v1848, %v1746
    %v1850 = vadd.f32 %v1849, %v1750
    %v1851 = vadd.f32 %v1850, %v1754
    %v1852 = vadd.f32 %v1851, %v1758
    %v1853 = vadd.f32 %v1852, %v1762
    %v1854 = vadd.f32 %v1853, %v1766
    %v1855 = vadd.f32 %v1854, %v1770
    %v1856 = vadd.f32 %v1855, %v1774
    %v1857 = vadd.f32 %v1856, %v1778
    %v1858 = vadd.f32 %v1857, %v1782
    %v1859 = vadd.f32 %v1858, %v1786
    %v1860 = vadd.f32 %v1859, %v1790
    %v1861 = vadd.f32 %v1860, %v1794
    %v1862 = vadd.f32 %v1861, %v1798
    %v1863 = vadd.f32 %v1862, %v1802
    %v1864 = vadd.f32 %v1863, %v1806
    %v1865 = vadd.f32 %v1864, %v1810
    %v1866 = vadd.f32 %v1865, %v1814
    %v1867 = vadd.f32 %v1866, %v1818
    %v1868 = vadd.f32 %v1867, %v1822
    %v1869 = vadd.f32 %v1868, %v1826
    %v1870 = vadd.f32 %v1869, %v1830
    %v1871 = vadd.f32 %v1870, %v1834
    %v1872 = vadd.f32 %v1871, %v1838
    %v1873 = vrot.slane %v1872, 4
    %v1874 = vadd.f32 %v1872, %v1873
    %v1875 = vrot.slane %v1874, 2
    %v1876 = vadd.f32 %v1874, %v1875
    %v1877 = vrot.slane %v1876, 1
    %v1878 = vadd.f32 %v1876, %v1877
    %v1879 = vadd.f32 %v1715, %v1719
    %v1880 = vadd.f32 %v1879, %v1723
    %v1881 = vadd.f32 %v1880, %v1727
    %v1882 = vadd.f32 %v1881, %v1731
    %v1883 = vadd.f32 %v1882, %v1735
    %v1884 = vadd.f32 %v1883, %v1739
    %v1885 = vadd.f32 %v1884, %v1743
    %v1886 = vadd.f32 %v1885, %v1747
    %v1887 = vadd.f32 %v1886, %v1751
    %v1888 = vadd.f32 %v1887, %v1755
    %v1889 = vadd.f32 %v1888, %v1759
    %v1890 = vadd.f32 %v1889, %v1763
    %v1891 = vadd.f32 %v1890, %v1767
    %v1892 = vadd.f32 %v1891, %v1771
    %v1893 = vadd.f32 %v1892, %v1775
    %v1894 = vadd.f32 %v1893, %v1779
    %v1895 = vadd.f32 %v1894, %v1783
    %v1896 = vadd.f32 %v1895, %v1787
    %v1897 = vadd.f32 %v1896, %v1791
    %v1898 = vadd.f32 %v1897, %v1795
    %v1899 = vadd.f32 %v1898, %v1799
    %v1900 = vadd.f32 %v1899, %v1803
    %v1901 = vadd.f32 %v1900, %v1807
    %v1902 = vadd.f32 %v1901, %v1811
    %v1903 = vadd.f32 %v1902, %v1815
    %v1904 = vadd.f32 %v1903, %v1819
    %v1905 = vadd.f32 %v1904, %v1823
    %v1906 = vadd.f32 %v1905, %v1827
    %v1907 = vadd.f32 %v1906, %v1831
    %v1908 = vadd.f32 %v1907, %v1835
    %v1909 = vadd.f32 %v1908, %v1839
    %v1910 = vrot.slane %v1909, 4
    %v1911 = vadd.f32 %v1909, %v1910
    %v1912 = vrot.slane %v1911, 2
    %v1913 = vadd.f32 %v1911, %v1912
    %v1914 = vrot.slane %v1913, 1
    %v1915 = vadd.f32 %v1913, %v1914
    %v1916 = vadd.f32 %v1716, %v1720
    %v1917 = vadd.f32 %v1916, %v1724
    %v1918 = vadd.f32 %v1917, %v1728
    %v1919 = vadd.f32 %v1918, %v1732
    %v1920 = vadd.f32 %v1919, %v1736
    %v1921 = vadd.f32 %v1920, %v1740
    %v1922 = vadd.f32 %v1921, %v1744
    %v1923 = vadd.f32 %v1922, %v1748
    %v1924 = vadd.f32 %v1923, %v1752
    %v1925 = vadd.f32 %v1924, %v1756
    %v1926 = vadd.f32 %v1925, %v1760
    %v1927 = vadd.f32 %v1926, %v1764
    %v1928 = vadd.f32 %v1927, %v1768
    %v1929 = vadd.f32 %v1928, %v1772
    %v1930 = vadd.f32 %v1929, %v1776
    %v1931 = vadd.f32 %v1930, %v1780
    %v1932 = vadd.f32 %v1931, %v1784
    %v1933 = vadd.f32 %v1932, %v1788
    %v1934 = vadd.f32 %v1933, %v1792
    %v1935 = vadd.f32 %v1934, %v1796
    %v1936 = vadd.f32 %v1935, %v1800
    %v1937 = vadd.f32 %v1936, %v1804
    %v1938 = vadd.f32 %v1937, %v1808
    %v1939 = vadd.f32 %v1938, %v1812
    %v1940 = vadd.f32 %v1939, %v1816
    %v1941 = vadd.f32 %v1940, %v1820
    %v1942 = vadd.f32 %v1941, %v1824
    %v1943 = vadd.f32 %v1942, %v1828
    %v1944 = vadd.f32 %v1943, %v1832
    %v1945 = vadd.f32 %v1944, %v1836
    %v1946 = vadd.f32 %v1945, %v1840
    %v1947 = vrot.slane %v1946, 4
    %v1948 = vadd.f32 %v1946, %v1947
    %v1949 = vrot.slane %v1948, 2
    %v1950 = vadd.f32 %v1948, %v1949
    %v1951 = vrot.slane %v1950, 1
    %v1952 = vadd.f32 %v1950, %v1951
    %v1953 = vadd.f32 %v1717, %v1721
    %v1954 = vadd.f32 %v1953, %v1725
    %v1955 = vadd.f32 %v1954, %v1729
    %v1956 = vadd.f32 %v1955, %v1733
    %v1957 = vadd.f32 %v1956, %v1737
    %v1958 = vadd.f32 %v1957, %v1741
    %v1959 = vadd.f32 %v1958, %v1745
    %v1960 = vadd.f32 %v1959, %v1749
    %v1961 = vadd.f32 %v1960, %v1753
    %v1962 = vadd.f32 %v1961, %v1757
    %v1963 = vadd.f32 %v1962, %v1761
    %v1964 = vadd.f32 %v1963, %v1765
    %v1965 = vadd.f32 %v1964, %v1769
    %v1966 = vadd.f32 %v1965, %v1773
    %v1967 = vadd.f32 %v1966, %v1777
    %v1968 = vadd.f32 %v1967, %v1781
    %v1969 = vadd.f32 %v1968, %v1785
    %v1970 = vadd.f32 %v1969, %v1789
    %v1971 = vadd.f32 %v1970, %v1793
    %v1972 = vadd.f32 %v1971, %v1797
    %v1973 = vadd.f32 %v1972, %v1801
    %v1974 = vadd.f32 %v1973, %v1805
    %v1975 = vadd.f32 %v1974, %v1809
    %v1976 = vadd.f32 %v1975, %v1813
    %v1977 = vadd.f32 %v1976, %v1817
    %v1978 = vadd.f32 %v1977, %v1821
    %v1979 = vadd.f32 %v1978, %v1825
    %v1980 = vadd.f32 %v1979, %v1829
    %v1981 = vadd.f32 %v1980, %v1833
    %v1982 = vadd.f32 %v1981, %v1837
    %v1983 = vadd.f32 %v1982, %v1841
    %v1984 = vrot.slane %v1983, 4
    %v1985 = vadd.f32 %v1983, %v1984
    %v1986 = vrot.slane %v1985, 2
    %v1987 = vadd.f32 %v1985, %v1986
    %v1988 = vrot.slane %v1987, 1
    %v1989 = vadd.f32 %v1987, %v1988
    %v1990 = vmul.f32 %v1602, 0.00390625
    %v1991 = vmul.f32 %v1639, 0.00390625
    %v1992 = vmul.f32 %v1676, 0.00390625
    %v1993 = vmul.f32 %v1713, 0.00390625
    %v1994 = vmul.f32 %v1878, 0.00390625
    %v1995 = vmul.f32 %v1915, 0.00390625
    %v1996 = vmul.f32 %v1952, 0.00390625
    %v1997 = vmul.f32 %v1989, 0.00390625
    %v1998 = vmul.f32 %v1990, %v1990
    %v1999 = vmul.f32 %v1991, %v1991
    %v2000 = vmul.f32 %v1992, %v1992
    %v2001 = vmul.f32 %v1993, %v1993
    %v2002 = vsub.f32 %v1994, %v1998
    %v2003 = vsub.f32 %v1995, %v1999
    %v2004 = vsub.f32 %v1996, %v2000
    %v2005 = vsub.f32 %v1997, %v2001
    %v2006 = vmax.f32 %v2002, 0.0
    %v2007 = vmax.f32 %v2003, 0.0
    %v2008 = vmax.f32 %v2004, 0.0
    %v2009 = vmax.f32 %v2005, 0.0
    %v2010 = vadd.f32 %v2006, 1e-05
    %v2011 = vadd.f32 %v2007, 1e-05
    %v2012 = vadd.f32 %v2008, 1e-05
    %v2013 = vadd.f32 %v2009, 1e-05
    %v2014 = vrsqrt.pop %v2010
    %v2015 = vrsqrt.pop %v2011
    %v2016 = vrsqrt.pop %v2012
    %v2017 = vrsqrt.pop %v2013
    %v2022 = vcombine.low %v2014, %v2015
    %v2023 = vcombine.low %v2016, %v2017
    %v2025 = vunpack.c.l.s4 1966171168
    %v2026 = vunpack.c.0.s8 %v2025
    %v2027 = vlaneseq
    %v2028 = vshrl.u32 %v2027, 7
    %v2029 = vsub.s32 %v2026, %v2028
    %v2030 = vrot.slane %v2022, %v2029
    %v2032 = vunpack.c.l.s4 1966171168
    %v2033 = vunpack.c.0.s8 %v2032
    %v2034 = vlaneseq
    %v2035 = vshrl.u32 %v2034, 7
    %v2036 = vsub.s32 %v2033, %v2035
    %v2037 = vrot.slane %v2023, %v2036
    %v2038 = vcombine.low %v2030, %v2037
    %v2040 = vunpack.c.l.s4 1966171168
    %v2041 = vunpack.c.0.s8 %v2040
    %v2042 = vlaneseq
    %v2043 = vshrl.u32 %v2042, 7
    %v2044 = vsub.s32 %v2041, %v2043
    %v2045 = vrot.slane %v2038, %v2044
    %v2047 = vmul.f32 %v1564, %v2045
    %v2049 = vlaneseq
    %v2050 = vshrl.u32 %v2049, 7
    %v2051 = vsub.s32 0, %v2050
    %v2052 = vrot.slane %v2047, %v2051
    %v2053 = vlaneseq
    %v2054 = vshrl.u32 %v2053, 7
    %v2055 = vsub.s32 1, %v2054
    %v2056 = vrot.slane %v2047, %v2055
    %v2057 = vlaneseq
    %v2058 = vshrl.u32 %v2057, 7
    %v2059 = vsub.s32 2, %v2058
    %v2060 = vrot.slane %v2047, %v2059
    %v2061 = vlaneseq
    %v2062 = vshrl.u32 %v2061, 7
    %v2063 = vsub.s32 3, %v2062
    %v2064 = vrot.slane %v2047, %v2063
    %v2069 = vmul.f32 %v1990, %v2052
    %v2070 = vmul.f32 %v1991, %v2056
    %v2071 = vmul.f32 %v1992, %v2060
    %v2072 = vmul.f32 %v1993, %v2064
    %v2077 = vcombine.low %v2069, %v2070
    %v2078 = vcombine.low %v2071, %v2072
    %v2080 = vunpack.c.l.s4 1966171168
    %v2081 = vunpack.c.0.s8 %v2080
    %v2082 = vlaneseq
    %v2083 = vshrl.u32 %v2082, 7
    %v2084 = vsub.s32 %v2081, %v2083
    %v2085 = vrot.slane %v2077, %v2084
    %v2087 = vunpack.c.l.s4 1966171168
    %v2088 = vunpack.c.0.s8 %v2087
    %v2089 = vlaneseq
    %v2090 = vshrl.u32 %v2089, 7
    %v2091 = vsub.s32 %v2088, %v2090
    %v2092 = vrot.slane %v2078, %v2091
    %v2093 = vcombine.low %v2085, %v2092
    %v2095 = vunpack.c.l.s4 1966171168
    %v2096 = vunpack.c.0.s8 %v2095
    %v2097 = vlaneseq
    %v2098 = vshrl.u32 %v2097, 7
    %v2099 = vsub.s32 %v2096, %v2098
    %v2100 = vrot.slane %v2093, %v2099
    %v2102 = vsub.f32 %v1565, %v2100
    %v2103 = vmul.f32 %v1213, %v2052
    %v2104 = vmul.f32 %v1215, %v2056
    %v2105 = vmul.f32 %v1406, %v2060
    %v2106 = vmul.f32 %v1408, %v2064
    %v2107 = vmul.f32 %v1217, %v2052
    %v2108 = vmul.f32 %v1219, %v2056
    %v2109 = vmul.f32 %v1410, %v2060
    %v2110 = vmul.f32 %v1412, %v2064
    %v2111 = vmul.f32 %v1223, %v2052
    %v2112 = vmul.f32 %v1225, %v2056
    %v2113 = vmul.f32 %v1416, %v2060
    %v2114 = vmul.f32 %v1418, %v2064
    %v2115 = vmul.f32 %v1227, %v2052
    %v2116 = vmul.f32 %v1229, %v2056
    %v2117 = vmul.f32 %v1420, %v2060
    %v2118 = vmul.f32 %v1422, %v2064
    %v2119 = vmul.f32 %v1233, %v2052
    %v2120 = vmul.f32 %v1235, %v2056
    %v2121 = vmul.f32 %v1426, %v2060
    %v2122 = vmul.f32 %v1428, %v2064
    %v2123 = vmul.f32 %v1237, %v2052
    %v2124 = vmul.f32 %v1239, %v2056
    %v2125 = vmul.f32 %v1430, %v2060
    %v2126 = vmul.f32 %v1432, %v2064
    %v2127 = vmul.f32 %v1243, %v2052
    %v2128 = vmul.f32 %v1245, %v2056
    %v2129 = vmul.f32 %v1436, %v2060
    %v2130 = vmul.f32 %v1438, %v2064
    %v2131 = vmul.f32 %v1247, %v2052
    %v2132 = vmul.f32 %v1249, %v2056
    %v2133 = vmul.f32 %v1440, %v2060
    %v2134 = vmul.f32 %v1442, %v2064
    %v2135 = vmul.f32 %v1253, %v2052
    %v2136 = vmul.f32 %v1255, %v2056
    %v2137 = vmul.f32 %v1446, %v2060
    %v2138 = vmul.f32 %v1448, %v2064
    %v2139 = vmul.f32 %v1257, %v2052
    %v2140 = vmul.f32 %v1259, %v2056
    %v2141 = vmul.f32 %v1450, %v2060
    %v2142 = vmul.f32 %v1452, %v2064
    %v2143 = vmul.f32 %v1263, %v2052
    %v2144 = vmul.f32 %v1265, %v2056
    %v2145 = vmul.f32 %v1456, %v2060
    %v2146 = vmul.f32 %v1458, %v2064
    %v2147 = vmul.f32 %v1267, %v2052
    %v2148 = vmul.f32 %v1269, %v2056
    %v2149 = vmul.f32 %v1460, %v2060
    %v2150 = vmul.f32 %v1462, %v2064
    %v2151 = vmul.f32 %v1273, %v2052
    %v2152 = vmul.f32 %v1275, %v2056
    %v2153 = vmul.f32 %v1466, %v2060
    %v2154 = vmul.f32 %v1468, %v2064
    %v2155 = vmul.f32 %v1277, %v2052
    %v2156 = vmul.f32 %v1279, %v2056
    %v2157 = vmul.f32 %v1470, %v2060
    %v2158 = vmul.f32 %v1472, %v2064
    %v2159 = vmul.f32 %v1283, %v2052
    %v2160 = vmul.f32 %v1285, %v2056
    %v2161 = vmul.f32 %v1476, %v2060
    %v2162 = vmul.f32 %v1478, %v2064
    %v2163 = vmul.f32 %v1287, %v2052
    %v2164 = vmul.f32 %v1289, %v2056
    %v2165 = vmul.f32 %v1480, %v2060
    %v2166 = vmul.f32 %v1482, %v2064
    %v2167 = vmul.f32 %v1293, %v2052
    %v2168 = vmul.f32 %v1295, %v2056
    %v2169 = vmul.f32 %v1486, %v2060
    %v2170 = vmul.f32 %v1488, %v2064
    %v2171 = vmul.f32 %v1297, %v2052
    %v2172 = vmul.f32 %v1299, %v2056
    %v2173 = vmul.f32 %v1490, %v2060
    %v2174 = vmul.f32 %v1492, %v2064
    %v2175 = vmul.f32 %v1303, %v2052
    %v2176 = vmul.f32 %v1305, %v2056
    %v2177 = vmul.f32 %v1496, %v2060
    %v2178 = vmul.f32 %v1498, %v2064
    %v2179 = vmul.f32 %v1307, %v2052
    %v2180 = vmul.f32 %v1309, %v2056
    %v2181 = vmul.f32 %v1500, %v2060
    %v2182 = vmul.f32 %v1502, %v2064
    %v2183 = vmul.f32 %v1313, %v2052
    %v2184 = vmul.f32 %v1315, %v2056
    %v2185 = vmul.f32 %v1506, %v2060
    %v2186 = vmul.f32 %v1508, %v2064
    %v2187 = vmul.f32 %v1317, %v2052
    %v2188 = vmul.f32 %v1319, %v2056
    %v2189 = vmul.f32 %v1510, %v2060
    %v2190 = vmul.f32 %v1512, %v2064
    %v2191 = vmul.f32 %v1323, %v2052
    %v2192 = vmul.f32 %v1325, %v2056
    %v2193 = vmul.f32 %v1516, %v2060
    %v2194 = vmul.f32 %v1518, %v2064
    %v2195 = vmul.f32 %v1327, %v2052
    %v2196 = vmul.f32 %v1329, %v2056
    %v2197 = vmul.f32 %v1520, %v2060
    %v2198 = vmul.f32 %v1522, %v2064
    %v2199 = vmul.f32 %v1333, %v2052
    %v2200 = vmul.f32 %v1335, %v2056
    %v2201 = vmul.f32 %v1526, %v2060
    %v2202 = vmul.f32 %v1528, %v2064
    %v2203 = vmul.f32 %v1337, %v2052
    %v2204 = vmul.f32 %v1339, %v2056
    %v2205 = vmul.f32 %v1530, %v2060
    %v2206 = vmul.f32 %v1532, %v2064
    %v2207 = vmul.f32 %v1343, %v2052
    %v2208 = vmul.f32 %v1345, %v2056
    %v2209 = vmul.f32 %v1536, %v2060
    %v2210 = vmul.f32 %v1538, %v2064
    %v2211 = vmul.f32 %v1347, %v2052
    %v2212 = vmul.f32 %v1349, %v2056
    %v2213 = vmul.f32 %v1540, %v2060
    %v2214 = vmul.f32 %v1542, %v2064
    %v2215 = vmul.f32 %v1353, %v2052
    %v2216 = vmul.f32 %v1355, %v2056
    %v2217 = vmul.f32 %v1546, %v2060
    %v2218 = vmul.f32 %v1548, %v2064
    %v2219 = vmul.f32 %v1357, %v2052
    %v2220 = vmul.f32 %v1359, %v2056
    %v2221 = vmul.f32 %v1550, %v2060
    %v2222 = vmul.f32 %v1552, %v2064
    %v2223 = vmul.f32 %v1363, %v2052
    %v2224 = vmul.f32 %v1365, %v2056
    %v2225 = vmul.f32 %v1556, %v2060
    %v2226 = vmul.f32 %v1558, %v2064
    %v2227 = vmul.f32 %v1367, %v2052
    %v2228 = vmul.f32 %v1369, %v2056
    %v2229 = vmul.f32 %v1560, %v2060
    %v2230 = vmul.f32 %v1562, %v2064
    %v2232 = vlaneseq
    %v2233 = vshrl.u32 %v2232, 7
    %v2234 = vsub.s32 0, %v2233
    %v2235 = vrot.slane %v2102, %v2234
    %v2236 = vlaneseq
    %v2237 = vshrl.u32 %v2236, 7
    %v2238 = vsub.s32 1, %v2237
    %v2239 = vrot.slane %v2102, %v2238
    %v2240 = vlaneseq
    %v2241 = vshrl.u32 %v2240, 7
    %v2242 = vsub.s32 2, %v2241
    %v2243 = vrot.slane %v2102, %v2242
    %v2244 = vlaneseq
    %v2245 = vshrl.u32 %v2244, 7
    %v2246 = vsub.s32 3, %v2245
    %v2247 = vrot.slane %v2102, %v2246
    %v2252 = vadd.f32 %v2103, %v2235
    %v2253 = vadd.f32 %v2104, %v2239
    %v2254 = vadd.f32 %v2105, %v2243
    %v2255 = vadd.f32 %v2106, %v2247
    %v2256 = vadd.f32 %v2107, %v2235
    %v2257 = vadd.f32 %v2108, %v2239
    %v2258 = vadd.f32 %v2109, %v2243
    %v2259 = vadd.f32 %v2110, %v2247
    %v2260 = vadd.f32 %v2111, %v2235
    %v2261 = vadd.f32 %v2112, %v2239
    %v2262 = vadd.f32 %v2113, %v2243
    %v2263 = vadd.f32 %v2114, %v2247
    %v2264 = vadd.f32 %v2115, %v2235
    %v2265 = vadd.f32 %v2116, %v2239
    %v2266 = vadd.f32 %v2117, %v2243
    %v2267 = vadd.f32 %v2118, %v2247
    %v2268 = vadd.f32 %v2119, %v2235
    %v2269 = vadd.f32 %v2120, %v2239
    %v2270 = vadd.f32 %v2121, %v2243
    %v2271 = vadd.f32 %v2122, %v2247
    %v2272 = vadd.f32 %v2123, %v2235
    %v2273 = vadd.f32 %v2124, %v2239
    %v2274 = vadd.f32 %v2125, %v2243
    %v2275 = vadd.f32 %v2126, %v2247
    %v2276 = vadd.f32 %v2127, %v2235
    %v2277 = vadd.f32 %v2128, %v2239
    %v2278 = vadd.f32 %v2129, %v2243
    %v2279 = vadd.f32 %v2130, %v2247
    %v2280 = vadd.f32 %v2131, %v2235
    %v2281 = vadd.f32 %v2132, %v2239
    %v2282 = vadd.f32 %v2133, %v2243
    %v2283 = vadd.f32 %v2134, %v2247
    %v2284 = vadd.f32 %v2135, %v2235
    %v2285 = vadd.f32 %v2136, %v2239
    %v2286 = vadd.f32 %v2137, %v2243
    %v2287 = vadd.f32 %v2138, %v2247
    %v2288 = vadd.f32 %v2139, %v2235
    %v2289 = vadd.f32 %v2140, %v2239
    %v2290 = vadd.f32 %v2141, %v2243
    %v2291 = vadd.f32 %v2142, %v2247
    %v2292 = vadd.f32 %v2143, %v2235
    %v2293 = vadd.f32 %v2144, %v2239
    %v2294 = vadd.f32 %v2145, %v2243
    %v2295 = vadd.f32 %v2146, %v2247
    %v2296 = vadd.f32 %v2147, %v2235
    %v2297 = vadd.f32 %v2148, %v2239
    %v2298 = vadd.f32 %v2149, %v2243
    %v2299 = vadd.f32 %v2150, %v2247
    %v2300 = vadd.f32 %v2151, %v2235
    %v2301 = vadd.f32 %v2152, %v2239
    %v2302 = vadd.f32 %v2153, %v2243
    %v2303 = vadd.f32 %v2154, %v2247
    %v2304 = vadd.f32 %v2155, %v2235
    %v2305 = vadd.f32 %v2156, %v2239
    %v2306 = vadd.f32 %v2157, %v2243
    %v2307 = vadd.f32 %v2158, %v2247
    %v2308 = vadd.f32 %v2159, %v2235
    %v2309 = vadd.f32 %v2160, %v2239
    %v2310 = vadd.f32 %v2161, %v2243
    %v2311 = vadd.f32 %v2162, %v2247
    %v2312 = vadd.f32 %v2163, %v2235
    %v2313 = vadd.f32 %v2164, %v2239
    %v2314 = vadd.f32 %v2165, %v2243
    %v2315 = vadd.f32 %v2166, %v2247
    %v2316 = vadd.f32 %v2167, %v2235
    %v2317 = vadd.f32 %v2168, %v2239
    %v2318 = vadd.f32 %v2169, %v2243
    %v2319 = vadd.f32 %v2170, %v2247
    %v2320 = vadd.f32 %v2171, %v2235
    %v2321 = vadd.f32 %v2172, %v2239
    %v2322 = vadd.f32 %v2173, %v2243
    %v2323 = vadd.f32 %v2174, %v2247
    %v2324 = vadd.f32 %v2175, %v2235
    %v2325 = vadd.f32 %v2176, %v2239
    %v2326 = vadd.f32 %v2177, %v2243
    %v2327 = vadd.f32 %v2178, %v2247
    %v2328 = vadd.f32 %v2179, %v2235
    %v2329 = vadd.f32 %v2180, %v2239
    %v2330 = vadd.f32 %v2181, %v2243
    %v2331 = vadd.f32 %v2182, %v2247
    %v2332 = vadd.f32 %v2183, %v2235
    %v2333 = vadd.f32 %v2184, %v2239
    %v2334 = vadd.f32 %v2185, %v2243
    %v2335 = vadd.f32 %v2186, %v2247
    %v2336 = vadd.f32 %v2187, %v2235
    %v2337 = vadd.f32 %v2188, %v2239
    %v2338 = vadd.f32 %v2189, %v2243
    %v2339 = vadd.f32 %v2190, %v2247
    %v2340 = vadd.f32 %v2191, %v2235
    %v2341 = vadd.f32 %v2192, %v2239
    %v2342 = vadd.f32 %v2193, %v2243
    %v2343 = vadd.f32 %v2194, %v2247
    %v2344 = vadd.f32 %v2195, %v2235
    %v2345 = vadd.f32 %v2196, %v2239
    %v2346 = vadd.f32 %v2197, %v2243
    %v2347 = vadd.f32 %v2198, %v2247
    %v2348 = vadd.f32 %v2199, %v2235
    %v2349 = vadd.f32 %v2200, %v2239
    %v2350 = vadd.f32 %v2201, %v2243
    %v2351 = vadd.f32 %v2202, %v2247
    %v2352 = vadd.f32 %v2203, %v2235
    %v2353 = vadd.f32 %v2204, %v2239
    %v2354 = vadd.f32 %v2205, %v2243
    %v2355 = vadd.f32 %v2206, %v2247
    %v2356 = vadd.f32 %v2207, %v2235
    %v2357 = vadd.f32 %v2208, %v2239
    %v2358 = vadd.f32 %v2209, %v2243
    %v2359 = vadd.f32 %v2210, %v2247
    %v2360 = vadd.f32 %v2211, %v2235
    %v2361 = vadd.f32 %v2212, %v2239
    %v2362 = vadd.f32 %v2213, %v2243
    %v2363 = vadd.f32 %v2214, %v2247
    %v2364 = vadd.f32 %v2215, %v2235
    %v2365 = vadd.f32 %v2216, %v2239
    %v2366 = vadd.f32 %v2217, %v2243
    %v2367 = vadd.f32 %v2218, %v2247
    %v2368 = vadd.f32 %v2219, %v2235
    %v2369 = vadd.f32 %v2220, %v2239
    %v2370 = vadd.f32 %v2221, %v2243
    %v2371 = vadd.f32 %v2222, %v2247
    %v2372 = vadd.f32 %v2223, %v2235
    %v2373 = vadd.f32 %v2224, %v2239
    %v2374 = vadd.f32 %v2225, %v2243
    %v2375 = vadd.f32 %v2226, %v2247
    %v2376 = vadd.f32 %v2227, %v2235
    %v2377 = vadd.f32 %v2228, %v2239
    %v2378 = vadd.f32 %v2229, %v2243
    %v2379 = vadd.f32 %v2230, %v2247
    %v2380 = vmax.f32 %v2252, 0.0
    %v2381 = vmax.f32 %v2253, 0.0
    %v2382 = vmax.f32 %v2254, 0.0
    %v2383 = vmax.f32 %v2255, 0.0
    %v2384 = vmax.f32 %v2256, 0.0
    %v2385 = vmax.f32 %v2257, 0.0
    %v2386 = vmax.f32 %v2258, 0.0
    %v2387 = vmax.f32 %v2259, 0.0
    %v2388 = vmax.f32 %v2260, 0.0
    %v2389 = vmax.f32 %v2261, 0.0
    %v2390 = vmax.f32 %v2262, 0.0
    %v2391 = vmax.f32 %v2263, 0.0
    %v2392 = vmax.f32 %v2264, 0.0
    %v2393 = vmax.f32 %v2265, 0.0
    %v2394 = vmax.f32 %v2266, 0.0
    %v2395 = vmax.f32 %v2267, 0.0
    %v2396 = vmax.f32 %v2268, 0.0
    %v2397 = vmax.f32 %v2269, 0.0
    %v2398 = vmax.f32 %v2270, 0.0
    %v2399 = vmax.f32 %v2271, 0.0
    %v2400 = vmax.f32 %v2272, 0.0
    %v2401 = vmax.f32 %v2273, 0.0
    %v2402 = vmax.f32 %v2274, 0.0
    %v2403 = vmax.f32 %v2275, 0.0
    %v2404 = vmax.f32 %v2276, 0.0
    %v2405 = vmax.f32 %v2277, 0.0
    %v2406 = vmax.f32 %v2278, 0.0
    %v2407 = vmax.f32 %v2279, 0.0
    %v2408 = vmax.f32 %v2280, 0.0
    %v2409 = vmax.f32 %v2281, 0.0
    %v2410 = vmax.f32 %v2282, 0.0
    %v2411 = vmax.f32 %v2283, 0.0
    %v2412 = vmax.f32 %v2284, 0.0
    %v2413 = vmax.f32 %v2285, 0.0
    %v2414 = vmax.f32 %v2286, 0.0
    %v2415 = vmax.f32 %v2287, 0.0
    %v2416 = vmax.f32 %v2288, 0.0
    %v2417 = vmax.f32 %v2289, 0.0
    %v2418 = vmax.f32 %v2290, 0.0
    %v2419 = vmax.f32 %v2291, 0.0
    %v2420 = vmax.f32 %v2292, 0.0
    %v2421 = vmax.f32 %v2293, 0.0
    %v2422 = vmax.f32 %v2294, 0.0
    %v2423 = vmax.f32 %v2295, 0.0
    %v2424 = vmax.f32 %v2296, 0.0
    %v2425 = vmax.f32 %v2297, 0.0
    %v2426 = vmax.f32 %v2298, 0.0
    %v2427 = vmax.f32 %v2299, 0.0
    %v2428 = vmax.f32 %v2300, 0.0
    %v2429 = vmax.f32 %v2301, 0.0
    %v2430 = vmax.f32 %v2302, 0.0
    %v2431 = vmax.f32 %v2303, 0.0
    %v2432 = vmax.f32 %v2304, 0.0
    %v2433 = vmax.f32 %v2305, 0.0
    %v2434 = vmax.f32 %v2306, 0.0
    %v2435 = vmax.f32 %v2307, 0.0
    %v2436 = vmax.f32 %v2308, 0.0
    %v2437 = vmax.f32 %v2309, 0.0
    %v2438 = vmax.f32 %v2310, 0.0
    %v2439 = vmax.f32 %v2311, 0.0
    %v2440 = vmax.f32 %v2312, 0.0
    %v2441 = vmax.f32 %v2313, 0.0
    %v2442 = vmax.f32 %v2314, 0.0
    %v2443 = vmax.f32 %v2315, 0.0
    %v2444 = vmax.f32 %v2316, 0.0
    %v2445 = vmax.f32 %v2317, 0.0
    %v2446 = vmax.f32 %v2318, 0.0
    %v2447 = vmax.f32 %v2319, 0.0
    %v2448 = vmax.f32 %v2320, 0.0
    %v2449 = vmax.f32 %v2321, 0.0
    %v2450 = vmax.f32 %v2322, 0.0
    %v2451 = vmax.f32 %v2323, 0.0
    %v2452 = vmax.f32 %v2324, 0.0
    %v2453 = vmax.f32 %v2325, 0.0
    %v2454 = vmax.f32 %v2326, 0.0
    %v2455 = vmax.f32 %v2327, 0.0
    %v2456 = vmax.f32 %v2328, 0.0
    %v2457 = vmax.f32 %v2329, 0.0
    %v2458 = vmax.f32 %v2330, 0.0
    %v2459 = vmax.f32 %v2331, 0.0
    %v2460 = vmax.f32 %v2332, 0.0
    %v2461 = vmax.f32 %v2333, 0.0
    %v2462 = vmax.f32 %v2334, 0.0
    %v2463 = vmax.f32 %v2335, 0.0
    %v2464 = vmax.f32 %v2336, 0.0
    %v2465 = vmax.f32 %v2337, 0.0
    %v2466 = vmax.f32 %v2338, 0.0
    %v2467 = vmax.f32 %v2339, 0.0
    %v2468 = vmax.f32 %v2340, 0.0
    %v2469 = vmax.f32 %v2341, 0.0
    %v2470 = vmax.f32 %v2342, 0.0
    %v2471 = vmax.f32 %v2343, 0.0
    %v2472 = vmax.f32 %v2344, 0.0
    %v2473 = vmax.f32 %v2345, 0.0
    %v2474 = vmax.f32 %v2346, 0.0
    %v2475 = vmax.f32 %v2347, 0.0
    %v2476 = vmax.f32 %v2348, 0.0
    %v2477 = vmax.f32 %v2349, 0.0
    %v2478 = vmax.f32 %v2350, 0.0
    %v2479 = vmax.f32 %v2351, 0.0
    %v2480 = vmax.f32 %v2352, 0.0
    %v2481 = vmax.f32 %v2353, 0.0
    %v2482 = vmax.f32 %v2354, 0.0
    %v2483 = vmax.f32 %v2355, 0.0
    %v2484 = vmax.f32 %v2356, 0.0
    %v2485 = vmax.f32 %v2357, 0.0
    %v2486 = vmax.f32 %v2358, 0.0
    %v2487 = vmax.f32 %v2359, 0.0
    %v2488 = vmax.f32 %v2360, 0.0
    %v2489 = vmax.f32 %v2361, 0.0
    %v2490 = vmax.f32 %v2362, 0.0
    %v2491 = vmax.f32 %v2363, 0.0
    %v2492 = vmax.f32 %v2364, 0.0
    %v2493 = vmax.f32 %v2365, 0.0
    %v2494 = vmax.f32 %v2366, 0.0
    %v2495 = vmax.f32 %v2367, 0.0
    %v2496 = vmax.f32 %v2368, 0.0
    %v2497 = vmax.f32 %v2369, 0.0
    %v2498 = vmax.f32 %v2370, 0.0
    %v2499 = vmax.f32 %v2371, 0.0
    %v2500 = vmax.f32 %v2372, 0.0
    %v2501 = vmax.f32 %v2373, 0.0
    %v2502 = vmax.f32 %v2374, 0.0
    %v2503 = vmax.f32 %v2375, 0.0
    %v2504 = vmax.f32 %v2376, 0.0
    %v2505 = vmax.f32 %v2377, 0.0
    %v2506 = vmax.f32 %v2378, 0.0
    %v2507 = vmax.f32 %v2379, 0.0
    %s2508 = smul.u32 4, 64
    %s2509 = smul.u32 %s2508, 8
    %s2510 = sshll.u32 %s2509, 4
    %2511 = dma.done %s185, %s2510
    %v2512 = vpack.c.bf16 %v2384, %v2380
    %v2513 = vpack.c.bf16 %v2385, %v2381
    %v2514 = vpack.c.bf16 %v2386, %v2382
    %v2515 = vpack.c.bf16 %v2387, %v2383
    %v2516 = vpack.c.bf16 %v2392, %v2388
    %v2517 = vpack.c.bf16 %v2393, %v2389
    %v2518 = vpack.c.bf16 %v2394, %v2390
    %v2519 = vpack.c.bf16 %v2395, %v2391
    %v2520 = vpack.c.bf16 %v2400, %v2396
    %v2521 = vpack.c.bf16 %v2401, %v2397
    %v2522 = vpack.c.bf16 %v2402, %v2398
    %v2523 = vpack.c.bf16 %v2403, %v2399
    %v2524 = vpack.c.bf16 %v2408, %v2404
    %v2525 = vpack.c.bf16 %v2409, %v2405
    %v2526 = vpack.c.bf16 %v2410, %v2406
    %v2527 = vpack.c.bf16 %v2411, %v2407
    %v2528 = vpack.c.bf16 %v2416, %v2412
    %v2529 = vpack.c.bf16 %v2417, %v2413
    %v2530 = vpack.c.bf16 %v2418, %v2414
    %v2531 = vpack.c.bf16 %v2419, %v2415
    %v2532 = vpack.c.bf16 %v2424, %v2420
    %v2533 = vpack.c.bf16 %v2425, %v2421
    %v2534 = vpack.c.bf16 %v2426, %v2422
    %v2535 = vpack.c.bf16 %v2427, %v2423
    %v2536 = vpack.c.bf16 %v2432, %v2428
    %v2537 = vpack.c.bf16 %v2433, %v2429
    %v2538 = vpack.c.bf16 %v2434, %v2430
    %v2539 = vpack.c.bf16 %v2435, %v2431
    %v2540 = vpack.c.bf16 %v2440, %v2436
    %v2541 = vpack.c.bf16 %v2441, %v2437
    %v2542 = vpack.c.bf16 %v2442, %v2438
    %v2543 = vpack.c.bf16 %v2443, %v2439
    %v2544 = vpack.c.bf16 %v2448, %v2444
    %v2545 = vpack.c.bf16 %v2449, %v2445
    %v2546 = vpack.c.bf16 %v2450, %v2446
    %v2547 = vpack.c.bf16 %v2451, %v2447
    %v2548 = vpack.c.bf16 %v2456, %v2452
    %v2549 = vpack.c.bf16 %v2457, %v2453
    %v2550 = vpack.c.bf16 %v2458, %v2454
    %v2551 = vpack.c.bf16 %v2459, %v2455
    %v2552 = vpack.c.bf16 %v2464, %v2460
    %v2553 = vpack.c.bf16 %v2465, %v2461
    %v2554 = vpack.c.bf16 %v2466, %v2462
    %v2555 = vpack.c.bf16 %v2467, %v2463
    %v2556 = vpack.c.bf16 %v2472, %v2468
    %v2557 = vpack.c.bf16 %v2473, %v2469
    %v2558 = vpack.c.bf16 %v2474, %v2470
    %v2559 = vpack.c.bf16 %v2475, %v2471
    %v2560 = vpack.c.bf16 %v2480, %v2476
    %v2561 = vpack.c.bf16 %v2481, %v2477
    %v2562 = vpack.c.bf16 %v2482, %v2478
    %v2563 = vpack.c.bf16 %v2483, %v2479
    %v2564 = vpack.c.bf16 %v2488, %v2484
    %v2565 = vpack.c.bf16 %v2489, %v2485
    %v2566 = vpack.c.bf16 %v2490, %v2486
    %v2567 = vpack.c.bf16 %v2491, %v2487
    %v2568 = vpack.c.bf16 %v2496, %v2492
    %v2569 = vpack.c.bf16 %v2497, %v2493
    %v2570 = vpack.c.bf16 %v2498, %v2494
    %v2571 = vpack.c.bf16 %v2499, %v2495
    %v2572 = vpack.c.bf16 %v2504, %v2500
    %v2573 = vpack.c.bf16 %v2505, %v2501
    %v2574 = vpack.c.bf16 %v2506, %v2502
    %v2575 = vpack.c.bf16 %v2507, %v2503
    %v2576 = vld [vmem:[#allocation4] sm:$0xff]
    %v2577 = vld [vmem:[#allocation4 + $0x8] sm:$0xff]
    %v2578 = vld [vmem:[#allocation4 + $0x10] sm:$0xff]
    %v2579 = vld [vmem:[#allocation4 + $0x18] sm:$0xff]
    %v2580 = vld [vmem:[#allocation4 + $0x20] sm:$0xff]
    %v2581 = vld [vmem:[#allocation4 + $0x28] sm:$0xff]
    %v2582 = vld [vmem:[#allocation4 + $0x30] sm:$0xff]
    %v2583 = vld [vmem:[#allocation4 + $0x38] sm:$0xff]
    %v2584 = vld [vmem:[#allocation4 + $0x40] sm:$0xff]
    %v2585 = vld [vmem:[#allocation4 + $0x48] sm:$0xff]
    %v2586 = vld [vmem:[#allocation4 + $0x50] sm:$0xff]
    %v2587 = vld [vmem:[#allocation4 + $0x58] sm:$0xff]
    %v2588 = vld [vmem:[#allocation4 + $0x60] sm:$0xff]
    %v2589 = vld [vmem:[#allocation4 + $0x68] sm:$0xff]
    %v2590 = vld [vmem:[#allocation4 + $0x70] sm:$0xff]
    %v2591 = vld [vmem:[#allocation4 + $0x78] sm:$0xff]
    %v2592 = vld [vmem:[#allocation4 + $0x80] sm:$0xff]
    %v2593 = vld [vmem:[#allocation4 + $0x88] sm:$0xff]
    %v2594 = vld [vmem:[#allocation4 + $0x90] sm:$0xff]
    %v2595 = vld [vmem:[#allocation4 + $0x98] sm:$0xff]
    %v2596 = vld [vmem:[#allocation4 + $0xa0] sm:$0xff]
    %v2597 = vld [vmem:[#allocation4 + $0xa8] sm:$0xff]
    %v2598 = vld [vmem:[#allocation4 + $0xb0] sm:$0xff]
    %v2599 = vld [vmem:[#allocation4 + $0xb8] sm:$0xff]
    %v2600 = vld [vmem:[#allocation4 + $0xc0] sm:$0xff]
    %v2601 = vld [vmem:[#allocation4 + $0xc8] sm:$0xff]
    %v2602 = vld [vmem:[#allocation4 + $0xd0] sm:$0xff]
    %v2603 = vld [vmem:[#allocation4 + $0xd8] sm:$0xff]
    %v2604 = vld [vmem:[#allocation4 + $0xe0] sm:$0xff]
    %v2605 = vld [vmem:[#allocation4 + $0xe8] sm:$0xff]
    %v2606 = vld [vmem:[#allocation4 + $0xf0] sm:$0xff]
    %v2607 = vld [vmem:[#allocation4 + $0xf8] sm:$0xff]
    %v2608 = vld [vmem:[#allocation4 + $0x100] sm:$0xff]
    %v2609 = vld [vmem:[#allocation4 + $0x108] sm:$0xff]
    %v2610 = vld [vmem:[#allocation4 + $0x110] sm:$0xff]
    %v2611 = vld [vmem:[#allocation4 + $0x118] sm:$0xff]
    %v2612 = vld [vmem:[#allocation4 + $0x120] sm:$0xff]
    %v2613 = vld [vmem:[#allocation4 + $0x128] sm:$0xff]
    %v2614 = vld [vmem:[#allocation4 + $0x130] sm:$0xff]
    %v2615 = vld [vmem:[#allocation4 + $0x138] sm:$0xff]
    %v2616 = vld [vmem:[#allocation4 + $0x140] sm:$0xff]
    %v2617 = vld [vmem:[#allocation4 + $0x148] sm:$0xff]
    %v2618 = vld [vmem:[#allocation4 + $0x150] sm:$0xff]
    %v2619 = vld [vmem:[#allocation4 + $0x158] sm:$0xff]
    %v2620 = vld [vmem:[#allocation4 + $0x160] sm:$0xff]
    %v2621 = vld [vmem:[#allocation4 + $0x168] sm:$0xff]
    %v2622 = vld [vmem:[#allocation4 + $0x170] sm:$0xff]
    %v2623 = vld [vmem:[#allocation4 + $0x178] sm:$0xff]
    %v2624 = vld [vmem:[#allocation4 + $0x180] sm:$0xff]
    %v2625 = vld [vmem:[#allocation4 + $0x188] sm:$0xff]
    %v2626 = vld [vmem:[#allocation4 + $0x190] sm:$0xff]
    %v2627 = vld [vmem:[#allocation4 + $0x198] sm:$0xff]
    %v2628 = vld [vmem:[#allocation4 + $0x1a0] sm:$0xff]
    %v2629 = vld [vmem:[#allocation4 + $0x1a8] sm:$0xff]
    %v2630 = vld [vmem:[#allocation4 + $0x1b0] sm:$0xff]
    %v2631 = vld [vmem:[#allocation4 + $0x1b8] sm:$0xff]
    %v2632 = vld [vmem:[#allocation4 + $0x1c0] sm:$0xff]
    %v2633 = vld [vmem:[#allocation4 + $0x1c8] sm:$0xff]
    %v2634 = vld [vmem:[#allocation4 + $0x1d0] sm:$0xff]
    %v2635 = vld [vmem:[#allocation4 + $0x1d8] sm:$0xff]
    %v2636 = vld [vmem:[#allocation4 + $0x1e0] sm:$0xff]
    %v2637 = vld [vmem:[#allocation4 + $0x1e8] sm:$0xff]
    %v2638 = vld [vmem:[#allocation4 + $0x1f0] sm:$0xff]
    %v2639 = vld [vmem:[#allocation4 + $0x1f8] sm:$0xff]
    %v2640 = vld [vmem:[#allocation4 + $0x200] sm:$0xff]
    %v2641 = vld [vmem:[#allocation4 + $0x208] sm:$0xff]
    %v2642 = vld [vmem:[#allocation4 + $0x210] sm:$0xff]
    %v2643 = vld [vmem:[#allocation4 + $0x218] sm:$0xff]
    %v2644 = vld [vmem:[#allocation4 + $0x220] sm:$0xff]
    %v2645 = vld [vmem:[#allocation4 + $0x228] sm:$0xff]
    %v2646 = vld [vmem:[#allocation4 + $0x230] sm:$0xff]
    %v2647 = vld [vmem:[#allocation4 + $0x238] sm:$0xff]
    %v2648 = vld [vmem:[#allocation4 + $0x240] sm:$0xff]
    %v2649 = vld [vmem:[#allocation4 + $0x248] sm:$0xff]
    %v2650 = vld [vmem:[#allocation4 + $0x250] sm:$0xff]
    %v2651 = vld [vmem:[#allocation4 + $0x258] sm:$0xff]
    %v2652 = vld [vmem:[#allocation4 + $0x260] sm:$0xff]
    %v2653 = vld [vmem:[#allocation4 + $0x268] sm:$0xff]
    %v2654 = vld [vmem:[#allocation4 + $0x270] sm:$0xff]
    %v2655 = vld [vmem:[#allocation4 + $0x278] sm:$0xff]
    %v2656 = vld [vmem:[#allocation4 + $0x280] sm:$0xff]
    %v2657 = vld [vmem:[#allocation4 + $0x288] sm:$0xff]
    %v2658 = vld [vmem:[#allocation4 + $0x290] sm:$0xff]
    %v2659 = vld [vmem:[#allocation4 + $0x298] sm:$0xff]
    %v2660 = vld [vmem:[#allocation4 + $0x2a0] sm:$0xff]
    %v2661 = vld [vmem:[#allocation4 + $0x2a8] sm:$0xff]
    %v2662 = vld [vmem:[#allocation4 + $0x2b0] sm:$0xff]
    %v2663 = vld [vmem:[#allocation4 + $0x2b8] sm:$0xff]
    %v2664 = vld [vmem:[#allocation4 + $0x2c0] sm:$0xff]
    %v2665 = vld [vmem:[#allocation4 + $0x2c8] sm:$0xff]
    %v2666 = vld [vmem:[#allocation4 + $0x2d0] sm:$0xff]
    %v2667 = vld [vmem:[#allocation4 + $0x2d8] sm:$0xff]
    %v2668 = vld [vmem:[#allocation4 + $0x2e0] sm:$0xff]
    %v2669 = vld [vmem:[#allocation4 + $0x2e8] sm:$0xff]
    %v2670 = vld [vmem:[#allocation4 + $0x2f0] sm:$0xff]
    %v2671 = vld [vmem:[#allocation4 + $0x2f8] sm:$0xff]
    %v2672 = vld [vmem:[#allocation4 + $0x300] sm:$0xff]
    %v2673 = vld [vmem:[#allocation4 + $0x308] sm:$0xff]
    %v2674 = vld [vmem:[#allocation4 + $0x310] sm:$0xff]
    %v2675 = vld [vmem:[#allocation4 + $0x318] sm:$0xff]
    %v2676 = vld [vmem:[#allocation4 + $0x320] sm:$0xff]
    %v2677 = vld [vmem:[#allocation4 + $0x328] sm:$0xff]
    %v2678 = vld [vmem:[#allocation4 + $0x330] sm:$0xff]
    %v2679 = vld [vmem:[#allocation4 + $0x338] sm:$0xff]
    %v2680 = vld [vmem:[#allocation4 + $0x340] sm:$0xff]
    %v2681 = vld [vmem:[#allocation4 + $0x348] sm:$0xff]
    %v2682 = vld [vmem:[#allocation4 + $0x350] sm:$0xff]
    %v2683 = vld [vmem:[#allocation4 + $0x358] sm:$0xff]
    %v2684 = vld [vmem:[#allocation4 + $0x360] sm:$0xff]
    %v2685 = vld [vmem:[#allocation4 + $0x368] sm:$0xff]
    %v2686 = vld [vmem:[#allocation4 + $0x370] sm:$0xff]
    %v2687 = vld [vmem:[#allocation4 + $0x378] sm:$0xff]
    %v2688 = vld [vmem:[#allocation4 + $0x380] sm:$0xff]
    %v2689 = vld [vmem:[#allocation4 + $0x388] sm:$0xff]
    %v2690 = vld [vmem:[#allocation4 + $0x390] sm:$0xff]
    %v2691 = vld [vmem:[#allocation4 + $0x398] sm:$0xff]
    %v2692 = vld [vmem:[#allocation4 + $0x3a0] sm:$0xff]
    %v2693 = vld [vmem:[#allocation4 + $0x3a8] sm:$0xff]
    %v2694 = vld [vmem:[#allocation4 + $0x3b0] sm:$0xff]
    %v2695 = vld [vmem:[#allocation4 + $0x3b8] sm:$0xff]
    %v2696 = vld [vmem:[#allocation4 + $0x3c0] sm:$0xff]
    %v2697 = vld [vmem:[#allocation4 + $0x3c8] sm:$0xff]
    %v2698 = vld [vmem:[#allocation4 + $0x3d0] sm:$0xff]
    %v2699 = vld [vmem:[#allocation4 + $0x3d8] sm:$0xff]
    %v2700 = vld [vmem:[#allocation4 + $0x3e0] sm:$0xff]
    %v2701 = vld [vmem:[#allocation4 + $0x3e8] sm:$0xff]
    %v2702 = vld [vmem:[#allocation4 + $0x3f0] sm:$0xff]
    %v2703 = vld [vmem:[#allocation4 + $0x3f8] sm:$0xff]
    %v2704 = vld [vmem:[#allocation4 + $0x400] sm:$0xff]
    %v2705 = vld [vmem:[#allocation4 + $0x408] sm:$0xff]
    %v2706 = vld [vmem:[#allocation4 + $0x410] sm:$0xff]
    %v2707 = vld [vmem:[#allocation4 + $0x418] sm:$0xff]
    %v2708 = vld [vmem:[#allocation4 + $0x420] sm:$0xff]
    %v2709 = vld [vmem:[#allocation4 + $0x428] sm:$0xff]
    %v2710 = vld [vmem:[#allocation4 + $0x430] sm:$0xff]
    %v2711 = vld [vmem:[#allocation4 + $0x438] sm:$0xff]
    %v2712 = vld [vmem:[#allocation4 + $0x440] sm:$0xff]
    %v2713 = vld [vmem:[#allocation4 + $0x448] sm:$0xff]
    %v2714 = vld [vmem:[#allocation4 + $0x450] sm:$0xff]
    %v2715 = vld [vmem:[#allocation4 + $0x458] sm:$0xff]
    %v2716 = vld [vmem:[#allocation4 + $0x460] sm:$0xff]
    %v2717 = vld [vmem:[#allocation4 + $0x468] sm:$0xff]
    %v2718 = vld [vmem:[#allocation4 + $0x470] sm:$0xff]
    %v2719 = vld [vmem:[#allocation4 + $0x478] sm:$0xff]
    %v2720 = vld [vmem:[#allocation4 + $0x480] sm:$0xff]
    %v2721 = vld [vmem:[#allocation4 + $0x488] sm:$0xff]
    %v2722 = vld [vmem:[#allocation4 + $0x490] sm:$0xff]
    %v2723 = vld [vmem:[#allocation4 + $0x498] sm:$0xff]
    %v2724 = vld [vmem:[#allocation4 + $0x4a0] sm:$0xff]
    %v2725 = vld [vmem:[#allocation4 + $0x4a8] sm:$0xff]
    %v2726 = vld [vmem:[#allocation4 + $0x4b0] sm:$0xff]
    %v2727 = vld [vmem:[#allocation4 + $0x4b8] sm:$0xff]
    %v2728 = vld [vmem:[#allocation4 + $0x4c0] sm:$0xff]
    %v2729 = vld [vmem:[#allocation4 + $0x4c8] sm:$0xff]
    %v2730 = vld [vmem:[#allocation4 + $0x4d0] sm:$0xff]
    %v2731 = vld [vmem:[#allocation4 + $0x4d8] sm:$0xff]
    %v2732 = vld [vmem:[#allocation4 + $0x4e0] sm:$0xff]
    %v2733 = vld [vmem:[#allocation4 + $0x4e8] sm:$0xff]
    %v2734 = vld [vmem:[#allocation4 + $0x4f0] sm:$0xff]
    %v2735 = vld [vmem:[#allocation4 + $0x4f8] sm:$0xff]
    %v2736 = vld [vmem:[#allocation4 + $0x500] sm:$0xff]
    %v2737 = vld [vmem:[#allocation4 + $0x508] sm:$0xff]
    %v2738 = vld [vmem:[#allocation4 + $0x510] sm:$0xff]
    %v2739 = vld [vmem:[#allocation4 + $0x518] sm:$0xff]
    %v2740 = vld [vmem:[#allocation4 + $0x520] sm:$0xff]
    %v2741 = vld [vmem:[#allocation4 + $0x528] sm:$0xff]
    %v2742 = vld [vmem:[#allocation4 + $0x530] sm:$0xff]
    %v2743 = vld [vmem:[#allocation4 + $0x538] sm:$0xff]
    %v2744 = vld [vmem:[#allocation4 + $0x540] sm:$0xff]
    %v2745 = vld [vmem:[#allocation4 + $0x548] sm:$0xff]
    %v2746 = vld [vmem:[#allocation4 + $0x550] sm:$0xff]
    %v2747 = vld [vmem:[#allocation4 + $0x558] sm:$0xff]
    %v2748 = vld [vmem:[#allocation4 + $0x560] sm:$0xff]
    %v2749 = vld [vmem:[#allocation4 + $0x568] sm:$0xff]
    %v2750 = vld [vmem:[#allocation4 + $0x570] sm:$0xff]
    %v2751 = vld [vmem:[#allocation4 + $0x578] sm:$0xff]
    %v2752 = vld [vmem:[#allocation4 + $0x580] sm:$0xff]
    %v2753 = vld [vmem:[#allocation4 + $0x588] sm:$0xff]
    %v2754 = vld [vmem:[#allocation4 + $0x590] sm:$0xff]
    %v2755 = vld [vmem:[#allocation4 + $0x598] sm:$0xff]
    %v2756 = vld [vmem:[#allocation4 + $0x5a0] sm:$0xff]
    %v2757 = vld [vmem:[#allocation4 + $0x5a8] sm:$0xff]
    %v2758 = vld [vmem:[#allocation4 + $0x5b0] sm:$0xff]
    %v2759 = vld [vmem:[#allocation4 + $0x5b8] sm:$0xff]
    %v2760 = vld [vmem:[#allocation4 + $0x5c0] sm:$0xff]
    %v2761 = vld [vmem:[#allocation4 + $0x5c8] sm:$0xff]
    %v2762 = vld [vmem:[#allocation4 + $0x5d0] sm:$0xff]
    %v2763 = vld [vmem:[#allocation4 + $0x5d8] sm:$0xff]
    %v2764 = vld [vmem:[#allocation4 + $0x5e0] sm:$0xff]
    %v2765 = vld [vmem:[#allocation4 + $0x5e8] sm:$0xff]
    %v2766 = vld [vmem:[#allocation4 + $0x5f0] sm:$0xff]
    %v2767 = vld [vmem:[#allocation4 + $0x5f8] sm:$0xff]
    %v2768 = vld [vmem:[#allocation4 + $0x600] sm:$0xff]
    %v2769 = vld [vmem:[#allocation4 + $0x608] sm:$0xff]
    %v2770 = vld [vmem:[#allocation4 + $0x610] sm:$0xff]
    %v2771 = vld [vmem:[#allocation4 + $0x618] sm:$0xff]
    %v2772 = vld [vmem:[#allocation4 + $0x620] sm:$0xff]
    %v2773 = vld [vmem:[#allocation4 + $0x628] sm:$0xff]
    %v2774 = vld [vmem:[#allocation4 + $0x630] sm:$0xff]
    %v2775 = vld [vmem:[#allocation4 + $0x638] sm:$0xff]
    %v2776 = vld [vmem:[#allocation4 + $0x640] sm:$0xff]
    %v2777 = vld [vmem:[#allocation4 + $0x648] sm:$0xff]
    %v2778 = vld [vmem:[#allocation4 + $0x650] sm:$0xff]
    %v2779 = vld [vmem:[#allocation4 + $0x658] sm:$0xff]
    %v2780 = vld [vmem:[#allocation4 + $0x660] sm:$0xff]
    %v2781 = vld [vmem:[#allocation4 + $0x668] sm:$0xff]
    %v2782 = vld [vmem:[#allocation4 + $0x670] sm:$0xff]
    %v2783 = vld [vmem:[#allocation4 + $0x678] sm:$0xff]
    %v2784 = vld [vmem:[#allocation4 + $0x680] sm:$0xff]
    %v2785 = vld [vmem:[#allocation4 + $0x688] sm:$0xff]
    %v2786 = vld [vmem:[#allocation4 + $0x690] sm:$0xff]
    %v2787 = vld [vmem:[#allocation4 + $0x698] sm:$0xff]
    %v2788 = vld [vmem:[#allocation4 + $0x6a0] sm:$0xff]
    %v2789 = vld [vmem:[#allocation4 + $0x6a8] sm:$0xff]
    %v2790 = vld [vmem:[#allocation4 + $0x6b0] sm:$0xff]
    %v2791 = vld [vmem:[#allocation4 + $0x6b8] sm:$0xff]
    %v2792 = vld [vmem:[#allocation4 + $0x6c0] sm:$0xff]
    %v2793 = vld [vmem:[#allocation4 + $0x6c8] sm:$0xff]
    %v2794 = vld [vmem:[#allocation4 + $0x6d0] sm:$0xff]
    %v2795 = vld [vmem:[#allocation4 + $0x6d8] sm:$0xff]
    %v2796 = vld [vmem:[#allocation4 + $0x6e0] sm:$0xff]
    %v2797 = vld [vmem:[#allocation4 + $0x6e8] sm:$0xff]
    %v2798 = vld [vmem:[#allocation4 + $0x6f0] sm:$0xff]
    %v2799 = vld [vmem:[#allocation4 + $0x6f8] sm:$0xff]
    %v2800 = vld [vmem:[#allocation4 + $0x700] sm:$0xff]
    %v2801 = vld [vmem:[#allocation4 + $0x708] sm:$0xff]
    %v2802 = vld [vmem:[#allocation4 + $0x710] sm:$0xff]
    %v2803 = vld [vmem:[#allocation4 + $0x718] sm:$0xff]
    %v2804 = vld [vmem:[#allocation4 + $0x720] sm:$0xff]
    %v2805 = vld [vmem:[#allocation4 + $0x728] sm:$0xff]
    %v2806 = vld [vmem:[#allocation4 + $0x730] sm:$0xff]
    %v2807 = vld [vmem:[#allocation4 + $0x738] sm:$0xff]
    %v2808 = vld [vmem:[#allocation4 + $0x740] sm:$0xff]
    %v2809 = vld [vmem:[#allocation4 + $0x748] sm:$0xff]
    %v2810 = vld [vmem:[#allocation4 + $0x750] sm:$0xff]
    %v2811 = vld [vmem:[#allocation4 + $0x758] sm:$0xff]
    %v2812 = vld [vmem:[#allocation4 + $0x760] sm:$0xff]
    %v2813 = vld [vmem:[#allocation4 + $0x768] sm:$0xff]
    %v2814 = vld [vmem:[#allocation4 + $0x770] sm:$0xff]
    %v2815 = vld [vmem:[#allocation4 + $0x778] sm:$0xff]
    %v2816 = vld [vmem:[#allocation4 + $0x780] sm:$0xff]
    %v2817 = vld [vmem:[#allocation4 + $0x788] sm:$0xff]
    %v2818 = vld [vmem:[#allocation4 + $0x790] sm:$0xff]
    %v2819 = vld [vmem:[#allocation4 + $0x798] sm:$0xff]
    %v2820 = vld [vmem:[#allocation4 + $0x7a0] sm:$0xff]
    %v2821 = vld [vmem:[#allocation4 + $0x7a8] sm:$0xff]
    %v2822 = vld [vmem:[#allocation4 + $0x7b0] sm:$0xff]
    %v2823 = vld [vmem:[#allocation4 + $0x7b8] sm:$0xff]
    %v2824 = vld [vmem:[#allocation4 + $0x7c0] sm:$0xff]
    %v2825 = vld [vmem:[#allocation4 + $0x7c8] sm:$0xff]
    %v2826 = vld [vmem:[#allocation4 + $0x7d0] sm:$0xff]
    %v2827 = vld [vmem:[#allocation4 + $0x7d8] sm:$0xff]
    %v2828 = vld [vmem:[#allocation4 + $0x7e0] sm:$0xff]
    %v2829 = vld [vmem:[#allocation4 + $0x7e8] sm:$0xff]
    %v2830 = vld [vmem:[#allocation4 + $0x7f0] sm:$0xff]
    %v2831 = vld [vmem:[#allocation4 + $0x7f8] sm:$0xff]
    %2832 = vmatprep.subr.bf16.mxu0 %v2577
    %2833 = vmatpush1.bf16.msra.mxu0 %v2576
    %2834 = vmatprep.subr.bf16.mxu0 %v2585
    %2835 = vmatpush1.bf16.msra.mxu0 %v2584
    %2836 = vmatprep.subr.bf16.mxu0 %v2593
    %2837 = vmatpush1.bf16.msra.mxu0 %v2592
    %2838 = vmatprep.subr.bf16.mxu0 %v2601
    %2839 = vmatpush1.bf16.msra.mxu0 %v2600
    %2840 = vmatprep.subr.bf16.mxu0 %v2609
    %2841 = vmatpush1.bf16.msra.mxu0 %v2608
    %2842 = vmatprep.subr.bf16.mxu0 %v2617
    %2843 = vmatpush1.bf16.msra.mxu0 %v2616
    %2844 = vmatprep.subr.bf16.mxu0 %v2625
    %2845 = vmatpush1.bf16.msra.mxu0 %v2624
    %2846 = vmatprep.subr.bf16.mxu0 %v2633
    %2847 = vmatpush1.bf16.msra.mxu0 %v2632
    %2848 = vmatprep.subr.bf16.mxu0 %v2641
    %2849 = vmatpush1.bf16.msra.mxu0 %v2640
    %2850 = vmatprep.subr.bf16.mxu0 %v2649
    %2851 = vmatpush1.bf16.msra.mxu0 %v2648
    %2852 = vmatprep.subr.bf16.mxu0 %v2657
    %2853 = vmatpush1.bf16.msra.mxu0 %v2656
    %2854 = vmatprep.subr.bf16.mxu0 %v2665
    %2855 = vmatpush1.bf16.msra.mxu0 %v2664
    %2856 = vmatprep.subr.bf16.mxu0 %v2673
    %2857 = vmatpush1.bf16.msra.mxu0 %v2672
    %2858 = vmatprep.subr.bf16.mxu0 %v2681
    %2859 = vmatpush1.bf16.msra.mxu0 %v2680
    %2860 = vmatprep.subr.bf16.mxu0 %v2689
    %2861 = vmatpush1.bf16.msra.mxu0 %v2688
    %2862 = vmatprep.subr.bf16.mxu0 %v2697
    %2863 = vmatpush1.bf16.msra.mxu0 %v2696
    %2864 = vmatprep.mubr.bf16.mxu0 %v2513
    %2865 = vmatmul.mubr.bf16.gmra.mrb[0].mxu0 %v2512
    %v2866 = vpop.f32.mrb[0].mxu0
    %v2867 = vadd.f32 0.0, %v2866
    %v2868 = vpop.f32.mrb[0].mxu0
    %v2869 = vadd.f32 0.0, %v2868
    %v2870 = vpop.f32.mrb[0].mxu0
    %v2871 = vadd.f32 0.0, %v2870
    %v2872 = vpop.f32.mrb[0].mxu0
    %v2873 = vadd.f32 0.0, %v2872
    %2874 = vmatprep.mubr.bf16.mxu0 %v2517
    %2875 = vmatmul.mubr.bf16.gmra.mrb[0].mxu0 %v2516
    %v2876 = vpop.f32.mrb[0].mxu0
    %v2877 = vadd.f32 0.0, %v2876
    %v2878 = vpop.f32.mrb[0].mxu0
    %v2879 = vadd.f32 0.0, %v2878
    %v2880 = vpop.f32.mrb[0].mxu0
    %v2881 = vadd.f32 0.0, %v2880
    %v2882 = vpop.f32.mrb[0].mxu0
    %v2883 = vadd.f32 0.0, %v2882
    %2884 = vmatprep.mubr.bf16.mxu0 %v2521
    %2885 = vmatmul.mubr.bf16.gmra.mrb[0].mxu0 %v2520
    %v2886 = vpop.f32.mrb[0].mxu0
    %v2887 = vadd.f32 0.0, %v2886
    %v2888 = vpop.f32.mrb[0].mxu0
    %v2889 = vadd.f32 0.0, %v2888
    %v2890 = vpop.f32.mrb[0].mxu0
    %v2891 = vadd.f32 0.0, %v2890
    %v2892 = vpop.f32.mrb[0].mxu0
    %v2893 = vadd.f32 0.0, %v2892
    %2894 = vmatprep.mubr.bf16.mxu0 %v2525
    %2895 = vmatmul.mubr.bf16.gmra.mrb[0].mxu0 %v2524
    %v2896 = vpop.f32.mrb[0].mxu0
    %v2897 = vadd.f32 0.0, %v2896
    %v2898 = vpop.f32.mrb[0].mxu0
    %v2899 = vadd.f32 0.0, %v2898
    %v2900 = vpop.f32.mrb[0].mxu0
    %v2901 = vadd.f32 0.0, %v2900
    %v2902 = vpop.f32.mrb[0].mxu0
    %v2903 = vadd.f32 0.0, %v2902
    %2904 = vmatprep.mubr.bf16.mxu0 %v2529
    %2905 = vmatmul.mubr.bf16.gmra.mrb[0].mxu0 %v2528
    %v2906 = vpop.f32.mrb[0].mxu0
    %v2907 = vadd.f32 0.0, %v2906
    %v2908 = vpop.f32.mrb[0].mxu0
    %v2909 = vadd.f32 0.0, %v2908
    %v2910 = vpop.f32.mrb[0].mxu0
    %v2911 = vadd.f32 0.0, %v2910
    %v2912 = vpop.f32.mrb[0].mxu0
    %v2913 = vadd.f32 0.0, %v2912
    %2914 = vmatprep.mubr.bf16.mxu0 %v2533
    %2915 = vmatmul.mubr.bf16.gmra.mrb[0].mxu0 %v2532
    %v2916 = vpop.f32.mrb[0].mxu0
    %v2917 = vadd.f32 0.0, %v2916
    %v2918 = vpop.f32.mrb[0].mxu0
    %v2919 = vadd.f32 0.0, %v2918
    %v2920 = vpop.f32.mrb[0].mxu0
    %v2921 = vadd.f32 0.0, %v2920
    %v2922 = vpop.f32.mrb[0].mxu0
    %v2923 = vadd.f32 0.0, %v2922
    %2924 = vmatprep.mubr.bf16.mxu0 %v2537
    %2925 = vmatmul.mubr.bf16.gmra.mrb[0].mxu0 %v2536
    %v2926 = vpop.f32.mrb[0].mxu0
    %v2927 = vadd.f32 0.0, %v2926
    %v2928 = vpop.f32.mrb[0].mxu0
    %v2929 = vadd.f32 0.0, %v2928
    %v2930 = vpop.f32.mrb[0].mxu0
    %v2931 = vadd.f32 0.0, %v2930
    %v2932 = vpop.f32.mrb[0].mxu0
    %v2933 = vadd.f32 0.0, %v2932
    %2934 = vmatprep.mubr.bf16.mxu0 %v2541
    %2935 = vmatmul.mubr.bf16.gmra.mrb[0].mxu0 %v2540
    %v2936 = vpop.f32.mrb[0].mxu0
    %v2937 = vadd.f32 0.0, %v2936
    %v2938 = vpop.f32.mrb[0].mxu0
    %v2939 = vadd.f32 0.0, %v2938
    %v2940 = vpop.f32.mrb[0].mxu0
    %v2941 = vadd.f32 0.0, %v2940
    %v2942 = vpop.f32.mrb[0].mxu0
    %v2943 = vadd.f32 0.0, %v2942
    %2944 = vmatprep.mubr.bf16.mxu0 %v2545
    %2945 = vmatmul.mubr.bf16.gmra.mrb[0].mxu0 %v2544
    %v2946 = vpop.f32.mrb[0].mxu0
    %v2947 = vadd.f32 0.0, %v2946
    %v2948 = vpop.f32.mrb[0].mxu0
    %v2949 = vadd.f32 0.0, %v2948
    %v2950 = vpop.f32.mrb[0].mxu0
    %v2951 = vadd.f32 0.0, %v2950
    %v2952 = vpop.f32.mrb[0].mxu0
    %v2953 = vadd.f32 0.0, %v2952
    %2954 = vmatprep.mubr.bf16.mxu0 %v2549
    %2955 = vmatmul.mubr.bf16.gmra.mrb[0].mxu0 %v2548
    %v2956 = vpop.f32.mrb[0].mxu0
    %v2957 = vadd.f32 0.0, %v2956
    %v2958 = vpop.f32.mrb[0].mxu0
    %v2959 = vadd.f32 0.0, %v2958
    %v2960 = vpop.f32.mrb[0].mxu0
    %v2961 = vadd.f32 0.0, %v2960
    %v2962 = vpop.f32.mrb[0].mxu0
    %v2963 = vadd.f32 0.0, %v2962
    %2964 = vmatprep.mubr.bf16.mxu0 %v2553
    %2965 = vmatmul.mubr.bf16.gmra.mrb[0].mxu0 %v2552
    %v2966 = vpop.f32.mrb[0].mxu0
    %v2967 = vadd.f32 0.0, %v2966
    %v2968 = vpop.f32.mrb[0].mxu0
    %v2969 = vadd.f32 0.0, %v2968
    %v2970 = vpop.f32.mrb[0].mxu0
    %v2971 = vadd.f32 0.0, %v2970
    %v2972 = vpop.f32.mrb[0].mxu0
    %v2973 = vadd.f32 0.0, %v2972
    %2974 = vmatprep.mubr.bf16.mxu0 %v2557
    %2975 = vmatmul.mubr.bf16.gmra.mrb[0].mxu0 %v2556
    %v2976 = vpop.f32.mrb[0].mxu0
    %v2977 = vadd.f32 0.0, %v2976
    %v2978 = vpop.f32.mrb[0].mxu0
    %v2979 = vadd.f32 0.0, %v2978
    %v2980 = vpop.f32.mrb[0].mxu0
    %v2981 = vadd.f32 0.0, %v2980
    %v2982 = vpop.f32.mrb[0].mxu0
    %v2983 = vadd.f32 0.0, %v2982
    %2984 = vmatprep.mubr.bf16.mxu0 %v2561
    %2985 = vmatmul.mubr.bf16.gmra.mrb[0].mxu0 %v2560
    %v2986 = vpop.f32.mrb[0].mxu0
    %v2987 = vadd.f32 0.0, %v2986
    %v2988 = vpop.f32.mrb[0].mxu0
    %v2989 = vadd.f32 0.0, %v2988
    %v2990 = vpop.f32.mrb[0].mxu0
    %v2991 = vadd.f32 0.0, %v2990
    %v2992 = vpop.f32.mrb[0].mxu0
    %v2993 = vadd.f32 0.0, %v2992
    %2994 = vmatprep.mubr.bf16.mxu0 %v2565
    %2995 = vmatmul.mubr.bf16.gmra.mrb[0].mxu0 %v2564
    %v2996 = vpop.f32.mrb[0].mxu0
    %v2997 = vadd.f32 0.0, %v2996
    %v2998 = vpop.f32.mrb[0].mxu0
    %v2999 = vadd.f32 0.0, %v2998
    %v3000 = vpop.f32.mrb[0].mxu0
    %v3001 = vadd.f32 0.0, %v3000
    %v3002 = vpop.f32.mrb[0].mxu0
    %v3003 = vadd.f32 0.0, %v3002
    %3004 = vmatprep.mubr.bf16.mxu0 %v2569
    %3005 = vmatmul.mubr.bf16.gmra.mrb[0].mxu0 %v2568
    %v3006 = vpop.f32.mrb[0].mxu0
    %v3007 = vadd.f32 0.0, %v3006
    %v3008 = vpop.f32.mrb[0].mxu0
    %v3009 = vadd.f32 0.0, %v3008
    %v3010 = vpop.f32.mrb[0].mxu0
    %v3011 = vadd.f32 0.0, %v3010
    %v3012 = vpop.f32.mrb[0].mxu0
    %v3013 = vadd.f32 0.0, %v3012
    %3014 = vmatprep.mubr.bf16.mxu0 %v2573
    %3015 = vmatmul.mubr.bf16.gmra.mrb[0].mxu0 %v2572
    %v3016 = vpop.f32.mrb[0].mxu0
    %v3017 = vadd.f32 0.0, %v3016
    %v3018 = vpop.f32.mrb[0].mxu0
    %v3019 = vadd.f32 0.0, %v3018
    %v3020 = vpop.f32.mrb[0].mxu0
    %v3021 = vadd.f32 0.0, %v3020
    %v3022 = vpop.f32.mrb[0].mxu0
    %v3023 = vadd.f32 0.0, %v3022
    %3024 = vdwg.mxu0
    %3025 = vmatprep.subr.bf16.mxu0 %v2705
    %3026 = vmatpush1.bf16.msra.mxu0 %v2704
    %3027 = vmatprep.subr.bf16.mxu0 %v2713
    %3028 = vmatpush1.bf16.msra.mxu0 %v2712
    %3029 = vmatprep.subr.bf16.mxu0 %v2721
    %3030 = vmatpush1.bf16.msra.mxu0 %v2720
    %3031 = vmatprep.subr.bf16.mxu0 %v2729
    %3032 = vmatpush1.bf16.msra.mxu0 %v2728
    %3033 = vmatprep.subr.bf16.mxu0 %v2737
    %3034 = vmatpush1.bf16.msra.mxu0 %v2736
    %3035 = vmatprep.subr.bf16.mxu0 %v2745
    %3036 = vmatpush1.bf16.msra.mxu0 %v2744
    %3037 = vmatprep.subr.bf16.mxu0 %v2753
    %3038 = vmatpush1.bf16.msra.mxu0 %v2752
    %3039 = vmatprep.subr.bf16.mxu0 %v2761
    %3040 = vmatpush1.bf16.msra.mxu0 %v2760
    %3041 = vmatprep.subr.bf16.mxu0 %v2769
    %3042 = vmatpush1.bf16.msra.mxu0 %v2768
    %3043 = vmatprep.subr.bf16.mxu0 %v2777
    %3044 = vmatpush1.bf16.msra.mxu0 %v2776
    %3045 = vmatprep.subr.bf16.mxu0 %v2785
    %3046 = vmatpush1.bf16.msra.mxu0 %v2784
    %3047 = vmatprep.subr.bf16.mxu0 %v2793
    %3048 = vmatpush1.bf16.msra.mxu0 %v2792
    %3049 = vmatprep.subr.bf16.mxu0 %v2801
    %3050 = vmatpush1.bf16.msra.mxu0 %v2800
    %3051 = vmatprep.subr.bf16.mxu0 %v2809
    %3052 = vmatpush1.bf16.msra.mxu0 %v2808
    %3053 = vmatprep.subr.bf16.mxu0 %v2817
    %3054 = vmatpush1.bf16.msra.mxu0 %v2816
    %3055 = vmatprep.subr.bf16.mxu0 %v2825
    %3056 = vmatpush1.bf16.msra.mxu0 %v2824
    %3057 = vmatprep.mubr.bf16.mxu0 %v2515
    %3058 = vmatmul.mubr.bf16.gmra.mrb[0].mxu0 %v2514
    %v3059 = vpop.f32.mrb[0].mxu0
    %v3060 = vadd.f32 %v2867, %v3059
    %v3061 = vpop.f32.mrb[0].mxu0
    %v3062 = vadd.f32 %v2869, %v3061
    %v3063 = vpop.f32.mrb[0].mxu0
    %v3064 = vadd.f32 %v2871, %v3063
    %v3065 = vpop.f32.mrb[0].mxu0
    %v3066 = vadd.f32 %v2873, %v3065
    %3067 = vmatprep.mubr.bf16.mxu0 %v2519
    %3068 = vmatmul.mubr.bf16.gmra.mrb[0].mxu0 %v2518
    %v3069 = vpop.f32.mrb[0].mxu0
    %v3070 = vadd.f32 %v2877, %v3069
    %v3071 = vpop.f32.mrb[0].mxu0
    %v3072 = vadd.f32 %v2879, %v3071
    %v3073 = vpop.f32.mrb[0].mxu0
    %v3074 = vadd.f32 %v2881, %v3073
    %v3075 = vpop.f32.mrb[0].mxu0
    %v3076 = vadd.f32 %v2883, %v3075
    %3077 = vmatprep.mubr.bf16.mxu0 %v2523
    %3078 = vmatmul.mubr.bf16.gmra.mrb[0].mxu0 %v2522
    %v3079 = vpop.f32.mrb[0].mxu0
    %v3080 = vadd.f32 %v2887, %v3079
    %v3081 = vpop.f32.mrb[0].mxu0
    %v3082 = vadd.f32 %v2889, %v3081
    %v3083 = vpop.f32.mrb[0].mxu0
    %v3084 = vadd.f32 %v2891, %v3083
    %v3085 = vpop.f32.mrb[0].mxu0
    %v3086 = vadd.f32 %v2893, %v3085
    %3087 = vmatprep.mubr.bf16.mxu0 %v2527
    %3088 = vmatmul.mubr.bf16.gmra.mrb[0].mxu0 %v2526
    %v3089 = vpop.f32.mrb[0].mxu0
    %v3090 = vadd.f32 %v2897, %v3089
    %v3091 = vpop.f32.mrb[0].mxu0
    %v3092 = vadd.f32 %v2899, %v3091
    %v3093 = vpop.f32.mrb[0].mxu0
    %v3094 = vadd.f32 %v2901, %v3093
    %v3095 = vpop.f32.mrb[0].mxu0
    %v3096 = vadd.f32 %v2903, %v3095
    %3097 = vmatprep.mubr.bf16.mxu0 %v2531
    %3098 = vmatmul.mubr.bf16.gmra.mrb[0].mxu0 %v2530
    %v3099 = vpop.f32.mrb[0].mxu0
    %v3100 = vadd.f32 %v2907, %v3099
    %v3101 = vpop.f32.mrb[0].mxu0
    %v3102 = vadd.f32 %v2909, %v3101
    %v3103 = vpop.f32.mrb[0].mxu0
    %v3104 = vadd.f32 %v2911, %v3103
    %v3105 = vpop.f32.mrb[0].mxu0
    %v3106 = vadd.f32 %v2913, %v3105
    %3107 = vmatprep.mubr.bf16.mxu0 %v2535
    %3108 = vmatmul.mubr.bf16.gmra.mrb[0].mxu0 %v2534
    %v3109 = vpop.f32.mrb[0].mxu0
    %v3110 = vadd.f32 %v2917, %v3109
    %v3111 = vpop.f32.mrb[0].mxu0
    %v3112 = vadd.f32 %v2919, %v3111
    %v3113 = vpop.f32.mrb[0].mxu0
    %v3114 = vadd.f32 %v2921, %v3113
    %v3115 = vpop.f32.mrb[0].mxu0
    %v3116 = vadd.f32 %v2923, %v3115
    %3117 = vmatprep.mubr.bf16.mxu0 %v2539
    %3118 = vmatmul.mubr.bf16.gmra.mrb[0].mxu0 %v2538
    %v3119 = vpop.f32.mrb[0].mxu0
    %v3120 = vadd.f32 %v2927, %v3119
    %v3121 = vpop.f32.mrb[0].mxu0
    %v3122 = vadd.f32 %v2929, %v3121
    %v3123 = vpop.f32.mrb[0].mxu0
    %v3124 = vadd.f32 %v2931, %v3123
    %v3125 = vpop.f32.mrb[0].mxu0
    %v3126 = vadd.f32 %v2933, %v3125
    %3127 = vmatprep.mubr.bf16.mxu0 %v2543
    %3128 = vmatmul.mubr.bf16.gmra.mrb[0].mxu0 %v2542
    %v3129 = vpop.f32.mrb[0].mxu0
    %v3130 = vadd.f32 %v2937, %v3129
    %v3131 = vpop.f32.mrb[0].mxu0
    %v3132 = vadd.f32 %v2939, %v3131
    %v3133 = vpop.f32.mrb[0].mxu0
    %v3134 = vadd.f32 %v2941, %v3133
    %v3135 = vpop.f32.mrb[0].mxu0
    %v3136 = vadd.f32 %v2943, %v3135
    %3137 = vmatprep.mubr.bf16.mxu0 %v2547
    %3138 = vmatmul.mubr.bf16.gmra.mrb[0].mxu0 %v2546
    %v3139 = vpop.f32.mrb[0].mxu0
    %v3140 = vadd.f32 %v2947, %v3139
    %v3141 = vpop.f32.mrb[0].mxu0
    %v3142 = vadd.f32 %v2949, %v3141
    %v3143 = vpop.f32.mrb[0].mxu0
    %v3144 = vadd.f32 %v2951, %v3143
    %v3145 = vpop.f32.mrb[0].mxu0
    %v3146 = vadd.f32 %v2953, %v3145
    %3147 = vmatprep.mubr.bf16.mxu0 %v2551
    %3148 = vmatmul.mubr.bf16.gmra.mrb[0].mxu0 %v2550
    %v3149 = vpop.f32.mrb[0].mxu0
    %v3150 = vadd.f32 %v2957, %v3149
    %v3151 = vpop.f32.mrb[0].mxu0
    %v3152 = vadd.f32 %v2959, %v3151
    %v3153 = vpop.f32.mrb[0].mxu0
    %v3154 = vadd.f32 %v2961, %v3153
    %v3155 = vpop.f32.mrb[0].mxu0
    %v3156 = vadd.f32 %v2963, %v3155
    %3157 = vmatprep.mubr.bf16.mxu0 %v2555
    %3158 = vmatmul.mubr.bf16.gmra.mrb[0].mxu0 %v2554
    %v3159 = vpop.f32.mrb[0].mxu0
    %v3160 = vadd.f32 %v2967, %v3159
    %v3161 = vpop.f32.mrb[0].mxu0
    %v3162 = vadd.f32 %v2969, %v3161
    %v3163 = vpop.f32.mrb[0].mxu0
    %v3164 = vadd.f32 %v2971, %v3163
    %v3165 = vpop.f32.mrb[0].mxu0
    %v3166 = vadd.f32 %v2973, %v3165
    %3167 = vmatprep.mubr.bf16.mxu0 %v2559
    %3168 = vmatmul.mubr.bf16.gmra.mrb[0].mxu0 %v2558
    %v3169 = vpop.f32.mrb[0].mxu0
    %v3170 = vadd.f32 %v2977, %v3169
    %v3171 = vpop.f32.mrb[0].mxu0
    %v3172 = vadd.f32 %v2979, %v3171
    %v3173 = vpop.f32.mrb[0].mxu0
    %v3174 = vadd.f32 %v2981, %v3173
    %v3175 = vpop.f32.mrb[0].mxu0
    %v3176 = vadd.f32 %v2983, %v3175
    %3177 = vmatprep.mubr.bf16.mxu0 %v2563
    %3178 = vmatmul.mubr.bf16.gmra.mrb[0].mxu0 %v2562
    %v3179 = vpop.f32.mrb[0].mxu0
    %v3180 = vadd.f32 %v2987, %v3179
    %v3181 = vpop.f32.mrb[0].mxu0
    %v3182 = vadd.f32 %v2989, %v3181
    %v3183 = vpop.f32.mrb[0].mxu0
    %v3184 = vadd.f32 %v2991, %v3183
    %v3185 = vpop.f32.mrb[0].mxu0
    %v3186 = vadd.f32 %v2993, %v3185
    %3187 = vmatprep.mubr.bf16.mxu0 %v2567
    %3188 = vmatmul.mubr.bf16.gmra.mrb[0].mxu0 %v2566
    %v3189 = vpop.f32.mrb[0].mxu0
    %v3190 = vadd.f32 %v2997, %v3189
    %v3191 = vpop.f32.mrb[0].mxu0
    %v3192 = vadd.f32 %v2999, %v3191
    %v3193 = vpop.f32.mrb[0].mxu0
    %v3194 = vadd.f32 %v3001, %v3193
    %v3195 = vpop.f32.mrb[0].mxu0
    %v3196 = vadd.f32 %v3003, %v3195
    %3197 = vmatprep.mubr.bf16.mxu0 %v2571
    %3198 = vmatmul.mubr.bf16.gmra.mrb[0].mxu0 %v2570
    %v3199 = vpop.f32.mrb[0].mxu0
    %v3200 = vadd.f32 %v3007, %v3199
    %v3201 = vpop.f32.mrb[0].mxu0
    %v3202 = vadd.f32 %v3009, %v3201
    %v3203 = vpop.f32.mrb[0].mxu0
    %v3204 = vadd.f32 %v3011, %v3203
    %v3205 = vpop.f32.mrb[0].mxu0
    %v3206 = vadd.f32 %v3013, %v3205
    %3207 = vmatprep.mubr.bf16.mxu0 %v2575
    %3208 = vmatmul.mubr.bf16.gmra.mrb[0].mxu0 %v2574
    %v3209 = vpop.f32.mrb[0].mxu0
    %v3210 = vadd.f32 %v3017, %v3209
    %v3211 = vpop.f32.mrb[0].mxu0
    %v3212 = vadd.f32 %v3019, %v3211
    %v3213 = vpop.f32.mrb[0].mxu0
    %v3214 = vadd.f32 %v3021, %v3213
    %v3215 = vpop.f32.mrb[0].mxu0
    %v3216 = vadd.f32 %v3023, %v3215
    %3217 = vdwg.mxu0
    %3218 = vmatprep.subr.bf16.mxu0 %v2579
    %3219 = vmatpush1.bf16.msra.mxu0 %v2578
    %3220 = vmatprep.subr.bf16.mxu0 %v2587
    %3221 = vmatpush1.bf16.msra.mxu0 %v2586
    %3222 = vmatprep.subr.bf16.mxu0 %v2595
    %3223 = vmatpush1.bf16.msra.mxu0 %v2594
    %3224 = vmatprep.subr.bf16.mxu0 %v2603
    %3225 = vmatpush1.bf16.msra.mxu0 %v2602
    %3226 = vmatprep.subr.bf16.mxu0 %v2611
    %3227 = vmatpush1.bf16.msra.mxu0 %v2610
    %3228 = vmatprep.subr.bf16.mxu0 %v2619
    %3229 = vmatpush1.bf16.msra.mxu0 %v2618
    %3230 = vmatprep.subr.bf16.mxu0 %v2627
    %3231 = vmatpush1.bf16.msra.mxu0 %v2626
    %3232 = vmatprep.subr.bf16.mxu0 %v2635
    %3233 = vmatpush1.bf16.msra.mxu0 %v2634
    %3234 = vmatprep.subr.bf16.mxu0 %v2643
    %3235 = vmatpush1.bf16.msra.mxu0 %v2642
    %3236 = vmatprep.subr.bf16.mxu0 %v2651
    %3237 = vmatpush1.bf16.msra.mxu0 %v2650
    %3238 = vmatprep.subr.bf16.mxu0 %v2659
    %3239 = vmatpush1.bf16.msra.mxu0 %v2658
    %3240 = vmatprep.subr.bf16.mxu0 %v2667
    %3241 = vmatpush1.bf16.msra.mxu0 %v2666
    %3242 = vmatprep.subr.bf16.mxu0 %v2675
    %3243 = vmatpush1.bf16.msra.mxu0 %v2674
    %3244 = vmatprep.subr.bf16.mxu0 %v2683
    %3245 = vmatpush1.bf16.msra.mxu0 %v2682
    %3246 = vmatprep.subr.bf16.mxu0 %v2691
    %3247 = vmatpush1.bf16.msra.mxu0 %v2690
    %3248 = vmatprep.subr.bf16.mxu0 %v2699
    %3249 = vmatpush1.bf16.msra.mxu0 %v2698
    %3250 = vmatprep.mubr.bf16.mxu0 %v2513
    %3251 = vmatmul.mubr.bf16.gmra.mrb[0].mxu0 %v2512
    %v3252 = vpop.f32.mrb[0].mxu0
    %v3253 = vadd.f32 0.0, %v3252
    %v3254 = vpop.f32.mrb[0].mxu0
    %v3255 = vadd.f32 0.0, %v3254
    %v3256 = vpop.f32.mrb[0].mxu0
    %v3257 = vadd.f32 0.0, %v3256
    %v3258 = vpop.f32.mrb[0].mxu0
    %v3259 = vadd.f32 0.0, %v3258
    %3260 = vmatprep.mubr.bf16.mxu0 %v2517
    %3261 = vmatmul.mubr.bf16.gmra.mrb[0].mxu0 %v2516
    %v3262 = vpop.f32.mrb[0].mxu0
    %v3263 = vadd.f32 0.0, %v3262
    %v3264 = vpop.f32.mrb[0].mxu0
    %v3265 = vadd.f32 0.0, %v3264
    %v3266 = vpop.f32.mrb[0].mxu0
    %v3267 = vadd.f32 0.0, %v3266
    %v3268 = vpop.f32.mrb[0].mxu0
    %v3269 = vadd.f32 0.0, %v3268
    %3270 = vmatprep.mubr.bf16.mxu0 %v2521
    %3271 = vmatmul.mubr.bf16.gmra.mrb[0].mxu0 %v2520
    %v3272 = vpop.f32.mrb[0].mxu0
    %v3273 = vadd.f32 0.0, %v3272
    %v3274 = vpop.f32.mrb[0].mxu0
    %v3275 = vadd.f32 0.0, %v3274
    %v3276 = vpop.f32.mrb[0].mxu0
    %v3277 = vadd.f32 0.0, %v3276
    %v3278 = vpop.f32.mrb[0].mxu0
    %v3279 = vadd.f32 0.0, %v3278
    %3280 = vmatprep.mubr.bf16.mxu0 %v2525
    %3281 = vmatmul.mubr.bf16.gmra.mrb[0].mxu0 %v2524
    %v3282 = vpop.f32.mrb[0].mxu0
    %v3283 = vadd.f32 0.0, %v3282
    %v3284 = vpop.f32.mrb[0].mxu0
    %v3285 = vadd.f32 0.0, %v3284
    %v3286 = vpop.f32.mrb[0].mxu0
    %v3287 = vadd.f32 0.0, %v3286
    %v3288 = vpop.f32.mrb[0].mxu0
    %v3289 = vadd.f32 0.0, %v3288
    %3290 = vmatprep.mubr.bf16.mxu0 %v2529
    %3291 = vmatmul.mubr.bf16.gmra.mrb[0].mxu0 %v2528
    %v3292 = vpop.f32.mrb[0].mxu0
    %v3293 = vadd.f32 0.0, %v3292
    %v3294 = vpop.f32.mrb[0].mxu0
    %v3295 = vadd.f32 0.0, %v3294
    %v3296 = vpop.f32.mrb[0].mxu0
    %v3297 = vadd.f32 0.0, %v3296
    %v3298 = vpop.f32.mrb[0].mxu0
    %v3299 = vadd.f32 0.0, %v3298
    %3300 = vmatprep.mubr.bf16.mxu0 %v2533
    %3301 = vmatmul.mubr.bf16.gmra.mrb[0].mxu0 %v2532
    %v3302 = vpop.f32.mrb[0].mxu0
    %v3303 = vadd.f32 0.0, %v3302
    %v3304 = vpop.f32.mrb[0].mxu0
    %v3305 = vadd.f32 0.0, %v3304
    %v3306 = vpop.f32.mrb[0].mxu0
    %v3307 = vadd.f32 0.0, %v3306
    %v3308 = vpop.f32.mrb[0].mxu0
    %v3309 = vadd.f32 0.0, %v3308
    %3310 = vmatprep.mubr.bf16.mxu0 %v2537
    %3311 = vmatmul.mubr.bf16.gmra.mrb[0].mxu0 %v2536
    %v3312 = vpop.f32.mrb[0].mxu0
    %v3313 = vadd.f32 0.0, %v3312
    %v3314 = vpop.f32.mrb[0].mxu0
    %v3315 = vadd.f32 0.0, %v3314
    %v3316 = vpop.f32.mrb[0].mxu0
    %v3317 = vadd.f32 0.0, %v3316
    %v3318 = vpop.f32.mrb[0].mxu0
    %v3319 = vadd.f32 0.0, %v3318
    %3320 = vmatprep.mubr.bf16.mxu0 %v2541
    %3321 = vmatmul.mubr.bf16.gmra.mrb[0].mxu0 %v2540
    %v3322 = vpop.f32.mrb[0].mxu0
    %v3323 = vadd.f32 0.0, %v3322
    %v3324 = vpop.f32.mrb[0].mxu0
    %v3325 = vadd.f32 0.0, %v3324
    %v3326 = vpop.f32.mrb[0].mxu0
    %v3327 = vadd.f32 0.0, %v3326
    %v3328 = vpop.f32.mrb[0].mxu0
    %v3329 = vadd.f32 0.0, %v3328
    %3330 = vmatprep.mubr.bf16.mxu0 %v2545
    %3331 = vmatmul.mubr.bf16.gmra.mrb[0].mxu0 %v2544
    %v3332 = vpop.f32.mrb[0].mxu0
    %v3333 = vadd.f32 0.0, %v3332
    %v3334 = vpop.f32.mrb[0].mxu0
    %v3335 = vadd.f32 0.0, %v3334
    %v3336 = vpop.f32.mrb[0].mxu0
    %v3337 = vadd.f32 0.0, %v3336
    %v3338 = vpop.f32.mrb[0].mxu0
    %v3339 = vadd.f32 0.0, %v3338
    %3340 = vmatprep.mubr.bf16.mxu0 %v2549
    %3341 = vmatmul.mubr.bf16.gmra.mrb[0].mxu0 %v2548
    %v3342 = vpop.f32.mrb[0].mxu0
    %v3343 = vadd.f32 0.0, %v3342
    %v3344 = vpop.f32.mrb[0].mxu0
    %v3345 = vadd.f32 0.0, %v3344
    %v3346 = vpop.f32.mrb[0].mxu0
    %v3347 = vadd.f32 0.0, %v3346
    %v3348 = vpop.f32.mrb[0].mxu0
    %v3349 = vadd.f32 0.0, %v3348
    %3350 = vmatprep.mubr.bf16.mxu0 %v2553
    %3351 = vmatmul.mubr.bf16.gmra.mrb[0].mxu0 %v2552
    %v3352 = vpop.f32.mrb[0].mxu0
    %v3353 = vadd.f32 0.0, %v3352
    %v3354 = vpop.f32.mrb[0].mxu0
    %v3355 = vadd.f32 0.0, %v3354
    %v3356 = vpop.f32.mrb[0].mxu0
    %v3357 = vadd.f32 0.0, %v3356
    %v3358 = vpop.f32.mrb[0].mxu0
    %v3359 = vadd.f32 0.0, %v3358
    %3360 = vmatprep.mubr.bf16.mxu0 %v2557
    %3361 = vmatmul.mubr.bf16.gmra.mrb[0].mxu0 %v2556
    %v3362 = vpop.f32.mrb[0].mxu0
    %v3363 = vadd.f32 0.0, %v3362
    %v3364 = vpop.f32.mrb[0].mxu0
    %v3365 = vadd.f32 0.0, %v3364
    %v3366 = vpop.f32.mrb[0].mxu0
    %v3367 = vadd.f32 0.0, %v3366
    %v3368 = vpop.f32.mrb[0].mxu0
    %v3369 = vadd.f32 0.0, %v3368
    %3370 = vmatprep.mubr.bf16.mxu0 %v2561
    %3371 = vmatmul.mubr.bf16.gmra.mrb[0].mxu0 %v2560
    %v3372 = vpop.f32.mrb[0].mxu0
    %v3373 = vadd.f32 0.0, %v3372
    %v3374 = vpop.f32.mrb[0].mxu0
    %v3375 = vadd.f32 0.0, %v3374
    %v3376 = vpop.f32.mrb[0].mxu0
    %v3377 = vadd.f32 0.0, %v3376
    %v3378 = vpop.f32.mrb[0].mxu0
    %v3379 = vadd.f32 0.0, %v3378
    %3380 = vmatprep.mubr.bf16.mxu0 %v2565
    %3381 = vmatmul.mubr.bf16.gmra.mrb[0].mxu0 %v2564
    %v3382 = vpop.f32.mrb[0].mxu0
    %v3383 = vadd.f32 0.0, %v3382
    %v3384 = vpop.f32.mrb[0].mxu0
    %v3385 = vadd.f32 0.0, %v3384
    %v3386 = vpop.f32.mrb[0].mxu0
    %v3387 = vadd.f32 0.0, %v3386
    %v3388 = vpop.f32.mrb[0].mxu0
    %v3389 = vadd.f32 0.0, %v3388
    %3390 = vmatprep.mubr.bf16.mxu0 %v2569
    %3391 = vmatmul.mubr.bf16.gmra.mrb[0].mxu0 %v2568
    %v3392 = vpop.f32.mrb[0].mxu0
    %v3393 = vadd.f32 0.0, %v3392
    %v3394 = vpop.f32.mrb[0].mxu0
    %v3395 = vadd.f32 0.0, %v3394
    %v3396 = vpop.f32.mrb[0].mxu0
    %v3397 = vadd.f32 0.0, %v3396
    %v3398 = vpop.f32.mrb[0].mxu0
    %v3399 = vadd.f32 0.0, %v3398
    %3400 = vmatprep.mubr.bf16.mxu0 %v2573
    %3401 = vmatmul.mubr.bf16.gmra.mrb[0].mxu0 %v2572
    %v3402 = vpop.f32.mrb[0].mxu0
    %v3403 = vadd.f32 0.0, %v3402
    %v3404 = vpop.f32.mrb[0].mxu0
    %v3405 = vadd.f32 0.0, %v3404
    %v3406 = vpop.f32.mrb[0].mxu0
    %v3407 = vadd.f32 0.0, %v3406
    %v3408 = vpop.f32.mrb[0].mxu0
    %v3409 = vadd.f32 0.0, %v3408
    %3410 = vdwg.mxu0
    %3411 = vmatprep.subr.bf16.mxu0 %v2707
    %3412 = vmatpush1.bf16.msra.mxu0 %v2706
    %3413 = vmatprep.subr.bf16.mxu0 %v2715
    %3414 = vmatpush1.bf16.msra.mxu0 %v2714
    %3415 = vmatprep.subr.bf16.mxu0 %v2723
    %3416 = vmatpush1.bf16.msra.mxu0 %v2722
    %3417 = vmatprep.subr.bf16.mxu0 %v2731
    %3418 = vmatpush1.bf16.msra.mxu0 %v2730
    %3419 = vmatprep.subr.bf16.mxu0 %v2739
    %3420 = vmatpush1.bf16.msra.mxu0 %v2738
    %3421 = vmatprep.subr.bf16.mxu0 %v2747
    %3422 = vmatpush1.bf16.msra.mxu0 %v2746
    %3423 = vmatprep.subr.bf16.mxu0 %v2755
    %3424 = vmatpush1.bf16.msra.mxu0 %v2754
    %3425 = vmatprep.subr.bf16.mxu0 %v2763
    %3426 = vmatpush1.bf16.msra.mxu0 %v2762
    %3427 = vmatprep.subr.bf16.mxu0 %v2771
    %3428 = vmatpush1.bf16.msra.mxu0 %v2770
    %3429 = vmatprep.subr.bf16.mxu0 %v2779
    %3430 = vmatpush1.bf16.msra.mxu0 %v2778
    %3431 = vmatprep.subr.bf16.mxu0 %v2787
    %3432 = vmatpush1.bf16.msra.mxu0 %v2786
    %3433 = vmatprep.subr.bf16.mxu0 %v2795
    %3434 = vmatpush1.bf16.msra.mxu0 %v2794
    %3435 = vmatprep.subr.bf16.mxu0 %v2803
    %3436 = vmatpush1.bf16.msra.mxu0 %v2802
    %3437 = vmatprep.subr.bf16.mxu0 %v2811
    %3438 = vmatpush1.bf16.msra.mxu0 %v2810
    %3439 = vmatprep.subr.bf16.mxu0 %v2819
    %3440 = vmatpush1.bf16.msra.mxu0 %v2818
    %3441 = vmatprep.subr.bf16.mxu0 %v2827
    %3442 = vmatpush1.bf16.msra.mxu0 %v2826
    %3443 = vmatprep.mubr.bf16.mxu0 %v2515
    %3444 = vmatmul.mubr.bf16.gmra.mrb[0].mxu0 %v2514
    %v3445 = vpop.f32.mrb[0].mxu0
    %v3446 = vadd.f32 %v3253, %v3445
    %v3447 = vpop.f32.mrb[0].mxu0
    %v3448 = vadd.f32 %v3255, %v3447
    %v3449 = vpop.f32.mrb[0].mxu0
    %v3450 = vadd.f32 %v3257, %v3449
    %v3451 = vpop.f32.mrb[0].mxu0
    %v3452 = vadd.f32 %v3259, %v3451
    %3453 = vmatprep.mubr.bf16.mxu0 %v2519
    %3454 = vmatmul.mubr.bf16.gmra.mrb[0].mxu0 %v2518
    %v3455 = vpop.f32.mrb[0].mxu0
    %v3456 = vadd.f32 %v3263, %v3455
    %v3457 = vpop.f32.mrb[0].mxu0
    %v3458 = vadd.f32 %v3265, %v3457
    %v3459 = vpop.f32.mrb[0].mxu0
    %v3460 = vadd.f32 %v3267, %v3459
    %v3461 = vpop.f32.mrb[0].mxu0
    %v3462 = vadd.f32 %v3269, %v3461
    %3463 = vmatprep.mubr.bf16.mxu0 %v2523
    %3464 = vmatmul.mubr.bf16.gmra.mrb[0].mxu0 %v2522
    %v3465 = vpop.f32.mrb[0].mxu0
    %v3466 = vadd.f32 %v3273, %v3465
    %v3467 = vpop.f32.mrb[0].mxu0
    %v3468 = vadd.f32 %v3275, %v3467
    %v3469 = vpop.f32.mrb[0].mxu0
    %v3470 = vadd.f32 %v3277, %v3469
    %v3471 = vpop.f32.mrb[0].mxu0
    %v3472 = vadd.f32 %v3279, %v3471
    %3473 = vmatprep.mubr.bf16.mxu0 %v2527
    %3474 = vmatmul.mubr.bf16.gmra.mrb[0].mxu0 %v2526
    %v3475 = vpop.f32.mrb[0].mxu0
    %v3476 = vadd.f32 %v3283, %v3475
    %v3477 = vpop.f32.mrb[0].mxu0
    %v3478 = vadd.f32 %v3285, %v3477
    %v3479 = vpop.f32.mrb[0].mxu0
    %v3480 = vadd.f32 %v3287, %v3479
    %v3481 = vpop.f32.mrb[0].mxu0
    %v3482 = vadd.f32 %v3289, %v3481
    %3483 = vmatprep.mubr.bf16.mxu0 %v2531
    %3484 = vmatmul.mubr.bf16.gmra.mrb[0].mxu0 %v2530
    %v3485 = vpop.f32.mrb[0].mxu0
    %v3486 = vadd.f32 %v3293, %v3485
    %v3487 = vpop.f32.mrb[0].mxu0
    %v3488 = vadd.f32 %v3295, %v3487
    %v3489 = vpop.f32.mrb[0].mxu0
    %v3490 = vadd.f32 %v3297, %v3489
    %v3491 = vpop.f32.mrb[0].mxu0
    %v3492 = vadd.f32 %v3299, %v3491
    %3493 = vmatprep.mubr.bf16.mxu0 %v2535
    %3494 = vmatmul.mubr.bf16.gmra.mrb[0].mxu0 %v2534
    %v3495 = vpop.f32.mrb[0].mxu0
    %v3496 = vadd.f32 %v3303, %v3495
    %v3497 = vpop.f32.mrb[0].mxu0
    %v3498 = vadd.f32 %v3305, %v3497
    %v3499 = vpop.f32.mrb[0].mxu0
    %v3500 = vadd.f32 %v3307, %v3499
    %v3501 = vpop.f32.mrb[0].mxu0
    %v3502 = vadd.f32 %v3309, %v3501
    %3503 = vmatprep.mubr.bf16.mxu0 %v2539
    %3504 = vmatmul.mubr.bf16.gmra.mrb[0].mxu0 %v2538
    %v3505 = vpop.f32.mrb[0].mxu0
    %v3506 = vadd.f32 %v3313, %v3505
    %v3507 = vpop.f32.mrb[0].mxu0
    %v3508 = vadd.f32 %v3315, %v3507
    %v3509 = vpop.f32.mrb[0].mxu0
    %v3510 = vadd.f32 %v3317, %v3509
    %v3511 = vpop.f32.mrb[0].mxu0
    %v3512 = vadd.f32 %v3319, %v3511
    %3513 = vmatprep.mubr.bf16.mxu0 %v2543
    %3514 = vmatmul.mubr.bf16.gmra.mrb[0].mxu0 %v2542
    %v3515 = vpop.f32.mrb[0].mxu0
    %v3516 = vadd.f32 %v3323, %v3515
    %v3517 = vpop.f32.mrb[0].mxu0
    %v3518 = vadd.f32 %v3325, %v3517
    %v3519 = vpop.f32.mrb[0].mxu0
    %v3520 = vadd.f32 %v3327, %v3519
    %v3521 = vpop.f32.mrb[0].mxu0
    %v3522 = vadd.f32 %v3329, %v3521
    %3523 = vmatprep.mubr.bf16.mxu0 %v2547
    %3524 = vmatmul.mubr.bf16.gmra.mrb[0].mxu0 %v2546
    %v3525 = vpop.f32.mrb[0].mxu0
    %v3526 = vadd.f32 %v3333, %v3525
    %v3527 = vpop.f32.mrb[0].mxu0
    %v3528 = vadd.f32 %v3335, %v3527
    %v3529 = vpop.f32.mrb[0].mxu0
    %v3530 = vadd.f32 %v3337, %v3529
    %v3531 = vpop.f32.mrb[0].mxu0
    %v3532 = vadd.f32 %v3339, %v3531
    %3533 = vmatprep.mubr.bf16.mxu0 %v2551
    %3534 = vmatmul.mubr.bf16.gmra.mrb[0].mxu0 %v2550
    %v3535 = vpop.f32.mrb[0].mxu0
    %v3536 = vadd.f32 %v3343, %v3535
    %v3537 = vpop.f32.mrb[0].mxu0
    %v3538 = vadd.f32 %v3345, %v3537
    %v3539 = vpop.f32.mrb[0].mxu0
    %v3540 = vadd.f32 %v3347, %v3539
    %v3541 = vpop.f32.mrb[0].mxu0
    %v3542 = vadd.f32 %v3349, %v3541
    %3543 = vmatprep.mubr.bf16.mxu0 %v2555
    %3544 = vmatmul.mubr.bf16.gmra.mrb[0].mxu0 %v2554
    %v3545 = vpop.f32.mrb[0].mxu0
    %v3546 = vadd.f32 %v3353, %v3545
    %v3547 = vpop.f32.mrb[0].mxu0
    %v3548 = vadd.f32 %v3355, %v3547
    %v3549 = vpop.f32.mrb[0].mxu0
    %v3550 = vadd.f32 %v3357, %v3549
    %v3551 = vpop.f32.mrb[0].mxu0
    %v3552 = vadd.f32 %v3359, %v3551
    %3553 = vmatprep.mubr.bf16.mxu0 %v2559
    %3554 = vmatmul.mubr.bf16.gmra.mrb[0].mxu0 %v2558
    %v3555 = vpop.f32.mrb[0].mxu0
    %v3556 = vadd.f32 %v3363, %v3555
    %v3557 = vpop.f32.mrb[0].mxu0
    %v3558 = vadd.f32 %v3365, %v3557
    %v3559 = vpop.f32.mrb[0].mxu0
    %v3560 = vadd.f32 %v3367, %v3559
    %v3561 = vpop.f32.mrb[0].mxu0
    %v3562 = vadd.f32 %v3369, %v3561
    %3563 = vmatprep.mubr.bf16.mxu0 %v2563
    %3564 = vmatmul.mubr.bf16.gmra.mrb[0].mxu0 %v2562
    %v3565 = vpop.f32.mrb[0].mxu0
    %v3566 = vadd.f32 %v3373, %v3565
    %v3567 = vpop.f32.mrb[0].mxu0
    %v3568 = vadd.f32 %v3375, %v3567
    %v3569 = vpop.f32.mrb[0].mxu0
    %v3570 = vadd.f32 %v3377, %v3569
    %v3571 = vpop.f32.mrb[0].mxu0
    %v3572 = vadd.f32 %v3379, %v3571
    %3573 = vmatprep.mubr.bf16.mxu0 %v2567
    %3574 = vmatmul.mubr.bf16.gmra.mrb[0].mxu0 %v2566
    %v3575 = vpop.f32.mrb[0].mxu0
    %v3576 = vadd.f32 %v3383, %v3575
    %v3577 = vpop.f32.mrb[0].mxu0
    %v3578 = vadd.f32 %v3385, %v3577
    %v3579 = vpop.f32.mrb[0].mxu0
    %v3580 = vadd.f32 %v3387, %v3579
    %v3581 = vpop.f32.mrb[0].mxu0
    %v3582 = vadd.f32 %v3389, %v3581
    %3583 = vmatprep.mubr.bf16.mxu0 %v2571
    %3584 = vmatmul.mubr.bf16.gmra.mrb[0].mxu0 %v2570
    %v3585 = vpop.f32.mrb[0].mxu0
    %v3586 = vadd.f32 %v3393, %v3585
    %v3587 = vpop.f32.mrb[0].mxu0
    %v3588 = vadd.f32 %v3395, %v3587
    %v3589 = vpop.f32.mrb[0].mxu0
    %v3590 = vadd.f32 %v3397, %v3589
    %v3591 = vpop.f32.mrb[0].mxu0
    %v3592 = vadd.f32 %v3399, %v3591
    %3593 = vmatprep.mubr.bf16.mxu0 %v2575
    %3594 = vmatmul.mubr.bf16.gmra.mrb[0].mxu0 %v2574
    %v3595 = vpop.f32.mrb[0].mxu0
    %v3596 = vadd.f32 %v3403, %v3595
    %v3597 = vpop.f32.mrb[0].mxu0
    %v3598 = vadd.f32 %v3405, %v3597
    %v3599 = vpop.f32.mrb[0].mxu0
    %v3600 = vadd.f32 %v3407, %v3599
    %v3601 = vpop.f32.mrb[0].mxu0
    %v3602 = vadd.f32 %v3409, %v3601
    %3603 = vdwg.mxu0
    %3604 = vmatprep.subr.bf16.mxu0 %v2581
    %3605 = vmatpush1.bf16.msra.mxu0 %v2580
    %3606 = vmatprep.subr.bf16.mxu0 %v2589
    %3607 = vmatpush1.bf16.msra.mxu0 %v2588
    %3608 = vmatprep.subr.bf16.mxu0 %v2597
    %3609 = vmatpush1.bf16.msra.mxu0 %v2596
    %3610 = vmatprep.subr.bf16.mxu0 %v2605
    %3611 = vmatpush1.bf16.msra.mxu0 %v2604
    %3612 = vmatprep.subr.bf16.mxu0 %v2613
    %3613 = vmatpush1.bf16.msra.mxu0 %v2612
    %3614 = vmatprep.subr.bf16.mxu0 %v2621
    %3615 = vmatpush1.bf16.msra.mxu0 %v2620
    %3616 = vmatprep.subr.bf16.mxu0 %v2629
    %3617 = vmatpush1.bf16.msra.mxu0 %v2628
    %3618 = vmatprep.subr.bf16.mxu0 %v2637
    %3619 = vmatpush1.bf16.msra.mxu0 %v2636
    %3620 = vmatprep.subr.bf16.mxu0 %v2645
    %3621 = vmatpush1.bf16.msra.mxu0 %v2644
    %3622 = vmatprep.subr.bf16.mxu0 %v2653
    %3623 = vmatpush1.bf16.msra.mxu0 %v2652
    %3624 = vmatprep.subr.bf16.mxu0 %v2661
    %3625 = vmatpush1.bf16.msra.mxu0 %v2660
    %3626 = vmatprep.subr.bf16.mxu0 %v2669
    %3627 = vmatpush1.bf16.msra.mxu0 %v2668
    %3628 = vmatprep.subr.bf16.mxu0 %v2677
    %3629 = vmatpush1.bf16.msra.mxu0 %v2676
    %3630 = vmatprep.subr.bf16.mxu0 %v2685
    %3631 = vmatpush1.bf16.msra.mxu0 %v2684
    %3632 = vmatprep.subr.bf16.mxu0 %v2693
    %3633 = vmatpush1.bf16.msra.mxu0 %v2692
    %3634 = vmatprep.subr.bf16.mxu0 %v2701
    %3635 = vmatpush1.bf16.msra.mxu0 %v2700
    %3636 = vmatprep.mubr.bf16.mxu0 %v2513
    %3637 = vmatmul.mubr.bf16.gmra.mrb[0].mxu0 %v2512
    %v3638 = vpop.f32.mrb[0].mxu0
    %v3639 = vadd.f32 0.0, %v3638
    %v3640 = vpop.f32.mrb[0].mxu0
    %v3641 = vadd.f32 0.0, %v3640
    %v3642 = vpop.f32.mrb[0].mxu0
    %v3643 = vadd.f32 0.0, %v3642
    %v3644 = vpop.f32.mrb[0].mxu0
    %v3645 = vadd.f32 0.0, %v3644
    %3646 = vmatprep.mubr.bf16.mxu0 %v2517
    %3647 = vmatmul.mubr.bf16.gmra.mrb[0].mxu0 %v2516
    %v3648 = vpop.f32.mrb[0].mxu0
    %v3649 = vadd.f32 0.0, %v3648
    %v3650 = vpop.f32.mrb[0].mxu0
    %v3651 = vadd.f32 0.0, %v3650
    %v3652 = vpop.f32.mrb[0].mxu0
    %v3653 = vadd.f32 0.0, %v3652
    %v3654 = vpop.f32.mrb[0].mxu0
    %v3655 = vadd.f32 0.0, %v3654
    %3656 = vmatprep.mubr.bf16.mxu0 %v2521
    %3657 = vmatmul.mubr.bf16.gmra.mrb[0].mxu0 %v2520
    %v3658 = vpop.f32.mrb[0].mxu0
    %v3659 = vadd.f32 0.0, %v3658
    %v3660 = vpop.f32.mrb[0].mxu0
    %v3661 = vadd.f32 0.0, %v3660
    %v3662 = vpop.f32.mrb[0].mxu0
    %v3663 = vadd.f32 0.0, %v3662
    %v3664 = vpop.f32.mrb[0].mxu0
    %v3665 = vadd.f32 0.0, %v3664
    %3666 = vmatprep.mubr.bf16.mxu0 %v2525
    %3667 = vmatmul.mubr.bf16.gmra.mrb[0].mxu0 %v2524
    %v3668 = vpop.f32.mrb[0].mxu0
    %v3669 = vadd.f32 0.0, %v3668
    %v3670 = vpop.f32.mrb[0].mxu0
    %v3671 = vadd.f32 0.0, %v3670
    %v3672 = vpop.f32.mrb[0].mxu0
    %v3673 = vadd.f32 0.0, %v3672
    %v3674 = vpop.f32.mrb[0].mxu0
    %v3675 = vadd.f32 0.0, %v3674
    %3676 = vmatprep.mubr.bf16.mxu0 %v2529
    %3677 = vmatmul.mubr.bf16.gmra.mrb[0].mxu0 %v2528
    %v3678 = vpop.f32.mrb[0].mxu0
    %v3679 = vadd.f32 0.0, %v3678
    %v3680 = vpop.f32.mrb[0].mxu0
    %v3681 = vadd.f32 0.0, %v3680
    %v3682 = vpop.f32.mrb[0].mxu0
    %v3683 = vadd.f32 0.0, %v3682
    %v3684 = vpop.f32.mrb[0].mxu0
    %v3685 = vadd.f32 0.0, %v3684
    %3686 = vmatprep.mubr.bf16.mxu0 %v2533
    %3687 = vmatmul.mubr.bf16.gmra.mrb[0].mxu0 %v2532
    %v3688 = vpop.f32.mrb[0].mxu0
    %v3689 = vadd.f32 0.0, %v3688
    %v3690 = vpop.f32.mrb[0].mxu0
    %v3691 = vadd.f32 0.0, %v3690
    %v3692 = vpop.f32.mrb[0].mxu0
    %v3693 = vadd.f32 0.0, %v3692
    %v3694 = vpop.f32.mrb[0].mxu0
    %v3695 = vadd.f32 0.0, %v3694
    %3696 = vmatprep.mubr.bf16.mxu0 %v2537
    %3697 = vmatmul.mubr.bf16.gmra.mrb[0].mxu0 %v2536
    %v3698 = vpop.f32.mrb[0].mxu0
    %v3699 = vadd.f32 0.0, %v3698
    %v3700 = vpop.f32.mrb[0].mxu0
    %v3701 = vadd.f32 0.0, %v3700
    %v3702 = vpop.f32.mrb[0].mxu0
    %v3703 = vadd.f32 0.0, %v3702
    %v3704 = vpop.f32.mrb[0].mxu0
    %v3705 = vadd.f32 0.0, %v3704
    %3706 = vmatprep.mubr.bf16.mxu0 %v2541
    %3707 = vmatmul.mubr.bf16.gmra.mrb[0].mxu0 %v2540
    %v3708 = vpop.f32.mrb[0].mxu0
    %v3709 = vadd.f32 0.0, %v3708
    %v3710 = vpop.f32.mrb[0].mxu0
    %v3711 = vadd.f32 0.0, %v3710
    %v3712 = vpop.f32.mrb[0].mxu0
    %v3713 = vadd.f32 0.0, %v3712
    %v3714 = vpop.f32.mrb[0].mxu0
    %v3715 = vadd.f32 0.0, %v3714
    %3716 = vmatprep.mubr.bf16.mxu0 %v2545
    %3717 = vmatmul.mubr.bf16.gmra.mrb[0].mxu0 %v2544
    %v3718 = vpop.f32.mrb[0].mxu0
    %v3719 = vadd.f32 0.0, %v3718
    %v3720 = vpop.f32.mrb[0].mxu0
    %v3721 = vadd.f32 0.0, %v3720
    %v3722 = vpop.f32.mrb[0].mxu0
    %v3723 = vadd.f32 0.0, %v3722
    %v3724 = vpop.f32.mrb[0].mxu0
    %v3725 = vadd.f32 0.0, %v3724
    %3726 = vmatprep.mubr.bf16.mxu0 %v2549
    %3727 = vmatmul.mubr.bf16.gmra.mrb[0].mxu0 %v2548
    %v3728 = vpop.f32.mrb[0].mxu0
    %v3729 = vadd.f32 0.0, %v3728
    %v3730 = vpop.f32.mrb[0].mxu0
    %v3731 = vadd.f32 0.0, %v3730
    %v3732 = vpop.f32.mrb[0].mxu0
    %v3733 = vadd.f32 0.0, %v3732
    %v3734 = vpop.f32.mrb[0].mxu0
    %v3735 = vadd.f32 0.0, %v3734
    %3736 = vmatprep.mubr.bf16.mxu0 %v2553
    %3737 = vmatmul.mubr.bf16.gmra.mrb[0].mxu0 %v2552
    %v3738 = vpop.f32.mrb[0].mxu0
    %v3739 = vadd.f32 0.0, %v3738
    %v3740 = vpop.f32.mrb[0].mxu0
    %v3741 = vadd.f32 0.0, %v3740
    %v3742 = vpop.f32.mrb[0].mxu0
    %v3743 = vadd.f32 0.0, %v3742
    %v3744 = vpop.f32.mrb[0].mxu0
    %v3745 = vadd.f32 0.0, %v3744
    %3746 = vmatprep.mubr.bf16.mxu0 %v2557
    %3747 = vmatmul.mubr.bf16.gmra.mrb[0].mxu0 %v2556
    %v3748 = vpop.f32.mrb[0].mxu0
    %v3749 = vadd.f32 0.0, %v3748
    %v3750 = vpop.f32.mrb[0].mxu0
    %v3751 = vadd.f32 0.0, %v3750
    %v3752 = vpop.f32.mrb[0].mxu0
    %v3753 = vadd.f32 0.0, %v3752
    %v3754 = vpop.f32.mrb[0].mxu0
    %v3755 = vadd.f32 0.0, %v3754
    %3756 = vmatprep.mubr.bf16.mxu0 %v2561
    %3757 = vmatmul.mubr.bf16.gmra.mrb[0].mxu0 %v2560
    %v3758 = vpop.f32.mrb[0].mxu0
    %v3759 = vadd.f32 0.0, %v3758
    %v3760 = vpop.f32.mrb[0].mxu0
    %v3761 = vadd.f32 0.0, %v3760
    %v3762 = vpop.f32.mrb[0].mxu0
    %v3763 = vadd.f32 0.0, %v3762
    %v3764 = vpop.f32.mrb[0].mxu0
    %v3765 = vadd.f32 0.0, %v3764
    %3766 = vmatprep.mubr.bf16.mxu0 %v2565
    %3767 = vmatmul.mubr.bf16.gmra.mrb[0].mxu0 %v2564
    %v3768 = vpop.f32.mrb[0].mxu0
    %v3769 = vadd.f32 0.0, %v3768
    %v3770 = vpop.f32.mrb[0].mxu0
    %v3771 = vadd.f32 0.0, %v3770
    %v3772 = vpop.f32.mrb[0].mxu0
    %v3773 = vadd.f32 0.0, %v3772
    %v3774 = vpop.f32.mrb[0].mxu0
    %v3775 = vadd.f32 0.0, %v3774
    %3776 = vmatprep.mubr.bf16.mxu0 %v2569
    %3777 = vmatmul.mubr.bf16.gmra.mrb[0].mxu0 %v2568
    %v3778 = vpop.f32.mrb[0].mxu0
    %v3779 = vadd.f32 0.0, %v3778
    %v3780 = vpop.f32.mrb[0].mxu0
    %v3781 = vadd.f32 0.0, %v3780
    %v3782 = vpop.f32.mrb[0].mxu0
    %v3783 = vadd.f32 0.0, %v3782
    %v3784 = vpop.f32.mrb[0].mxu0
    %v3785 = vadd.f32 0.0, %v3784
    %3786 = vmatprep.mubr.bf16.mxu0 %v2573
    %3787 = vmatmul.mubr.bf16.gmra.mrb[0].mxu0 %v2572
    %v3788 = vpop.f32.mrb[0].mxu0
    %v3789 = vadd.f32 0.0, %v3788
    %v3790 = vpop.f32.mrb[0].mxu0
    %v3791 = vadd.f32 0.0, %v3790
    %v3792 = vpop.f32.mrb[0].mxu0
    %v3793 = vadd.f32 0.0, %v3792
    %v3794 = vpop.f32.mrb[0].mxu0
    %v3795 = vadd.f32 0.0, %v3794
    %3796 = vdwg.mxu0
    %3797 = vmatprep.subr.bf16.mxu0 %v2709
    %3798 = vmatpush1.bf16.msra.mxu0 %v2708
    %3799 = vmatprep.subr.bf16.mxu0 %v2717
    %3800 = vmatpush1.bf16.msra.mxu0 %v2716
    %3801 = vmatprep.subr.bf16.mxu0 %v2725
    %3802 = vmatpush1.bf16.msra.mxu0 %v2724
    %3803 = vmatprep.subr.bf16.mxu0 %v2733
    %3804 = vmatpush1.bf16.msra.mxu0 %v2732
    %3805 = vmatprep.subr.bf16.mxu0 %v2741
    %3806 = vmatpush1.bf16.msra.mxu0 %v2740
    %3807 = vmatprep.subr.bf16.mxu0 %v2749
    %3808 = vmatpush1.bf16.msra.mxu0 %v2748
    %3809 = vmatprep.subr.bf16.mxu0 %v2757
    %3810 = vmatpush1.bf16.msra.mxu0 %v2756
    %3811 = vmatprep.subr.bf16.mxu0 %v2765
    %3812 = vmatpush1.bf16.msra.mxu0 %v2764
    %3813 = vmatprep.subr.bf16.mxu0 %v2773
    %3814 = vmatpush1.bf16.msra.mxu0 %v2772
    %3815 = vmatprep.subr.bf16.mxu0 %v2781
    %3816 = vmatpush1.bf16.msra.mxu0 %v2780
    %3817 = vmatprep.subr.bf16.mxu0 %v2789
    %3818 = vmatpush1.bf16.msra.mxu0 %v2788
    %3819 = vmatprep.subr.bf16.mxu0 %v2797
    %3820 = vmatpush1.bf16.msra.mxu0 %v2796
    %3821 = vmatprep.subr.bf16.mxu0 %v2805
    %3822 = vmatpush1.bf16.msra.mxu0 %v2804
    %3823 = vmatprep.subr.bf16.mxu0 %v2813
    %3824 = vmatpush1.bf16.msra.mxu0 %v2812
    %3825 = vmatprep.subr.bf16.mxu0 %v2821
    %3826 = vmatpush1.bf16.msra.mxu0 %v2820
    %3827 = vmatprep.subr.bf16.mxu0 %v2829
    %3828 = vmatpush1.bf16.msra.mxu0 %v2828
    %3829 = vmatprep.mubr.bf16.mxu0 %v2515
    %3830 = vmatmul.mubr.bf16.gmra.mrb[0].mxu0 %v2514
    %v3831 = vpop.f32.mrb[0].mxu0
    %v3832 = vadd.f32 %v3639, %v3831
    %v3833 = vpop.f32.mrb[0].mxu0
    %v3834 = vadd.f32 %v3641, %v3833
    %v3835 = vpop.f32.mrb[0].mxu0
    %v3836 = vadd.f32 %v3643, %v3835
    %v3837 = vpop.f32.mrb[0].mxu0
    %v3838 = vadd.f32 %v3645, %v3837
    %3839 = vmatprep.mubr.bf16.mxu0 %v2519
    %3840 = vmatmul.mubr.bf16.gmra.mrb[0].mxu0 %v2518
    %v3841 = vpop.f32.mrb[0].mxu0
    %v3842 = vadd.f32 %v3649, %v3841
    %v3843 = vpop.f32.mrb[0].mxu0
    %v3844 = vadd.f32 %v3651, %v3843
    %v3845 = vpop.f32.mrb[0].mxu0
    %v3846 = vadd.f32 %v3653, %v3845
    %v3847 = vpop.f32.mrb[0].mxu0
    %v3848 = vadd.f32 %v3655, %v3847
    %3849 = vmatprep.mubr.bf16.mxu0 %v2523
    %3850 = vmatmul.mubr.bf16.gmra.mrb[0].mxu0 %v2522
    %v3851 = vpop.f32.mrb[0].mxu0
    %v3852 = vadd.f32 %v3659, %v3851
    %v3853 = vpop.f32.mrb[0].mxu0
    %v3854 = vadd.f32 %v3661, %v3853
    %v3855 = vpop.f32.mrb[0].mxu0
    %v3856 = vadd.f32 %v3663, %v3855
    %v3857 = vpop.f32.mrb[0].mxu0
    %v3858 = vadd.f32 %v3665, %v3857
    %3859 = vmatprep.mubr.bf16.mxu0 %v2527
    %3860 = vmatmul.mubr.bf16.gmra.mrb[0].mxu0 %v2526
    %v3861 = vpop.f32.mrb[0].mxu0
    %v3862 = vadd.f32 %v3669, %v3861
    %v3863 = vpop.f32.mrb[0].mxu0
    %v3864 = vadd.f32 %v3671, %v3863
    %v3865 = vpop.f32.mrb[0].mxu0
    %v3866 = vadd.f32 %v3673, %v3865
    %v3867 = vpop.f32.mrb[0].mxu0
    %v3868 = vadd.f32 %v3675, %v3867
    %3869 = vmatprep.mubr.bf16.mxu0 %v2531
    %3870 = vmatmul.mubr.bf16.gmra.mrb[0].mxu0 %v2530
    %v3871 = vpop.f32.mrb[0].mxu0
    %v3872 = vadd.f32 %v3679, %v3871
    %v3873 = vpop.f32.mrb[0].mxu0
    %v3874 = vadd.f32 %v3681, %v3873
    %v3875 = vpop.f32.mrb[0].mxu0
    %v3876 = vadd.f32 %v3683, %v3875
    %v3877 = vpop.f32.mrb[0].mxu0
    %v3878 = vadd.f32 %v3685, %v3877
    %3879 = vmatprep.mubr.bf16.mxu0 %v2535
    %3880 = vmatmul.mubr.bf16.gmra.mrb[0].mxu0 %v2534
    %v3881 = vpop.f32.mrb[0].mxu0
    %v3882 = vadd.f32 %v3689, %v3881
    %v3883 = vpop.f32.mrb[0].mxu0
    %v3884 = vadd.f32 %v3691, %v3883
    %v3885 = vpop.f32.mrb[0].mxu0
    %v3886 = vadd.f32 %v3693, %v3885
    %v3887 = vpop.f32.mrb[0].mxu0
    %v3888 = vadd.f32 %v3695, %v3887
    %3889 = vmatprep.mubr.bf16.mxu0 %v2539
    %3890 = vmatmul.mubr.bf16.gmra.mrb[0].mxu0 %v2538
    %v3891 = vpop.f32.mrb[0].mxu0
    %v3892 = vadd.f32 %v3699, %v3891
    %v3893 = vpop.f32.mrb[0].mxu0
    %v3894 = vadd.f32 %v3701, %v3893
    %v3895 = vpop.f32.mrb[0].mxu0
    %v3896 = vadd.f32 %v3703, %v3895
    %v3897 = vpop.f32.mrb[0].mxu0
    %v3898 = vadd.f32 %v3705, %v3897
    %3899 = vmatprep.mubr.bf16.mxu0 %v2543
    %3900 = vmatmul.mubr.bf16.gmra.mrb[0].mxu0 %v2542
    %v3901 = vpop.f32.mrb[0].mxu0
    %v3902 = vadd.f32 %v3709, %v3901
    %v3903 = vpop.f32.mrb[0].mxu0
    %v3904 = vadd.f32 %v3711, %v3903
    %v3905 = vpop.f32.mrb[0].mxu0
    %v3906 = vadd.f32 %v3713, %v3905
    %v3907 = vpop.f32.mrb[0].mxu0
    %v3908 = vadd.f32 %v3715, %v3907
    %3909 = vmatprep.mubr.bf16.mxu0 %v2547
    %3910 = vmatmul.mubr.bf16.gmra.mrb[0].mxu0 %v2546
    %v3911 = vpop.f32.mrb[0].mxu0
    %v3912 = vadd.f32 %v3719, %v3911
    %v3913 = vpop.f32.mrb[0].mxu0
    %v3914 = vadd.f32 %v3721, %v3913
    %v3915 = vpop.f32.mrb[0].mxu0
    %v3916 = vadd.f32 %v3723, %v3915
    %v3917 = vpop.f32.mrb[0].mxu0
    %v3918 = vadd.f32 %v3725, %v3917
    %3919 = vmatprep.mubr.bf16.mxu0 %v2551
    %3920 = vmatmul.mubr.bf16.gmra.mrb[0].mxu0 %v2550
    %v3921 = vpop.f32.mrb[0].mxu0
    %v3922 = vadd.f32 %v3729, %v3921
    %v3923 = vpop.f32.mrb[0].mxu0
    %v3924 = vadd.f32 %v3731, %v3923
    %v3925 = vpop.f32.mrb[0].mxu0
    %v3926 = vadd.f32 %v3733, %v3925
    %v3927 = vpop.f32.mrb[0].mxu0
    %v3928 = vadd.f32 %v3735, %v3927
    %3929 = vmatprep.mubr.bf16.mxu0 %v2555
    %3930 = vmatmul.mubr.bf16.gmra.mrb[0].mxu0 %v2554
    %v3931 = vpop.f32.mrb[0].mxu0
    %v3932 = vadd.f32 %v3739, %v3931
    %v3933 = vpop.f32.mrb[0].mxu0
    %v3934 = vadd.f32 %v3741, %v3933
    %v3935 = vpop.f32.mrb[0].mxu0
    %v3936 = vadd.f32 %v3743, %v3935
    %v3937 = vpop.f32.mrb[0].mxu0
    %v3938 = vadd.f32 %v3745, %v3937
    %3939 = vmatprep.mubr.bf16.mxu0 %v2559
    %3940 = vmatmul.mubr.bf16.gmra.mrb[0].mxu0 %v2558
    %v3941 = vpop.f32.mrb[0].mxu0
    %v3942 = vadd.f32 %v3749, %v3941
    %v3943 = vpop.f32.mrb[0].mxu0
    %v3944 = vadd.f32 %v3751, %v3943
    %v3945 = vpop.f32.mrb[0].mxu0
    %v3946 = vadd.f32 %v3753, %v3945
    %v3947 = vpop.f32.mrb[0].mxu0
    %v3948 = vadd.f32 %v3755, %v3947
    %3949 = vmatprep.mubr.bf16.mxu0 %v2563
    %3950 = vmatmul.mubr.bf16.gmra.mrb[0].mxu0 %v2562
    %v3951 = vpop.f32.mrb[0].mxu0
    %v3952 = vadd.f32 %v3759, %v3951
    %v3953 = vpop.f32.mrb[0].mxu0
    %v3954 = vadd.f32 %v3761, %v3953
    %v3955 = vpop.f32.mrb[0].mxu0
    %v3956 = vadd.f32 %v3763, %v3955
    %v3957 = vpop.f32.mrb[0].mxu0
    %v3958 = vadd.f32 %v3765, %v3957
    %3959 = vmatprep.mubr.bf16.mxu0 %v2567
    %3960 = vmatmul.mubr.bf16.gmra.mrb[0].mxu0 %v2566
    %v3961 = vpop.f32.mrb[0].mxu0
    %v3962 = vadd.f32 %v3769, %v3961
    %v3963 = vpop.f32.mrb[0].mxu0
    %v3964 = vadd.f32 %v3771, %v3963
    %v3965 = vpop.f32.mrb[0].mxu0
    %v3966 = vadd.f32 %v3773, %v3965
    %v3967 = vpop.f32.mrb[0].mxu0
    %v3968 = vadd.f32 %v3775, %v3967
    %3969 = vmatprep.mubr.bf16.mxu0 %v2571
    %3970 = vmatmul.mubr.bf16.gmra.mrb[0].mxu0 %v2570
    %v3971 = vpop.f32.mrb[0].mxu0
    %v3972 = vadd.f32 %v3779, %v3971
    %v3973 = vpop.f32.mrb[0].mxu0
    %v3974 = vadd.f32 %v3781, %v3973
    %v3975 = vpop.f32.mrb[0].mxu0
    %v3976 = vadd.f32 %v3783, %v3975
    %v3977 = vpop.f32.mrb[0].mxu0
    %v3978 = vadd.f32 %v3785, %v3977
    %3979 = vmatprep.mubr.bf16.mxu0 %v2575
    %3980 = vmatmul.mubr.bf16.gmra.mrb[0].mxu0 %v2574
    %v3981 = vpop.f32.mrb[0].mxu0
    %v3982 = vadd.f32 %v3789, %v3981
    %v3983 = vpop.f32.mrb[0].mxu0
    %v3984 = vadd.f32 %v3791, %v3983
    %v3985 = vpop.f32.mrb[0].mxu0
    %v3986 = vadd.f32 %v3793, %v3985
    %v3987 = vpop.f32.mrb[0].mxu0
    %v3988 = vadd.f32 %v3795, %v3987
    %3989 = vdwg.mxu0
    %3990 = vmatprep.subr.bf16.mxu0 %v2583
    %3991 = vmatpush1.bf16.msra.mxu0 %v2582
    %3992 = vmatprep.subr.bf16.mxu0 %v2591
    %3993 = vmatpush1.bf16.msra.mxu0 %v2590
    %3994 = vmatprep.subr.bf16.mxu0 %v2599
    %3995 = vmatpush1.bf16.msra.mxu0 %v2598
    %3996 = vmatprep.subr.bf16.mxu0 %v2607
    %3997 = vmatpush1.bf16.msra.mxu0 %v2606
    %3998 = vmatprep.subr.bf16.mxu0 %v2615
    %3999 = vmatpush1.bf16.msra.mxu0 %v2614
    %4000 = vmatprep.subr.bf16.mxu0 %v2623
    %4001 = vmatpush1.bf16.msra.mxu0 %v2622
    %4002 = vmatprep.subr.bf16.mxu0 %v2631
    %4003 = vmatpush1.bf16.msra.mxu0 %v2630
    %4004 = vmatprep.subr.bf16.mxu0 %v2639
    %4005 = vmatpush1.bf16.msra.mxu0 %v2638
    %4006 = vmatprep.subr.bf16.mxu0 %v2647
    %4007 = vmatpush1.bf16.msra.mxu0 %v2646
    %4008 = vmatprep.subr.bf16.mxu0 %v2655
    %4009 = vmatpush1.bf16.msra.mxu0 %v2654
    %4010 = vmatprep.subr.bf16.mxu0 %v2663
    %4011 = vmatpush1.bf16.msra.mxu0 %v2662
    %4012 = vmatprep.subr.bf16.mxu0 %v2671
    %4013 = vmatpush1.bf16.msra.mxu0 %v2670
    %4014 = vmatprep.subr.bf16.mxu0 %v2679
    %4015 = vmatpush1.bf16.msra.mxu0 %v2678
    %4016 = vmatprep.subr.bf16.mxu0 %v2687
    %4017 = vmatpush1.bf16.msra.mxu0 %v2686
    %4018 = vmatprep.subr.bf16.mxu0 %v2695
    %4019 = vmatpush1.bf16.msra.mxu0 %v2694
    %4020 = vmatprep.subr.bf16.mxu0 %v2703
    %4021 = vmatpush1.bf16.msra.mxu0 %v2702
    %4022 = vmatprep.mubr.bf16.mxu0 %v2513
    %4023 = vmatmul.mubr.bf16.gmra.mrb[0].mxu0 %v2512
    %v4024 = vpop.f32.mrb[0].mxu0
    %v4025 = vadd.f32 0.0, %v4024
    %v4026 = vpop.f32.mrb[0].mxu0
    %v4027 = vadd.f32 0.0, %v4026
    %v4028 = vpop.f32.mrb[0].mxu0
    %v4029 = vadd.f32 0.0, %v4028
    %v4030 = vpop.f32.mrb[0].mxu0
    %v4031 = vadd.f32 0.0, %v4030
    %4032 = vmatprep.mubr.bf16.mxu0 %v2517
    %4033 = vmatmul.mubr.bf16.gmra.mrb[0].mxu0 %v2516
    %v4034 = vpop.f32.mrb[0].mxu0
    %v4035 = vadd.f32 0.0, %v4034
    %v4036 = vpop.f32.mrb[0].mxu0
    %v4037 = vadd.f32 0.0, %v4036
    %v4038 = vpop.f32.mrb[0].mxu0
    %v4039 = vadd.f32 0.0, %v4038
    %v4040 = vpop.f32.mrb[0].mxu0
    %v4041 = vadd.f32 0.0, %v4040
    %4042 = vmatprep.mubr.bf16.mxu0 %v2521
    %4043 = vmatmul.mubr.bf16.gmra.mrb[0].mxu0 %v2520
    %v4044 = vpop.f32.mrb[0].mxu0
    %v4045 = vadd.f32 0.0, %v4044
    %v4046 = vpop.f32.mrb[0].mxu0
    %v4047 = vadd.f32 0.0, %v4046
    %v4048 = vpop.f32.mrb[0].mxu0
    %v4049 = vadd.f32 0.0, %v4048
    %v4050 = vpop.f32.mrb[0].mxu0
    %v4051 = vadd.f32 0.0, %v4050
    %4052 = vmatprep.mubr.bf16.mxu0 %v2525
    %4053 = vmatmul.mubr.bf16.gmra.mrb[0].mxu0 %v2524
    %v4054 = vpop.f32.mrb[0].mxu0
    %v4055 = vadd.f32 0.0, %v4054
    %v4056 = vpop.f32.mrb[0].mxu0
    %v4057 = vadd.f32 0.0, %v4056
    %v4058 = vpop.f32.mrb[0].mxu0
    %v4059 = vadd.f32 0.0, %v4058
    %v4060 = vpop.f32.mrb[0].mxu0
    %v4061 = vadd.f32 0.0, %v4060
    %4062 = vmatprep.mubr.bf16.mxu0 %v2529
    %4063 = vmatmul.mubr.bf16.gmra.mrb[0].mxu0 %v2528
    %v4064 = vpop.f32.mrb[0].mxu0
    %v4065 = vadd.f32 0.0, %v4064
    %v4066 = vpop.f32.mrb[0].mxu0
    %v4067 = vadd.f32 0.0, %v4066
    %v4068 = vpop.f32.mrb[0].mxu0
    %v4069 = vadd.f32 0.0, %v4068
    %v4070 = vpop.f32.mrb[0].mxu0
    %v4071 = vadd.f32 0.0, %v4070
    %4072 = vmatprep.mubr.bf16.mxu0 %v2533
    %4073 = vmatmul.mubr.bf16.gmra.mrb[0].mxu0 %v2532
    %v4074 = vpop.f32.mrb[0].mxu0
    %v4075 = vadd.f32 0.0, %v4074
    %v4076 = vpop.f32.mrb[0].mxu0
    %v4077 = vadd.f32 0.0, %v4076
    %v4078 = vpop.f32.mrb[0].mxu0
    %v4079 = vadd.f32 0.0, %v4078
    %v4080 = vpop.f32.mrb[0].mxu0
    %v4081 = vadd.f32 0.0, %v4080
    %4082 = vmatprep.mubr.bf16.mxu0 %v2537
    %4083 = vmatmul.mubr.bf16.gmra.mrb[0].mxu0 %v2536
    %v4084 = vpop.f32.mrb[0].mxu0
    %v4085 = vadd.f32 0.0, %v4084
    %v4086 = vpop.f32.mrb[0].mxu0
    %v4087 = vadd.f32 0.0, %v4086
    %v4088 = vpop.f32.mrb[0].mxu0
    %v4089 = vadd.f32 0.0, %v4088
    %v4090 = vpop.f32.mrb[0].mxu0
    %v4091 = vadd.f32 0.0, %v4090
    %4092 = vmatprep.mubr.bf16.mxu0 %v2541
    %4093 = vmatmul.mubr.bf16.gmra.mrb[0].mxu0 %v2540
    %v4094 = vpop.f32.mrb[0].mxu0
    %v4095 = vadd.f32 0.0, %v4094
    %v4096 = vpop.f32.mrb[0].mxu0
    %v4097 = vadd.f32 0.0, %v4096
    %v4098 = vpop.f32.mrb[0].mxu0
    %v4099 = vadd.f32 0.0, %v4098
    %v4100 = vpop.f32.mrb[0].mxu0
    %v4101 = vadd.f32 0.0, %v4100
    %4102 = vmatprep.mubr.bf16.mxu0 %v2545
    %4103 = vmatmul.mubr.bf16.gmra.mrb[0].mxu0 %v2544
    %v4104 = vpop.f32.mrb[0].mxu0
    %v4105 = vadd.f32 0.0, %v4104
    %v4106 = vpop.f32.mrb[0].mxu0
    %v4107 = vadd.f32 0.0, %v4106
    %v4108 = vpop.f32.mrb[0].mxu0
    %v4109 = vadd.f32 0.0, %v4108
    %v4110 = vpop.f32.mrb[0].mxu0
    %v4111 = vadd.f32 0.0, %v4110
    %4112 = vmatprep.mubr.bf16.mxu0 %v2549
    %4113 = vmatmul.mubr.bf16.gmra.mrb[0].mxu0 %v2548
    %v4114 = vpop.f32.mrb[0].mxu0
    %v4115 = vadd.f32 0.0, %v4114
    %v4116 = vpop.f32.mrb[0].mxu0
    %v4117 = vadd.f32 0.0, %v4116
    %v4118 = vpop.f32.mrb[0].mxu0
    %v4119 = vadd.f32 0.0, %v4118
    %v4120 = vpop.f32.mrb[0].mxu0
    %v4121 = vadd.f32 0.0, %v4120
    %4122 = vmatprep.mubr.bf16.mxu0 %v2553
    %4123 = vmatmul.mubr.bf16.gmra.mrb[0].mxu0 %v2552
    %v4124 = vpop.f32.mrb[0].mxu0
    %v4125 = vadd.f32 0.0, %v4124
    %v4126 = vpop.f32.mrb[0].mxu0
    %v4127 = vadd.f32 0.0, %v4126
    %v4128 = vpop.f32.mrb[0].mxu0
    %v4129 = vadd.f32 0.0, %v4128
    %v4130 = vpop.f32.mrb[0].mxu0
    %v4131 = vadd.f32 0.0, %v4130
    %4132 = vmatprep.mubr.bf16.mxu0 %v2557
    %4133 = vmatmul.mubr.bf16.gmra.mrb[0].mxu0 %v2556
    %v4134 = vpop.f32.mrb[0].mxu0
    %v4135 = vadd.f32 0.0, %v4134
    %v4136 = vpop.f32.mrb[0].mxu0
    %v4137 = vadd.f32 0.0, %v4136
    %v4138 = vpop.f32.mrb[0].mxu0
    %v4139 = vadd.f32 0.0, %v4138
    %v4140 = vpop.f32.mrb[0].mxu0
    %v4141 = vadd.f32 0.0, %v4140
    %4142 = vmatprep.mubr.bf16.mxu0 %v2561
    %4143 = vmatmul.mubr.bf16.gmra.mrb[0].mxu0 %v2560
    %v4144 = vpop.f32.mrb[0].mxu0
    %v4145 = vadd.f32 0.0, %v4144
    %v4146 = vpop.f32.mrb[0].mxu0
    %v4147 = vadd.f32 0.0, %v4146
    %v4148 = vpop.f32.mrb[0].mxu0
    %v4149 = vadd.f32 0.0, %v4148
    %v4150 = vpop.f32.mrb[0].mxu0
    %v4151 = vadd.f32 0.0, %v4150
    %4152 = vmatprep.mubr.bf16.mxu0 %v2565
    %4153 = vmatmul.mubr.bf16.gmra.mrb[0].mxu0 %v2564
    %v4154 = vpop.f32.mrb[0].mxu0
    %v4155 = vadd.f32 0.0, %v4154
    %v4156 = vpop.f32.mrb[0].mxu0
    %v4157 = vadd.f32 0.0, %v4156
    %v4158 = vpop.f32.mrb[0].mxu0
    %v4159 = vadd.f32 0.0, %v4158
    %v4160 = vpop.f32.mrb[0].mxu0
    %v4161 = vadd.f32 0.0, %v4160
    %4162 = vmatprep.mubr.bf16.mxu0 %v2569
    %4163 = vmatmul.mubr.bf16.gmra.mrb[0].mxu0 %v2568
    %v4164 = vpop.f32.mrb[0].mxu0
    %v4165 = vadd.f32 0.0, %v4164
    %v4166 = vpop.f32.mrb[0].mxu0
    %v4167 = vadd.f32 0.0, %v4166
    %v4168 = vpop.f32.mrb[0].mxu0
    %v4169 = vadd.f32 0.0, %v4168
    %v4170 = vpop.f32.mrb[0].mxu0
    %v4171 = vadd.f32 0.0, %v4170
    %4172 = vmatprep.mubr.bf16.mxu0 %v2573
    %4173 = vmatmul.mubr.bf16.gmra.mrb[0].mxu0 %v2572
    %v4174 = vpop.f32.mrb[0].mxu0
    %v4175 = vadd.f32 0.0, %v4174
    %v4176 = vpop.f32.mrb[0].mxu0
    %v4177 = vadd.f32 0.0, %v4176
    %v4178 = vpop.f32.mrb[0].mxu0
    %v4179 = vadd.f32 0.0, %v4178
    %v4180 = vpop.f32.mrb[0].mxu0
    %v4181 = vadd.f32 0.0, %v4180
    %4182 = vdwg.mxu0
    %4183 = vmatprep.subr.bf16.mxu0 %v2711
    %4184 = vmatpush1.bf16.msra.mxu0 %v2710
    %4185 = vmatprep.subr.bf16.mxu0 %v2719
    %4186 = vmatpush1.bf16.msra.mxu0 %v2718
    %4187 = vmatprep.subr.bf16.mxu0 %v2727
    %4188 = vmatpush1.bf16.msra.mxu0 %v2726
    %4189 = vmatprep.subr.bf16.mxu0 %v2735
    %4190 = vmatpush1.bf16.msra.mxu0 %v2734
    %4191 = vmatprep.subr.bf16.mxu0 %v2743
    %4192 = vmatpush1.bf16.msra.mxu0 %v2742
    %4193 = vmatprep.subr.bf16.mxu0 %v2751
    %4194 = vmatpush1.bf16.msra.mxu0 %v2750
    %4195 = vmatprep.subr.bf16.mxu0 %v2759
    %4196 = vmatpush1.bf16.msra.mxu0 %v2758
    %4197 = vmatprep.subr.bf16.mxu0 %v2767
    %4198 = vmatpush1.bf16.msra.mxu0 %v2766
    %4199 = vmatprep.subr.bf16.mxu0 %v2775
    %4200 = vmatpush1.bf16.msra.mxu0 %v2774
    %4201 = vmatprep.subr.bf16.mxu0 %v2783
    %4202 = vmatpush1.bf16.msra.mxu0 %v2782
    %4203 = vmatprep.subr.bf16.mxu0 %v2791
    %4204 = vmatpush1.bf16.msra.mxu0 %v2790
    %4205 = vmatprep.subr.bf16.mxu0 %v2799
    %4206 = vmatpush1.bf16.msra.mxu0 %v2798
    %4207 = vmatprep.subr.bf16.mxu0 %v2807
    %4208 = vmatpush1.bf16.msra.mxu0 %v2806
    %4209 = vmatprep.subr.bf16.mxu0 %v2815
    %4210 = vmatpush1.bf16.msra.mxu0 %v2814
    %4211 = vmatprep.subr.bf16.mxu0 %v2823
    %4212 = vmatpush1.bf16.msra.mxu0 %v2822
    %4213 = vmatprep.subr.bf16.mxu0 %v2831
    %4214 = vmatpush1.bf16.msra.mxu0 %v2830
    %4215 = vmatprep.mubr.bf16.mxu0 %v2515
    %4216 = vmatmul.mubr.bf16.gmra.mrb[0].mxu0 %v2514
    %v4217 = vpop.f32.mrb[0].mxu0
    %v4218 = vadd.f32 %v4025, %v4217
    %v4219 = vpop.f32.mrb[0].mxu0
    %v4220 = vadd.f32 %v4027, %v4219
    %v4221 = vpop.f32.mrb[0].mxu0
    %v4222 = vadd.f32 %v4029, %v4221
    %v4223 = vpop.f32.mrb[0].mxu0
    %v4224 = vadd.f32 %v4031, %v4223
    %4225 = vmatprep.mubr.bf16.mxu0 %v2519
    %4226 = vmatmul.mubr.bf16.gmra.mrb[0].mxu0 %v2518
    %v4227 = vpop.f32.mrb[0].mxu0
    %v4228 = vadd.f32 %v4035, %v4227
    %v4229 = vpop.f32.mrb[0].mxu0
    %v4230 = vadd.f32 %v4037, %v4229
    %v4231 = vpop.f32.mrb[0].mxu0
    %v4232 = vadd.f32 %v4039, %v4231
    %v4233 = vpop.f32.mrb[0].mxu0
    %v4234 = vadd.f32 %v4041, %v4233
    %4235 = vmatprep.mubr.bf16.mxu0 %v2523
    %4236 = vmatmul.mubr.bf16.gmra.mrb[0].mxu0 %v2522
    %v4237 = vpop.f32.mrb[0].mxu0
    %v4238 = vadd.f32 %v4045, %v4237
    %v4239 = vpop.f32.mrb[0].mxu0
    %v4240 = vadd.f32 %v4047, %v4239
    %v4241 = vpop.f32.mrb[0].mxu0
    %v4242 = vadd.f32 %v4049, %v4241
    %v4243 = vpop.f32.mrb[0].mxu0
    %v4244 = vadd.f32 %v4051, %v4243
    %4245 = vmatprep.mubr.bf16.mxu0 %v2527
    %4246 = vmatmul.mubr.bf16.gmra.mrb[0].mxu0 %v2526
    %v4247 = vpop.f32.mrb[0].mxu0
    %v4248 = vadd.f32 %v4055, %v4247
    %v4249 = vpop.f32.mrb[0].mxu0
    %v4250 = vadd.f32 %v4057, %v4249
    %v4251 = vpop.f32.mrb[0].mxu0
    %v4252 = vadd.f32 %v4059, %v4251
    %v4253 = vpop.f32.mrb[0].mxu0
    %v4254 = vadd.f32 %v4061, %v4253
    %4255 = vmatprep.mubr.bf16.mxu0 %v2531
    %4256 = vmatmul.mubr.bf16.gmra.mrb[0].mxu0 %v2530
    %v4257 = vpop.f32.mrb[0].mxu0
    %v4258 = vadd.f32 %v4065, %v4257
    %v4259 = vpop.f32.mrb[0].mxu0
    %v4260 = vadd.f32 %v4067, %v4259
    %v4261 = vpop.f32.mrb[0].mxu0
    %v4262 = vadd.f32 %v4069, %v4261
    %v4263 = vpop.f32.mrb[0].mxu0
    %v4264 = vadd.f32 %v4071, %v4263
    %4265 = vmatprep.mubr.bf16.mxu0 %v2535
    %4266 = vmatmul.mubr.bf16.gmra.mrb[0].mxu0 %v2534
    %v4267 = vpop.f32.mrb[0].mxu0
    %v4268 = vadd.f32 %v4075, %v4267
    %v4269 = vpop.f32.mrb[0].mxu0
    %v4270 = vadd.f32 %v4077, %v4269
    %v4271 = vpop.f32.mrb[0].mxu0
    %v4272 = vadd.f32 %v4079, %v4271
    %v4273 = vpop.f32.mrb[0].mxu0
    %v4274 = vadd.f32 %v4081, %v4273
    %4275 = vmatprep.mubr.bf16.mxu0 %v2539
    %4276 = vmatmul.mubr.bf16.gmra.mrb[0].mxu0 %v2538
    %v4277 = vpop.f32.mrb[0].mxu0
    %v4278 = vadd.f32 %v4085, %v4277
    %v4279 = vpop.f32.mrb[0].mxu0
    %v4280 = vadd.f32 %v4087, %v4279
    %v4281 = vpop.f32.mrb[0].mxu0
    %v4282 = vadd.f32 %v4089, %v4281
    %v4283 = vpop.f32.mrb[0].mxu0
    %v4284 = vadd.f32 %v4091, %v4283
    %4285 = vmatprep.mubr.bf16.mxu0 %v2543
    %4286 = vmatmul.mubr.bf16.gmra.mrb[0].mxu0 %v2542
    %v4287 = vpop.f32.mrb[0].mxu0
    %v4288 = vadd.f32 %v4095, %v4287
    %v4289 = vpop.f32.mrb[0].mxu0
    %v4290 = vadd.f32 %v4097, %v4289
    %v4291 = vpop.f32.mrb[0].mxu0
    %v4292 = vadd.f32 %v4099, %v4291
    %v4293 = vpop.f32.mrb[0].mxu0
    %v4294 = vadd.f32 %v4101, %v4293
    %4295 = vmatprep.mubr.bf16.mxu0 %v2547
    %4296 = vmatmul.mubr.bf16.gmra.mrb[0].mxu0 %v2546
    %v4297 = vpop.f32.mrb[0].mxu0
    %v4298 = vadd.f32 %v4105, %v4297
    %v4299 = vpop.f32.mrb[0].mxu0
    %v4300 = vadd.f32 %v4107, %v4299
    %v4301 = vpop.f32.mrb[0].mxu0
    %v4302 = vadd.f32 %v4109, %v4301
    %v4303 = vpop.f32.mrb[0].mxu0
    %v4304 = vadd.f32 %v4111, %v4303
    %4305 = vmatprep.mubr.bf16.mxu0 %v2551
    %4306 = vmatmul.mubr.bf16.gmra.mrb[0].mxu0 %v2550
    %v4307 = vpop.f32.mrb[0].mxu0
    %v4308 = vadd.f32 %v4115, %v4307
    %v4309 = vpop.f32.mrb[0].mxu0
    %v4310 = vadd.f32 %v4117, %v4309
    %v4311 = vpop.f32.mrb[0].mxu0
    %v4312 = vadd.f32 %v4119, %v4311
    %v4313 = vpop.f32.mrb[0].mxu0
    %v4314 = vadd.f32 %v4121, %v4313
    %4315 = vmatprep.mubr.bf16.mxu0 %v2555
    %4316 = vmatmul.mubr.bf16.gmra.mrb[0].mxu0 %v2554
    %v4317 = vpop.f32.mrb[0].mxu0
    %v4318 = vadd.f32 %v4125, %v4317
    %v4319 = vpop.f32.mrb[0].mxu0
    %v4320 = vadd.f32 %v4127, %v4319
    %v4321 = vpop.f32.mrb[0].mxu0
    %v4322 = vadd.f32 %v4129, %v4321
    %v4323 = vpop.f32.mrb[0].mxu0
    %v4324 = vadd.f32 %v4131, %v4323
    %4325 = vmatprep.mubr.bf16.mxu0 %v2559
    %4326 = vmatmul.mubr.bf16.gmra.mrb[0].mxu0 %v2558
    %v4327 = vpop.f32.mrb[0].mxu0
    %v4328 = vadd.f32 %v4135, %v4327
    %v4329 = vpop.f32.mrb[0].mxu0
    %v4330 = vadd.f32 %v4137, %v4329
    %v4331 = vpop.f32.mrb[0].mxu0
    %v4332 = vadd.f32 %v4139, %v4331
    %v4333 = vpop.f32.mrb[0].mxu0
    %v4334 = vadd.f32 %v4141, %v4333
    %4335 = vmatprep.mubr.bf16.mxu0 %v2563
    %4336 = vmatmul.mubr.bf16.gmra.mrb[0].mxu0 %v2562
    %v4337 = vpop.f32.mrb[0].mxu0
    %v4338 = vadd.f32 %v4145, %v4337
    %v4339 = vpop.f32.mrb[0].mxu0
    %v4340 = vadd.f32 %v4147, %v4339
    %v4341 = vpop.f32.mrb[0].mxu0
    %v4342 = vadd.f32 %v4149, %v4341
    %v4343 = vpop.f32.mrb[0].mxu0
    %v4344 = vadd.f32 %v4151, %v4343
    %4345 = vmatprep.mubr.bf16.mxu0 %v2567
    %4346 = vmatmul.mubr.bf16.gmra.mrb[0].mxu0 %v2566
    %v4347 = vpop.f32.mrb[0].mxu0
    %v4348 = vadd.f32 %v4155, %v4347
    %v4349 = vpop.f32.mrb[0].mxu0
    %v4350 = vadd.f32 %v4157, %v4349
    %v4351 = vpop.f32.mrb[0].mxu0
    %v4352 = vadd.f32 %v4159, %v4351
    %v4353 = vpop.f32.mrb[0].mxu0
    %v4354 = vadd.f32 %v4161, %v4353
    %4355 = vmatprep.mubr.bf16.mxu0 %v2571
    %4356 = vmatmul.mubr.bf16.gmra.mrb[0].mxu0 %v2570
    %v4357 = vpop.f32.mrb[0].mxu0
    %v4358 = vadd.f32 %v4165, %v4357
    %v4359 = vpop.f32.mrb[0].mxu0
    %v4360 = vadd.f32 %v4167, %v4359
    %v4361 = vpop.f32.mrb[0].mxu0
    %v4362 = vadd.f32 %v4169, %v4361
    %v4363 = vpop.f32.mrb[0].mxu0
    %v4364 = vadd.f32 %v4171, %v4363
    %4365 = vmatprep.mubr.bf16.mxu0 %v2575
    %4366 = vmatmul.mubr.bf16.gmra.mrb[0].mxu0 %v2574
    %v4367 = vpop.f32.mrb[0].mxu0
    %v4368 = vadd.f32 %v4175, %v4367
    %v4369 = vpop.f32.mrb[0].mxu0
    %v4370 = vadd.f32 %v4177, %v4369
    %v4371 = vpop.f32.mrb[0].mxu0
    %v4372 = vadd.f32 %v4179, %v4371
    %v4373 = vpop.f32.mrb[0].mxu0
    %v4374 = vadd.f32 %v4181, %v4373
    %4375 = vdwg.mxu0
    %v4376 = vld [vmem:[#allocation14] sm:$0xff]
    %v4377 = vld [vmem:[#allocation15] sm:$0xff]
    %v4378 = vadd.f32 %v3060, %v3064
    %v4379 = vadd.f32 %v4378, %v3070
    %v4380 = vadd.f32 %v4379, %v3074
    %v4381 = vadd.f32 %v4380, %v3080
    %v4382 = vadd.f32 %v4381, %v3084
    %v4383 = vadd.f32 %v4382, %v3090
    %v4384 = vadd.f32 %v4383, %v3094
    %v4385 = vadd.f32 %v4384, %v3100
    %v4386 = vadd.f32 %v4385, %v3104
    %v4387 = vadd.f32 %v4386, %v3110
    %v4388 = vadd.f32 %v4387, %v3114
    %v4389 = vadd.f32 %v4388, %v3120
    %v4390 = vadd.f32 %v4389, %v3124
    %v4391 = vadd.f32 %v4390, %v3130
    %v4392 = vadd.f32 %v4391, %v3134
    %v4393 = vadd.f32 %v4392, %v3140
    %v4394 = vadd.f32 %v4393, %v3144
    %v4395 = vadd.f32 %v4394, %v3150
    %v4396 = vadd.f32 %v4395, %v3154
    %v4397 = vadd.f32 %v4396, %v3160
    %v4398 = vadd.f32 %v4397, %v3164
    %v4399 = vadd.f32 %v4398, %v3170
    %v4400 = vadd.f32 %v4399, %v3174
    %v4401 = vadd.f32 %v4400, %v3180
    %v4402 = vadd.f32 %v4401, %v3184
    %v4403 = vadd.f32 %v4402, %v3190
    %v4404 = vadd.f32 %v4403, %v3194
    %v4405 = vadd.f32 %v4404, %v3200
    %v4406 = vadd.f32 %v4405, %v3204
    %v4407 = vadd.f32 %v4406, %v3210
    %v4408 = vadd.f32 %v4407, %v3214
    %v4409 = vrot.slane %v4408, 4
    %v4410 = vadd.f32 %v4408, %v4409
    %v4411 = vrot.slane %v4410, 2
    %v4412 = vadd.f32 %v4410, %v4411
    %v4413 = vrot.slane %v4412, 1
    %v4414 = vadd.f32 %v4412, %v4413
    %v4415 = vadd.f32 %v3062, %v3066
    %v4416 = vadd.f32 %v4415, %v3072
    %v4417 = vadd.f32 %v4416, %v3076
    %v4418 = vadd.f32 %v4417, %v3082
    %v4419 = vadd.f32 %v4418, %v3086
    %v4420 = vadd.f32 %v4419, %v3092
    %v4421 = vadd.f32 %v4420, %v3096
    %v4422 = vadd.f32 %v4421, %v3102
    %v4423 = vadd.f32 %v4422, %v3106
    %v4424 = vadd.f32 %v4423, %v3112
    %v4425 = vadd.f32 %v4424, %v3116
    %v4426 = vadd.f32 %v4425, %v3122
    %v4427 = vadd.f32 %v4426, %v3126
    %v4428 = vadd.f32 %v4427, %v3132
    %v4429 = vadd.f32 %v4428, %v3136
    %v4430 = vadd.f32 %v4429, %v3142
    %v4431 = vadd.f32 %v4430, %v3146
    %v4432 = vadd.f32 %v4431, %v3152
    %v4433 = vadd.f32 %v4432, %v3156
    %v4434 = vadd.f32 %v4433, %v3162
    %v4435 = vadd.f32 %v4434, %v3166
    %v4436 = vadd.f32 %v4435, %v3172
    %v4437 = vadd.f32 %v4436, %v3176
    %v4438 = vadd.f32 %v4437, %v3182
    %v4439 = vadd.f32 %v4438, %v3186
    %v4440 = vadd.f32 %v4439, %v3192
    %v4441 = vadd.f32 %v4440, %v3196
    %v4442 = vadd.f32 %v4441, %v3202
    %v4443 = vadd.f32 %v4442, %v3206
    %v4444 = vadd.f32 %v4443, %v3212
    %v4445 = vadd.f32 %v4444, %v3216
    %v4446 = vrot.slane %v4445, 4
    %v4447 = vadd.f32 %v4445, %v4446
    %v4448 = vrot.slane %v4447, 2
    %v4449 = vadd.f32 %v4447, %v4448
    %v4450 = vrot.slane %v4449, 1
    %v4451 = vadd.f32 %v4449, %v4450
    %v4452 = vadd.f32 %v3446, %v3450
    %v4453 = vadd.f32 %v4452, %v3456
    %v4454 = vadd.f32 %v4453, %v3460
    %v4455 = vadd.f32 %v4454, %v3466
    %v4456 = vadd.f32 %v4455, %v3470
    %v4457 = vadd.f32 %v4456, %v3476
    %v4458 = vadd.f32 %v4457, %v3480
    %v4459 = vadd.f32 %v4458, %v3486
    %v4460 = vadd.f32 %v4459, %v3490
    %v4461 = vadd.f32 %v4460, %v3496
    %v4462 = vadd.f32 %v4461, %v3500
    %v4463 = vadd.f32 %v4462, %v3506
    %v4464 = vadd.f32 %v4463, %v3510
    %v4465 = vadd.f32 %v4464, %v3516
    %v4466 = vadd.f32 %v4465, %v3520
    %v4467 = vadd.f32 %v4466, %v3526
    %v4468 = vadd.f32 %v4467, %v3530
    %v4469 = vadd.f32 %v4468, %v3536
    %v4470 = vadd.f32 %v4469, %v3540
    %v4471 = vadd.f32 %v4470, %v3546
    %v4472 = vadd.f32 %v4471, %v3550
    %v4473 = vadd.f32 %v4472, %v3556
    %v4474 = vadd.f32 %v4473, %v3560
    %v4475 = vadd.f32 %v4474, %v3566
    %v4476 = vadd.f32 %v4475, %v3570
    %v4477 = vadd.f32 %v4476, %v3576
    %v4478 = vadd.f32 %v4477, %v3580
    %v4479 = vadd.f32 %v4478, %v3586
    %v4480 = vadd.f32 %v4479, %v3590
    %v4481 = vadd.f32 %v4480, %v3596
    %v4482 = vadd.f32 %v4481, %v3600
    %v4483 = vrot.slane %v4482, 4
    %v4484 = vadd.f32 %v4482, %v4483
    %v4485 = vrot.slane %v4484, 2
    %v4486 = vadd.f32 %v4484, %v4485
    %v4487 = vrot.slane %v4486, 1
    %v4488 = vadd.f32 %v4486, %v4487
    %v4489 = vadd.f32 %v3448, %v3452
    %v4490 = vadd.f32 %v4489, %v3458
    %v4491 = vadd.f32 %v4490, %v3462
    %v4492 = vadd.f32 %v4491, %v3468
    %v4493 = vadd.f32 %v4492, %v3472
    %v4494 = vadd.f32 %v4493, %v3478
    %v4495 = vadd.f32 %v4494, %v3482
    %v4496 = vadd.f32 %v4495, %v3488
    %v4497 = vadd.f32 %v4496, %v3492
    %v4498 = vadd.f32 %v4497, %v3498
    %v4499 = vadd.f32 %v4498, %v3502
    %v4500 = vadd.f32 %v4499, %v3508
    %v4501 = vadd.f32 %v4500, %v3512
    %v4502 = vadd.f32 %v4501, %v3518
    %v4503 = vadd.f32 %v4502, %v3522
    %v4504 = vadd.f32 %v4503, %v3528
    %v4505 = vadd.f32 %v4504, %v3532
    %v4506 = vadd.f32 %v4505, %v3538
    %v4507 = vadd.f32 %v4506, %v3542
    %v4508 = vadd.f32 %v4507, %v3548
    %v4509 = vadd.f32 %v4508, %v3552
    %v4510 = vadd.f32 %v4509, %v3558
    %v4511 = vadd.f32 %v4510, %v3562
    %v4512 = vadd.f32 %v4511, %v3568
    %v4513 = vadd.f32 %v4512, %v3572
    %v4514 = vadd.f32 %v4513, %v3578
    %v4515 = vadd.f32 %v4514, %v3582
    %v4516 = vadd.f32 %v4515, %v3588
    %v4517 = vadd.f32 %v4516, %v3592
    %v4518 = vadd.f32 %v4517, %v3598
    %v4519 = vadd.f32 %v4518, %v3602
    %v4520 = vrot.slane %v4519, 4
    %v4521 = vadd.f32 %v4519, %v4520
    %v4522 = vrot.slane %v4521, 2
    %v4523 = vadd.f32 %v4521, %v4522
    %v4524 = vrot.slane %v4523, 1
    %v4525 = vadd.f32 %v4523, %v4524
    %v4526 = vadd.f32 %v3832, %v3836
    %v4527 = vadd.f32 %v4526, %v3842
    %v4528 = vadd.f32 %v4527, %v3846
    %v4529 = vadd.f32 %v4528, %v3852
    %v4530 = vadd.f32 %v4529, %v3856
    %v4531 = vadd.f32 %v4530, %v3862
    %v4532 = vadd.f32 %v4531, %v3866
    %v4533 = vadd.f32 %v4532, %v3872
    %v4534 = vadd.f32 %v4533, %v3876
    %v4535 = vadd.f32 %v4534, %v3882
    %v4536 = vadd.f32 %v4535, %v3886
    %v4537 = vadd.f32 %v4536, %v3892
    %v4538 = vadd.f32 %v4537, %v3896
    %v4539 = vadd.f32 %v4538, %v3902
    %v4540 = vadd.f32 %v4539, %v3906
    %v4541 = vadd.f32 %v4540, %v3912
    %v4542 = vadd.f32 %v4541, %v3916
    %v4543 = vadd.f32 %v4542, %v3922
    %v4544 = vadd.f32 %v4543, %v3926
    %v4545 = vadd.f32 %v4544, %v3932
    %v4546 = vadd.f32 %v4545, %v3936
    %v4547 = vadd.f32 %v4546, %v3942
    %v4548 = vadd.f32 %v4547, %v3946
    %v4549 = vadd.f32 %v4548, %v3952
    %v4550 = vadd.f32 %v4549, %v3956
    %v4551 = vadd.f32 %v4550, %v3962
    %v4552 = vadd.f32 %v4551, %v3966
    %v4553 = vadd.f32 %v4552, %v3972
    %v4554 = vadd.f32 %v4553, %v3976
    %v4555 = vadd.f32 %v4554, %v3982
    %v4556 = vadd.f32 %v4555, %v3986
    %v4557 = vrot.slane %v4556, 4
    %v4558 = vadd.f32 %v4556, %v4557
    %v4559 = vrot.slane %v4558, 2
    %v4560 = vadd.f32 %v4558, %v4559
    %v4561 = vrot.slane %v4560, 1
    %v4562 = vadd.f32 %v4560, %v4561
    %v4563 = vadd.f32 %v3834, %v3838
    %v4564 = vadd.f32 %v4563, %v3844
    %v4565 = vadd.f32 %v4564, %v3848
    %v4566 = vadd.f32 %v4565, %v3854
    %v4567 = vadd.f32 %v4566, %v3858
    %v4568 = vadd.f32 %v4567, %v3864
    %v4569 = vadd.f32 %v4568, %v3868
    %v4570 = vadd.f32 %v4569, %v3874
    %v4571 = vadd.f32 %v4570, %v3878
    %v4572 = vadd.f32 %v4571, %v3884
    %v4573 = vadd.f32 %v4572, %v3888
    %v4574 = vadd.f32 %v4573, %v3894
    %v4575 = vadd.f32 %v4574, %v3898
    %v4576 = vadd.f32 %v4575, %v3904
    %v4577 = vadd.f32 %v4576, %v3908
    %v4578 = vadd.f32 %v4577, %v3914
    %v4579 = vadd.f32 %v4578, %v3918
    %v4580 = vadd.f32 %v4579, %v3924
    %v4581 = vadd.f32 %v4580, %v3928
    %v4582 = vadd.f32 %v4581, %v3934
    %v4583 = vadd.f32 %v4582, %v3938
    %v4584 = vadd.f32 %v4583, %v3944
    %v4585 = vadd.f32 %v4584, %v3948
    %v4586 = vadd.f32 %v4585, %v3954
    %v4587 = vadd.f32 %v4586, %v3958
    %v4588 = vadd.f32 %v4587, %v3964
    %v4589 = vadd.f32 %v4588, %v3968
    %v4590 = vadd.f32 %v4589, %v3974
    %v4591 = vadd.f32 %v4590, %v3978
    %v4592 = vadd.f32 %v4591, %v3984
    %v4593 = vadd.f32 %v4592, %v3988
    %v4594 = vrot.slane %v4593, 4
    %v4595 = vadd.f32 %v4593, %v4594
    %v4596 = vrot.slane %v4595, 2
    %v4597 = vadd.f32 %v4595, %v4596
    %v4598 = vrot.slane %v4597, 1
    %v4599 = vadd.f32 %v4597, %v4598
    %v4600 = vadd.f32 %v4218, %v4222
    %v4601 = vadd.f32 %v4600, %v4228
    %v4602 = vadd.f32 %v4601, %v4232
    %v4603 = vadd.f32 %v4602, %v4238
    %v4604 = vadd.f32 %v4603, %v4242
    %v4605 = vadd.f32 %v4604, %v4248
    %v4606 = vadd.f32 %v4605, %v4252
    %v4607 = vadd.f32 %v4606, %v4258
    %v4608 = vadd.f32 %v4607, %v4262
    %v4609 = vadd.f32 %v4608, %v4268
    %v4610 = vadd.f32 %v4609, %v4272
    %v4611 = vadd.f32 %v4610, %v4278
    %v4612 = vadd.f32 %v4611, %v4282
    %v4613 = vadd.f32 %v4612, %v4288
    %v4614 = vadd.f32 %v4613, %v4292
    %v4615 = vadd.f32 %v4614, %v4298
    %v4616 = vadd.f32 %v4615, %v4302
    %v4617 = vadd.f32 %v4616, %v4308
    %v4618 = vadd.f32 %v4617, %v4312
    %v4619 = vadd.f32 %v4618, %v4318
    %v4620 = vadd.f32 %v4619, %v4322
    %v4621 = vadd.f32 %v4620, %v4328
    %v4622 = vadd.f32 %v4621, %v4332
    %v4623 = vadd.f32 %v4622, %v4338
    %v4624 = vadd.f32 %v4623, %v4342
    %v4625 = vadd.f32 %v4624, %v4348
    %v4626 = vadd.f32 %v4625, %v4352
    %v4627 = vadd.f32 %v4626, %v4358
    %v4628 = vadd.f32 %v4627, %v4362
    %v4629 = vadd.f32 %v4628, %v4368
    %v4630 = vadd.f32 %v4629, %v4372
    %v4631 = vrot.slane %v4630, 4
    %v4632 = vadd.f32 %v4630, %v4631
    %v4633 = vrot.slane %v4632, 2
    %v4634 = vadd.f32 %v4632, %v4633
    %v4635 = vrot.slane %v4634, 1
    %v4636 = vadd.f32 %v4634, %v4635
    %v4637 = vadd.f32 %v4220, %v4224
    %v4638 = vadd.f32 %v4637, %v4230
    %v4639 = vadd.f32 %v4638, %v4234
    %v4640 = vadd.f32 %v4639, %v4240
    %v4641 = vadd.f32 %v4640, %v4244
    %v4642 = vadd.f32 %v4641, %v4250
    %v4643 = vadd.f32 %v4642, %v4254
    %v4644 = vadd.f32 %v4643, %v4260
    %v4645 = vadd.f32 %v4644, %v4264
    %v4646 = vadd.f32 %v4645, %v4270
    %v4647 = vadd.f32 %v4646, %v4274
    %v4648 = vadd.f32 %v4647, %v4280
    %v4649 = vadd.f32 %v4648, %v4284
    %v4650 = vadd.f32 %v4649, %v4290
    %v4651 = vadd.f32 %v4650, %v4294
    %v4652 = vadd.f32 %v4651, %v4300
    %v4653 = vadd.f32 %v4652, %v4304
    %v4654 = vadd.f32 %v4653, %v4310
    %v4655 = vadd.f32 %v4654, %v4314
    %v4656 = vadd.f32 %v4655, %v4320
    %v4657 = vadd.f32 %v4656, %v4324
    %v4658 = vadd.f32 %v4657, %v4330
    %v4659 = vadd.f32 %v4658, %v4334
    %v4660 = vadd.f32 %v4659, %v4340
    %v4661 = vadd.f32 %v4660, %v4344
    %v4662 = vadd.f32 %v4661, %v4350
    %v4663 = vadd.f32 %v4662, %v4354
    %v4664 = vadd.f32 %v4663, %v4360
    %v4665 = vadd.f32 %v4664, %v4364
    %v4666 = vadd.f32 %v4665, %v4370
    %v4667 = vadd.f32 %v4666, %v4374
    %v4668 = vrot.slane %v4667, 4
    %v4669 = vadd.f32 %v4667, %v4668
    %v4670 = vrot.slane %v4669, 2
    %v4671 = vadd.f32 %v4669, %v4670
    %v4672 = vrot.slane %v4671, 1
    %v4673 = vadd.f32 %v4671, %v4672
    %v4674 = vmul.f32 %v3060, %v3060
    %v4675 = vmul.f32 %v3062, %v3062
    %v4676 = vmul.f32 %v3446, %v3446
    %v4677 = vmul.f32 %v3448, %v3448
    %v4678 = vmul.f32 %v3832, %v3832
    %v4679 = vmul.f32 %v3834, %v3834
    %v4680 = vmul.f32 %v4218, %v4218
    %v4681 = vmul.f32 %v4220, %v4220
    %v4682 = vmul.f32 %v3064, %v3064
    %v4683 = vmul.f32 %v3066, %v3066
    %v4684 = vmul.f32 %v3450, %v3450
    %v4685 = vmul.f32 %v3452, %v3452
    %v4686 = vmul.f32 %v3836, %v3836
    %v4687 = vmul.f32 %v3838, %v3838
    %v4688 = vmul.f32 %v4222, %v4222
    %v4689 = vmul.f32 %v4224, %v4224
    %v4690 = vmul.f32 %v3070, %v3070
    %v4691 = vmul.f32 %v3072, %v3072
    %v4692 = vmul.f32 %v3456, %v3456
    %v4693 = vmul.f32 %v3458, %v3458
    %v4694 = vmul.f32 %v3842, %v3842
    %v4695 = vmul.f32 %v3844, %v3844
    %v4696 = vmul.f32 %v4228, %v4228
    %v4697 = vmul.f32 %v4230, %v4230
    %v4698 = vmul.f32 %v3074, %v3074
    %v4699 = vmul.f32 %v3076, %v3076
    %v4700 = vmul.f32 %v3460, %v3460
    %v4701 = vmul.f32 %v3462, %v3462
    %v4702 = vmul.f32 %v3846, %v3846
    %v4703 = vmul.f32 %v3848, %v3848
    %v4704 = vmul.f32 %v4232, %v4232
    %v4705 = vmul.f32 %v4234, %v4234
    %v4706 = vmul.f32 %v3080, %v3080
    %v4707 = vmul.f32 %v3082, %v3082
    %v4708 = vmul.f32 %v3466, %v3466
    %v4709 = vmul.f32 %v3468, %v3468
    %v4710 = vmul.f32 %v3852, %v3852
    %v4711 = vmul.f32 %v3854, %v3854
    %v4712 = vmul.f32 %v4238, %v4238
    %v4713 = vmul.f32 %v4240, %v4240
    %v4714 = vmul.f32 %v3084, %v3084
    %v4715 = vmul.f32 %v3086, %v3086
    %v4716 = vmul.f32 %v3470, %v3470
    %v4717 = vmul.f32 %v3472, %v3472
    %v4718 = vmul.f32 %v3856, %v3856
    %v4719 = vmul.f32 %v3858, %v3858
    %v4720 = vmul.f32 %v4242, %v4242
    %v4721 = vmul.f32 %v4244, %v4244
    %v4722 = vmul.f32 %v3090, %v3090
    %v4723 = vmul.f32 %v3092, %v3092
    %v4724 = vmul.f32 %v3476, %v3476
    %v4725 = vmul.f32 %v3478, %v3478
    %v4726 = vmul.f32 %v3862, %v3862
    %v4727 = vmul.f32 %v3864, %v3864
    %v4728 = vmul.f32 %v4248, %v4248
    %v4729 = vmul.f32 %v4250, %v4250
    %v4730 = vmul.f32 %v3094, %v3094
    %v4731 = vmul.f32 %v3096, %v3096
    %v4732 = vmul.f32 %v3480, %v3480
    %v4733 = vmul.f32 %v3482, %v3482
    %v4734 = vmul.f32 %v3866, %v3866
    %v4735 = vmul.f32 %v3868, %v3868
    %v4736 = vmul.f32 %v4252, %v4252
    %v4737 = vmul.f32 %v4254, %v4254
    %v4738 = vmul.f32 %v3100, %v3100
    %v4739 = vmul.f32 %v3102, %v3102
    %v4740 = vmul.f32 %v3486, %v3486
    %v4741 = vmul.f32 %v3488, %v3488
    %v4742 = vmul.f32 %v3872, %v3872
    %v4743 = vmul.f32 %v3874, %v3874
    %v4744 = vmul.f32 %v4258, %v4258
    %v4745 = vmul.f32 %v4260, %v4260
    %v4746 = vmul.f32 %v3104, %v3104
    %v4747 = vmul.f32 %v3106, %v3106
    %v4748 = vmul.f32 %v3490, %v3490
    %v4749 = vmul.f32 %v3492, %v3492
    %v4750 = vmul.f32 %v3876, %v3876
    %v4751 = vmul.f32 %v3878, %v3878
    %v4752 = vmul.f32 %v4262, %v4262
    %v4753 = vmul.f32 %v4264, %v4264
    %v4754 = vmul.f32 %v3110, %v3110
    %v4755 = vmul.f32 %v3112, %v3112
    %v4756 = vmul.f32 %v3496, %v3496
    %v4757 = vmul.f32 %v3498, %v3498
    %v4758 = vmul.f32 %v3882, %v3882
    %v4759 = vmul.f32 %v3884, %v3884
    %v4760 = vmul.f32 %v4268, %v4268
    %v4761 = vmul.f32 %v4270, %v4270
    %v4762 = vmul.f32 %v3114, %v3114
    %v4763 = vmul.f32 %v3116, %v3116
    %v4764 = vmul.f32 %v3500, %v3500
    %v4765 = vmul.f32 %v3502, %v3502
    %v4766 = vmul.f32 %v3886, %v3886
    %v4767 = vmul.f32 %v3888, %v3888
    %v4768 = vmul.f32 %v4272, %v4272
    %v4769 = vmul.f32 %v4274, %v4274
    %v4770 = vmul.f32 %v3120, %v3120
    %v4771 = vmul.f32 %v3122, %v3122
    %v4772 = vmul.f32 %v3506, %v3506
    %v4773 = vmul.f32 %v3508, %v3508
    %v4774 = vmul.f32 %v3892, %v3892
    %v4775 = vmul.f32 %v3894, %v3894
    %v4776 = vmul.f32 %v4278, %v4278
    %v4777 = vmul.f32 %v4280, %v4280
    %v4778 = vmul.f32 %v3124, %v3124
    %v4779 = vmul.f32 %v3126, %v3126
    %v4780 = vmul.f32 %v3510, %v3510
    %v4781 = vmul.f32 %v3512, %v3512
    %v4782 = vmul.f32 %v3896, %v3896
    %v4783 = vmul.f32 %v3898, %v3898
    %v4784 = vmul.f32 %v4282, %v4282
    %v4785 = vmul.f32 %v4284, %v4284
    %v4786 = vmul.f32 %v3130, %v3130
    %v4787 = vmul.f32 %v3132, %v3132
    %v4788 = vmul.f32 %v3516, %v3516
    %v4789 = vmul.f32 %v3518, %v3518
    %v4790 = vmul.f32 %v3902, %v3902
    %v4791 = vmul.f32 %v3904, %v3904
    %v4792 = vmul.f32 %v4288, %v4288
    %v4793 = vmul.f32 %v4290, %v4290
    %v4794 = vmul.f32 %v3134, %v3134
    %v4795 = vmul.f32 %v3136, %v3136
    %v4796 = vmul.f32 %v3520, %v3520
    %v4797 = vmul.f32 %v3522, %v3522
    %v4798 = vmul.f32 %v3906, %v3906
    %v4799 = vmul.f32 %v3908, %v3908
    %v4800 = vmul.f32 %v4292, %v4292
    %v4801 = vmul.f32 %v4294, %v4294
    %v4802 = vmul.f32 %v3140, %v3140
    %v4803 = vmul.f32 %v3142, %v3142
    %v4804 = vmul.f32 %v3526, %v3526
    %v4805 = vmul.f32 %v3528, %v3528
    %v4806 = vmul.f32 %v3912, %v3912
    %v4807 = vmul.f32 %v3914, %v3914
    %v4808 = vmul.f32 %v4298, %v4298
    %v4809 = vmul.f32 %v4300, %v4300
    %v4810 = vmul.f32 %v3144, %v3144
    %v4811 = vmul.f32 %v3146, %v3146
    %v4812 = vmul.f32 %v3530, %v3530
    %v4813 = vmul.f32 %v3532, %v3532
    %v4814 = vmul.f32 %v3916, %v3916
    %v4815 = vmul.f32 %v3918, %v3918
    %v4816 = vmul.f32 %v4302, %v4302
    %v4817 = vmul.f32 %v4304, %v4304
    %v4818 = vmul.f32 %v3150, %v3150
    %v4819 = vmul.f32 %v3152, %v3152
    %v4820 = vmul.f32 %v3536, %v3536
    %v4821 = vmul.f32 %v3538, %v3538
    %v4822 = vmul.f32 %v3922, %v3922
    %v4823 = vmul.f32 %v3924, %v3924
    %v4824 = vmul.f32 %v4308, %v4308
    %v4825 = vmul.f32 %v4310, %v4310
    %v4826 = vmul.f32 %v3154, %v3154
    %v4827 = vmul.f32 %v3156, %v3156
    %v4828 = vmul.f32 %v3540, %v3540
    %v4829 = vmul.f32 %v3542, %v3542
    %v4830 = vmul.f32 %v3926, %v3926
    %v4831 = vmul.f32 %v3928, %v3928
    %v4832 = vmul.f32 %v4312, %v4312
    %v4833 = vmul.f32 %v4314, %v4314
    %v4834 = vmul.f32 %v3160, %v3160
    %v4835 = vmul.f32 %v3162, %v3162
    %v4836 = vmul.f32 %v3546, %v3546
    %v4837 = vmul.f32 %v3548, %v3548
    %v4838 = vmul.f32 %v3932, %v3932
    %v4839 = vmul.f32 %v3934, %v3934
    %v4840 = vmul.f32 %v4318, %v4318
    %v4841 = vmul.f32 %v4320, %v4320
    %v4842 = vmul.f32 %v3164, %v3164
    %v4843 = vmul.f32 %v3166, %v3166
    %v4844 = vmul.f32 %v3550, %v3550
    %v4845 = vmul.f32 %v3552, %v3552
    %v4846 = vmul.f32 %v3936, %v3936
    %v4847 = vmul.f32 %v3938, %v3938
    %v4848 = vmul.f32 %v4322, %v4322
    %v4849 = vmul.f32 %v4324, %v4324
    %v4850 = vmul.f32 %v3170, %v3170
    %v4851 = vmul.f32 %v3172, %v3172
    %v4852 = vmul.f32 %v3556, %v3556
    %v4853 = vmul.f32 %v3558, %v3558
    %v4854 = vmul.f32 %v3942, %v3942
    %v4855 = vmul.f32 %v3944, %v3944
    %v4856 = vmul.f32 %v4328, %v4328
    %v4857 = vmul.f32 %v4330, %v4330
    %v4858 = vmul.f32 %v3174, %v3174
    %v4859 = vmul.f32 %v3176, %v3176
    %v4860 = vmul.f32 %v3560, %v3560
    %v4861 = vmul.f32 %v3562, %v3562
    %v4862 = vmul.f32 %v3946, %v3946
    %v4863 = vmul.f32 %v3948, %v3948
    %v4864 = vmul.f32 %v4332, %v4332
    %v4865 = vmul.f32 %v4334, %v4334
    %v4866 = vmul.f32 %v3180, %v3180
    %v4867 = vmul.f32 %v3182, %v3182
    %v4868 = vmul.f32 %v3566, %v3566
    %v4869 = vmul.f32 %v3568, %v3568
    %v4870 = vmul.f32 %v3952, %v3952
    %v4871 = vmul.f32 %v3954, %v3954
    %v4872 = vmul.f32 %v4338, %v4338
    %v4873 = vmul.f32 %v4340, %v4340
    %v4874 = vmul.f32 %v3184, %v3184
    %v4875 = vmul.f32 %v3186, %v3186
    %v4876 = vmul.f32 %v3570, %v3570
    %v4877 = vmul.f32 %v3572, %v3572
    %v4878 = vmul.f32 %v3956, %v3956
    %v4879 = vmul.f32 %v3958, %v3958
    %v4880 = vmul.f32 %v4342, %v4342
    %v4881 = vmul.f32 %v4344, %v4344
    %v4882 = vmul.f32 %v3190, %v3190
    %v4883 = vmul.f32 %v3192, %v3192
    %v4884 = vmul.f32 %v3576, %v3576
    %v4885 = vmul.f32 %v3578, %v3578
    %v4886 = vmul.f32 %v3962, %v3962
    %v4887 = vmul.f32 %v3964, %v3964
    %v4888 = vmul.f32 %v4348, %v4348
    %v4889 = vmul.f32 %v4350, %v4350
    %v4890 = vmul.f32 %v3194, %v3194
    %v4891 = vmul.f32 %v3196, %v3196
    %v4892 = vmul.f32 %v3580, %v3580
    %v4893 = vmul.f32 %v3582, %v3582
    %v4894 = vmul.f32 %v3966, %v3966
    %v4895 = vmul.f32 %v3968, %v3968
    %v4896 = vmul.f32 %v4352, %v4352
    %v4897 = vmul.f32 %v4354, %v4354
    %v4898 = vmul.f32 %v3200, %v3200
    %v4899 = vmul.f32 %v3202, %v3202
    %v4900 = vmul.f32 %v3586, %v3586
    %v4901 = vmul.f32 %v3588, %v3588
    %v4902 = vmul.f32 %v3972, %v3972
    %v4903 = vmul.f32 %v3974, %v3974
    %v4904 = vmul.f32 %v4358, %v4358
    %v4905 = vmul.f32 %v4360, %v4360
    %v4906 = vmul.f32 %v3204, %v3204
    %v4907 = vmul.f32 %v3206, %v3206
    %v4908 = vmul.f32 %v3590, %v3590
    %v4909 = vmul.f32 %v3592, %v3592
    %v4910 = vmul.f32 %v3976, %v3976
    %v4911 = vmul.f32 %v3978, %v3978
    %v4912 = vmul.f32 %v4362, %v4362
    %v4913 = vmul.f32 %v4364, %v4364
    %v4914 = vmul.f32 %v3210, %v3210
    %v4915 = vmul.f32 %v3212, %v3212
    %v4916 = vmul.f32 %v3596, %v3596
    %v4917 = vmul.f32 %v3598, %v3598
    %v4918 = vmul.f32 %v3982, %v3982
    %v4919 = vmul.f32 %v3984, %v3984
    %v4920 = vmul.f32 %v4368, %v4368
    %v4921 = vmul.f32 %v4370, %v4370
    %v4922 = vmul.f32 %v3214, %v3214
    %v4923 = vmul.f32 %v3216, %v3216
    %v4924 = vmul.f32 %v3600, %v3600
    %v4925 = vmul.f32 %v3602, %v3602
    %v4926 = vmul.f32 %v3986, %v3986
    %v4927 = vmul.f32 %v3988, %v3988
    %v4928 = vmul.f32 %v4372, %v4372
    %v4929 = vmul.f32 %v4374, %v4374
    %v4930 = vadd.f32 %v4674, %v4682
    %v4931 = vadd.f32 %v4930, %v4690
    %v4932 = vadd.f32 %v4931, %v4698
    %v4933 = vadd.f32 %v4932, %v4706
    %v4934 = vadd.f32 %v4933, %v4714
    %v4935 = vadd.f32 %v4934, %v4722
    %v4936 = vadd.f32 %v4935, %v4730
    %v4937 = vadd.f32 %v4936, %v4738
    %v4938 = vadd.f32 %v4937, %v4746
    %v4939 = vadd.f32 %v4938, %v4754
    %v4940 = vadd.f32 %v4939, %v4762
    %v4941 = vadd.f32 %v4940, %v4770
    %v4942 = vadd.f32 %v4941, %v4778
    %v4943 = vadd.f32 %v4942, %v4786
    %v4944 = vadd.f32 %v4943, %v4794
    %v4945 = vadd.f32 %v4944, %v4802
    %v4946 = vadd.f32 %v4945, %v4810
    %v4947 = vadd.f32 %v4946, %v4818
    %v4948 = vadd.f32 %v4947, %v4826
    %v4949 = vadd.f32 %v4948, %v4834
    %v4950 = vadd.f32 %v4949, %v4842
    %v4951 = vadd.f32 %v4950, %v4850
    %v4952 = vadd.f32 %v4951, %v4858
    %v4953 = vadd.f32 %v4952, %v4866
    %v4954 = vadd.f32 %v4953, %v4874
    %v4955 = vadd.f32 %v4954, %v4882
    %v4956 = vadd.f32 %v4955, %v4890
    %v4957 = vadd.f32 %v4956, %v4898
    %v4958 = vadd.f32 %v4957, %v4906
    %v4959 = vadd.f32 %v4958, %v4914
    %v4960 = vadd.f32 %v4959, %v4922
    %v4961 = vrot.slane %v4960, 4
    %v4962 = vadd.f32 %v4960, %v4961
    %v4963 = vrot.slane %v4962, 2
    %v4964 = vadd.f32 %v4962, %v4963
    %v4965 = vrot.slane %v4964, 1
    %v4966 = vadd.f32 %v4964, %v4965
    %v4967 = vadd.f32 %v4675, %v4683
    %v4968 = vadd.f32 %v4967, %v4691
    %v4969 = vadd.f32 %v4968, %v4699
    %v4970 = vadd.f32 %v4969, %v4707
    %v4971 = vadd.f32 %v4970, %v4715
    %v4972 = vadd.f32 %v4971, %v4723
    %v4973 = vadd.f32 %v4972, %v4731
    %v4974 = vadd.f32 %v4973, %v4739
    %v4975 = vadd.f32 %v4974, %v4747
    %v4976 = vadd.f32 %v4975, %v4755
    %v4977 = vadd.f32 %v4976, %v4763
    %v4978 = vadd.f32 %v4977, %v4771
    %v4979 = vadd.f32 %v4978, %v4779
    %v4980 = vadd.f32 %v4979, %v4787
    %v4981 = vadd.f32 %v4980, %v4795
    %v4982 = vadd.f32 %v4981, %v4803
    %v4983 = vadd.f32 %v4982, %v4811
    %v4984 = vadd.f32 %v4983, %v4819
    %v4985 = vadd.f32 %v4984, %v4827
    %v4986 = vadd.f32 %v4985, %v4835
    %v4987 = vadd.f32 %v4986, %v4843
    %v4988 = vadd.f32 %v4987, %v4851
    %v4989 = vadd.f32 %v4988, %v4859
    %v4990 = vadd.f32 %v4989, %v4867
    %v4991 = vadd.f32 %v4990, %v4875
    %v4992 = vadd.f32 %v4991, %v4883
    %v4993 = vadd.f32 %v4992, %v4891
    %v4994 = vadd.f32 %v4993, %v4899
    %v4995 = vadd.f32 %v4994, %v4907
    %v4996 = vadd.f32 %v4995, %v4915
    %v4997 = vadd.f32 %v4996, %v4923
    %v4998 = vrot.slane %v4997, 4
    %v4999 = vadd.f32 %v4997, %v4998
    %v5000 = vrot.slane %v4999, 2
    %v5001 = vadd.f32 %v4999, %v5000
    %v5002 = vrot.slane %v5001, 1
    %v5003 = vadd.f32 %v5001, %v5002
    %v5004 = vadd.f32 %v4676, %v4684
    %v5005 = vadd.f32 %v5004, %v4692
    %v5006 = vadd.f32 %v5005, %v4700
    %v5007 = vadd.f32 %v5006, %v4708
    %v5008 = vadd.f32 %v5007, %v4716
    %v5009 = vadd.f32 %v5008, %v4724
    %v5010 = vadd.f32 %v5009, %v4732
    %v5011 = vadd.f32 %v5010, %v4740
    %v5012 = vadd.f32 %v5011, %v4748
    %v5013 = vadd.f32 %v5012, %v4756
    %v5014 = vadd.f32 %v5013, %v4764
    %v5015 = vadd.f32 %v5014, %v4772
    %v5016 = vadd.f32 %v5015, %v4780
    %v5017 = vadd.f32 %v5016, %v4788
    %v5018 = vadd.f32 %v5017, %v4796
    %v5019 = vadd.f32 %v5018, %v4804
    %v5020 = vadd.f32 %v5019, %v4812
    %v5021 = vadd.f32 %v5020, %v4820
    %v5022 = vadd.f32 %v5021, %v4828
    %v5023 = vadd.f32 %v5022, %v4836
    %v5024 = vadd.f32 %v5023, %v4844
    %v5025 = vadd.f32 %v5024, %v4852
    %v5026 = vadd.f32 %v5025, %v4860
    %v5027 = vadd.f32 %v5026, %v4868
    %v5028 = vadd.f32 %v5027, %v4876
    %v5029 = vadd.f32 %v5028, %v4884
    %v5030 = vadd.f32 %v5029, %v4892
    %v5031 = vadd.f32 %v5030, %v4900
    %v5032 = vadd.f32 %v5031, %v4908
    %v5033 = vadd.f32 %v5032, %v4916
    %v5034 = vadd.f32 %v5033, %v4924
    %v5035 = vrot.slane %v5034, 4
    %v5036 = vadd.f32 %v5034, %v5035
    %v5037 = vrot.slane %v5036, 2
    %v5038 = vadd.f32 %v5036, %v5037
    %v5039 = vrot.slane %v5038, 1
    %v5040 = vadd.f32 %v5038, %v5039
    %v5041 = vadd.f32 %v4677, %v4685
    %v5042 = vadd.f32 %v5041, %v4693
    %v5043 = vadd.f32 %v5042, %v4701
    %v5044 = vadd.f32 %v5043, %v4709
    %v5045 = vadd.f32 %v5044, %v4717
    %v5046 = vadd.f32 %v5045, %v4725
    %v5047 = vadd.f32 %v5046, %v4733
    %v5048 = vadd.f32 %v5047, %v4741
    %v5049 = vadd.f32 %v5048, %v4749
    %v5050 = vadd.f32 %v5049, %v4757
    %v5051 = vadd.f32 %v5050, %v4765
    %v5052 = vadd.f32 %v5051, %v4773
    %v5053 = vadd.f32 %v5052, %v4781
    %v5054 = vadd.f32 %v5053, %v4789
    %v5055 = vadd.f32 %v5054, %v4797
    %v5056 = vadd.f32 %v5055, %v4805
    %v5057 = vadd.f32 %v5056, %v4813
    %v5058 = vadd.f32 %v5057, %v4821
    %v5059 = vadd.f32 %v5058, %v4829
    %v5060 = vadd.f32 %v5059, %v4837
    %v5061 = vadd.f32 %v5060, %v4845
    %v5062 = vadd.f32 %v5061, %v4853
    %v5063 = vadd.f32 %v5062, %v4861
    %v5064 = vadd.f32 %v5063, %v4869
    %v5065 = vadd.f32 %v5064, %v4877
    %v5066 = vadd.f32 %v5065, %v4885
    %v5067 = vadd.f32 %v5066, %v4893
    %v5068 = vadd.f32 %v5067, %v4901
    %v5069 = vadd.f32 %v5068, %v4909
    %v5070 = vadd.f32 %v5069, %v4917
    %v5071 = vadd.f32 %v5070, %v4925
    %v5072 = vrot.slane %v5071, 4
    %v5073 = vadd.f32 %v5071, %v5072
    %v5074 = vrot.slane %v5073, 2
    %v5075 = vadd.f32 %v5073, %v5074
    %v5076 = vrot.slane %v5075, 1
    %v5077 = vadd.f32 %v5075, %v5076
    %v5078 = vadd.f32 %v4678, %v4686
    %v5079 = vadd.f32 %v5078, %v4694
    %v5080 = vadd.f32 %v5079, %v4702
    %v5081 = vadd.f32 %v5080, %v4710
    %v5082 = vadd.f32 %v5081, %v4718
    %v5083 = vadd.f32 %v5082, %v4726
    %v5084 = vadd.f32 %v5083, %v4734
    %v5085 = vadd.f32 %v5084, %v4742
    %v5086 = vadd.f32 %v5085, %v4750
    %v5087 = vadd.f32 %v5086, %v4758
    %v5088 = vadd.f32 %v5087, %v4766
    %v5089 = vadd.f32 %v5088, %v4774
    %v5090 = vadd.f32 %v5089, %v4782
    %v5091 = vadd.f32 %v5090, %v4790
    %v5092 = vadd.f32 %v5091, %v4798
    %v5093 = vadd.f32 %v5092, %v4806
    %v5094 = vadd.f32 %v5093, %v4814
    %v5095 = vadd.f32 %v5094, %v4822
    %v5096 = vadd.f32 %v5095, %v4830
    %v5097 = vadd.f32 %v5096, %v4838
    %v5098 = vadd.f32 %v5097, %v4846
    %v5099 = vadd.f32 %v5098, %v4854
    %v5100 = vadd.f32 %v5099, %v4862
    %v5101 = vadd.f32 %v5100, %v4870
    %v5102 = vadd.f32 %v5101, %v4878
    %v5103 = vadd.f32 %v5102, %v4886
    %v5104 = vadd.f32 %v5103, %v4894
    %v5105 = vadd.f32 %v5104, %v4902
    %v5106 = vadd.f32 %v5105, %v4910
    %v5107 = vadd.f32 %v5106, %v4918
    %v5108 = vadd.f32 %v5107, %v4926
    %v5109 = vrot.slane %v5108, 4
    %v5110 = vadd.f32 %v5108, %v5109
    %v5111 = vrot.slane %v5110, 2
    %v5112 = vadd.f32 %v5110, %v5111
    %v5113 = vrot.slane %v5112, 1
    %v5114 = vadd.f32 %v5112, %v5113
    %v5115 = vadd.f32 %v4679, %v4687
    %v5116 = vadd.f32 %v5115, %v4695
    %v5117 = vadd.f32 %v5116, %v4703
    %v5118 = vadd.f32 %v5117, %v4711
    %v5119 = vadd.f32 %v5118, %v4719
    %v5120 = vadd.f32 %v5119, %v4727
    %v5121 = vadd.f32 %v5120, %v4735
    %v5122 = vadd.f32 %v5121, %v4743
    %v5123 = vadd.f32 %v5122, %v4751
    %v5124 = vadd.f32 %v5123, %v4759
    %v5125 = vadd.f32 %v5124, %v4767
    %v5126 = vadd.f32 %v5125, %v4775
    %v5127 = vadd.f32 %v5126, %v4783
    %v5128 = vadd.f32 %v5127, %v4791
    %v5129 = vadd.f32 %v5128, %v4799
    %v5130 = vadd.f32 %v5129, %v4807
    %v5131 = vadd.f32 %v5130, %v4815
    %v5132 = vadd.f32 %v5131, %v4823
    %v5133 = vadd.f32 %v5132, %v4831
    %v5134 = vadd.f32 %v5133, %v4839
    %v5135 = vadd.f32 %v5134, %v4847
    %v5136 = vadd.f32 %v5135, %v4855
    %v5137 = vadd.f32 %v5136, %v4863
    %v5138 = vadd.f32 %v5137, %v4871
    %v5139 = vadd.f32 %v5138, %v4879
    %v5140 = vadd.f32 %v5139, %v4887
    %v5141 = vadd.f32 %v5140, %v4895
    %v5142 = vadd.f32 %v5141, %v4903
    %v5143 = vadd.f32 %v5142, %v4911
    %v5144 = vadd.f32 %v5143, %v4919
    %v5145 = vadd.f32 %v5144, %v4927
    %v5146 = vrot.slane %v5145, 4
    %v5147 = vadd.f32 %v5145, %v5146
    %v5148 = vrot.slane %v5147, 2
    %v5149 = vadd.f32 %v5147, %v5148
    %v5150 = vrot.slane %v5149, 1
    %v5151 = vadd.f32 %v5149, %v5150
    %v5152 = vadd.f32 %v4680, %v4688
    %v5153 = vadd.f32 %v5152, %v4696
    %v5154 = vadd.f32 %v5153, %v4704
    %v5155 = vadd.f32 %v5154, %v4712
    %v5156 = vadd.f32 %v5155, %v4720
    %v5157 = vadd.f32 %v5156, %v4728
    %v5158 = vadd.f32 %v5157, %v4736
    %v5159 = vadd.f32 %v5158, %v4744
    %v5160 = vadd.f32 %v5159, %v4752
    %v5161 = vadd.f32 %v5160, %v4760
    %v5162 = vadd.f32 %v5161, %v4768
    %v5163 = vadd.f32 %v5162, %v4776
    %v5164 = vadd.f32 %v5163, %v4784
    %v5165 = vadd.f32 %v5164, %v4792
    %v5166 = vadd.f32 %v5165, %v4800
    %v5167 = vadd.f32 %v5166, %v4808
    %v5168 = vadd.f32 %v5167, %v4816
    %v5169 = vadd.f32 %v5168, %v4824
    %v5170 = vadd.f32 %v5169, %v4832
    %v5171 = vadd.f32 %v5170, %v4840
    %v5172 = vadd.f32 %v5171, %v4848
    %v5173 = vadd.f32 %v5172, %v4856
    %v5174 = vadd.f32 %v5173, %v4864
    %v5175 = vadd.f32 %v5174, %v4872
    %v5176 = vadd.f32 %v5175, %v4880
    %v5177 = vadd.f32 %v5176, %v4888
    %v5178 = vadd.f32 %v5177, %v4896
    %v5179 = vadd.f32 %v5178, %v4904
    %v5180 = vadd.f32 %v5179, %v4912
    %v5181 = vadd.f32 %v5180, %v4920
    %v5182 = vadd.f32 %v5181, %v4928
    %v5183 = vrot.slane %v5182, 4
    %v5184 = vadd.f32 %v5182, %v5183
    %v5185 = vrot.slane %v5184, 2
    %v5186 = vadd.f32 %v5184, %v5185
    %v5187 = vrot.slane %v5186, 1
    %v5188 = vadd.f32 %v5186, %v5187
    %v5189 = vadd.f32 %v4681, %v4689
    %v5190 = vadd.f32 %v5189, %v4697
    %v5191 = vadd.f32 %v5190, %v4705
    %v5192 = vadd.f32 %v5191, %v4713
    %v5193 = vadd.f32 %v5192, %v4721
    %v5194 = vadd.f32 %v5193, %v4729
    %v5195 = vadd.f32 %v5194, %v4737
    %v5196 = vadd.f32 %v5195, %v4745
    %v5197 = vadd.f32 %v5196, %v4753
    %v5198 = vadd.f32 %v5197, %v4761
    %v5199 = vadd.f32 %v5198, %v4769
    %v5200 = vadd.f32 %v5199, %v4777
    %v5201 = vadd.f32 %v5200, %v4785
    %v5202 = vadd.f32 %v5201, %v4793
    %v5203 = vadd.f32 %v5202, %v4801
    %v5204 = vadd.f32 %v5203, %v4809
    %v5205 = vadd.f32 %v5204, %v4817
    %v5206 = vadd.f32 %v5205, %v4825
    %v5207 = vadd.f32 %v5206, %v4833
    %v5208 = vadd.f32 %v5207, %v4841
    %v5209 = vadd.f32 %v5208, %v4849
    %v5210 = vadd.f32 %v5209, %v4857
    %v5211 = vadd.f32 %v5210, %v4865
    %v5212 = vadd.f32 %v5211, %v4873
    %v5213 = vadd.f32 %v5212, %v4881
    %v5214 = vadd.f32 %v5213, %v4889
    %v5215 = vadd.f32 %v5214, %v4897
    %v5216 = vadd.f32 %v5215, %v4905
    %v5217 = vadd.f32 %v5216, %v4913
    %v5218 = vadd.f32 %v5217, %v4921
    %v5219 = vadd.f32 %v5218, %v4929
    %v5220 = vrot.slane %v5219, 4
    %v5221 = vadd.f32 %v5219, %v5220
    %v5222 = vrot.slane %v5221, 2
    %v5223 = vadd.f32 %v5221, %v5222
    %v5224 = vrot.slane %v5223, 1
    %v5225 = vadd.f32 %v5223, %v5224
    %v5226 = vmul.f32 %v4414, 0.00390625
    %v5227 = vmul.f32 %v4451, 0.00390625
    %v5228 = vmul.f32 %v4488, 0.00390625
    %v5229 = vmul.f32 %v4525, 0.00390625
    %v5230 = vmul.f32 %v4562, 0.00390625
    %v5231 = vmul.f32 %v4599, 0.00390625
    %v5232 = vmul.f32 %v4636, 0.00390625
    %v5233 = vmul.f32 %v4673, 0.00390625
    %v5234 = vmul.f32 %v4966, 0.00390625
    %v5235 = vmul.f32 %v5003, 0.00390625
    %v5236 = vmul.f32 %v5040, 0.00390625
    %v5237 = vmul.f32 %v5077, 0.00390625
    %v5238 = vmul.f32 %v5114, 0.00390625
    %v5239 = vmul.f32 %v5151, 0.00390625
    %v5240 = vmul.f32 %v5188, 0.00390625
    %v5241 = vmul.f32 %v5225, 0.00390625
    %v5242 = vmul.f32 %v5226, %v5226
    %v5243 = vmul.f32 %v5227, %v5227
    %v5244 = vmul.f32 %v5228, %v5228
    %v5245 = vmul.f32 %v5229, %v5229
    %v5246 = vmul.f32 %v5230, %v5230
    %v5247 = vmul.f32 %v5231, %v5231
    %v5248 = vmul.f32 %v5232, %v5232
    %v5249 = vmul.f32 %v5233, %v5233
    %v5250 = vsub.f32 %v5234, %v5242
    %v5251 = vsub.f32 %v5235, %v5243
    %v5252 = vsub.f32 %v5236, %v5244
    %v5253 = vsub.f32 %v5237, %v5245
    %v5254 = vsub.f32 %v5238, %v5246
    %v5255 = vsub.f32 %v5239, %v5247
    %v5256 = vsub.f32 %v5240, %v5248
    %v5257 = vsub.f32 %v5241, %v5249
    %v5258 = vmax.f32 %v5250, 0.0
    %v5259 = vmax.f32 %v5251, 0.0
    %v5260 = vmax.f32 %v5252, 0.0
    %v5261 = vmax.f32 %v5253, 0.0
    %v5262 = vmax.f32 %v5254, 0.0
    %v5263 = vmax.f32 %v5255, 0.0
    %v5264 = vmax.f32 %v5256, 0.0
    %v5265 = vmax.f32 %v5257, 0.0
    %v5266 = vadd.f32 %v5258, 1e-05
    %v5267 = vadd.f32 %v5259, 1e-05
    %v5268 = vadd.f32 %v5260, 1e-05
    %v5269 = vadd.f32 %v5261, 1e-05
    %v5270 = vadd.f32 %v5262, 1e-05
    %v5271 = vadd.f32 %v5263, 1e-05
    %v5272 = vadd.f32 %v5264, 1e-05
    %v5273 = vadd.f32 %v5265, 1e-05
    %v5274 = vrsqrt.pop %v5266
    %v5275 = vrsqrt.pop %v5267
    %v5276 = vrsqrt.pop %v5268
    %v5277 = vrsqrt.pop %v5269
    %v5278 = vrsqrt.pop %v5270
    %v5279 = vrsqrt.pop %v5271
    %v5280 = vrsqrt.pop %v5272
    %v5281 = vrsqrt.pop %v5273
    %v5290 = vcombine.low %v5274, %v5275
    %v5291 = vcombine.low %v5276, %v5277
    %v5292 = vcombine.low %v5278, %v5279
    %v5293 = vcombine.low %v5280, %v5281
    %v5295 = vunpack.c.l.s4 1966171168
    %v5296 = vunpack.c.0.s8 %v5295
    %v5297 = vlaneseq
    %v5298 = vshrl.u32 %v5297, 7
    %v5299 = vsub.s32 %v5296, %v5298
    %v5300 = vrot.slane %v5290, %v5299
    %v5302 = vunpack.c.l.s4 1966171168
    %v5303 = vunpack.c.0.s8 %v5302
    %v5304 = vlaneseq
    %v5305 = vshrl.u32 %v5304, 7
    %v5306 = vsub.s32 %v5303, %v5305
    %v5307 = vrot.slane %v5291, %v5306
    %v5309 = vunpack.c.l.s4 1966171168
    %v5310 = vunpack.c.0.s8 %v5309
    %v5311 = vlaneseq
    %v5312 = vshrl.u32 %v5311, 7
    %v5313 = vsub.s32 %v5310, %v5312
    %v5314 = vrot.slane %v5292, %v5313
    %v5316 = vunpack.c.l.s4 1966171168
    %v5317 = vunpack.c.0.s8 %v5316
    %v5318 = vlaneseq
    %v5319 = vshrl.u32 %v5318, 7
    %v5320 = vsub.s32 %v5317, %v5319
    %v5321 = vrot.slane %v5293, %v5320
    %v5322 = vcombine.low %v5300, %v5307
    %v5323 = vcombine.low %v5314, %v5321
    %v5325 = vunpack.c.l.s4 1966171168
    %v5326 = vunpack.c.0.s8 %v5325
    %v5327 = vlaneseq
    %v5328 = vshrl.u32 %v5327, 7
    %v5329 = vsub.s32 %v5326, %v5328
    %v5330 = vrot.slane %v5322, %v5329
    %v5332 = vunpack.c.l.s4 1966171168
    %v5333 = vunpack.c.0.s8 %v5332
    %v5334 = vlaneseq
    %v5335 = vshrl.u32 %v5334, 7
    %v5336 = vsub.s32 %v5333, %v5335
    %v5337 = vrot.slane %v5323, %v5336
    %v5338 = vcombine.low %v5330, %v5337
    %v5340 = vmul.f32 %v4376, %v5338
    %v5342 = vlaneseq
    %v5343 = vshrl.u32 %v5342, 7
    %v5344 = vsub.s32 0, %v5343
    %v5345 = vrot.slane %v5340, %v5344
    %v5346 = vlaneseq
    %v5347 = vshrl.u32 %v5346, 7
    %v5348 = vsub.s32 1, %v5347
    %v5349 = vrot.slane %v5340, %v5348
    %v5350 = vlaneseq
    %v5351 = vshrl.u32 %v5350, 7
    %v5352 = vsub.s32 2, %v5351
    %v5353 = vrot.slane %v5340, %v5352
    %v5354 = vlaneseq
    %v5355 = vshrl.u32 %v5354, 7
    %v5356 = vsub.s32 3, %v5355
    %v5357 = vrot.slane %v5340, %v5356
    %v5358 = vlaneseq
    %v5359 = vshrl.u32 %v5358, 7
    %v5360 = vsub.s32 4, %v5359
    %v5361 = vrot.slane %v5340, %v5360
    %v5362 = vlaneseq
    %v5363 = vshrl.u32 %v5362, 7
    %v5364 = vsub.s32 5, %v5363
    %v5365 = vrot.slane %v5340, %v5364
    %v5366 = vlaneseq
    %v5367 = vshrl.u32 %v5366, 7
    %v5368 = vsub.s32 6, %v5367
    %v5369 = vrot.slane %v5340, %v5368
    %v5370 = vlaneseq
    %v5371 = vshrl.u32 %v5370, 7
    %v5372 = vsub.s32 7, %v5371
    %v5373 = vrot.slane %v5340, %v5372
    %v5382 = vmul.f32 %v5226, %v5345
    %v5383 = vmul.f32 %v5227, %v5349
    %v5384 = vmul.f32 %v5228, %v5353
    %v5385 = vmul.f32 %v5229, %v5357
    %v5386 = vmul.f32 %v5230, %v5361
    %v5387 = vmul.f32 %v5231, %v5365
    %v5388 = vmul.f32 %v5232, %v5369
    %v5389 = vmul.f32 %v5233, %v5373
    %v5398 = vcombine.low %v5382, %v5383
    %v5399 = vcombine.low %v5384, %v5385
    %v5400 = vcombine.low %v5386, %v5387
    %v5401 = vcombine.low %v5388, %v5389
    %v5403 = vunpack.c.l.s4 1966171168
    %v5404 = vunpack.c.0.s8 %v5403
    %v5405 = vlaneseq
    %v5406 = vshrl.u32 %v5405, 7
    %v5407 = vsub.s32 %v5404, %v5406
    %v5408 = vrot.slane %v5398, %v5407
    %v5410 = vunpack.c.l.s4 1966171168
    %v5411 = vunpack.c.0.s8 %v5410
    %v5412 = vlaneseq
    %v5413 = vshrl.u32 %v5412, 7
    %v5414 = vsub.s32 %v5411, %v5413
    %v5415 = vrot.slane %v5399, %v5414
    %v5417 = vunpack.c.l.s4 1966171168
    %v5418 = vunpack.c.0.s8 %v5417
    %v5419 = vlaneseq
    %v5420 = vshrl.u32 %v5419, 7
    %v5421 = vsub.s32 %v5418, %v5420
    %v5422 = vrot.slane %v5400, %v5421
    %v5424 = vunpack.c.l.s4 1966171168
    %v5425 = vunpack.c.0.s8 %v5424
    %v5426 = vlaneseq
    %v5427 = vshrl.u32 %v5426, 7
    %v5428 = vsub.s32 %v5425, %v5427
    %v5429 = vrot.slane %v5401, %v5428
    %v5430 = vcombine.low %v5408, %v5415
    %v5431 = vcombine.low %v5422, %v5429
    %v5433 = vunpack.c.l.s4 1966171168
    %v5434 = vunpack.c.0.s8 %v5433
    %v5435 = vlaneseq
    %v5436 = vshrl.u32 %v5435, 7
    %v5437 = vsub.s32 %v5434, %v5436
    %v5438 = vrot.slane %v5430, %v5437
    %v5440 = vunpack.c.l.s4 1966171168
    %v5441 = vunpack.c.0.s8 %v5440
    %v5442 = vlaneseq
    %v5443 = vshrl.u32 %v5442, 7
    %v5444 = vsub.s32 %v5441, %v5443
    %v5445 = vrot.slane %v5431, %v5444
    %v5446 = vcombine.low %v5438, %v5445
    %v5448 = vsub.f32 %v4377, %v5446
    %v5449 = vmul.f32 %v3060, %v5345
    %v5450 = vmul.f32 %v3062, %v5349
    %v5451 = vmul.f32 %v3446, %v5353
    %v5452 = vmul.f32 %v3448, %v5357
    %v5453 = vmul.f32 %v3832, %v5361
    %v5454 = vmul.f32 %v3834, %v5365
    %v5455 = vmul.f32 %v4218, %v5369
    %v5456 = vmul.f32 %v4220, %v5373
    %v5457 = vmul.f32 %v3064, %v5345
    %v5458 = vmul.f32 %v3066, %v5349
    %v5459 = vmul.f32 %v3450, %v5353
    %v5460 = vmul.f32 %v3452, %v5357
    %v5461 = vmul.f32 %v3836, %v5361
    %v5462 = vmul.f32 %v3838, %v5365
    %v5463 = vmul.f32 %v4222, %v5369
    %v5464 = vmul.f32 %v4224, %v5373
    %v5465 = vmul.f32 %v3070, %v5345
    %v5466 = vmul.f32 %v3072, %v5349
    %v5467 = vmul.f32 %v3456, %v5353
    %v5468 = vmul.f32 %v3458, %v5357
    %v5469 = vmul.f32 %v3842, %v5361
    %v5470 = vmul.f32 %v3844, %v5365
    %v5471 = vmul.f32 %v4228, %v5369
    %v5472 = vmul.f32 %v4230, %v5373
    %v5473 = vmul.f32 %v3074, %v5345
    %v5474 = vmul.f32 %v3076, %v5349
    %v5475 = vmul.f32 %v3460, %v5353
    %v5476 = vmul.f32 %v3462, %v5357
    %v5477 = vmul.f32 %v3846, %v5361
    %v5478 = vmul.f32 %v3848, %v5365
    %v5479 = vmul.f32 %v4232, %v5369
    %v5480 = vmul.f32 %v4234, %v5373
    %v5481 = vmul.f32 %v3080, %v5345
    %v5482 = vmul.f32 %v3082, %v5349
    %v5483 = vmul.f32 %v3466, %v5353
    %v5484 = vmul.f32 %v3468, %v5357
    %v5485 = vmul.f32 %v3852, %v5361
    %v5486 = vmul.f32 %v3854, %v5365
    %v5487 = vmul.f32 %v4238, %v5369
    %v5488 = vmul.f32 %v4240, %v5373
    %v5489 = vmul.f32 %v3084, %v5345
    %v5490 = vmul.f32 %v3086, %v5349
    %v5491 = vmul.f32 %v3470, %v5353
    %v5492 = vmul.f32 %v3472, %v5357
    %v5493 = vmul.f32 %v3856, %v5361
    %v5494 = vmul.f32 %v3858, %v5365
    %v5495 = vmul.f32 %v4242, %v5369
    %v5496 = vmul.f32 %v4244, %v5373
    %v5497 = vmul.f32 %v3090, %v5345
    %v5498 = vmul.f32 %v3092, %v5349
    %v5499 = vmul.f32 %v3476, %v5353
    %v5500 = vmul.f32 %v3478, %v5357
    %v5501 = vmul.f32 %v3862, %v5361
    %v5502 = vmul.f32 %v3864, %v5365
    %v5503 = vmul.f32 %v4248, %v5369
    %v5504 = vmul.f32 %v4250, %v5373
    %v5505 = vmul.f32 %v3094, %v5345
    %v5506 = vmul.f32 %v3096, %v5349
    %v5507 = vmul.f32 %v3480, %v5353
    %v5508 = vmul.f32 %v3482, %v5357
    %v5509 = vmul.f32 %v3866, %v5361
    %v5510 = vmul.f32 %v3868, %v5365
    %v5511 = vmul.f32 %v4252, %v5369
    %v5512 = vmul.f32 %v4254, %v5373
    %v5513 = vmul.f32 %v3100, %v5345
    %v5514 = vmul.f32 %v3102, %v5349
    %v5515 = vmul.f32 %v3486, %v5353
    %v5516 = vmul.f32 %v3488, %v5357
    %v5517 = vmul.f32 %v3872, %v5361
    %v5518 = vmul.f32 %v3874, %v5365
    %v5519 = vmul.f32 %v4258, %v5369
    %v5520 = vmul.f32 %v4260, %v5373
    %v5521 = vmul.f32 %v3104, %v5345
    %v5522 = vmul.f32 %v3106, %v5349
    %v5523 = vmul.f32 %v3490, %v5353
    %v5524 = vmul.f32 %v3492, %v5357
    %v5525 = vmul.f32 %v3876, %v5361
    %v5526 = vmul.f32 %v3878, %v5365
    %v5527 = vmul.f32 %v4262, %v5369
    %v5528 = vmul.f32 %v4264, %v5373
    %v5529 = vmul.f32 %v3110, %v5345
    %v5530 = vmul.f32 %v3112, %v5349
    %v5531 = vmul.f32 %v3496, %v5353
    %v5532 = vmul.f32 %v3498, %v5357
    %v5533 = vmul.f32 %v3882, %v5361
    %v5534 = vmul.f32 %v3884, %v5365
    %v5535 = vmul.f32 %v4268, %v5369
    %v5536 = vmul.f32 %v4270, %v5373
    %v5537 = vmul.f32 %v3114, %v5345
    %v5538 = vmul.f32 %v3116, %v5349
    %v5539 = vmul.f32 %v3500, %v5353
    %v5540 = vmul.f32 %v3502, %v5357
    %v5541 = vmul.f32 %v3886, %v5361
    %v5542 = vmul.f32 %v3888, %v5365
    %v5543 = vmul.f32 %v4272, %v5369
    %v5544 = vmul.f32 %v4274, %v5373
    %v5545 = vmul.f32 %v3120, %v5345
    %v5546 = vmul.f32 %v3122, %v5349
    %v5547 = vmul.f32 %v3506, %v5353
    %v5548 = vmul.f32 %v3508, %v5357
    %v5549 = vmul.f32 %v3892, %v5361
    %v5550 = vmul.f32 %v3894, %v5365
    %v5551 = vmul.f32 %v4278, %v5369
    %v5552 = vmul.f32 %v4280, %v5373
    %v5553 = vmul.f32 %v3124, %v5345
    %v5554 = vmul.f32 %v3126, %v5349
    %v5555 = vmul.f32 %v3510, %v5353
    %v5556 = vmul.f32 %v3512, %v5357
    %v5557 = vmul.f32 %v3896, %v5361
    %v5558 = vmul.f32 %v3898, %v5365
    %v5559 = vmul.f32 %v4282, %v5369
    %v5560 = vmul.f32 %v4284, %v5373
    %v5561 = vmul.f32 %v3130, %v5345
    %v5562 = vmul.f32 %v3132, %v5349
    %v5563 = vmul.f32 %v3516, %v5353
    %v5564 = vmul.f32 %v3518, %v5357
    %v5565 = vmul.f32 %v3902, %v5361
    %v5566 = vmul.f32 %v3904, %v5365
    %v5567 = vmul.f32 %v4288, %v5369
    %v5568 = vmul.f32 %v4290, %v5373
    %v5569 = vmul.f32 %v3134, %v5345
    %v5570 = vmul.f32 %v3136, %v5349
    %v5571 = vmul.f32 %v3520, %v5353
    %v5572 = vmul.f32 %v3522, %v5357
    %v5573 = vmul.f32 %v3906, %v5361
    %v5574 = vmul.f32 %v3908, %v5365
    %v5575 = vmul.f32 %v4292, %v5369
    %v5576 = vmul.f32 %v4294, %v5373
    %v5577 = vmul.f32 %v3140, %v5345
    %v5578 = vmul.f32 %v3142, %v5349
    %v5579 = vmul.f32 %v3526, %v5353
    %v5580 = vmul.f32 %v3528, %v5357
    %v5581 = vmul.f32 %v3912, %v5361
    %v5582 = vmul.f32 %v3914, %v5365
    %v5583 = vmul.f32 %v4298, %v5369
    %v5584 = vmul.f32 %v4300, %v5373
    %v5585 = vmul.f32 %v3144, %v5345
    %v5586 = vmul.f32 %v3146, %v5349
    %v5587 = vmul.f32 %v3530, %v5353
    %v5588 = vmul.f32 %v3532, %v5357
    %v5589 = vmul.f32 %v3916, %v5361
    %v5590 = vmul.f32 %v3918, %v5365
    %v5591 = vmul.f32 %v4302, %v5369
    %v5592 = vmul.f32 %v4304, %v5373
    %v5593 = vmul.f32 %v3150, %v5345
    %v5594 = vmul.f32 %v3152, %v5349
    %v5595 = vmul.f32 %v3536, %v5353
    %v5596 = vmul.f32 %v3538, %v5357
    %v5597 = vmul.f32 %v3922, %v5361
    %v5598 = vmul.f32 %v3924, %v5365
    %v5599 = vmul.f32 %v4308, %v5369
    %v5600 = vmul.f32 %v4310, %v5373
    %v5601 = vmul.f32 %v3154, %v5345
    %v5602 = vmul.f32 %v3156, %v5349
    %v5603 = vmul.f32 %v3540, %v5353
    %v5604 = vmul.f32 %v3542, %v5357
    %v5605 = vmul.f32 %v3926, %v5361
    %v5606 = vmul.f32 %v3928, %v5365
    %v5607 = vmul.f32 %v4312, %v5369
    %v5608 = vmul.f32 %v4314, %v5373
    %v5609 = vmul.f32 %v3160, %v5345
    %v5610 = vmul.f32 %v3162, %v5349
    %v5611 = vmul.f32 %v3546, %v5353
    %v5612 = vmul.f32 %v3548, %v5357
    %v5613 = vmul.f32 %v3932, %v5361
    %v5614 = vmul.f32 %v3934, %v5365
    %v5615 = vmul.f32 %v4318, %v5369
    %v5616 = vmul.f32 %v4320, %v5373
    %v5617 = vmul.f32 %v3164, %v5345
    %v5618 = vmul.f32 %v3166, %v5349
    %v5619 = vmul.f32 %v3550, %v5353
    %v5620 = vmul.f32 %v3552, %v5357
    %v5621 = vmul.f32 %v3936, %v5361
    %v5622 = vmul.f32 %v3938, %v5365
    %v5623 = vmul.f32 %v4322, %v5369
    %v5624 = vmul.f32 %v4324, %v5373
    %v5625 = vmul.f32 %v3170, %v5345
    %v5626 = vmul.f32 %v3172, %v5349
    %v5627 = vmul.f32 %v3556, %v5353
    %v5628 = vmul.f32 %v3558, %v5357
    %v5629 = vmul.f32 %v3942, %v5361
    %v5630 = vmul.f32 %v3944, %v5365
    %v5631 = vmul.f32 %v4328, %v5369
    %v5632 = vmul.f32 %v4330, %v5373
    %v5633 = vmul.f32 %v3174, %v5345
    %v5634 = vmul.f32 %v3176, %v5349
    %v5635 = vmul.f32 %v3560, %v5353
    %v5636 = vmul.f32 %v3562, %v5357
    %v5637 = vmul.f32 %v3946, %v5361
    %v5638 = vmul.f32 %v3948, %v5365
    %v5639 = vmul.f32 %v4332, %v5369
    %v5640 = vmul.f32 %v4334, %v5373
    %v5641 = vmul.f32 %v3180, %v5345
    %v5642 = vmul.f32 %v3182, %v5349
    %v5643 = vmul.f32 %v3566, %v5353
    %v5644 = vmul.f32 %v3568, %v5357
    %v5645 = vmul.f32 %v3952, %v5361
    %v5646 = vmul.f32 %v3954, %v5365
    %v5647 = vmul.f32 %v4338, %v5369
    %v5648 = vmul.f32 %v4340, %v5373
    %v5649 = vmul.f32 %v3184, %v5345
    %v5650 = vmul.f32 %v3186, %v5349
    %v5651 = vmul.f32 %v3570, %v5353
    %v5652 = vmul.f32 %v3572, %v5357
    %v5653 = vmul.f32 %v3956, %v5361
    %v5654 = vmul.f32 %v3958, %v5365
    %v5655 = vmul.f32 %v4342, %v5369
    %v5656 = vmul.f32 %v4344, %v5373
    %v5657 = vmul.f32 %v3190, %v5345
    %v5658 = vmul.f32 %v3192, %v5349
    %v5659 = vmul.f32 %v3576, %v5353
    %v5660 = vmul.f32 %v3578, %v5357
    %v5661 = vmul.f32 %v3962, %v5361
    %v5662 = vmul.f32 %v3964, %v5365
    %v5663 = vmul.f32 %v4348, %v5369
    %v5664 = vmul.f32 %v4350, %v5373
    %v5665 = vmul.f32 %v3194, %v5345
    %v5666 = vmul.f32 %v3196, %v5349
    %v5667 = vmul.f32 %v3580, %v5353
    %v5668 = vmul.f32 %v3582, %v5357
    %v5669 = vmul.f32 %v3966, %v5361
    %v5670 = vmul.f32 %v3968, %v5365
    %v5671 = vmul.f32 %v4352, %v5369
    %v5672 = vmul.f32 %v4354, %v5373
    %v5673 = vmul.f32 %v3200, %v5345
    %v5674 = vmul.f32 %v3202, %v5349
    %v5675 = vmul.f32 %v3586, %v5353
    %v5676 = vmul.f32 %v3588, %v5357
    %v5677 = vmul.f32 %v3972, %v5361
    %v5678 = vmul.f32 %v3974, %v5365
    %v5679 = vmul.f32 %v4358, %v5369
    %v5680 = vmul.f32 %v4360, %v5373
    %v5681 = vmul.f32 %v3204, %v5345
    %v5682 = vmul.f32 %v3206, %v5349
    %v5683 = vmul.f32 %v3590, %v5353
    %v5684 = vmul.f32 %v3592, %v5357
    %v5685 = vmul.f32 %v3976, %v5361
    %v5686 = vmul.f32 %v3978, %v5365
    %v5687 = vmul.f32 %v4362, %v5369
    %v5688 = vmul.f32 %v4364, %v5373
    %v5689 = vmul.f32 %v3210, %v5345
    %v5690 = vmul.f32 %v3212, %v5349
    %v5691 = vmul.f32 %v3596, %v5353
    %v5692 = vmul.f32 %v3598, %v5357
    %v5693 = vmul.f32 %v3982, %v5361
    %v5694 = vmul.f32 %v3984, %v5365
    %v5695 = vmul.f32 %v4368, %v5369
    %v5696 = vmul.f32 %v4370, %v5373
    %v5697 = vmul.f32 %v3214, %v5345
    %v5698 = vmul.f32 %v3216, %v5349
    %v5699 = vmul.f32 %v3600, %v5353
    %v5700 = vmul.f32 %v3602, %v5357
    %v5701 = vmul.f32 %v3986, %v5361
    %v5702 = vmul.f32 %v3988, %v5365
    %v5703 = vmul.f32 %v4372, %v5369
    %v5704 = vmul.f32 %v4374, %v5373
    %v5706 = vlaneseq
    %v5707 = vshrl.u32 %v5706, 7
    %v5708 = vsub.s32 0, %v5707
    %v5709 = vrot.slane %v5448, %v5708
    %v5710 = vlaneseq
    %v5711 = vshrl.u32 %v5710, 7
    %v5712 = vsub.s32 1, %v5711
    %v5713 = vrot.slane %v5448, %v5712
    %v5714 = vlaneseq
    %v5715 = vshrl.u32 %v5714, 7
    %v5716 = vsub.s32 2, %v5715
    %v5717 = vrot.slane %v5448, %v5716
    %v5718 = vlaneseq
    %v5719 = vshrl.u32 %v5718, 7
    %v5720 = vsub.s32 3, %v5719
    %v5721 = vrot.slane %v5448, %v5720
    %v5722 = vlaneseq
    %v5723 = vshrl.u32 %v5722, 7
    %v5724 = vsub.s32 4, %v5723
    %v5725 = vrot.slane %v5448, %v5724
    %v5726 = vlaneseq
    %v5727 = vshrl.u32 %v5726, 7
    %v5728 = vsub.s32 5, %v5727
    %v5729 = vrot.slane %v5448, %v5728
    %v5730 = vlaneseq
    %v5731 = vshrl.u32 %v5730, 7
    %v5732 = vsub.s32 6, %v5731
    %v5733 = vrot.slane %v5448, %v5732
    %v5734 = vlaneseq
    %v5735 = vshrl.u32 %v5734, 7
    %v5736 = vsub.s32 7, %v5735
    %v5737 = vrot.slane %v5448, %v5736
    %v5746 = vadd.f32 %v5449, %v5709
    %v5747 = vadd.f32 %v5450, %v5713
    %v5748 = vadd.f32 %v5451, %v5717
    %v5749 = vadd.f32 %v5452, %v5721
    %v5750 = vadd.f32 %v5453, %v5725
    %v5751 = vadd.f32 %v5454, %v5729
    %v5752 = vadd.f32 %v5455, %v5733
    %v5753 = vadd.f32 %v5456, %v5737
    %v5754 = vadd.f32 %v5457, %v5709
    %v5755 = vadd.f32 %v5458, %v5713
    %v5756 = vadd.f32 %v5459, %v5717
    %v5757 = vadd.f32 %v5460, %v5721
    %v5758 = vadd.f32 %v5461, %v5725
    %v5759 = vadd.f32 %v5462, %v5729
    %v5760 = vadd.f32 %v5463, %v5733
    %v5761 = vadd.f32 %v5464, %v5737
    %v5762 = vadd.f32 %v5465, %v5709
    %v5763 = vadd.f32 %v5466, %v5713
    %v5764 = vadd.f32 %v5467, %v5717
    %v5765 = vadd.f32 %v5468, %v5721
    %v5766 = vadd.f32 %v5469, %v5725
    %v5767 = vadd.f32 %v5470, %v5729
    %v5768 = vadd.f32 %v5471, %v5733
    %v5769 = vadd.f32 %v5472, %v5737
    %v5770 = vadd.f32 %v5473, %v5709
    %v5771 = vadd.f32 %v5474, %v5713
    %v5772 = vadd.f32 %v5475, %v5717
    %v5773 = vadd.f32 %v5476, %v5721
    %v5774 = vadd.f32 %v5477, %v5725
    %v5775 = vadd.f32 %v5478, %v5729
    %v5776 = vadd.f32 %v5479, %v5733
    %v5777 = vadd.f32 %v5480, %v5737
    %v5778 = vadd.f32 %v5481, %v5709
    %v5779 = vadd.f32 %v5482, %v5713
    %v5780 = vadd.f32 %v5483, %v5717
    %v5781 = vadd.f32 %v5484, %v5721
    %v5782 = vadd.f32 %v5485, %v5725
    %v5783 = vadd.f32 %v5486, %v5729
    %v5784 = vadd.f32 %v5487, %v5733
    %v5785 = vadd.f32 %v5488, %v5737
    %v5786 = vadd.f32 %v5489, %v5709
    %v5787 = vadd.f32 %v5490, %v5713
    %v5788 = vadd.f32 %v5491, %v5717
    %v5789 = vadd.f32 %v5492, %v5721
    %v5790 = vadd.f32 %v5493, %v5725
    %v5791 = vadd.f32 %v5494, %v5729
    %v5792 = vadd.f32 %v5495, %v5733
    %v5793 = vadd.f32 %v5496, %v5737
    %v5794 = vadd.f32 %v5497, %v5709
    %v5795 = vadd.f32 %v5498, %v5713
    %v5796 = vadd.f32 %v5499, %v5717
    %v5797 = vadd.f32 %v5500, %v5721
    %v5798 = vadd.f32 %v5501, %v5725
    %v5799 = vadd.f32 %v5502, %v5729
    %v5800 = vadd.f32 %v5503, %v5733
    %v5801 = vadd.f32 %v5504, %v5737
    %v5802 = vadd.f32 %v5505, %v5709
    %v5803 = vadd.f32 %v5506, %v5713
    %v5804 = vadd.f32 %v5507, %v5717
    %v5805 = vadd.f32 %v5508, %v5721
    %v5806 = vadd.f32 %v5509, %v5725
    %v5807 = vadd.f32 %v5510, %v5729
    %v5808 = vadd.f32 %v5511, %v5733
    %v5809 = vadd.f32 %v5512, %v5737
    %v5810 = vadd.f32 %v5513, %v5709
    %v5811 = vadd.f32 %v5514, %v5713
    %v5812 = vadd.f32 %v5515, %v5717
    %v5813 = vadd.f32 %v5516, %v5721
    %v5814 = vadd.f32 %v5517, %v5725
    %v5815 = vadd.f32 %v5518, %v5729
    %v5816 = vadd.f32 %v5519, %v5733
    %v5817 = vadd.f32 %v5520, %v5737
    %v5818 = vadd.f32 %v5521, %v5709
    %v5819 = vadd.f32 %v5522, %v5713
    %v5820 = vadd.f32 %v5523, %v5717
    %v5821 = vadd.f32 %v5524, %v5721
    %v5822 = vadd.f32 %v5525, %v5725
    %v5823 = vadd.f32 %v5526, %v5729
    %v5824 = vadd.f32 %v5527, %v5733
    %v5825 = vadd.f32 %v5528, %v5737
    %v5826 = vadd.f32 %v5529, %v5709
    %v5827 = vadd.f32 %v5530, %v5713
    %v5828 = vadd.f32 %v5531, %v5717
    %v5829 = vadd.f32 %v5532, %v5721
    %v5830 = vadd.f32 %v5533, %v5725
    %v5831 = vadd.f32 %v5534, %v5729
    %v5832 = vadd.f32 %v5535, %v5733
    %v5833 = vadd.f32 %v5536, %v5737
    %v5834 = vadd.f32 %v5537, %v5709
    %v5835 = vadd.f32 %v5538, %v5713
    %v5836 = vadd.f32 %v5539, %v5717
    %v5837 = vadd.f32 %v5540, %v5721
    %v5838 = vadd.f32 %v5541, %v5725
    %v5839 = vadd.f32 %v5542, %v5729
    %v5840 = vadd.f32 %v5543, %v5733
    %v5841 = vadd.f32 %v5544, %v5737
    %v5842 = vadd.f32 %v5545, %v5709
    %v5843 = vadd.f32 %v5546, %v5713
    %v5844 = vadd.f32 %v5547, %v5717
    %v5845 = vadd.f32 %v5548, %v5721
    %v5846 = vadd.f32 %v5549, %v5725
    %v5847 = vadd.f32 %v5550, %v5729
    %v5848 = vadd.f32 %v5551, %v5733
    %v5849 = vadd.f32 %v5552, %v5737
    %v5850 = vadd.f32 %v5553, %v5709
    %v5851 = vadd.f32 %v5554, %v5713
    %v5852 = vadd.f32 %v5555, %v5717
    %v5853 = vadd.f32 %v5556, %v5721
    %v5854 = vadd.f32 %v5557, %v5725
    %v5855 = vadd.f32 %v5558, %v5729
    %v5856 = vadd.f32 %v5559, %v5733
    %v5857 = vadd.f32 %v5560, %v5737
    %v5858 = vadd.f32 %v5561, %v5709
    %v5859 = vadd.f32 %v5562, %v5713
    %v5860 = vadd.f32 %v5563, %v5717
    %v5861 = vadd.f32 %v5564, %v5721
    %v5862 = vadd.f32 %v5565, %v5725
    %v5863 = vadd.f32 %v5566, %v5729
    %v5864 = vadd.f32 %v5567, %v5733
    %v5865 = vadd.f32 %v5568, %v5737
    %v5866 = vadd.f32 %v5569, %v5709
    %v5867 = vadd.f32 %v5570, %v5713
    %v5868 = vadd.f32 %v5571, %v5717
    %v5869 = vadd.f32 %v5572, %v5721
    %v5870 = vadd.f32 %v5573, %v5725
    %v5871 = vadd.f32 %v5574, %v5729
    %v5872 = vadd.f32 %v5575, %v5733
    %v5873 = vadd.f32 %v5576, %v5737
    %v5874 = vadd.f32 %v5577, %v5709
    %v5875 = vadd.f32 %v5578, %v5713
    %v5876 = vadd.f32 %v5579, %v5717
    %v5877 = vadd.f32 %v5580, %v5721
    %v5878 = vadd.f32 %v5581, %v5725
    %v5879 = vadd.f32 %v5582, %v5729
    %v5880 = vadd.f32 %v5583, %v5733
    %v5881 = vadd.f32 %v5584, %v5737
    %v5882 = vadd.f32 %v5585, %v5709
    %v5883 = vadd.f32 %v5586, %v5713
    %v5884 = vadd.f32 %v5587, %v5717
    %v5885 = vadd.f32 %v5588, %v5721
    %v5886 = vadd.f32 %v5589, %v5725
    %v5887 = vadd.f32 %v5590, %v5729
    %v5888 = vadd.f32 %v5591, %v5733
    %v5889 = vadd.f32 %v5592, %v5737
    %v5890 = vadd.f32 %v5593, %v5709
    %v5891 = vadd.f32 %v5594, %v5713
    %v5892 = vadd.f32 %v5595, %v5717
    %v5893 = vadd.f32 %v5596, %v5721
    %v5894 = vadd.f32 %v5597, %v5725
    %v5895 = vadd.f32 %v5598, %v5729
    %v5896 = vadd.f32 %v5599, %v5733
    %v5897 = vadd.f32 %v5600, %v5737
    %v5898 = vadd.f32 %v5601, %v5709
    %v5899 = vadd.f32 %v5602, %v5713
    %v5900 = vadd.f32 %v5603, %v5717
    %v5901 = vadd.f32 %v5604, %v5721
    %v5902 = vadd.f32 %v5605, %v5725
    %v5903 = vadd.f32 %v5606, %v5729
    %v5904 = vadd.f32 %v5607, %v5733
    %v5905 = vadd.f32 %v5608, %v5737
    %v5906 = vadd.f32 %v5609, %v5709
    %v5907 = vadd.f32 %v5610, %v5713
    %v5908 = vadd.f32 %v5611, %v5717
    %v5909 = vadd.f32 %v5612, %v5721
    %v5910 = vadd.f32 %v5613, %v5725
    %v5911 = vadd.f32 %v5614, %v5729
    %v5912 = vadd.f32 %v5615, %v5733
    %v5913 = vadd.f32 %v5616, %v5737
    %v5914 = vadd.f32 %v5617, %v5709
    %v5915 = vadd.f32 %v5618, %v5713
    %v5916 = vadd.f32 %v5619, %v5717
    %v5917 = vadd.f32 %v5620, %v5721
    %v5918 = vadd.f32 %v5621, %v5725
    %v5919 = vadd.f32 %v5622, %v5729
    %v5920 = vadd.f32 %v5623, %v5733
    %v5921 = vadd.f32 %v5624, %v5737
    %v5922 = vadd.f32 %v5625, %v5709
    %v5923 = vadd.f32 %v5626, %v5713
    %v5924 = vadd.f32 %v5627, %v5717
    %v5925 = vadd.f32 %v5628, %v5721
    %v5926 = vadd.f32 %v5629, %v5725
    %v5927 = vadd.f32 %v5630, %v5729
    %v5928 = vadd.f32 %v5631, %v5733
    %v5929 = vadd.f32 %v5632, %v5737
    %v5930 = vadd.f32 %v5633, %v5709
    %v5931 = vadd.f32 %v5634, %v5713
    %v5932 = vadd.f32 %v5635, %v5717
    %v5933 = vadd.f32 %v5636, %v5721
    %v5934 = vadd.f32 %v5637, %v5725
    %v5935 = vadd.f32 %v5638, %v5729
    %v5936 = vadd.f32 %v5639, %v5733
    %v5937 = vadd.f32 %v5640, %v5737
    %v5938 = vadd.f32 %v5641, %v5709
    %v5939 = vadd.f32 %v5642, %v5713
    %v5940 = vadd.f32 %v5643, %v5717
    %v5941 = vadd.f32 %v5644, %v5721
    %v5942 = vadd.f32 %v5645, %v5725
    %v5943 = vadd.f32 %v5646, %v5729
    %v5944 = vadd.f32 %v5647, %v5733
    %v5945 = vadd.f32 %v5648, %v5737
    %v5946 = vadd.f32 %v5649, %v5709
    %v5947 = vadd.f32 %v5650, %v5713
    %v5948 = vadd.f32 %v5651, %v5717
    %v5949 = vadd.f32 %v5652, %v5721
    %v5950 = vadd.f32 %v5653, %v5725
    %v5951 = vadd.f32 %v5654, %v5729
    %v5952 = vadd.f32 %v5655, %v5733
    %v5953 = vadd.f32 %v5656, %v5737
    %v5954 = vadd.f32 %v5657, %v5709
    %v5955 = vadd.f32 %v5658, %v5713
    %v5956 = vadd.f32 %v5659, %v5717
    %v5957 = vadd.f32 %v5660, %v5721
    %v5958 = vadd.f32 %v5661, %v5725
    %v5959 = vadd.f32 %v5662, %v5729
    %v5960 = vadd.f32 %v5663, %v5733
    %v5961 = vadd.f32 %v5664, %v5737
    %v5962 = vadd.f32 %v5665, %v5709
    %v5963 = vadd.f32 %v5666, %v5713
    %v5964 = vadd.f32 %v5667, %v5717
    %v5965 = vadd.f32 %v5668, %v5721
    %v5966 = vadd.f32 %v5669, %v5725
    %v5967 = vadd.f32 %v5670, %v5729
    %v5968 = vadd.f32 %v5671, %v5733
    %v5969 = vadd.f32 %v5672, %v5737
    %v5970 = vadd.f32 %v5673, %v5709
    %v5971 = vadd.f32 %v5674, %v5713
    %v5972 = vadd.f32 %v5675, %v5717
    %v5973 = vadd.f32 %v5676, %v5721
    %v5974 = vadd.f32 %v5677, %v5725
    %v5975 = vadd.f32 %v5678, %v5729
    %v5976 = vadd.f32 %v5679, %v5733
    %v5977 = vadd.f32 %v5680, %v5737
    %v5978 = vadd.f32 %v5681, %v5709
    %v5979 = vadd.f32 %v5682, %v5713
    %v5980 = vadd.f32 %v5683, %v5717
    %v5981 = vadd.f32 %v5684, %v5721
    %v5982 = vadd.f32 %v5685, %v5725
    %v5983 = vadd.f32 %v5686, %v5729
    %v5984 = vadd.f32 %v5687, %v5733
    %v5985 = vadd.f32 %v5688, %v5737
    %v5986 = vadd.f32 %v5689, %v5709
    %v5987 = vadd.f32 %v5690, %v5713
    %v5988 = vadd.f32 %v5691, %v5717
    %v5989 = vadd.f32 %v5692, %v5721
    %v5990 = vadd.f32 %v5693, %v5725
    %v5991 = vadd.f32 %v5694, %v5729
    %v5992 = vadd.f32 %v5695, %v5733
    %v5993 = vadd.f32 %v5696, %v5737
    %v5994 = vadd.f32 %v5697, %v5709
    %v5995 = vadd.f32 %v5698, %v5713
    %v5996 = vadd.f32 %v5699, %v5717
    %v5997 = vadd.f32 %v5700, %v5721
    %v5998 = vadd.f32 %v5701, %v5725
    %v5999 = vadd.f32 %v5702, %v5729
    %v6000 = vadd.f32 %v5703, %v5733
    %v6001 = vadd.f32 %v5704, %v5737
    %v6002 = vmax.f32 %v5746, 0.0
    %v6003 = vmax.f32 %v5747, 0.0
    %v6004 = vmax.f32 %v5748, 0.0
    %v6005 = vmax.f32 %v5749, 0.0
    %v6006 = vmax.f32 %v5750, 0.0
    %v6007 = vmax.f32 %v5751, 0.0
    %v6008 = vmax.f32 %v5752, 0.0
    %v6009 = vmax.f32 %v5753, 0.0
    %v6010 = vmax.f32 %v5754, 0.0
    %v6011 = vmax.f32 %v5755, 0.0
    %v6012 = vmax.f32 %v5756, 0.0
    %v6013 = vmax.f32 %v5757, 0.0
    %v6014 = vmax.f32 %v5758, 0.0
    %v6015 = vmax.f32 %v5759, 0.0
    %v6016 = vmax.f32 %v5760, 0.0
    %v6017 = vmax.f32 %v5761, 0.0
    %v6018 = vmax.f32 %v5762, 0.0
    %v6019 = vmax.f32 %v5763, 0.0
    %v6020 = vmax.f32 %v5764, 0.0
    %v6021 = vmax.f32 %v5765, 0.0
    %v6022 = vmax.f32 %v5766, 0.0
    %v6023 = vmax.f32 %v5767, 0.0
    %v6024 = vmax.f32 %v5768, 0.0
    %v6025 = vmax.f32 %v5769, 0.0
    %v6026 = vmax.f32 %v5770, 0.0
    %v6027 = vmax.f32 %v5771, 0.0
    %v6028 = vmax.f32 %v5772, 0.0
    %v6029 = vmax.f32 %v5773, 0.0
    %v6030 = vmax.f32 %v5774, 0.0
    %v6031 = vmax.f32 %v5775, 0.0
    %v6032 = vmax.f32 %v5776, 0.0
    %v6033 = vmax.f32 %v5777, 0.0
    %v6034 = vmax.f32 %v5778, 0.0
    %v6035 = vmax.f32 %v5779, 0.0
    %v6036 = vmax.f32 %v5780, 0.0
    %v6037 = vmax.f32 %v5781, 0.0
    %v6038 = vmax.f32 %v5782, 0.0
    %v6039 = vmax.f32 %v5783, 0.0
    %v6040 = vmax.f32 %v5784, 0.0
    %v6041 = vmax.f32 %v5785, 0.0
    %v6042 = vmax.f32 %v5786, 0.0
    %v6043 = vmax.f32 %v5787, 0.0
    %v6044 = vmax.f32 %v5788, 0.0
    %v6045 = vmax.f32 %v5789, 0.0
    %v6046 = vmax.f32 %v5790, 0.0
    %v6047 = vmax.f32 %v5791, 0.0
    %v6048 = vmax.f32 %v5792, 0.0
    %v6049 = vmax.f32 %v5793, 0.0
    %v6050 = vmax.f32 %v5794, 0.0
    %v6051 = vmax.f32 %v5795, 0.0
    %v6052 = vmax.f32 %v5796, 0.0
    %v6053 = vmax.f32 %v5797, 0.0
    %v6054 = vmax.f32 %v5798, 0.0
    %v6055 = vmax.f32 %v5799, 0.0
    %v6056 = vmax.f32 %v5800, 0.0
    %v6057 = vmax.f32 %v5801, 0.0
    %v6058 = vmax.f32 %v5802, 0.0
    %v6059 = vmax.f32 %v5803, 0.0
    %v6060 = vmax.f32 %v5804, 0.0
    %v6061 = vmax.f32 %v5805, 0.0
    %v6062 = vmax.f32 %v5806, 0.0
    %v6063 = vmax.f32 %v5807, 0.0
    %v6064 = vmax.f32 %v5808, 0.0
    %v6065 = vmax.f32 %v5809, 0.0
    %v6066 = vmax.f32 %v5810, 0.0
    %v6067 = vmax.f32 %v5811, 0.0
    %v6068 = vmax.f32 %v5812, 0.0
    %v6069 = vmax.f32 %v5813, 0.0
    %v6070 = vmax.f32 %v5814, 0.0
    %v6071 = vmax.f32 %v5815, 0.0
    %v6072 = vmax.f32 %v5816, 0.0
    %v6073 = vmax.f32 %v5817, 0.0
    %v6074 = vmax.f32 %v5818, 0.0
    %v6075 = vmax.f32 %v5819, 0.0
    %v6076 = vmax.f32 %v5820, 0.0
    %v6077 = vmax.f32 %v5821, 0.0
    %v6078 = vmax.f32 %v5822, 0.0
    %v6079 = vmax.f32 %v5823, 0.0
    %v6080 = vmax.f32 %v5824, 0.0
    %v6081 = vmax.f32 %v5825, 0.0
    %v6082 = vmax.f32 %v5826, 0.0
    %v6083 = vmax.f32 %v5827, 0.0
    %v6084 = vmax.f32 %v5828, 0.0
    %v6085 = vmax.f32 %v5829, 0.0
    %v6086 = vmax.f32 %v5830, 0.0
    %v6087 = vmax.f32 %v5831, 0.0
    %v6088 = vmax.f32 %v5832, 0.0
    %v6089 = vmax.f32 %v5833, 0.0
    %v6090 = vmax.f32 %v5834, 0.0
    %v6091 = vmax.f32 %v5835, 0.0
    %v6092 = vmax.f32 %v5836, 0.0
    %v6093 = vmax.f32 %v5837, 0.0
    %v6094 = vmax.f32 %v5838, 0.0
    %v6095 = vmax.f32 %v5839, 0.0
    %v6096 = vmax.f32 %v5840, 0.0
    %v6097 = vmax.f32 %v5841, 0.0
    %v6098 = vmax.f32 %v5842, 0.0
    %v6099 = vmax.f32 %v5843, 0.0
    %v6100 = vmax.f32 %v5844, 0.0
    %v6101 = vmax.f32 %v5845, 0.0
    %v6102 = vmax.f32 %v5846, 0.0
    %v6103 = vmax.f32 %v5847, 0.0
    %v6104 = vmax.f32 %v5848, 0.0
    %v6105 = vmax.f32 %v5849, 0.0
    %v6106 = vmax.f32 %v5850, 0.0
    %v6107 = vmax.f32 %v5851, 0.0
    %v6108 = vmax.f32 %v5852, 0.0
    %v6109 = vmax.f32 %v5853, 0.0
    %v6110 = vmax.f32 %v5854, 0.0
    %v6111 = vmax.f32 %v5855, 0.0
    %v6112 = vmax.f32 %v5856, 0.0
    %v6113 = vmax.f32 %v5857, 0.0
    %v6114 = vmax.f32 %v5858, 0.0
    %v6115 = vmax.f32 %v5859, 0.0
    %v6116 = vmax.f32 %v5860, 0.0
    %v6117 = vmax.f32 %v5861, 0.0
    %v6118 = vmax.f32 %v5862, 0.0
    %v6119 = vmax.f32 %v5863, 0.0
    %v6120 = vmax.f32 %v5864, 0.0
    %v6121 = vmax.f32 %v5865, 0.0
    %v6122 = vmax.f32 %v5866, 0.0
    %v6123 = vmax.f32 %v5867, 0.0
    %v6124 = vmax.f32 %v5868, 0.0
    %v6125 = vmax.f32 %v5869, 0.0
    %v6126 = vmax.f32 %v5870, 0.0
    %v6127 = vmax.f32 %v5871, 0.0
    %v6128 = vmax.f32 %v5872, 0.0
    %v6129 = vmax.f32 %v5873, 0.0
    %v6130 = vmax.f32 %v5874, 0.0
    %v6131 = vmax.f32 %v5875, 0.0
    %v6132 = vmax.f32 %v5876, 0.0
    %v6133 = vmax.f32 %v5877, 0.0
    %v6134 = vmax.f32 %v5878, 0.0
    %v6135 = vmax.f32 %v5879, 0.0
    %v6136 = vmax.f32 %v5880, 0.0
    %v6137 = vmax.f32 %v5881, 0.0
    %v6138 = vmax.f32 %v5882, 0.0
    %v6139 = vmax.f32 %v5883, 0.0
    %v6140 = vmax.f32 %v5884, 0.0
    %v6141 = vmax.f32 %v5885, 0.0
    %v6142 = vmax.f32 %v5886, 0.0
    %v6143 = vmax.f32 %v5887, 0.0
    %v6144 = vmax.f32 %v5888, 0.0
    %v6145 = vmax.f32 %v5889, 0.0
    %v6146 = vmax.f32 %v5890, 0.0
    %v6147 = vmax.f32 %v5891, 0.0
    %v6148 = vmax.f32 %v5892, 0.0
    %v6149 = vmax.f32 %v5893, 0.0
    %v6150 = vmax.f32 %v5894, 0.0
    %v6151 = vmax.f32 %v5895, 0.0
    %v6152 = vmax.f32 %v5896, 0.0
    %v6153 = vmax.f32 %v5897, 0.0
    %v6154 = vmax.f32 %v5898, 0.0
    %v6155 = vmax.f32 %v5899, 0.0
    %v6156 = vmax.f32 %v5900, 0.0
    %v6157 = vmax.f32 %v5901, 0.0
    %v6158 = vmax.f32 %v5902, 0.0
    %v6159 = vmax.f32 %v5903, 0.0
    %v6160 = vmax.f32 %v5904, 0.0
    %v6161 = vmax.f32 %v5905, 0.0
    %v6162 = vmax.f32 %v5906, 0.0
    %v6163 = vmax.f32 %v5907, 0.0
    %v6164 = vmax.f32 %v5908, 0.0
    %v6165 = vmax.f32 %v5909, 0.0
    %v6166 = vmax.f32 %v5910, 0.0
    %v6167 = vmax.f32 %v5911, 0.0
    %v6168 = vmax.f32 %v5912, 0.0
    %v6169 = vmax.f32 %v5913, 0.0
    %v6170 = vmax.f32 %v5914, 0.0
    %v6171 = vmax.f32 %v5915, 0.0
    %v6172 = vmax.f32 %v5916, 0.0
    %v6173 = vmax.f32 %v5917, 0.0
    %v6174 = vmax.f32 %v5918, 0.0
    %v6175 = vmax.f32 %v5919, 0.0
    %v6176 = vmax.f32 %v5920, 0.0
    %v6177 = vmax.f32 %v5921, 0.0
    %v6178 = vmax.f32 %v5922, 0.0
    %v6179 = vmax.f32 %v5923, 0.0
    %v6180 = vmax.f32 %v5924, 0.0
    %v6181 = vmax.f32 %v5925, 0.0
    %v6182 = vmax.f32 %v5926, 0.0
    %v6183 = vmax.f32 %v5927, 0.0
    %v6184 = vmax.f32 %v5928, 0.0
    %v6185 = vmax.f32 %v5929, 0.0
    %v6186 = vmax.f32 %v5930, 0.0
    %v6187 = vmax.f32 %v5931, 0.0
    %v6188 = vmax.f32 %v5932, 0.0
    %v6189 = vmax.f32 %v5933, 0.0
    %v6190 = vmax.f32 %v5934, 0.0
    %v6191 = vmax.f32 %v5935, 0.0
    %v6192 = vmax.f32 %v5936, 0.0
    %v6193 = vmax.f32 %v5937, 0.0
    %v6194 = vmax.f32 %v5938, 0.0
    %v6195 = vmax.f32 %v5939, 0.0
    %v6196 = vmax.f32 %v5940, 0.0
    %v6197 = vmax.f32 %v5941, 0.0
    %v6198 = vmax.f32 %v5942, 0.0
    %v6199 = vmax.f32 %v5943, 0.0
    %v6200 = vmax.f32 %v5944, 0.0
    %v6201 = vmax.f32 %v5945, 0.0
    %v6202 = vmax.f32 %v5946, 0.0
    %v6203 = vmax.f32 %v5947, 0.0
    %v6204 = vmax.f32 %v5948, 0.0
    %v6205 = vmax.f32 %v5949, 0.0
    %v6206 = vmax.f32 %v5950, 0.0
    %v6207 = vmax.f32 %v5951, 0.0
    %v6208 = vmax.f32 %v5952, 0.0
    %v6209 = vmax.f32 %v5953, 0.0
    %v6210 = vmax.f32 %v5954, 0.0
    %v6211 = vmax.f32 %v5955, 0.0
    %v6212 = vmax.f32 %v5956, 0.0
    %v6213 = vmax.f32 %v5957, 0.0
    %v6214 = vmax.f32 %v5958, 0.0
    %v6215 = vmax.f32 %v5959, 0.0
    %v6216 = vmax.f32 %v5960, 0.0
    %v6217 = vmax.f32 %v5961, 0.0
    %v6218 = vmax.f32 %v5962, 0.0
    %v6219 = vmax.f32 %v5963, 0.0
    %v6220 = vmax.f32 %v5964, 0.0
    %v6221 = vmax.f32 %v5965, 0.0
    %v6222 = vmax.f32 %v5966, 0.0
    %v6223 = vmax.f32 %v5967, 0.0
    %v6224 = vmax.f32 %v5968, 0.0
    %v6225 = vmax.f32 %v5969, 0.0
    %v6226 = vmax.f32 %v5970, 0.0
    %v6227 = vmax.f32 %v5971, 0.0
    %v6228 = vmax.f32 %v5972, 0.0
    %v6229 = vmax.f32 %v5973, 0.0
    %v6230 = vmax.f32 %v5974, 0.0
    %v6231 = vmax.f32 %v5975, 0.0
    %v6232 = vmax.f32 %v5976, 0.0
    %v6233 = vmax.f32 %v5977, 0.0
    %v6234 = vmax.f32 %v5978, 0.0
    %v6235 = vmax.f32 %v5979, 0.0
    %v6236 = vmax.f32 %v5980, 0.0
    %v6237 = vmax.f32 %v5981, 0.0
    %v6238 = vmax.f32 %v5982, 0.0
    %v6239 = vmax.f32 %v5983, 0.0
    %v6240 = vmax.f32 %v5984, 0.0
    %v6241 = vmax.f32 %v5985, 0.0
    %v6242 = vmax.f32 %v5986, 0.0
    %v6243 = vmax.f32 %v5987, 0.0
    %v6244 = vmax.f32 %v5988, 0.0
    %v6245 = vmax.f32 %v5989, 0.0
    %v6246 = vmax.f32 %v5990, 0.0
    %v6247 = vmax.f32 %v5991, 0.0
    %v6248 = vmax.f32 %v5992, 0.0
    %v6249 = vmax.f32 %v5993, 0.0
    %v6250 = vmax.f32 %v5994, 0.0
    %v6251 = vmax.f32 %v5995, 0.0
    %v6252 = vmax.f32 %v5996, 0.0
    %v6253 = vmax.f32 %v5997, 0.0
    %v6254 = vmax.f32 %v5998, 0.0
    %v6255 = vmax.f32 %v5999, 0.0
    %v6256 = vmax.f32 %v6000, 0.0
    %v6257 = vmax.f32 %v6001, 0.0
    %s6258 = smul.u32 4, 128
    %s6259 = smul.u32 %s6258, 7
    %s6260 = sshll.u32 %s6259, 4
    %6261 = dma.done %s220, %s6260
    %v6262 = vpack.c.bf16 %v6010, %v6002
    %v6263 = vpack.c.bf16 %v6011, %v6003
    %v6264 = vpack.c.bf16 %v6012, %v6004
    %v6265 = vpack.c.bf16 %v6013, %v6005
    %v6266 = vpack.c.bf16 %v6014, %v6006
    %v6267 = vpack.c.bf16 %v6015, %v6007
    %v6268 = vpack.c.bf16 %v6016, %v6008
    %v6269 = vpack.c.bf16 %v6017, %v6009
    %v6270 = vpack.c.bf16 %v6026, %v6018
    %v6271 = vpack.c.bf16 %v6027, %v6019
    %v6272 = vpack.c.bf16 %v6028, %v6020
    %v6273 = vpack.c.bf16 %v6029, %v6021
    %v6274 = vpack.c.bf16 %v6030, %v6022
    %v6275 = vpack.c.bf16 %v6031, %v6023
    %v6276 = vpack.c.bf16 %v6032, %v6024
    %v6277 = vpack.c.bf16 %v6033, %v6025
    %v6278 = vpack.c.bf16 %v6042, %v6034
    %v6279 = vpack.c.bf16 %v6043, %v6035
    %v6280 = vpack.c.bf16 %v6044, %v6036
    %v6281 = vpack.c.bf16 %v6045, %v6037
    %v6282 = vpack.c.bf16 %v6046, %v6038
    %v6283 = vpack.c.bf16 %v6047, %v6039
    %v6284 = vpack.c.bf16 %v6048, %v6040
    %v6285 = vpack.c.bf16 %v6049, %v6041
    %v6286 = vpack.c.bf16 %v6058, %v6050
    %v6287 = vpack.c.bf16 %v6059, %v6051
    %v6288 = vpack.c.bf16 %v6060, %v6052
    %v6289 = vpack.c.bf16 %v6061, %v6053
    %v6290 = vpack.c.bf16 %v6062, %v6054
    %v6291 = vpack.c.bf16 %v6063, %v6055
    %v6292 = vpack.c.bf16 %v6064, %v6056
    %v6293 = vpack.c.bf16 %v6065, %v6057
    %v6294 = vpack.c.bf16 %v6074, %v6066
    %v6295 = vpack.c.bf16 %v6075, %v6067
    %v6296 = vpack.c.bf16 %v6076, %v6068
    %v6297 = vpack.c.bf16 %v6077, %v6069
    %v6298 = vpack.c.bf16 %v6078, %v6070
    %v6299 = vpack.c.bf16 %v6079, %v6071
    %v6300 = vpack.c.bf16 %v6080, %v6072
    %v6301 = vpack.c.bf16 %v6081, %v6073
    %v6302 = vpack.c.bf16 %v6090, %v6082
    %v6303 = vpack.c.bf16 %v6091, %v6083
    %v6304 = vpack.c.bf16 %v6092, %v6084
    %v6305 = vpack.c.bf16 %v6093, %v6085
    %v6306 = vpack.c.bf16 %v6094, %v6086
    %v6307 = vpack.c.bf16 %v6095, %v6087
    %v6308 = vpack.c.bf16 %v6096, %v6088
    %v6309 = vpack.c.bf16 %v6097, %v6089
    %v6310 = vpack.c.bf16 %v6106, %v6098
    %v6311 = vpack.c.bf16 %v6107, %v6099
    %v6312 = vpack.c.bf16 %v6108, %v6100
    %v6313 = vpack.c.bf16 %v6109, %v6101
    %v6314 = vpack.c.bf16 %v6110, %v6102
    %v6315 = vpack.c.bf16 %v6111, %v6103
    %v6316 = vpack.c.bf16 %v6112, %v6104
    %v6317 = vpack.c.bf16 %v6113, %v6105
    %v6318 = vpack.c.bf16 %v6122, %v6114
    %v6319 = vpack.c.bf16 %v6123, %v6115
    %v6320 = vpack.c.bf16 %v6124, %v6116
    %v6321 = vpack.c.bf16 %v6125, %v6117
    %v6322 = vpack.c.bf16 %v6126, %v6118
    %v6323 = vpack.c.bf16 %v6127, %v6119
    %v6324 = vpack.c.bf16 %v6128, %v6120
    %v6325 = vpack.c.bf16 %v6129, %v6121
    %v6326 = vpack.c.bf16 %v6138, %v6130
    %v6327 = vpack.c.bf16 %v6139, %v6131
    %v6328 = vpack.c.bf16 %v6140, %v6132
    %v6329 = vpack.c.bf16 %v6141, %v6133
    %v6330 = vpack.c.bf16 %v6142, %v6134
    %v6331 = vpack.c.bf16 %v6143, %v6135
    %v6332 = vpack.c.bf16 %v6144, %v6136
    %v6333 = vpack.c.bf16 %v6145, %v6137
    %v6334 = vpack.c.bf16 %v6154, %v6146
    %v6335 = vpack.c.bf16 %v6155, %v6147
    %v6336 = vpack.c.bf16 %v6156, %v6148
    %v6337 = vpack.c.bf16 %v6157, %v6149
    %v6338 = vpack.c.bf16 %v6158, %v6150
    %v6339 = vpack.c.bf16 %v6159, %v6151
    %v6340 = vpack.c.bf16 %v6160, %v6152
    %v6341 = vpack.c.bf16 %v6161, %v6153
    %v6342 = vpack.c.bf16 %v6170, %v6162
    %v6343 = vpack.c.bf16 %v6171, %v6163
    %v6344 = vpack.c.bf16 %v6172, %v6164
    %v6345 = vpack.c.bf16 %v6173, %v6165
    %v6346 = vpack.c.bf16 %v6174, %v6166
    %v6347 = vpack.c.bf16 %v6175, %v6167
    %v6348 = vpack.c.bf16 %v6176, %v6168
    %v6349 = vpack.c.bf16 %v6177, %v6169
    %v6350 = vpack.c.bf16 %v6186, %v6178
    %v6351 = vpack.c.bf16 %v6187, %v6179
    %v6352 = vpack.c.bf16 %v6188, %v6180
    %v6353 = vpack.c.bf16 %v6189, %v6181
    %v6354 = vpack.c.bf16 %v6190, %v6182
    %v6355 = vpack.c.bf16 %v6191, %v6183
    %v6356 = vpack.c.bf16 %v6192, %v6184
    %v6357 = vpack.c.bf16 %v6193, %v6185
    %v6358 = vpack.c.bf16 %v6202, %v6194
    %v6359 = vpack.c.bf16 %v6203, %v6195
    %v6360 = vpack.c.bf16 %v6204, %v6196
    %v6361 = vpack.c.bf16 %v6205, %v6197
    %v6362 = vpack.c.bf16 %v6206, %v6198
    %v6363 = vpack.c.bf16 %v6207, %v6199
    %v6364 = vpack.c.bf16 %v6208, %v6200
    %v6365 = vpack.c.bf16 %v6209, %v6201
    %v6366 = vpack.c.bf16 %v6218, %v6210
    %v6367 = vpack.c.bf16 %v6219, %v6211
    %v6368 = vpack.c.bf16 %v6220, %v6212
    %v6369 = vpack.c.bf16 %v6221, %v6213
    %v6370 = vpack.c.bf16 %v6222, %v6214
    %v6371 = vpack.c.bf16 %v6223, %v6215
    %v6372 = vpack.c.bf16 %v6224, %v6216
    %v6373 = vpack.c.bf16 %v6225, %v6217
    %v6374 = vpack.c.bf16 %v6234, %v6226
    %v6375 = vpack.c.bf16 %v6235, %v6227
    %v6376 = vpack.c.bf16 %v6236, %v6228
    %v6377 = vpack.c.bf16 %v6237, %v6229
    %v6378 = vpack.c.bf16 %v6238, %v6230
    %v6379 = vpack.c.bf16 %v6239, %v6231
    %v6380 = vpack.c.bf16 %v6240, %v6232
    %v6381 = vpack.c.bf16 %v6241, %v6233
    %v6382 = vpack.c.bf16 %v6250, %v6242
    %v6383 = vpack.c.bf16 %v6251, %v6243
    %v6384 = vpack.c.bf16 %v6252, %v6244
    %v6385 = vpack.c.bf16 %v6253, %v6245
    %v6386 = vpack.c.bf16 %v6254, %v6246
    %v6387 = vpack.c.bf16 %v6255, %v6247
    %v6388 = vpack.c.bf16 %v6256, %v6248
    %v6389 = vpack.c.bf16 %v6257, %v6249
    %v6390 = vld [vmem:[#allocation5] sm:$0xff]
    %v6391 = vld [vmem:[#allocation5 + $0x8] sm:$0xff]
    %v6392 = vld [vmem:[#allocation5 + $0x10] sm:$0xff]
    %v6393 = vld [vmem:[#allocation5 + $0x18] sm:$0xff]
    %v6394 = vld [vmem:[#allocation5 + $0x20] sm:$0xff]
    %v6395 = vld [vmem:[#allocation5 + $0x28] sm:$0xff]
    %v6396 = vld [vmem:[#allocation5 + $0x30] sm:$0xff]
    %v6397 = vld [vmem:[#allocation5 + $0x38] sm:$0xff]
    %v6398 = vld [vmem:[#allocation5 + $0x40] sm:$0xff]
    %v6399 = vld [vmem:[#allocation5 + $0x48] sm:$0xff]
    %v6400 = vld [vmem:[#allocation5 + $0x50] sm:$0xff]
    %v6401 = vld [vmem:[#allocation5 + $0x58] sm:$0xff]
    %v6402 = vld [vmem:[#allocation5 + $0x60] sm:$0xff]
    %v6403 = vld [vmem:[#allocation5 + $0x68] sm:$0xff]
    %v6404 = vld [vmem:[#allocation5 + $0x70] sm:$0xff]
    %v6405 = vld [vmem:[#allocation5 + $0x78] sm:$0xff]
    %v6406 = vld [vmem:[#allocation5 + $0x80] sm:$0xff]
    %v6407 = vld [vmem:[#allocation5 + $0x88] sm:$0xff]
    %v6408 = vld [vmem:[#allocation5 + $0x90] sm:$0xff]
    %v6409 = vld [vmem:[#allocation5 + $0x98] sm:$0xff]
    %v6410 = vld [vmem:[#allocation5 + $0xa0] sm:$0xff]
    %v6411 = vld [vmem:[#allocation5 + $0xa8] sm:$0xff]
    %v6412 = vld [vmem:[#allocation5 + $0xb0] sm:$0xff]
    %v6413 = vld [vmem:[#allocation5 + $0xb8] sm:$0xff]
    %v6414 = vld [vmem:[#allocation5 + $0xc0] sm:$0xff]
    %v6415 = vld [vmem:[#allocation5 + $0xc8] sm:$0xff]
    %v6416 = vld [vmem:[#allocation5 + $0xd0] sm:$0xff]
    %v6417 = vld [vmem:[#allocation5 + $0xd8] sm:$0xff]
    %v6418 = vld [vmem:[#allocation5 + $0xe0] sm:$0xff]
    %v6419 = vld [vmem:[#allocation5 + $0xe8] sm:$0xff]
    %v6420 = vld [vmem:[#allocation5 + $0xf0] sm:$0xff]
    %v6421 = vld [vmem:[#allocation5 + $0xf8] sm:$0xff]
    %v6422 = vld [vmem:[#allocation5 + $0x100] sm:$0xff]
    %v6423 = vld [vmem:[#allocation5 + $0x108] sm:$0xff]
    %v6424 = vld [vmem:[#allocation5 + $0x110] sm:$0xff]
    %v6425 = vld [vmem:[#allocation5 + $0x118] sm:$0xff]
    %v6426 = vld [vmem:[#allocation5 + $0x120] sm:$0xff]
    %v6427 = vld [vmem:[#allocation5 + $0x128] sm:$0xff]
    %v6428 = vld [vmem:[#allocation5 + $0x130] sm:$0xff]
    %v6429 = vld [vmem:[#allocation5 + $0x138] sm:$0xff]
    %v6430 = vld [vmem:[#allocation5 + $0x140] sm:$0xff]
    %v6431 = vld [vmem:[#allocation5 + $0x148] sm:$0xff]
    %v6432 = vld [vmem:[#allocation5 + $0x150] sm:$0xff]
    %v6433 = vld [vmem:[#allocation5 + $0x158] sm:$0xff]
    %v6434 = vld [vmem:[#allocation5 + $0x160] sm:$0xff]
    %v6435 = vld [vmem:[#allocation5 + $0x168] sm:$0xff]
    %v6436 = vld [vmem:[#allocation5 + $0x170] sm:$0xff]
    %v6437 = vld [vmem:[#allocation5 + $0x178] sm:$0xff]
    %v6438 = vld [vmem:[#allocation5 + $0x180] sm:$0xff]
    %v6439 = vld [vmem:[#allocation5 + $0x188] sm:$0xff]
    %v6440 = vld [vmem:[#allocation5 + $0x190] sm:$0xff]
    %v6441 = vld [vmem:[#allocation5 + $0x198] sm:$0xff]
    %v6442 = vld [vmem:[#allocation5 + $0x1a0] sm:$0xff]
    %v6443 = vld [vmem:[#allocation5 + $0x1a8] sm:$0xff]
    %v6444 = vld [vmem:[#allocation5 + $0x1b0] sm:$0xff]
    %v6445 = vld [vmem:[#allocation5 + $0x1b8] sm:$0xff]
    %v6446 = vld [vmem:[#allocation5 + $0x1c0] sm:$0xff]
    %v6447 = vld [vmem:[#allocation5 + $0x1c8] sm:$0xff]
    %v6448 = vld [vmem:[#allocation5 + $0x1d0] sm:$0xff]
    %v6449 = vld [vmem:[#allocation5 + $0x1d8] sm:$0xff]
    %v6450 = vld [vmem:[#allocation5 + $0x1e0] sm:$0xff]
    %v6451 = vld [vmem:[#allocation5 + $0x1e8] sm:$0xff]
    %v6452 = vld [vmem:[#allocation5 + $0x1f0] sm:$0xff]
    %v6453 = vld [vmem:[#allocation5 + $0x1f8] sm:$0xff]
    %v6454 = vld [vmem:[#allocation5 + $0x200] sm:$0xff]
    %v6455 = vld [vmem:[#allocation5 + $0x208] sm:$0xff]
    %v6456 = vld [vmem:[#allocation5 + $0x210] sm:$0xff]
    %v6457 = vld [vmem:[#allocation5 + $0x218] sm:$0xff]
    %v6458 = vld [vmem:[#allocation5 + $0x220] sm:$0xff]
    %v6459 = vld [vmem:[#allocation5 + $0x228] sm:$0xff]
    %v6460 = vld [vmem:[#allocation5 + $0x230] sm:$0xff]
    %v6461 = vld [vmem:[#allocation5 + $0x238] sm:$0xff]
    %v6462 = vld [vmem:[#allocation5 + $0x240] sm:$0xff]
    %v6463 = vld [vmem:[#allocation5 + $0x248] sm:$0xff]
    %v6464 = vld [vmem:[#allocation5 + $0x250] sm:$0xff]
    %v6465 = vld [vmem:[#allocation5 + $0x258] sm:$0xff]
    %v6466 = vld [vmem:[#allocation5 + $0x260] sm:$0xff]
    %v6467 = vld [vmem:[#allocation5 + $0x268] sm:$0xff]
    %v6468 = vld [vmem:[#allocation5 + $0x270] sm:$0xff]
    %v6469 = vld [vmem:[#allocation5 + $0x278] sm:$0xff]
    %v6470 = vld [vmem:[#allocation5 + $0x280] sm:$0xff]
    %v6471 = vld [vmem:[#allocation5 + $0x288] sm:$0xff]
    %v6472 = vld [vmem:[#allocation5 + $0x290] sm:$0xff]
    %v6473 = vld [vmem:[#allocation5 + $0x298] sm:$0xff]
    %v6474 = vld [vmem:[#allocation5 + $0x2a0] sm:$0xff]
    %v6475 = vld [vmem:[#allocation5 + $0x2a8] sm:$0xff]
    %v6476 = vld [vmem:[#allocation5 + $0x2b0] sm:$0xff]
    %v6477 = vld [vmem:[#allocation5 + $0x2b8] sm:$0xff]
    %v6478 = vld [vmem:[#allocation5 + $0x2c0] sm:$0xff]
    %v6479 = vld [vmem:[#allocation5 + $0x2c8] sm:$0xff]
    %v6480 = vld [vmem:[#allocation5 + $0x2d0] sm:$0xff]
    %v6481 = vld [vmem:[#allocation5 + $0x2d8] sm:$0xff]
    %v6482 = vld [vmem:[#allocation5 + $0x2e0] sm:$0xff]
    %v6483 = vld [vmem:[#allocation5 + $0x2e8] sm:$0xff]
    %v6484 = vld [vmem:[#allocation5 + $0x2f0] sm:$0xff]
    %v6485 = vld [vmem:[#allocation5 + $0x2f8] sm:$0xff]
    %v6486 = vld [vmem:[#allocation5 + $0x300] sm:$0xff]
    %v6487 = vld [vmem:[#allocation5 + $0x308] sm:$0xff]
    %v6488 = vld [vmem:[#allocation5 + $0x310] sm:$0xff]
    %v6489 = vld [vmem:[#allocation5 + $0x318] sm:$0xff]
    %v6490 = vld [vmem:[#allocation5 + $0x320] sm:$0xff]
    %v6491 = vld [vmem:[#allocation5 + $0x328] sm:$0xff]
    %v6492 = vld [vmem:[#allocation5 + $0x330] sm:$0xff]
    %v6493 = vld [vmem:[#allocation5 + $0x338] sm:$0xff]
    %v6494 = vld [vmem:[#allocation5 + $0x340] sm:$0xff]
    %v6495 = vld [vmem:[#allocation5 + $0x348] sm:$0xff]
    %v6496 = vld [vmem:[#allocation5 + $0x350] sm:$0xff]
    %v6497 = vld [vmem:[#allocation5 + $0x358] sm:$0xff]
    %v6498 = vld [vmem:[#allocation5 + $0x360] sm:$0xff]
    %v6499 = vld [vmem:[#allocation5 + $0x368] sm:$0xff]
    %v6500 = vld [vmem:[#allocation5 + $0x370] sm:$0xff]
    %v6501 = vld [vmem:[#allocation5 + $0x378] sm:$0xff]
    %v6502 = vld [vmem:[#allocation5 + $0x380] sm:$0xff]
    %v6503 = vld [vmem:[#allocation5 + $0x388] sm:$0xff]
    %v6504 = vld [vmem:[#allocation5 + $0x390] sm:$0xff]
    %v6505 = vld [vmem:[#allocation5 + $0x398] sm:$0xff]
    %v6506 = vld [vmem:[#allocation5 + $0x3a0] sm:$0xff]
    %v6507 = vld [vmem:[#allocation5 + $0x3a8] sm:$0xff]
    %v6508 = vld [vmem:[#allocation5 + $0x3b0] sm:$0xff]
    %v6509 = vld [vmem:[#allocation5 + $0x3b8] sm:$0xff]
    %v6510 = vld [vmem:[#allocation5 + $0x3c0] sm:$0xff]
    %v6511 = vld [vmem:[#allocation5 + $0x3c8] sm:$0xff]
    %v6512 = vld [vmem:[#allocation5 + $0x3d0] sm:$0xff]
    %v6513 = vld [vmem:[#allocation5 + $0x3d8] sm:$0xff]
    %v6514 = vld [vmem:[#allocation5 + $0x3e0] sm:$0xff]
    %v6515 = vld [vmem:[#allocation5 + $0x3e8] sm:$0xff]
    %v6516 = vld [vmem:[#allocation5 + $0x3f0] sm:$0xff]
    %v6517 = vld [vmem:[#allocation5 + $0x3f8] sm:$0xff]
    %v6518 = vld [vmem:[#allocation5 + $0x400] sm:$0xff]
    %v6519 = vld [vmem:[#allocation5 + $0x408] sm:$0xff]
    %v6520 = vld [vmem:[#allocation5 + $0x410] sm:$0xff]
    %v6521 = vld [vmem:[#allocation5 + $0x418] sm:$0xff]
    %v6522 = vld [vmem:[#allocation5 + $0x420] sm:$0xff]
    %v6523 = vld [vmem:[#allocation5 + $0x428] sm:$0xff]
    %v6524 = vld [vmem:[#allocation5 + $0x430] sm:$0xff]
    %v6525 = vld [vmem:[#allocation5 + $0x438] sm:$0xff]
    %v6526 = vld [vmem:[#allocation5 + $0x440] sm:$0xff]
    %v6527 = vld [vmem:[#allocation5 + $0x448] sm:$0xff]
    %v6528 = vld [vmem:[#allocation5 + $0x450] sm:$0xff]
    %v6529 = vld [vmem:[#allocation5 + $0x458] sm:$0xff]
    %v6530 = vld [vmem:[#allocation5 + $0x460] sm:$0xff]
    %v6531 = vld [vmem:[#allocation5 + $0x468] sm:$0xff]
    %v6532 = vld [vmem:[#allocation5 + $0x470] sm:$0xff]
    %v6533 = vld [vmem:[#allocation5 + $0x478] sm:$0xff]
    %v6534 = vld [vmem:[#allocation5 + $0x480] sm:$0xff]
    %v6535 = vld [vmem:[#allocation5 + $0x488] sm:$0xff]
    %v6536 = vld [vmem:[#allocation5 + $0x490] sm:$0xff]
    %v6537 = vld [vmem:[#allocation5 + $0x498] sm:$0xff]
    %v6538 = vld [vmem:[#allocation5 + $0x4a0] sm:$0xff]
    %v6539 = vld [vmem:[#allocation5 + $0x4a8] sm:$0xff]
    %v6540 = vld [vmem:[#allocation5 + $0x4b0] sm:$0xff]
    %v6541 = vld [vmem:[#allocation5 + $0x4b8] sm:$0xff]
    %v6542 = vld [vmem:[#allocation5 + $0x4c0] sm:$0xff]
    %v6543 = vld [vmem:[#allocation5 + $0x4c8] sm:$0xff]
    %v6544 = vld [vmem:[#allocation5 + $0x4d0] sm:$0xff]
    %v6545 = vld [vmem:[#allocation5 + $0x4d8] sm:$0xff]
    %v6546 = vld [vmem:[#allocation5 + $0x4e0] sm:$0xff]
    %v6547 = vld [vmem:[#allocation5 + $0x4e8] sm:$0xff]
    %v6548 = vld [vmem:[#allocation5 + $0x4f0] sm:$0xff]
    %v6549 = vld [vmem:[#allocation5 + $0x4f8] sm:$0xff]
    %v6550 = vld [vmem:[#allocation5 + $0x500] sm:$0xff]
    %v6551 = vld [vmem:[#allocation5 + $0x508] sm:$0xff]
    %v6552 = vld [vmem:[#allocation5 + $0x510] sm:$0xff]
    %v6553 = vld [vmem:[#allocation5 + $0x518] sm:$0xff]
    %v6554 = vld [vmem:[#allocation5 + $0x520] sm:$0xff]
    %v6555 = vld [vmem:[#allocation5 + $0x528] sm:$0xff]
    %v6556 = vld [vmem:[#allocation5 + $0x530] sm:$0xff]
    %v6557 = vld [vmem:[#allocation5 + $0x538] sm:$0xff]
    %v6558 = vld [vmem:[#allocation5 + $0x540] sm:$0xff]
    %v6559 = vld [vmem:[#allocation5 + $0x548] sm:$0xff]
    %v6560 = vld [vmem:[#allocation5 + $0x550] sm:$0xff]
    %v6561 = vld [vmem:[#allocation5 + $0x558] sm:$0xff]
    %v6562 = vld [vmem:[#allocation5 + $0x560] sm:$0xff]
    %v6563 = vld [vmem:[#allocation5 + $0x568] sm:$0xff]
    %v6564 = vld [vmem:[#allocation5 + $0x570] sm:$0xff]
    %v6565 = vld [vmem:[#allocation5 + $0x578] sm:$0xff]
    %v6566 = vld [vmem:[#allocation5 + $0x580] sm:$0xff]
    %v6567 = vld [vmem:[#allocation5 + $0x588] sm:$0xff]
    %v6568 = vld [vmem:[#allocation5 + $0x590] sm:$0xff]
    %v6569 = vld [vmem:[#allocation5 + $0x598] sm:$0xff]
    %v6570 = vld [vmem:[#allocation5 + $0x5a0] sm:$0xff]
    %v6571 = vld [vmem:[#allocation5 + $0x5a8] sm:$0xff]
    %v6572 = vld [vmem:[#allocation5 + $0x5b0] sm:$0xff]
    %v6573 = vld [vmem:[#allocation5 + $0x5b8] sm:$0xff]
    %v6574 = vld [vmem:[#allocation5 + $0x5c0] sm:$0xff]
    %v6575 = vld [vmem:[#allocation5 + $0x5c8] sm:$0xff]
    %v6576 = vld [vmem:[#allocation5 + $0x5d0] sm:$0xff]
    %v6577 = vld [vmem:[#allocation5 + $0x5d8] sm:$0xff]
    %v6578 = vld [vmem:[#allocation5 + $0x5e0] sm:$0xff]
    %v6579 = vld [vmem:[#allocation5 + $0x5e8] sm:$0xff]
    %v6580 = vld [vmem:[#allocation5 + $0x5f0] sm:$0xff]
    %v6581 = vld [vmem:[#allocation5 + $0x5f8] sm:$0xff]
    %v6582 = vld [vmem:[#allocation5 + $0x600] sm:$0xff]
    %v6583 = vld [vmem:[#allocation5 + $0x608] sm:$0xff]
    %v6584 = vld [vmem:[#allocation5 + $0x610] sm:$0xff]
    %v6585 = vld [vmem:[#allocation5 + $0x618] sm:$0xff]
    %v6586 = vld [vmem:[#allocation5 + $0x620] sm:$0xff]
    %v6587 = vld [vmem:[#allocation5 + $0x628] sm:$0xff]
    %v6588 = vld [vmem:[#allocation5 + $0x630] sm:$0xff]
    %v6589 = vld [vmem:[#allocation5 + $0x638] sm:$0xff]
    %v6590 = vld [vmem:[#allocation5 + $0x640] sm:$0xff]
    %v6591 = vld [vmem:[#allocation5 + $0x648] sm:$0xff]
    %v6592 = vld [vmem:[#allocation5 + $0x650] sm:$0xff]
    %v6593 = vld [vmem:[#allocation5 + $0x658] sm:$0xff]
    %v6594 = vld [vmem:[#allocation5 + $0x660] sm:$0xff]
    %v6595 = vld [vmem:[#allocation5 + $0x668] sm:$0xff]
    %v6596 = vld [vmem:[#allocation5 + $0x670] sm:$0xff]
    %v6597 = vld [vmem:[#allocation5 + $0x678] sm:$0xff]
    %v6598 = vld [vmem:[#allocation5 + $0x680] sm:$0xff]
    %v6599 = vld [vmem:[#allocation5 + $0x688] sm:$0xff]
    %v6600 = vld [vmem:[#allocation5 + $0x690] sm:$0xff]
    %v6601 = vld [vmem:[#allocation5 + $0x698] sm:$0xff]
    %v6602 = vld [vmem:[#allocation5 + $0x6a0] sm:$0xff]
    %v6603 = vld [vmem:[#allocation5 + $0x6a8] sm:$0xff]
    %v6604 = vld [vmem:[#allocation5 + $0x6b0] sm:$0xff]
    %v6605 = vld [vmem:[#allocation5 + $0x6b8] sm:$0xff]
    %v6606 = vld [vmem:[#allocation5 + $0x6c0] sm:$0xff]
    %v6607 = vld [vmem:[#allocation5 + $0x6c8] sm:$0xff]
    %v6608 = vld [vmem:[#allocation5 + $0x6d0] sm:$0xff]
    %v6609 = vld [vmem:[#allocation5 + $0x6d8] sm:$0xff]
    %v6610 = vld [vmem:[#allocation5 + $0x6e0] sm:$0xff]
    %v6611 = vld [vmem:[#allocation5 + $0x6e8] sm:$0xff]
    %v6612 = vld [vmem:[#allocation5 + $0x6f0] sm:$0xff]
    %v6613 = vld [vmem:[#allocation5 + $0x6f8] sm:$0xff]
    %v6614 = vld [vmem:[#allocation5 + $0x700] sm:$0xff]
    %v6615 = vld [vmem:[#allocation5 + $0x708] sm:$0xff]
    %v6616 = vld [vmem:[#allocation5 + $0x710] sm:$0xff]
    %v6617 = vld [vmem:[#allocation5 + $0x718] sm:$0xff]
    %v6618 = vld [vmem:[#allocation5 + $0x720] sm:$0xff]
    %v6619 = vld [vmem:[#allocation5 + $0x728] sm:$0xff]
    %v6620 = vld [vmem:[#allocation5 + $0x730] sm:$0xff]
    %v6621 = vld [vmem:[#allocation5 + $0x738] sm:$0xff]
    %v6622 = vld [vmem:[#allocation5 + $0x740] sm:$0xff]
    %v6623 = vld [vmem:[#allocation5 + $0x748] sm:$0xff]
    %v6624 = vld [vmem:[#allocation5 + $0x750] sm:$0xff]
    %v6625 = vld [vmem:[#allocation5 + $0x758] sm:$0xff]
    %v6626 = vld [vmem:[#allocation5 + $0x760] sm:$0xff]
    %v6627 = vld [vmem:[#allocation5 + $0x768] sm:$0xff]
    %v6628 = vld [vmem:[#allocation5 + $0x770] sm:$0xff]
    %v6629 = vld [vmem:[#allocation5 + $0x778] sm:$0xff]
    %v6630 = vld [vmem:[#allocation5 + $0x780] sm:$0xff]
    %v6631 = vld [vmem:[#allocation5 + $0x788] sm:$0xff]
    %v6632 = vld [vmem:[#allocation5 + $0x790] sm:$0xff]
    %v6633 = vld [vmem:[#allocation5 + $0x798] sm:$0xff]
    %v6634 = vld [vmem:[#allocation5 + $0x7a0] sm:$0xff]
    %v6635 = vld [vmem:[#allocation5 + $0x7a8] sm:$0xff]
    %v6636 = vld [vmem:[#allocation5 + $0x7b0] sm:$0xff]
    %v6637 = vld [vmem:[#allocation5 + $0x7b8] sm:$0xff]
    %v6638 = vld [vmem:[#allocation5 + $0x7c0] sm:$0xff]
    %v6639 = vld [vmem:[#allocation5 + $0x7c8] sm:$0xff]
    %v6640 = vld [vmem:[#allocation5 + $0x7d0] sm:$0xff]
    %v6641 = vld [vmem:[#allocation5 + $0x7d8] sm:$0xff]
    %v6642 = vld [vmem:[#allocation5 + $0x7e0] sm:$0xff]
    %v6643 = vld [vmem:[#allocation5 + $0x7e8] sm:$0xff]
    %v6644 = vld [vmem:[#allocation5 + $0x7f0] sm:$0xff]
    %v6645 = vld [vmem:[#allocation5 + $0x7f8] sm:$0xff]
    %v6646 = vld [vmem:[#allocation5 + $0x800] sm:$0xff]
    %v6647 = vld [vmem:[#allocation5 + $0x808] sm:$0xff]
    %v6648 = vld [vmem:[#allocation5 + $0x810] sm:$0xff]
    %v6649 = vld [vmem:[#allocation5 + $0x818] sm:$0xff]
    %v6650 = vld [vmem:[#allocation5 + $0x820] sm:$0xff]
    %v6651 = vld [vmem:[#allocation5 + $0x828] sm:$0xff]
    %v6652 = vld [vmem:[#allocation5 + $0x830] sm:$0xff]
    %v6653 = vld [vmem:[#allocation5 + $0x838] sm:$0xff]
    %v6654 = vld [vmem:[#allocation5 + $0x840] sm:$0xff]
    %v6655 = vld [vmem:[#allocation5 + $0x848] sm:$0xff]
    %v6656 = vld [vmem:[#allocation5 + $0x850] sm:$0xff]
    %v6657 = vld [vmem:[#allocation5 + $0x858] sm:$0xff]
    %v6658 = vld [vmem:[#allocation5 + $0x860] sm:$0xff]
    %v6659 = vld [vmem:[#allocation5 + $0x868] sm:$0xff]
    %v6660 = vld [vmem:[#allocation5 + $0x870] sm:$0xff]
    %v6661 = vld [vmem:[#allocation5 + $0x878] sm:$0xff]
    %v6662 = vld [vmem:[#allocation5 + $0x880] sm:$0xff]
    %v6663 = vld [vmem:[#allocation5 + $0x888] sm:$0xff]
    %v6664 = vld [vmem:[#allocation5 + $0x890] sm:$0xff]
    %v6665 = vld [vmem:[#allocation5 + $0x898] sm:$0xff]
    %v6666 = vld [vmem:[#allocation5 + $0x8a0] sm:$0xff]
    %v6667 = vld [vmem:[#allocation5 + $0x8a8] sm:$0xff]
    %v6668 = vld [vmem:[#allocation5 + $0x8b0] sm:$0xff]
    %v6669 = vld [vmem:[#allocation5 + $0x8b8] sm:$0xff]
    %v6670 = vld [vmem:[#allocation5 + $0x8c0] sm:$0xff]
    %v6671 = vld [vmem:[#allocation5 + $0x8c8] sm:$0xff]
    %v6672 = vld [vmem:[#allocation5 + $0x8d0] sm:$0xff]
    %v6673 = vld [vmem:[#allocation5 + $0x8d8] sm:$0xff]
    %v6674 = vld [vmem:[#allocation5 + $0x8e0] sm:$0xff]
    %v6675 = vld [vmem:[#allocation5 + $0x8e8] sm:$0xff]
    %v6676 = vld [vmem:[#allocation5 + $0x8f0] sm:$0xff]
    %v6677 = vld [vmem:[#allocation5 + $0x8f8] sm:$0xff]
    %v6678 = vld [vmem:[#allocation5 + $0x900] sm:$0xff]
    %v6679 = vld [vmem:[#allocation5 + $0x908] sm:$0xff]
    %v6680 = vld [vmem:[#allocation5 + $0x910] sm:$0xff]
    %v6681 = vld [vmem:[#allocation5 + $0x918] sm:$0xff]
    %v6682 = vld [vmem:[#allocation5 + $0x920] sm:$0xff]
    %v6683 = vld [vmem:[#allocation5 + $0x928] sm:$0xff]
    %v6684 = vld [vmem:[#allocation5 + $0x930] sm:$0xff]
    %v6685 = vld [vmem:[#allocation5 + $0x938] sm:$0xff]
    %v6686 = vld [vmem:[#allocation5 + $0x940] sm:$0xff]
    %v6687 = vld [vmem:[#allocation5 + $0x948] sm:$0xff]
    %v6688 = vld [vmem:[#allocation5 + $0x950] sm:$0xff]
    %v6689 = vld [vmem:[#allocation5 + $0x958] sm:$0xff]
    %v6690 = vld [vmem:[#allocation5 + $0x960] sm:$0xff]
    %v6691 = vld [vmem:[#allocation5 + $0x968] sm:$0xff]
    %v6692 = vld [vmem:[#allocation5 + $0x970] sm:$0xff]
    %v6693 = vld [vmem:[#allocation5 + $0x978] sm:$0xff]
    %v6694 = vld [vmem:[#allocation5 + $0x980] sm:$0xff]
    %v6695 = vld [vmem:[#allocation5 + $0x988] sm:$0xff]
    %v6696 = vld [vmem:[#allocation5 + $0x990] sm:$0xff]
    %v6697 = vld [vmem:[#allocation5 + $0x998] sm:$0xff]
    %v6698 = vld [vmem:[#allocation5 + $0x9a0] sm:$0xff]
    %v6699 = vld [vmem:[#allocation5 + $0x9a8] sm:$0xff]
    %v6700 = vld [vmem:[#allocation5 + $0x9b0] sm:$0xff]
    %v6701 = vld [vmem:[#allocation5 + $0x9b8] sm:$0xff]
    %v6702 = vld [vmem:[#allocation5 + $0x9c0] sm:$0xff]
    %v6703 = vld [vmem:[#allocation5 + $0x9c8] sm:$0xff]
    %v6704 = vld [vmem:[#allocation5 + $0x9d0] sm:$0xff]
    %v6705 = vld [vmem:[#allocation5 + $0x9d8] sm:$0xff]
    %v6706 = vld [vmem:[#allocation5 + $0x9e0] sm:$0xff]
    %v6707 = vld [vmem:[#allocation5 + $0x9e8] sm:$0xff]
    %v6708 = vld [vmem:[#allocation5 + $0x9f0] sm:$0xff]
    %v6709 = vld [vmem:[#allocation5 + $0x9f8] sm:$0xff]
    %v6710 = vld [vmem:[#allocation5 + $0xa00] sm:$0xff]
    %v6711 = vld [vmem:[#allocation5 + $0xa08] sm:$0xff]
    %v6712 = vld [vmem:[#allocation5 + $0xa10] sm:$0xff]
    %v6713 = vld [vmem:[#allocation5 + $0xa18] sm:$0xff]
    %v6714 = vld [vmem:[#allocation5 + $0xa20] sm:$0xff]
    %v6715 = vld [vmem:[#allocation5 + $0xa28] sm:$0xff]
    %v6716 = vld [vmem:[#allocation5 + $0xa30] sm:$0xff]
    %v6717 = vld [vmem:[#allocation5 + $0xa38] sm:$0xff]
    %v6718 = vld [vmem:[#allocation5 + $0xa40] sm:$0xff]
    %v6719 = vld [vmem:[#allocation5 + $0xa48] sm:$0xff]
    %v6720 = vld [vmem:[#allocation5 + $0xa50] sm:$0xff]
    %v6721 = vld [vmem:[#allocation5 + $0xa58] sm:$0xff]
    %v6722 = vld [vmem:[#allocation5 + $0xa60] sm:$0xff]
    %v6723 = vld [vmem:[#allocation5 + $0xa68] sm:$0xff]
    %v6724 = vld [vmem:[#allocation5 + $0xa70] sm:$0xff]
    %v6725 = vld [vmem:[#allocation5 + $0xa78] sm:$0xff]
    %v6726 = vld [vmem:[#allocation5 + $0xa80] sm:$0xff]
    %v6727 = vld [vmem:[#allocation5 + $0xa88] sm:$0xff]
    %v6728 = vld [vmem:[#allocation5 + $0xa90] sm:$0xff]
    %v6729 = vld [vmem:[#allocation5 + $0xa98] sm:$0xff]
    %v6730 = vld [vmem:[#allocation5 + $0xaa0] sm:$0xff]
    %v6731 = vld [vmem:[#allocation5 + $0xaa8] sm:$0xff]
    %v6732 = vld [vmem:[#allocation5 + $0xab0] sm:$0xff]
    %v6733 = vld [vmem:[#allocation5 + $0xab8] sm:$0xff]
    %v6734 = vld [vmem:[#allocation5 + $0xac0] sm:$0xff]
    %v6735 = vld [vmem:[#allocation5 + $0xac8] sm:$0xff]
    %v6736 = vld [vmem:[#allocation5 + $0xad0] sm:$0xff]
    %v6737 = vld [vmem:[#allocation5 + $0xad8] sm:$0xff]
    %v6738 = vld [vmem:[#allocation5 + $0xae0] sm:$0xff]
    %v6739 = vld [vmem:[#allocation5 + $0xae8] sm:$0xff]
    %v6740 = vld [vmem:[#allocation5 + $0xaf0] sm:$0xff]
    %v6741 = vld [vmem:[#allocation5 + $0xaf8] sm:$0xff]
    %v6742 = vld [vmem:[#allocation5 + $0xb00] sm:$0xff]
    %v6743 = vld [vmem:[#allocation5 + $0xb08] sm:$0xff]
    %v6744 = vld [vmem:[#allocation5 + $0xb10] sm:$0xff]
    %v6745 = vld [vmem:[#allocation5 + $0xb18] sm:$0xff]
    %v6746 = vld [vmem:[#allocation5 + $0xb20] sm:$0xff]
    %v6747 = vld [vmem:[#allocation5 + $0xb28] sm:$0xff]
    %v6748 = vld [vmem:[#allocation5 + $0xb30] sm:$0xff]
    %v6749 = vld [vmem:[#allocation5 + $0xb38] sm:$0xff]
    %v6750 = vld [vmem:[#allocation5 + $0xb40] sm:$0xff]
    %v6751 = vld [vmem:[#allocation5 + $0xb48] sm:$0xff]
    %v6752 = vld [vmem:[#allocation5 + $0xb50] sm:$0xff]
    %v6753 = vld [vmem:[#allocation5 + $0xb58] sm:$0xff]
    %v6754 = vld [vmem:[#allocation5 + $0xb60] sm:$0xff]
    %v6755 = vld [vmem:[#allocation5 + $0xb68] sm:$0xff]
    %v6756 = vld [vmem:[#allocation5 + $0xb70] sm:$0xff]
    %v6757 = vld [vmem:[#allocation5 + $0xb78] sm:$0xff]
    %v6758 = vld [vmem:[#allocation5 + $0xb80] sm:$0xff]
    %v6759 = vld [vmem:[#allocation5 + $0xb88] sm:$0xff]
    %v6760 = vld [vmem:[#allocation5 + $0xb90] sm:$0xff]
    %v6761 = vld [vmem:[#allocation5 + $0xb98] sm:$0xff]
    %v6762 = vld [vmem:[#allocation5 + $0xba0] sm:$0xff]
    %v6763 = vld [vmem:[#allocation5 + $0xba8] sm:$0xff]
    %v6764 = vld [vmem:[#allocation5 + $0xbb0] sm:$0xff]
    %v6765 = vld [vmem:[#allocation5 + $0xbb8] sm:$0xff]
    %v6766 = vld [vmem:[#allocation5 + $0xbc0] sm:$0xff]
    %v6767 = vld [vmem:[#allocation5 + $0xbc8] sm:$0xff]
    %v6768 = vld [vmem:[#allocation5 + $0xbd0] sm:$0xff]
    %v6769 = vld [vmem:[#allocation5 + $0xbd8] sm:$0xff]
    %v6770 = vld [vmem:[#allocation5 + $0xbe0] sm:$0xff]
    %v6771 = vld [vmem:[#allocation5 + $0xbe8] sm:$0xff]
    %v6772 = vld [vmem:[#allocation5 + $0xbf0] sm:$0xff]
    %v6773 = vld [vmem:[#allocation5 + $0xbf8] sm:$0xff]
    %v6774 = vld [vmem:[#allocation5 + $0xc00] sm:$0xff]
    %v6775 = vld [vmem:[#allocation5 + $0xc08] sm:$0xff]
    %v6776 = vld [vmem:[#allocation5 + $0xc10] sm:$0xff]
    %v6777 = vld [vmem:[#allocation5 + $0xc18] sm:$0xff]
    %v6778 = vld [vmem:[#allocation5 + $0xc20] sm:$0xff]
    %v6779 = vld [vmem:[#allocation5 + $0xc28] sm:$0xff]
    %v6780 = vld [vmem:[#allocation5 + $0xc30] sm:$0xff]
    %v6781 = vld [vmem:[#allocation5 + $0xc38] sm:$0xff]
    %v6782 = vld [vmem:[#allocation5 + $0xc40] sm:$0xff]
    %v6783 = vld [vmem:[#allocation5 + $0xc48] sm:$0xff]
    %v6784 = vld [vmem:[#allocation5 + $0xc50] sm:$0xff]
    %v6785 = vld [vmem:[#allocation5 + $0xc58] sm:$0xff]
    %v6786 = vld [vmem:[#allocation5 + $0xc60] sm:$0xff]
    %v6787 = vld [vmem:[#allocation5 + $0xc68] sm:$0xff]
    %v6788 = vld [vmem:[#allocation5 + $0xc70] sm:$0xff]
    %v6789 = vld [vmem:[#allocation5 + $0xc78] sm:$0xff]
    %v6790 = vld [vmem:[#allocation5 + $0xc80] sm:$0xff]
    %v6791 = vld [vmem:[#allocation5 + $0xc88] sm:$0xff]
    %v6792 = vld [vmem:[#allocation5 + $0xc90] sm:$0xff]
    %v6793 = vld [vmem:[#allocation5 + $0xc98] sm:$0xff]
    %v6794 = vld [vmem:[#allocation5 + $0xca0] sm:$0xff]
    %v6795 = vld [vmem:[#allocation5 + $0xca8] sm:$0xff]
    %v6796 = vld [vmem:[#allocation5 + $0xcb0] sm:$0xff]
    %v6797 = vld [vmem:[#allocation5 + $0xcb8] sm:$0xff]
    %v6798 = vld [vmem:[#allocation5 + $0xcc0] sm:$0xff]
    %v6799 = vld [vmem:[#allocation5 + $0xcc8] sm:$0xff]
    %v6800 = vld [vmem:[#allocation5 + $0xcd0] sm:$0xff]
    %v6801 = vld [vmem:[#allocation5 + $0xcd8] sm:$0xff]
    %v6802 = vld [vmem:[#allocation5 + $0xce0] sm:$0xff]
    %v6803 = vld [vmem:[#allocation5 + $0xce8] sm:$0xff]
    %v6804 = vld [vmem:[#allocation5 + $0xcf0] sm:$0xff]
    %v6805 = vld [vmem:[#allocation5 + $0xcf8] sm:$0xff]
    %v6806 = vld [vmem:[#allocation5 + $0xd00] sm:$0xff]
    %v6807 = vld [vmem:[#allocation5 + $0xd08] sm:$0xff]
    %v6808 = vld [vmem:[#allocation5 + $0xd10] sm:$0xff]
    %v6809 = vld [vmem:[#allocation5 + $0xd18] sm:$0xff]
    %v6810 = vld [vmem:[#allocation5 + $0xd20] sm:$0xff]
    %v6811 = vld [vmem:[#allocation5 + $0xd28] sm:$0xff]
    %v6812 = vld [vmem:[#allocation5 + $0xd30] sm:$0xff]
    %v6813 = vld [vmem:[#allocation5 + $0xd38] sm:$0xff]
    %v6814 = vld [vmem:[#allocation5 + $0xd40] sm:$0xff]
    %v6815 = vld [vmem:[#allocation5 + $0xd48] sm:$0xff]
    %v6816 = vld [vmem:[#allocation5 + $0xd50] sm:$0xff]
    %v6817 = vld [vmem:[#allocation5 + $0xd58] sm:$0xff]
    %v6818 = vld [vmem:[#allocation5 + $0xd60] sm:$0xff]
    %v6819 = vld [vmem:[#allocation5 + $0xd68] sm:$0xff]
    %v6820 = vld [vmem:[#allocation5 + $0xd70] sm:$0xff]
    %v6821 = vld [vmem:[#allocation5 + $0xd78] sm:$0xff]
    %v6822 = vld [vmem:[#allocation5 + $0xd80] sm:$0xff]
    %v6823 = vld [vmem:[#allocation5 + $0xd88] sm:$0xff]
    %v6824 = vld [vmem:[#allocation5 + $0xd90] sm:$0xff]
    %v6825 = vld [vmem:[#allocation5 + $0xd98] sm:$0xff]
    %v6826 = vld [vmem:[#allocation5 + $0xda0] sm:$0xff]
    %v6827 = vld [vmem:[#allocation5 + $0xda8] sm:$0xff]
    %v6828 = vld [vmem:[#allocation5 + $0xdb0] sm:$0xff]
    %v6829 = vld [vmem:[#allocation5 + $0xdb8] sm:$0xff]
    %v6830 = vld [vmem:[#allocation5 + $0xdc0] sm:$0xff]
    %v6831 = vld [vmem:[#allocation5 + $0xdc8] sm:$0xff]
    %v6832 = vld [vmem:[#allocation5 + $0xdd0] sm:$0xff]
    %v6833 = vld [vmem:[#allocation5 + $0xdd8] sm:$0xff]
    %v6834 = vld [vmem:[#allocation5 + $0xde0] sm:$0xff]
    %v6835 = vld [vmem:[#allocation5 + $0xde8] sm:$0xff]
    %v6836 = vld [vmem:[#allocation5 + $0xdf0] sm:$0xff]
    %v6837 = vld [vmem:[#allocation5 + $0xdf8] sm:$0xff]
    %6838 = vmatprep.subr.bf16.mxu0 %v6391
    %6839 = vmatpush1.bf16.msra.mxu0 %v6390
    %6840 = vmatprep.subr.bf16.mxu0 %v6398
    %6841 = vmatpush1.bf16.msra.mxu0 %v6397
    %6842 = vmatprep.subr.bf16.mxu0 %v6405
    %6843 = vmatpush1.bf16.msra.mxu0 %v6404
    %6844 = vmatprep.subr.bf16.mxu0 %v6412
    %6845 = vmatpush1.bf16.msra.mxu0 %v6411
    %6846 = vmatprep.subr.bf16.mxu0 %v6419
    %6847 = vmatpush1.bf16.msra.mxu0 %v6418
    %6848 = vmatprep.subr.bf16.mxu0 %v6426
    %6849 = vmatpush1.bf16.msra.mxu0 %v6425
    %6850 = vmatprep.subr.bf16.mxu0 %v6433
    %6851 = vmatpush1.bf16.msra.mxu0 %v6432
    %6852 = vmatprep.subr.bf16.mxu0 %v6440
    %6853 = vmatpush1.bf16.msra.mxu0 %v6439
    %6854 = vmatprep.subr.bf16.mxu0 %v6447
    %6855 = vmatpush1.bf16.msra.mxu0 %v6446
    %6856 = vmatprep.subr.bf16.mxu0 %v6454
    %6857 = vmatpush1.bf16.msra.mxu0 %v6453
    %6858 = vmatprep.subr.bf16.mxu0 %v6461
    %6859 = vmatpush1.bf16.msra.mxu0 %v6460
    %6860 = vmatprep.subr.bf16.mxu0 %v6468
    %6861 = vmatpush1.bf16.msra.mxu0 %v6467
    %6862 = vmatprep.subr.bf16.mxu0 %v6475
    %6863 = vmatpush1.bf16.msra.mxu0 %v6474
    %6864 = vmatprep.subr.bf16.mxu0 %v6482
    %6865 = vmatpush1.bf16.msra.mxu0 %v6481
    %6866 = vmatprep.subr.bf16.mxu0 %v6489
    %6867 = vmatpush1.bf16.msra.mxu0 %v6488
    %6868 = vmatprep.subr.bf16.mxu0 %v6496
    %6869 = vmatpush1.bf16.msra.mxu0 %v6495
    %6870 = vmatprep.mubr.bf16.mxu0 %v6263
    %6871 = vmatmul.mubr.bf16.gmra.mrb[0].mxu0 %v6262
    %v6872 = vpop.f32.mrb[0].mxu0
    %v6873 = vadd.f32 0.0, %v6872
    %v6874 = vpop.f32.mrb[0].mxu0
    %v6875 = vadd.f32 0.0, %v6874
    %v6876 = vpop.f32.mrb[0].mxu0
    %v6877 = vadd.f32 0.0, %v6876
    %v6878 = vpop.f32.mrb[0].mxu0
    %v6879 = vadd.f32 0.0, %v6878
    %6880 = vmatprep.mubr.bf16.mxu0 %v6271
    %6881 = vmatmul.mubr.bf16.gmra.mrb[0].mxu0 %v6270
    %v6882 = vpop.f32.mrb[0].mxu0
    %v6883 = vadd.f32 0.0, %v6882
    %v6884 = vpop.f32.mrb[0].mxu0
    %v6885 = vadd.f32 0.0, %v6884
    %v6886 = vpop.f32.mrb[0].mxu0
    %v6887 = vadd.f32 0.0, %v6886
    %v6888 = vpop.f32.mrb[0].mxu0
    %v6889 = vadd.f32 0.0, %v6888
    %6890 = vmatprep.mubr.bf16.mxu0 %v6279
    %6891 = vmatmul.mubr.bf16.gmra.mrb[0].mxu0 %v6278
    %v6892 = vpop.f32.mrb[0].mxu0
    %v6893 = vadd.f32 0.0, %v6892
    %v6894 = vpop.f32.mrb[0].mxu0
    %v6895 = vadd.f32 0.0, %v6894
    %v6896 = vpop.f32.mrb[0].mxu0
    %v6897 = vadd.f32 0.0, %v6896
    %v6898 = vpop.f32.mrb[0].mxu0
    %v6899 = vadd.f32 0.0, %v6898
    %6900 = vmatprep.mubr.bf16.mxu0 %v6287
    %6901 = vmatmul.mubr.bf16.gmra.mrb[0].mxu0 %v6286
    %v6902 = vpop.f32.mrb[0].mxu0
    %v6903 = vadd.f32 0.0, %v6902
    %v6904 = vpop.f32.mrb[0].mxu0
    %v6905 = vadd.f32 0.0, %v6904
    %v6906 = vpop.f32.mrb[0].mxu0
    %v6907 = vadd.f32 0.0, %v6906
    %v6908 = vpop.f32.mrb[0].mxu0
    %v6909 = vadd.f32 0.0, %v6908
    %6910 = vmatprep.mubr.bf16.mxu0 %v6295
    %6911 = vmatmul.mubr.bf16.gmra.mrb[0].mxu0 %v6294
    %v6912 = vpop.f32.mrb[0].mxu0
    %v6913 = vadd.f32 0.0, %v6912
    %v6914 = vpop.f32.mrb[0].mxu0
    %v6915 = vadd.f32 0.0, %v6914
    %v6916 = vpop.f32.mrb[0].mxu0
    %v6917 = vadd.f32 0.0, %v6916
    %v6918 = vpop.f32.mrb[0].mxu0
    %v6919 = vadd.f32 0.0, %v6918
    %6920 = vmatprep.mubr.bf16.mxu0 %v6303
    %6921 = vmatmul.mubr.bf16.gmra.mrb[0].mxu0 %v6302
    %v6922 = vpop.f32.mrb[0].mxu0
    %v6923 = vadd.f32 0.0, %v6922
    %v6924 = vpop.f32.mrb[0].mxu0
    %v6925 = vadd.f32 0.0, %v6924
    %v6926 = vpop.f32.mrb[0].mxu0
    %v6927 = vadd.f32 0.0, %v6926
    %v6928 = vpop.f32.mrb[0].mxu0
    %v6929 = vadd.f32 0.0, %v6928
    %6930 = vmatprep.mubr.bf16.mxu0 %v6311
    %6931 = vmatmul.mubr.bf16.gmra.mrb[0].mxu0 %v6310
    %v6932 = vpop.f32.mrb[0].mxu0
    %v6933 = vadd.f32 0.0, %v6932
    %v6934 = vpop.f32.mrb[0].mxu0
    %v6935 = vadd.f32 0.0, %v6934
    %v6936 = vpop.f32.mrb[0].mxu0
    %v6937 = vadd.f32 0.0, %v6936
    %v6938 = vpop.f32.mrb[0].mxu0
    %v6939 = vadd.f32 0.0, %v6938
    %6940 = vmatprep.mubr.bf16.mxu0 %v6319
    %6941 = vmatmul.mubr.bf16.gmra.mrb[0].mxu0 %v6318
    %v6942 = vpop.f32.mrb[0].mxu0
    %v6943 = vadd.f32 0.0, %v6942
    %v6944 = vpop.f32.mrb[0].mxu0
    %v6945 = vadd.f32 0.0, %v6944
    %v6946 = vpop.f32.mrb[0].mxu0
    %v6947 = vadd.f32 0.0, %v6946
    %v6948 = vpop.f32.mrb[0].mxu0
    %v6949 = vadd.f32 0.0, %v6948
    %6950 = vmatprep.mubr.bf16.mxu0 %v6327
    %6951 = vmatmul.mubr.bf16.gmra.mrb[0].mxu0 %v6326
    %v6952 = vpop.f32.mrb[0].mxu0
    %v6953 = vadd.f32 0.0, %v6952
    %v6954 = vpop.f32.mrb[0].mxu0
    %v6955 = vadd.f32 0.0, %v6954
    %v6956 = vpop.f32.mrb[0].mxu0
    %v6957 = vadd.f32 0.0, %v6956
    %v6958 = vpop.f32.mrb[0].mxu0
    %v6959 = vadd.f32 0.0, %v6958
    %6960 = vmatprep.mubr.bf16.mxu0 %v6335
    %6961 = vmatmul.mubr.bf16.gmra.mrb[0].mxu0 %v6334
    %v6962 = vpop.f32.mrb[0].mxu0
    %v6963 = vadd.f32 0.0, %v6962
    %v6964 = vpop.f32.mrb[0].mxu0
    %v6965 = vadd.f32 0.0, %v6964
    %v6966 = vpop.f32.mrb[0].mxu0
    %v6967 = vadd.f32 0.0, %v6966
    %v6968 = vpop.f32.mrb[0].mxu0
    %v6969 = vadd.f32 0.0, %v6968
    %6970 = vmatprep.mubr.bf16.mxu0 %v6343
    %6971 = vmatmul.mubr.bf16.gmra.mrb[0].mxu0 %v6342
    %v6972 = vpop.f32.mrb[0].mxu0
    %v6973 = vadd.f32 0.0, %v6972
    %v6974 = vpop.f32.mrb[0].mxu0
    %v6975 = vadd.f32 0.0, %v6974
    %v6976 = vpop.f32.mrb[0].mxu0
    %v6977 = vadd.f32 0.0, %v6976
    %v6978 = vpop.f32.mrb[0].mxu0
    %v6979 = vadd.f32 0.0, %v6978
    %6980 = vmatprep.mubr.bf16.mxu0 %v6351
    %6981 = vmatmul.mubr.bf16.gmra.mrb[0].mxu0 %v6350
    %v6982 = vpop.f32.mrb[0].mxu0
    %v6983 = vadd.f32 0.0, %v6982
    %v6984 = vpop.f32.mrb[0].mxu0
    %v6985 = vadd.f32 0.0, %v6984
    %v6986 = vpop.f32.mrb[0].mxu0
    %v6987 = vadd.f32 0.0, %v6986
    %v6988 = vpop.f32.mrb[0].mxu0
    %v6989 = vadd.f32 0.0, %v6988
    %6990 = vmatprep.mubr.bf16.mxu0 %v6359
    %6991 = vmatmul.mubr.bf16.gmra.mrb[0].mxu0 %v6358
    %v6992 = vpop.f32.mrb[0].mxu0
    %v6993 = vadd.f32 0.0, %v6992
    %v6994 = vpop.f32.mrb[0].mxu0
    %v6995 = vadd.f32 0.0, %v6994
    %v6996 = vpop.f32.mrb[0].mxu0
    %v6997 = vadd.f32 0.0, %v6996
    %v6998 = vpop.f32.mrb[0].mxu0
    %v6999 = vadd.f32 0.0, %v6998
    %7000 = vmatprep.mubr.bf16.mxu0 %v6367
    %7001 = vmatmul.mubr.bf16.gmra.mrb[0].mxu0 %v6366
    %v7002 = vpop.f32.mrb[0].mxu0
    %v7003 = vadd.f32 0.0, %v7002
    %v7004 = vpop.f32.mrb[0].mxu0
    %v7005 = vadd.f32 0.0, %v7004
    %v7006 = vpop.f32.mrb[0].mxu0
    %v7007 = vadd.f32 0.0, %v7006
    %v7008 = vpop.f32.mrb[0].mxu0
    %v7009 = vadd.f32 0.0, %v7008
    %7010 = vmatprep.mubr.bf16.mxu0 %v6375
    %7011 = vmatmul.mubr.bf16.gmra.mrb[0].mxu0 %v6374
    %v7012 = vpop.f32.mrb[0].mxu0
    %v7013 = vadd.f32 0.0, %v7012
    %v7014 = vpop.f32.mrb[0].mxu0
    %v7015 = vadd.f32 0.0, %v7014
    %v7016 = vpop.f32.mrb[0].mxu0
    %v7017 = vadd.f32 0.0, %v7016
    %v7018 = vpop.f32.mrb[0].mxu0
    %v7019 = vadd.f32 0.0, %v7018
    %7020 = vmatprep.mubr.bf16.mxu0 %v6383
    %7021 = vmatmul.mubr.bf16.gmra.mrb[0].mxu0 %v6382
    %v7022 = vpop.f32.mrb[0].mxu0
    %v7023 = vadd.f32 0.0, %v7022
    %v7024 = vpop.f32.mrb[0].mxu0
    %v7025 = vadd.f32 0.0, %v7024
    %v7026 = vpop.f32.mrb[0].mxu0
    %v7027 = vadd.f32 0.0, %v7026
    %v7028 = vpop.f32.mrb[0].mxu0
    %v7029 = vadd.f32 0.0, %v7028
    %7030 = vdwg.mxu0
    %7031 = vmatprep.subr.bf16.mxu0 %v6503
    %7032 = vmatpush1.bf16.msra.mxu0 %v6502
    %7033 = vmatprep.subr.bf16.mxu0 %v6510
    %7034 = vmatpush1.bf16.msra.mxu0 %v6509
    %7035 = vmatprep.subr.bf16.mxu0 %v6517
    %7036 = vmatpush1.bf16.msra.mxu0 %v6516
    %7037 = vmatprep.subr.bf16.mxu0 %v6524
    %7038 = vmatpush1.bf16.msra.mxu0 %v6523
    %7039 = vmatprep.subr.bf16.mxu0 %v6531
    %7040 = vmatpush1.bf16.msra.mxu0 %v6530
    %7041 = vmatprep.subr.bf16.mxu0 %v6538
    %7042 = vmatpush1.bf16.msra.mxu0 %v6537
    %7043 = vmatprep.subr.bf16.mxu0 %v6545
    %7044 = vmatpush1.bf16.msra.mxu0 %v6544
    %7045 = vmatprep.subr.bf16.mxu0 %v6552
    %7046 = vmatpush1.bf16.msra.mxu0 %v6551
    %7047 = vmatprep.subr.bf16.mxu0 %v6559
    %7048 = vmatpush1.bf16.msra.mxu0 %v6558
    %7049 = vmatprep.subr.bf16.mxu0 %v6566
    %7050 = vmatpush1.bf16.msra.mxu0 %v6565
    %7051 = vmatprep.subr.bf16.mxu0 %v6573
    %7052 = vmatpush1.bf16.msra.mxu0 %v6572
    %7053 = vmatprep.subr.bf16.mxu0 %v6580
    %7054 = vmatpush1.bf16.msra.mxu0 %v6579
    %7055 = vmatprep.subr.bf16.mxu0 %v6587
    %7056 = vmatpush1.bf16.msra.mxu0 %v6586
    %7057 = vmatprep.subr.bf16.mxu0 %v6594
    %7058 = vmatpush1.bf16.msra.mxu0 %v6593
    %7059 = vmatprep.subr.bf16.mxu0 %v6601
    %7060 = vmatpush1.bf16.msra.mxu0 %v6600
    %7061 = vmatprep.subr.bf16.mxu0 %v6608
    %7062 = vmatpush1.bf16.msra.mxu0 %v6607
    %7063 = vmatprep.mubr.bf16.mxu0 %v6265
    %7064 = vmatmul.mubr.bf16.gmra.mrb[0].mxu0 %v6264
    %v7065 = vpop.f32.mrb[0].mxu0
    %v7066 = vadd.f32 %v6873, %v7065
    %v7067 = vpop.f32.mrb[0].mxu0
    %v7068 = vadd.f32 %v6875, %v7067
    %v7069 = vpop.f32.mrb[0].mxu0
    %v7070 = vadd.f32 %v6877, %v7069
    %v7071 = vpop.f32.mrb[0].mxu0
    %v7072 = vadd.f32 %v6879, %v7071
    %7073 = vmatprep.mubr.bf16.mxu0 %v6273
    %7074 = vmatmul.mubr.bf16.gmra.mrb[0].mxu0 %v6272
    %v7075 = vpop.f32.mrb[0].mxu0
    %v7076 = vadd.f32 %v6883, %v7075
    %v7077 = vpop.f32.mrb[0].mxu0
    %v7078 = vadd.f32 %v6885, %v7077
    %v7079 = vpop.f32.mrb[0].mxu0
    %v7080 = vadd.f32 %v6887, %v7079
    %v7081 = vpop.f32.mrb[0].mxu0
    %v7082 = vadd.f32 %v6889, %v7081
    %7083 = vmatprep.mubr.bf16.mxu0 %v6281
    %7084 = vmatmul.mubr.bf16.gmra.mrb[0].mxu0 %v6280
    %v7085 = vpop.f32.mrb[0].mxu0
    %v7086 = vadd.f32 %v6893, %v7085
    %v7087 = vpop.f32.mrb[0].mxu0
    %v7088 = vadd.f32 %v6895, %v7087
    %v7089 = vpop.f32.mrb[0].mxu0
    %v7090 = vadd.f32 %v6897, %v7089
    %v7091 = vpop.f32.mrb[0].mxu0
    %v7092 = vadd.f32 %v6899, %v7091
    %7093 = vmatprep.mubr.bf16.mxu0 %v6289
    %7094 = vmatmul.mubr.bf16.gmra.mrb[0].mxu0 %v6288
    %v7095 = vpop.f32.mrb[0].mxu0
    %v7096 = vadd.f32 %v6903, %v7095
    %v7097 = vpop.f32.mrb[0].mxu0
    %v7098 = vadd.f32 %v6905, %v7097
    %v7099 = vpop.f32.mrb[0].mxu0
    %v7100 = vadd.f32 %v6907, %v7099
    %v7101 = vpop.f32.mrb[0].mxu0
    %v7102 = vadd.f32 %v6909, %v7101
    %7103 = vmatprep.mubr.bf16.mxu0 %v6297
    %7104 = vmatmul.mubr.bf16.gmra.mrb[0].mxu0 %v6296
    %v7105 = vpop.f32.mrb[0].mxu0
    %v7106 = vadd.f32 %v6913, %v7105
    %v7107 = vpop.f32.mrb[0].mxu0
    %v7108 = vadd.f32 %v6915, %v7107
    %v7109 = vpop.f32.mrb[0].mxu0
    %v7110 = vadd.f32 %v6917, %v7109
    %v7111 = vpop.f32.mrb[0].mxu0
    %v7112 = vadd.f32 %v6919, %v7111
    %7113 = vmatprep.mubr.bf16.mxu0 %v6305
    %7114 = vmatmul.mubr.bf16.gmra.mrb[0].mxu0 %v6304
    %v7115 = vpop.f32.mrb[0].mxu0
    %v7116 = vadd.f32 %v6923, %v7115
    %v7117 = vpop.f32.mrb[0].mxu0
    %v7118 = vadd.f32 %v6925, %v7117
    %v7119 = vpop.f32.mrb[0].mxu0
    %v7120 = vadd.f32 %v6927, %v7119
    %v7121 = vpop.f32.mrb[0].mxu0
    %v7122 = vadd.f32 %v6929, %v7121
    %7123 = vmatprep.mubr.bf16.mxu0 %v6313
    %7124 = vmatmul.mubr.bf16.gmra.mrb[0].mxu0 %v6312
    %v7125 = vpop.f32.mrb[0].mxu0
    %v7126 = vadd.f32 %v6933, %v7125
    %v7127 = vpop.f32.mrb[0].mxu0
    %v7128 = vadd.f32 %v6935, %v7127
    %v7129 = vpop.f32.mrb[0].mxu0
    %v7130 = vadd.f32 %v6937, %v7129
    %v7131 = vpop.f32.mrb[0].mxu0
    %v7132 = vadd.f32 %v6939, %v7131
    %7133 = vmatprep.mubr.bf16.mxu0 %v6321
    %7134 = vmatmul.mubr.bf16.gmra.mrb[0].mxu0 %v6320
    %v7135 = vpop.f32.mrb[0].mxu0
    %v7136 = vadd.f32 %v6943, %v7135
    %v7137 = vpop.f32.mrb[0].mxu0
    %v7138 = vadd.f32 %v6945, %v7137
    %v7139 = vpop.f32.mrb[0].mxu0
    %v7140 = vadd.f32 %v6947, %v7139
    %v7141 = vpop.f32.mrb[0].mxu0
    %v7142 = vadd.f32 %v6949, %v7141
    %7143 = vmatprep.mubr.bf16.mxu0 %v6329
    %7144 = vmatmul.mubr.bf16.gmra.mrb[0].mxu0 %v6328
    %v7145 = vpop.f32.mrb[0].mxu0
    %v7146 = vadd.f32 %v6953, %v7145
    %v7147 = vpop.f32.mrb[0].mxu0
    %v7148 = vadd.f32 %v6955, %v7147
    %v7149 = vpop.f32.mrb[0].mxu0
    %v7150 = vadd.f32 %v6957, %v7149
    %v7151 = vpop.f32.mrb[0].mxu0
    %v7152 = vadd.f32 %v6959, %v7151
    %7153 = vmatprep.mubr.bf16.mxu0 %v6337
    %7154 = vmatmul.mubr.bf16.gmra.mrb[0].mxu0 %v6336
    %v7155 = vpop.f32.mrb[0].mxu0
    %v7156 = vadd.f32 %v6963, %v7155
    %v7157 = vpop.f32.mrb[0].mxu0
    %v7158 = vadd.f32 %v6965, %v7157
    %v7159 = vpop.f32.mrb[0].mxu0
    %v7160 = vadd.f32 %v6967, %v7159
    %v7161 = vpop.f32.mrb[0].mxu0
    %v7162 = vadd.f32 %v6969, %v7161
    %7163 = vmatprep.mubr.bf16.mxu0 %v6345
    %7164 = vmatmul.mubr.bf16.gmra.mrb[0].mxu0 %v6344
    %v7165 = vpop.f32.mrb[0].mxu0
    %v7166 = vadd.f32 %v6973, %v7165
    %v7167 = vpop.f32.mrb[0].mxu0
    %v7168 = vadd.f32 %v6975, %v7167
    %v7169 = vpop.f32.mrb[0].mxu0
    %v7170 = vadd.f32 %v6977, %v7169
    %v7171 = vpop.f32.mrb[0].mxu0
    %v7172 = vadd.f32 %v6979, %v7171
    %7173 = vmatprep.mubr.bf16.mxu0 %v6353
    %7174 = vmatmul.mubr.bf16.gmra.mrb[0].mxu0 %v6352
    %v7175 = vpop.f32.mrb[0].mxu0
    %v7176 = vadd.f32 %v6983, %v7175
    %v7177 = vpop.f32.mrb[0].mxu0
    %v7178 = vadd.f32 %v6985, %v7177
    %v7179 = vpop.f32.mrb[0].mxu0
    %v7180 = vadd.f32 %v6987, %v7179
    %v7181 = vpop.f32.mrb[0].mxu0
    %v7182 = vadd.f32 %v6989, %v7181
    %7183 = vmatprep.mubr.bf16.mxu0 %v6361
    %7184 = vmatmul.mubr.bf16.gmra.mrb[0].mxu0 %v6360
    %v7185 = vpop.f32.mrb[0].mxu0
    %v7186 = vadd.f32 %v6993, %v7185
    %v7187 = vpop.f32.mrb[0].mxu0
    %v7188 = vadd.f32 %v6995, %v7187
    %v7189 = vpop.f32.mrb[0].mxu0
    %v7190 = vadd.f32 %v6997, %v7189
    %v7191 = vpop.f32.mrb[0].mxu0
    %v7192 = vadd.f32 %v6999, %v7191
    %7193 = vmatprep.mubr.bf16.mxu0 %v6369
    %7194 = vmatmul.mubr.bf16.gmra.mrb[0].mxu0 %v6368
    %v7195 = vpop.f32.mrb[0].mxu0
    %v7196 = vadd.f32 %v7003, %v7195
    %v7197 = vpop.f32.mrb[0].mxu0
    %v7198 = vadd.f32 %v7005, %v7197
    %v7199 = vpop.f32.mrb[0].mxu0
    %v7200 = vadd.f32 %v7007, %v7199
    %v7201 = vpop.f32.mrb[0].mxu0
    %v7202 = vadd.f32 %v7009, %v7201
    %7203 = vmatprep.mubr.bf16.mxu0 %v6377
    %7204 = vmatmul.mubr.bf16.gmra.mrb[0].mxu0 %v6376
    %v7205 = vpop.f32.mrb[0].mxu0
    %v7206 = vadd.f32 %v7013, %v7205
    %v7207 = vpop.f32.mrb[0].mxu0
    %v7208 = vadd.f32 %v7015, %v7207
    %v7209 = vpop.f32.mrb[0].mxu0
    %v7210 = vadd.f32 %v7017, %v7209
    %v7211 = vpop.f32.mrb[0].mxu0
    %v7212 = vadd.f32 %v7019, %v7211
    %7213 = vmatprep.mubr.bf16.mxu0 %v6385
    %7214 = vmatmul.mubr.bf16.gmra.mrb[0].mxu0 %v6384
    %v7215 = vpop.f32.mrb[0].mxu0
    %v7216 = vadd.f32 %v7023, %v7215
    %v7217 = vpop.f32.mrb[0].mxu0
    %v7218 = vadd.f32 %v7025, %v7217
    %v7219 = vpop.f32.mrb[0].mxu0
    %v7220 = vadd.f32 %v7027, %v7219
    %v7221 = vpop.f32.mrb[0].mxu0
    %v7222 = vadd.f32 %v7029, %v7221
    %7223 = vdwg.mxu0
    %7224 = vmatprep.subr.bf16.mxu0 %v6615
    %7225 = vmatpush1.bf16.msra.mxu0 %v6614
    %7226 = vmatprep.subr.bf16.mxu0 %v6622
    %7227 = vmatpush1.bf16.msra.mxu0 %v6621
    %7228 = vmatprep.subr.bf16.mxu0 %v6629
    %7229 = vmatpush1.bf16.msra.mxu0 %v6628
    %7230 = vmatprep.subr.bf16.mxu0 %v6636
    %7231 = vmatpush1.bf16.msra.mxu0 %v6635
    %7232 = vmatprep.subr.bf16.mxu0 %v6643
    %7233 = vmatpush1.bf16.msra.mxu0 %v6642
    %7234 = vmatprep.subr.bf16.mxu0 %v6650
    %7235 = vmatpush1.bf16.msra.mxu0 %v6649
    %7236 = vmatprep.subr.bf16.mxu0 %v6657
    %7237 = vmatpush1.bf16.msra.mxu0 %v6656
    %7238 = vmatprep.subr.bf16.mxu0 %v6664
    %7239 = vmatpush1.bf16.msra.mxu0 %v6663
    %7240 = vmatprep.subr.bf16.mxu0 %v6671
    %7241 = vmatpush1.bf16.msra.mxu0 %v6670
    %7242 = vmatprep.subr.bf16.mxu0 %v6678
    %7243 = vmatpush1.bf16.msra.mxu0 %v6677
    %7244 = vmatprep.subr.bf16.mxu0 %v6685
    %7245 = vmatpush1.bf16.msra.mxu0 %v6684
    %7246 = vmatprep.subr.bf16.mxu0 %v6692
    %7247 = vmatpush1.bf16.msra.mxu0 %v6691
    %7248 = vmatprep.subr.bf16.mxu0 %v6699
    %7249 = vmatpush1.bf16.msra.mxu0 %v6698
    %7250 = vmatprep.subr.bf16.mxu0 %v6706
    %7251 = vmatpush1.bf16.msra.mxu0 %v6705
    %7252 = vmatprep.subr.bf16.mxu0 %v6713
    %7253 = vmatpush1.bf16.msra.mxu0 %v6712
    %7254 = vmatprep.subr.bf16.mxu0 %v6720
    %7255 = vmatpush1.bf16.msra.mxu0 %v6719
    %7256 = vmatprep.mubr.bf16.mxu0 %v6267
    %7257 = vmatmul.mubr.bf16.gmra.mrb[0].mxu0 %v6266
    %v7258 = vpop.f32.mrb[0].mxu0
    %v7259 = vadd.f32 %v7066, %v7258
    %v7260 = vpop.f32.mrb[0].mxu0
    %v7261 = vadd.f32 %v7068, %v7260
    %v7262 = vpop.f32.mrb[0].mxu0
    %v7263 = vadd.f32 %v7070, %v7262
    %v7264 = vpop.f32.mrb[0].mxu0
    %v7265 = vadd.f32 %v7072, %v7264
    %7266 = vmatprep.mubr.bf16.mxu0 %v6275
    %7267 = vmatmul.mubr.bf16.gmra.mrb[0].mxu0 %v6274
    %v7268 = vpop.f32.mrb[0].mxu0
    %v7269 = vadd.f32 %v7076, %v7268
    %v7270 = vpop.f32.mrb[0].mxu0
    %v7271 = vadd.f32 %v7078, %v7270
    %v7272 = vpop.f32.mrb[0].mxu0
    %v7273 = vadd.f32 %v7080, %v7272
    %v7274 = vpop.f32.mrb[0].mxu0
    %v7275 = vadd.f32 %v7082, %v7274
    %7276 = vmatprep.mubr.bf16.mxu0 %v6283
    %7277 = vmatmul.mubr.bf16.gmra.mrb[0].mxu0 %v6282
    %v7278 = vpop.f32.mrb[0].mxu0
    %v7279 = vadd.f32 %v7086, %v7278
    %v7280 = vpop.f32.mrb[0].mxu0
    %v7281 = vadd.f32 %v7088, %v7280
    %v7282 = vpop.f32.mrb[0].mxu0
    %v7283 = vadd.f32 %v7090, %v7282
    %v7284 = vpop.f32.mrb[0].mxu0
    %v7285 = vadd.f32 %v7092, %v7284
    %7286 = vmatprep.mubr.bf16.mxu0 %v6291
    %7287 = vmatmul.mubr.bf16.gmra.mrb[0].mxu0 %v6290
    %v7288 = vpop.f32.mrb[0].mxu0
    %v7289 = vadd.f32 %v7096, %v7288
    %v7290 = vpop.f32.mrb[0].mxu0
    %v7291 = vadd.f32 %v7098, %v7290
    %v7292 = vpop.f32.mrb[0].mxu0
    %v7293 = vadd.f32 %v7100, %v7292
    %v7294 = vpop.f32.mrb[0].mxu0
    %v7295 = vadd.f32 %v7102, %v7294
    %7296 = vmatprep.mubr.bf16.mxu0 %v6299
    %7297 = vmatmul.mubr.bf16.gmra.mrb[0].mxu0 %v6298
    %v7298 = vpop.f32.mrb[0].mxu0
    %v7299 = vadd.f32 %v7106, %v7298
    %v7300 = vpop.f32.mrb[0].mxu0
    %v7301 = vadd.f32 %v7108, %v7300
    %v7302 = vpop.f32.mrb[0].mxu0
    %v7303 = vadd.f32 %v7110, %v7302
    %v7304 = vpop.f32.mrb[0].mxu0
    %v7305 = vadd.f32 %v7112, %v7304
    %7306 = vmatprep.mubr.bf16.mxu0 %v6307
    %7307 = vmatmul.mubr.bf16.gmra.mrb[0].mxu0 %v6306
    %v7308 = vpop.f32.mrb[0].mxu0
    %v7309 = vadd.f32 %v7116, %v7308
    %v7310 = vpop.f32.mrb[0].mxu0
    %v7311 = vadd.f32 %v7118, %v7310
    %v7312 = vpop.f32.mrb[0].mxu0
    %v7313 = vadd.f32 %v7120, %v7312
    %v7314 = vpop.f32.mrb[0].mxu0
    %v7315 = vadd.f32 %v7122, %v7314
    %7316 = vmatprep.mubr.bf16.mxu0 %v6315
    %7317 = vmatmul.mubr.bf16.gmra.mrb[0].mxu0 %v6314
    %v7318 = vpop.f32.mrb[0].mxu0
    %v7319 = vadd.f32 %v7126, %v7318
    %v7320 = vpop.f32.mrb[0].mxu0
    %v7321 = vadd.f32 %v7128, %v7320
    %v7322 = vpop.f32.mrb[0].mxu0
    %v7323 = vadd.f32 %v7130, %v7322
    %v7324 = vpop.f32.mrb[0].mxu0
    %v7325 = vadd.f32 %v7132, %v7324
    %7326 = vmatprep.mubr.bf16.mxu0 %v6323
    %7327 = vmatmul.mubr.bf16.gmra.mrb[0].mxu0 %v6322
    %v7328 = vpop.f32.mrb[0].mxu0
    %v7329 = vadd.f32 %v7136, %v7328
    %v7330 = vpop.f32.mrb[0].mxu0
    %v7331 = vadd.f32 %v7138, %v7330
    %v7332 = vpop.f32.mrb[0].mxu0
    %v7333 = vadd.f32 %v7140, %v7332
    %v7334 = vpop.f32.mrb[0].mxu0
    %v7335 = vadd.f32 %v7142, %v7334
    %7336 = vmatprep.mubr.bf16.mxu0 %v6331
    %7337 = vmatmul.mubr.bf16.gmra.mrb[0].mxu0 %v6330
    %v7338 = vpop.f32.mrb[0].mxu0
    %v7339 = vadd.f32 %v7146, %v7338
    %v7340 = vpop.f32.mrb[0].mxu0
    %v7341 = vadd.f32 %v7148, %v7340
    %v7342 = vpop.f32.mrb[0].mxu0
    %v7343 = vadd.f32 %v7150, %v7342
    %v7344 = vpop.f32.mrb[0].mxu0
    %v7345 = vadd.f32 %v7152, %v7344
    %7346 = vmatprep.mubr.bf16.mxu0 %v6339
    %7347 = vmatmul.mubr.bf16.gmra.mrb[0].mxu0 %v6338
    %v7348 = vpop.f32.mrb[0].mxu0
    %v7349 = vadd.f32 %v7156, %v7348
    %v7350 = vpop.f32.mrb[0].mxu0
    %v7351 = vadd.f32 %v7158, %v7350
    %v7352 = vpop.f32.mrb[0].mxu0
    %v7353 = vadd.f32 %v7160, %v7352
    %v7354 = vpop.f32.mrb[0].mxu0
    %v7355 = vadd.f32 %v7162, %v7354
    %7356 = vmatprep.mubr.bf16.mxu0 %v6347
    %7357 = vmatmul.mubr.bf16.gmra.mrb[0].mxu0 %v6346
    %v7358 = vpop.f32.mrb[0].mxu0
    %v7359 = vadd.f32 %v7166, %v7358
    %v7360 = vpop.f32.mrb[0].mxu0
    %v7361 = vadd.f32 %v7168, %v7360
    %v7362 = vpop.f32.mrb[0].mxu0
    %v7363 = vadd.f32 %v7170, %v7362
    %v7364 = vpop.f32.mrb[0].mxu0
    %v7365 = vadd.f32 %v7172, %v7364
    %7366 = vmatprep.mubr.bf16.mxu0 %v6355
    %7367 = vmatmul.mubr.bf16.gmra.mrb[0].mxu0 %v6354
    %v7368 = vpop.f32.mrb[0].mxu0
    %v7369 = vadd.f32 %v7176, %v7368
    %v7370 = vpop.f32.mrb[0].mxu0
    %v7371 = vadd.f32 %v7178, %v7370
    %v7372 = vpop.f32.mrb[0].mxu0
    %v7373 = vadd.f32 %v7180, %v7372
    %v7374 = vpop.f32.mrb[0].mxu0
    %v7375 = vadd.f32 %v7182, %v7374
    %7376 = vmatprep.mubr.bf16.mxu0 %v6363
    %7377 = vmatmul.mubr.bf16.gmra.mrb[0].mxu0 %v6362
    %v7378 = vpop.f32.mrb[0].mxu0
    %v7379 = vadd.f32 %v7186, %v7378
    %v7380 = vpop.f32.mrb[0].mxu0
    %v7381 = vadd.f32 %v7188, %v7380
    %v7382 = vpop.f32.mrb[0].mxu0
    %v7383 = vadd.f32 %v7190, %v7382
    %v7384 = vpop.f32.mrb[0].mxu0
    %v7385 = vadd.f32 %v7192, %v7384
    %7386 = vmatprep.mubr.bf16.mxu0 %v6371
    %7387 = vmatmul.mubr.bf16.gmra.mrb[0].mxu0 %v6370
    %v7388 = vpop.f32.mrb[0].mxu0
    %v7389 = vadd.f32 %v7196, %v7388
    %v7390 = vpop.f32.mrb[0].mxu0
    %v7391 = vadd.f32 %v7198, %v7390
    %v7392 = vpop.f32.mrb[0].mxu0
    %v7393 = vadd.f32 %v7200, %v7392
    %v7394 = vpop.f32.mrb[0].mxu0
    %v7395 = vadd.f32 %v7202, %v7394
    %7396 = vmatprep.mubr.bf16.mxu0 %v6379
    %7397 = vmatmul.mubr.bf16.gmra.mrb[0].mxu0 %v6378
    %v7398 = vpop.f32.mrb[0].mxu0
    %v7399 = vadd.f32 %v7206, %v7398
    %v7400 = vpop.f32.mrb[0].mxu0
    %v7401 = vadd.f32 %v7208, %v7400
    %v7402 = vpop.f32.mrb[0].mxu0
    %v7403 = vadd.f32 %v7210, %v7402
    %v7404 = vpop.f32.mrb[0].mxu0
    %v7405 = vadd.f32 %v7212, %v7404
    %7406 = vmatprep.mubr.bf16.mxu0 %v6387
    %7407 = vmatmul.mubr.bf16.gmra.mrb[0].mxu0 %v6386
    %v7408 = vpop.f32.mrb[0].mxu0
    %v7409 = vadd.f32 %v7216, %v7408
    %v7410 = vpop.f32.mrb[0].mxu0
    %v7411 = vadd.f32 %v7218, %v7410
    %v7412 = vpop.f32.mrb[0].mxu0
    %v7413 = vadd.f32 %v7220, %v7412
    %v7414 = vpop.f32.mrb[0].mxu0
    %v7415 = vadd.f32 %v7222, %v7414
    %7416 = vdwg.mxu0
    %7417 = vmatprep.subr.bf16.mxu0 %v6727
    %7418 = vmatpush1.bf16.msra.mxu0 %v6726
    %7419 = vmatprep.subr.bf16.mxu0 %v6734
    %7420 = vmatpush1.bf16.msra.mxu0 %v6733
    %7421 = vmatprep.subr.bf16.mxu0 %v6741
    %7422 = vmatpush1.bf16.msra.mxu0 %v6740
    %7423 = vmatprep.subr.bf16.mxu0 %v6748
    %7424 = vmatpush1.bf16.msra.mxu0 %v6747
    %7425 = vmatprep.subr.bf16.mxu0 %v6755
    %7426 = vmatpush1.bf16.msra.mxu0 %v6754
    %7427 = vmatprep.subr.bf16.mxu0 %v6762
    %7428 = vmatpush1.bf16.msra.mxu0 %v6761
    %7429 = vmatprep.subr.bf16.mxu0 %v6769
    %7430 = vmatpush1.bf16.msra.mxu0 %v6768
    %7431 = vmatprep.subr.bf16.mxu0 %v6776
    %7432 = vmatpush1.bf16.msra.mxu0 %v6775
    %7433 = vmatprep.subr.bf16.mxu0 %v6783
    %7434 = vmatpush1.bf16.msra.mxu0 %v6782
    %7435 = vmatprep.subr.bf16.mxu0 %v6790
    %7436 = vmatpush1.bf16.msra.mxu0 %v6789
    %7437 = vmatprep.subr.bf16.mxu0 %v6797
    %7438 = vmatpush1.bf16.msra.mxu0 %v6796
    %7439 = vmatprep.subr.bf16.mxu0 %v6804
    %7440 = vmatpush1.bf16.msra.mxu0 %v6803
    %7441 = vmatprep.subr.bf16.mxu0 %v6811
    %7442 = vmatpush1.bf16.msra.mxu0 %v6810
    %7443 = vmatprep.subr.bf16.mxu0 %v6818
    %7444 = vmatpush1.bf16.msra.mxu0 %v6817
    %7445 = vmatprep.subr.bf16.mxu0 %v6825
    %7446 = vmatpush1.bf16.msra.mxu0 %v6824
    %7447 = vmatprep.subr.bf16.mxu0 %v6832
    %7448 = vmatpush1.bf16.msra.mxu0 %v6831
    %7449 = vmatprep.mubr.bf16.mxu0 %v6269
    %7450 = vmatmul.mubr.bf16.gmra.mrb[0].mxu0 %v6268
    %v7451 = vpop.f32.mrb[0].mxu0
    %v7452 = vadd.f32 %v7259, %v7451
    %v7453 = vpop.f32.mrb[0].mxu0
    %v7454 = vadd.f32 %v7261, %v7453
    %v7455 = vpop.f32.mrb[0].mxu0
    %v7456 = vadd.f32 %v7263, %v7455
    %v7457 = vpop.f32.mrb[0].mxu0
    %v7458 = vadd.f32 %v7265, %v7457
    %7459 = vmatprep.mubr.bf16.mxu0 %v6277
    %7460 = vmatmul.mubr.bf16.gmra.mrb[0].mxu0 %v6276
    %v7461 = vpop.f32.mrb[0].mxu0
    %v7462 = vadd.f32 %v7269, %v7461
    %v7463 = vpop.f32.mrb[0].mxu0
    %v7464 = vadd.f32 %v7271, %v7463
    %v7465 = vpop.f32.mrb[0].mxu0
    %v7466 = vadd.f32 %v7273, %v7465
    %v7467 = vpop.f32.mrb[0].mxu0
    %v7468 = vadd.f32 %v7275, %v7467
    %7469 = vmatprep.mubr.bf16.mxu0 %v6285
    %7470 = vmatmul.mubr.bf16.gmra.mrb[0].mxu0 %v6284
    %v7471 = vpop.f32.mrb[0].mxu0
    %v7472 = vadd.f32 %v7279, %v7471
    %v7473 = vpop.f32.mrb[0].mxu0
    %v7474 = vadd.f32 %v7281, %v7473
    %v7475 = vpop.f32.mrb[0].mxu0
    %v7476 = vadd.f32 %v7283, %v7475
    %v7477 = vpop.f32.mrb[0].mxu0
    %v7478 = vadd.f32 %v7285, %v7477
    %7479 = vmatprep.mubr.bf16.mxu0 %v6293
    %7480 = vmatmul.mubr.bf16.gmra.mrb[0].mxu0 %v6292
    %v7481 = vpop.f32.mrb[0].mxu0
    %v7482 = vadd.f32 %v7289, %v7481
    %v7483 = vpop.f32.mrb[0].mxu0
    %v7484 = vadd.f32 %v7291, %v7483
    %v7485 = vpop.f32.mrb[0].mxu0
    %v7486 = vadd.f32 %v7293, %v7485
    %v7487 = vpop.f32.mrb[0].mxu0
    %v7488 = vadd.f32 %v7295, %v7487
    %7489 = vmatprep.mubr.bf16.mxu0 %v6301
    %7490 = vmatmul.mubr.bf16.gmra.mrb[0].mxu0 %v6300
    %v7491 = vpop.f32.mrb[0].mxu0
    %v7492 = vadd.f32 %v7299, %v7491
    %v7493 = vpop.f32.mrb[0].mxu0
    %v7494 = vadd.f32 %v7301, %v7493
    %v7495 = vpop.f32.mrb[0].mxu0
    %v7496 = vadd.f32 %v7303, %v7495
    %v7497 = vpop.f32.mrb[0].mxu0
    %v7498 = vadd.f32 %v7305, %v7497
    %7499 = vmatprep.mubr.bf16.mxu0 %v6309
    %7500 = vmatmul.mubr.bf16.gmra.mrb[0].mxu0 %v6308
    %v7501 = vpop.f32.mrb[0].mxu0
    %v7502 = vadd.f32 %v7309, %v7501
    %v7503 = vpop.f32.mrb[0].mxu0
    %v7504 = vadd.f32 %v7311, %v7503
    %v7505 = vpop.f32.mrb[0].mxu0
    %v7506 = vadd.f32 %v7313, %v7505
    %v7507 = vpop.f32.mrb[0].mxu0
    %v7508 = vadd.f32 %v7315, %v7507
    %7509 = vmatprep.mubr.bf16.mxu0 %v6317
    %7510 = vmatmul.mubr.bf16.gmra.mrb[0].mxu0 %v6316
    %v7511 = vpop.f32.mrb[0].mxu0
    %v7512 = vadd.f32 %v7319, %v7511
    %v7513 = vpop.f32.mrb[0].mxu0
    %v7514 = vadd.f32 %v7321, %v7513
    %v7515 = vpop.f32.mrb[0].mxu0
    %v7516 = vadd.f32 %v7323, %v7515
    %v7517 = vpop.f32.mrb[0].mxu0
    %v7518 = vadd.f32 %v7325, %v7517
    %7519 = vmatprep.mubr.bf16.mxu0 %v6325
    %7520 = vmatmul.mubr.bf16.gmra.mrb[0].mxu0 %v6324
    %v7521 = vpop.f32.mrb[0].mxu0
    %v7522 = vadd.f32 %v7329, %v7521
    %v7523 = vpop.f32.mrb[0].mxu0
    %v7524 = vadd.f32 %v7331, %v7523
    %v7525 = vpop.f32.mrb[0].mxu0
    %v7526 = vadd.f32 %v7333, %v7525
    %v7527 = vpop.f32.mrb[0].mxu0
    %v7528 = vadd.f32 %v7335, %v7527
    %7529 = vmatprep.mubr.bf16.mxu0 %v6333
    %7530 = vmatmul.mubr.bf16.gmra.mrb[0].mxu0 %v6332
    %v7531 = vpop.f32.mrb[0].mxu0
    %v7532 = vadd.f32 %v7339, %v7531
    %v7533 = vpop.f32.mrb[0].mxu0
    %v7534 = vadd.f32 %v7341, %v7533
    %v7535 = vpop.f32.mrb[0].mxu0
    %v7536 = vadd.f32 %v7343, %v7535
    %v7537 = vpop.f32.mrb[0].mxu0
    %v7538 = vadd.f32 %v7345, %v7537
    %7539 = vmatprep.mubr.bf16.mxu0 %v6341
    %7540 = vmatmul.mubr.bf16.gmra.mrb[0].mxu0 %v6340
    %v7541 = vpop.f32.mrb[0].mxu0
    %v7542 = vadd.f32 %v7349, %v7541
    %v7543 = vpop.f32.mrb[0].mxu0
    %v7544 = vadd.f32 %v7351, %v7543
    %v7545 = vpop.f32.mrb[0].mxu0
    %v7546 = vadd.f32 %v7353, %v7545
    %v7547 = vpop.f32.mrb[0].mxu0
    %v7548 = vadd.f32 %v7355, %v7547
    %7549 = vmatprep.mubr.bf16.mxu0 %v6349
    %7550 = vmatmul.mubr.bf16.gmra.mrb[0].mxu0 %v6348
    %v7551 = vpop.f32.mrb[0].mxu0
    %v7552 = vadd.f32 %v7359, %v7551
    %v7553 = vpop.f32.mrb[0].mxu0
    %v7554 = vadd.f32 %v7361, %v7553
    %v7555 = vpop.f32.mrb[0].mxu0
    %v7556 = vadd.f32 %v7363, %v7555
    %v7557 = vpop.f32.mrb[0].mxu0
    %v7558 = vadd.f32 %v7365, %v7557
    %7559 = vmatprep.mubr.bf16.mxu0 %v6357
    %7560 = vmatmul.mubr.bf16.gmra.mrb[0].mxu0 %v6356
    %v7561 = vpop.f32.mrb[0].mxu0
    %v7562 = vadd.f32 %v7369, %v7561
    %v7563 = vpop.f32.mrb[0].mxu0
    %v7564 = vadd.f32 %v7371, %v7563
    %v7565 = vpop.f32.mrb[0].mxu0
    %v7566 = vadd.f32 %v7373, %v7565
    %v7567 = vpop.f32.mrb[0].mxu0
    %v7568 = vadd.f32 %v7375, %v7567
    %7569 = vmatprep.mubr.bf16.mxu0 %v6365
    %7570 = vmatmul.mubr.bf16.gmra.mrb[0].mxu0 %v6364
    %v7571 = vpop.f32.mrb[0].mxu0
    %v7572 = vadd.f32 %v7379, %v7571
    %v7573 = vpop.f32.mrb[0].mxu0
    %v7574 = vadd.f32 %v7381, %v7573
    %v7575 = vpop.f32.mrb[0].mxu0
    %v7576 = vadd.f32 %v7383, %v7575
    %v7577 = vpop.f32.mrb[0].mxu0
    %v7578 = vadd.f32 %v7385, %v7577
    %7579 = vmatprep.mubr.bf16.mxu0 %v6373
    %7580 = vmatmul.mubr.bf16.gmra.mrb[0].mxu0 %v6372
    %v7581 = vpop.f32.mrb[0].mxu0
    %v7582 = vadd.f32 %v7389, %v7581
    %v7583 = vpop.f32.mrb[0].mxu0
    %v7584 = vadd.f32 %v7391, %v7583
    %v7585 = vpop.f32.mrb[0].mxu0
    %v7586 = vadd.f32 %v7393, %v7585
    %v7587 = vpop.f32.mrb[0].mxu0
    %v7588 = vadd.f32 %v7395, %v7587
    %7589 = vmatprep.mubr.bf16.mxu0 %v6381
    %7590 = vmatmul.mubr.bf16.gmra.mrb[0].mxu0 %v6380
    %v7591 = vpop.f32.mrb[0].mxu0
    %v7592 = vadd.f32 %v7399, %v7591
    %v7593 = vpop.f32.mrb[0].mxu0
    %v7594 = vadd.f32 %v7401, %v7593
    %v7595 = vpop.f32.mrb[0].mxu0
    %v7596 = vadd.f32 %v7403, %v7595
    %v7597 = vpop.f32.mrb[0].mxu0
    %v7598 = vadd.f32 %v7405, %v7597
    %7599 = vmatprep.mubr.bf16.mxu0 %v6389
    %7600 = vmatmul.mubr.bf16.gmra.mrb[0].mxu0 %v6388
    %v7601 = vpop.f32.mrb[0].mxu0
    %v7602 = vadd.f32 %v7409, %v7601
    %v7603 = vpop.f32.mrb[0].mxu0
    %v7604 = vadd.f32 %v7411, %v7603
    %v7605 = vpop.f32.mrb[0].mxu0
    %v7606 = vadd.f32 %v7413, %v7605
    %v7607 = vpop.f32.mrb[0].mxu0
    %v7608 = vadd.f32 %v7415, %v7607
    %7609 = vdwg.mxu0
    %7610 = vmatprep.subr.bf16.mxu0 %v6393
    %7611 = vmatpush1.bf16.msra.mxu0 %v6392
    %7612 = vmatprep.subr.bf16.mxu0 %v6400
    %7613 = vmatpush1.bf16.msra.mxu0 %v6399
    %7614 = vmatprep.subr.bf16.mxu0 %v6407
    %7615 = vmatpush1.bf16.msra.mxu0 %v6406
    %7616 = vmatprep.subr.bf16.mxu0 %v6414
    %7617 = vmatpush1.bf16.msra.mxu0 %v6413
    %7618 = vmatprep.subr.bf16.mxu0 %v6421
    %7619 = vmatpush1.bf16.msra.mxu0 %v6420
    %7620 = vmatprep.subr.bf16.mxu0 %v6428
    %7621 = vmatpush1.bf16.msra.mxu0 %v6427
    %7622 = vmatprep.subr.bf16.mxu0 %v6435
    %7623 = vmatpush1.bf16.msra.mxu0 %v6434
    %7624 = vmatprep.subr.bf16.mxu0 %v6442
    %7625 = vmatpush1.bf16.msra.mxu0 %v6441
    %7626 = vmatprep.subr.bf16.mxu0 %v6449
    %7627 = vmatpush1.bf16.msra.mxu0 %v6448
    %7628 = vmatprep.subr.bf16.mxu0 %v6456
    %7629 = vmatpush1.bf16.msra.mxu0 %v6455
    %7630 = vmatprep.subr.bf16.mxu0 %v6463
    %7631 = vmatpush1.bf16.msra.mxu0 %v6462
    %7632 = vmatprep.subr.bf16.mxu0 %v6470
    %7633 = vmatpush1.bf16.msra.mxu0 %v6469
    %7634 = vmatprep.subr.bf16.mxu0 %v6477
    %7635 = vmatpush1.bf16.msra.mxu0 %v6476
    %7636 = vmatprep.subr.bf16.mxu0 %v6484
    %7637 = vmatpush1.bf16.msra.mxu0 %v6483
    %7638 = vmatprep.subr.bf16.mxu0 %v6491
    %7639 = vmatpush1.bf16.msra.mxu0 %v6490
    %7640 = vmatprep.subr.bf16.mxu0 %v6498
    %7641 = vmatpush1.bf16.msra.mxu0 %v6497
    %7642 = vmatprep.mubr.bf16.mxu0 %v6263
    %7643 = vmatmul.mubr.bf16.gmra.mrb[0].mxu0 %v6262
    %v7644 = vpop.f32.mrb[0].mxu0
    %v7645 = vadd.f32 0.0, %v7644
    %v7646 = vpop.f32.mrb[0].mxu0
    %v7647 = vadd.f32 0.0, %v7646
    %v7648 = vpop.f32.mrb[0].mxu0
    %v7649 = vadd.f32 0.0, %v7648
    %v7650 = vpop.f32.mrb[0].mxu0
    %v7651 = vadd.f32 0.0, %v7650
    %7652 = vmatprep.mubr.bf16.mxu0 %v6271
    %7653 = vmatmul.mubr.bf16.gmra.mrb[0].mxu0 %v6270
    %v7654 = vpop.f32.mrb[0].mxu0
    %v7655 = vadd.f32 0.0, %v7654
    %v7656 = vpop.f32.mrb[0].mxu0
    %v7657 = vadd.f32 0.0, %v7656
    %v7658 = vpop.f32.mrb[0].mxu0
    %v7659 = vadd.f32 0.0, %v7658
    %v7660 = vpop.f32.mrb[0].mxu0
    %v7661 = vadd.f32 0.0, %v7660
    %7662 = vmatprep.mubr.bf16.mxu0 %v6279
    %7663 = vmatmul.mubr.bf16.gmra.mrb[0].mxu0 %v6278
    %v7664 = vpop.f32.mrb[0].mxu0
    %v7665 = vadd.f32 0.0, %v7664
    %v7666 = vpop.f32.mrb[0].mxu0
    %v7667 = vadd.f32 0.0, %v7666
    %v7668 = vpop.f32.mrb[0].mxu0
    %v7669 = vadd.f32 0.0, %v7668
    %v7670 = vpop.f32.mrb[0].mxu0
    %v7671 = vadd.f32 0.0, %v7670
    %7672 = vmatprep.mubr.bf16.mxu0 %v6287
    %7673 = vmatmul.mubr.bf16.gmra.mrb[0].mxu0 %v6286
    %v7674 = vpop.f32.mrb[0].mxu0
    %v7675 = vadd.f32 0.0, %v7674
    %v7676 = vpop.f32.mrb[0].mxu0
    %v7677 = vadd.f32 0.0, %v7676
    %v7678 = vpop.f32.mrb[0].mxu0
    %v7679 = vadd.f32 0.0, %v7678
    %v7680 = vpop.f32.mrb[0].mxu0
    %v7681 = vadd.f32 0.0, %v7680
    %7682 = vmatprep.mubr.bf16.mxu0 %v6295
    %7683 = vmatmul.mubr.bf16.gmra.mrb[0].mxu0 %v6294
    %v7684 = vpop.f32.mrb[0].mxu0
    %v7685 = vadd.f32 0.0, %v7684
    %v7686 = vpop.f32.mrb[0].mxu0
    %v7687 = vadd.f32 0.0, %v7686
    %v7688 = vpop.f32.mrb[0].mxu0
    %v7689 = vadd.f32 0.0, %v7688
    %v7690 = vpop.f32.mrb[0].mxu0
    %v7691 = vadd.f32 0.0, %v7690
    %7692 = vmatprep.mubr.bf16.mxu0 %v6303
    %7693 = vmatmul.mubr.bf16.gmra.mrb[0].mxu0 %v6302
    %v7694 = vpop.f32.mrb[0].mxu0
    %v7695 = vadd.f32 0.0, %v7694
    %v7696 = vpop.f32.mrb[0].mxu0
    %v7697 = vadd.f32 0.0, %v7696
    %v7698 = vpop.f32.mrb[0].mxu0
    %v7699 = vadd.f32 0.0, %v7698
    %v7700 = vpop.f32.mrb[0].mxu0
    %v7701 = vadd.f32 0.0, %v7700
    %7702 = vmatprep.mubr.bf16.mxu0 %v6311
    %7703 = vmatmul.mubr.bf16.gmra.mrb[0].mxu0 %v6310
    %v7704 = vpop.f32.mrb[0].mxu0
    %v7705 = vadd.f32 0.0, %v7704
    %v7706 = vpop.f32.mrb[0].mxu0
    %v7707 = vadd.f32 0.0, %v7706
    %v7708 = vpop.f32.mrb[0].mxu0
    %v7709 = vadd.f32 0.0, %v7708
    %v7710 = vpop.f32.mrb[0].mxu0
    %v7711 = vadd.f32 0.0, %v7710
    %7712 = vmatprep.mubr.bf16.mxu0 %v6319
    %7713 = vmatmul.mubr.bf16.gmra.mrb[0].mxu0 %v6318
    %v7714 = vpop.f32.mrb[0].mxu0
    %v7715 = vadd.f32 0.0, %v7714
    %v7716 = vpop.f32.mrb[0].mxu0
    %v7717 = vadd.f32 0.0, %v7716
    %v7718 = vpop.f32.mrb[0].mxu0
    %v7719 = vadd.f32 0.0, %v7718
    %v7720 = vpop.f32.mrb[0].mxu0
    %v7721 = vadd.f32 0.0, %v7720
    %7722 = vmatprep.mubr.bf16.mxu0 %v6327
    %7723 = vmatmul.mubr.bf16.gmra.mrb[0].mxu0 %v6326
    %v7724 = vpop.f32.mrb[0].mxu0
    %v7725 = vadd.f32 0.0, %v7724
    %v7726 = vpop.f32.mrb[0].mxu0
    %v7727 = vadd.f32 0.0, %v7726
    %v7728 = vpop.f32.mrb[0].mxu0
    %v7729 = vadd.f32 0.0, %v7728
    %v7730 = vpop.f32.mrb[0].mxu0
    %v7731 = vadd.f32 0.0, %v7730
    %7732 = vmatprep.mubr.bf16.mxu0 %v6335
    %7733 = vmatmul.mubr.bf16.gmra.mrb[0].mxu0 %v6334
    %v7734 = vpop.f32.mrb[0].mxu0
    %v7735 = vadd.f32 0.0, %v7734
    %v7736 = vpop.f32.mrb[0].mxu0
    %v7737 = vadd.f32 0.0, %v7736
    %v7738 = vpop.f32.mrb[0].mxu0
    %v7739 = vadd.f32 0.0, %v7738
    %v7740 = vpop.f32.mrb[0].mxu0
    %v7741 = vadd.f32 0.0, %v7740
    %7742 = vmatprep.mubr.bf16.mxu0 %v6343
    %7743 = vmatmul.mubr.bf16.gmra.mrb[0].mxu0 %v6342
    %v7744 = vpop.f32.mrb[0].mxu0
    %v7745 = vadd.f32 0.0, %v7744
    %v7746 = vpop.f32.mrb[0].mxu0
    %v7747 = vadd.f32 0.0, %v7746
    %v7748 = vpop.f32.mrb[0].mxu0
    %v7749 = vadd.f32 0.0, %v7748
    %v7750 = vpop.f32.mrb[0].mxu0
    %v7751 = vadd.f32 0.0, %v7750
    %7752 = vmatprep.mubr.bf16.mxu0 %v6351
    %7753 = vmatmul.mubr.bf16.gmra.mrb[0].mxu0 %v6350
    %v7754 = vpop.f32.mrb[0].mxu0
    %v7755 = vadd.f32 0.0, %v7754
    %v7756 = vpop.f32.mrb[0].mxu0
    %v7757 = vadd.f32 0.0, %v7756
    %v7758 = vpop.f32.mrb[0].mxu0
    %v7759 = vadd.f32 0.0, %v7758
    %v7760 = vpop.f32.mrb[0].mxu0
    %v7761 = vadd.f32 0.0, %v7760
    %7762 = vmatprep.mubr.bf16.mxu0 %v6359
    %7763 = vmatmul.mubr.bf16.gmra.mrb[0].mxu0 %v6358
    %v7764 = vpop.f32.mrb[0].mxu0
    %v7765 = vadd.f32 0.0, %v7764
    %v7766 = vpop.f32.mrb[0].mxu0
    %v7767 = vadd.f32 0.0, %v7766
    %v7768 = vpop.f32.mrb[0].mxu0
    %v7769 = vadd.f32 0.0, %v7768
    %v7770 = vpop.f32.mrb[0].mxu0
    %v7771 = vadd.f32 0.0, %v7770
    %7772 = vmatprep.mubr.bf16.mxu0 %v6367
    %7773 = vmatmul.mubr.bf16.gmra.mrb[0].mxu0 %v6366
    %v7774 = vpop.f32.mrb[0].mxu0
    %v7775 = vadd.f32 0.0, %v7774
    %v7776 = vpop.f32.mrb[0].mxu0
    %v7777 = vadd.f32 0.0, %v7776
    %v7778 = vpop.f32.mrb[0].mxu0
    %v7779 = vadd.f32 0.0, %v7778
    %v7780 = vpop.f32.mrb[0].mxu0
    %v7781 = vadd.f32 0.0, %v7780
    %7782 = vmatprep.mubr.bf16.mxu0 %v6375
    %7783 = vmatmul.mubr.bf16.gmra.mrb[0].mxu0 %v6374
    %v7784 = vpop.f32.mrb[0].mxu0
    %v7785 = vadd.f32 0.0, %v7784
    %v7786 = vpop.f32.mrb[0].mxu0
    %v7787 = vadd.f32 0.0, %v7786
    %v7788 = vpop.f32.mrb[0].mxu0
    %v7789 = vadd.f32 0.0, %v7788
    %v7790 = vpop.f32.mrb[0].mxu0
    %v7791 = vadd.f32 0.0, %v7790
    %7792 = vmatprep.mubr.bf16.mxu0 %v6383
    %7793 = vmatmul.mubr.bf16.gmra.mrb[0].mxu0 %v6382
    %v7794 = vpop.f32.mrb[0].mxu0
    %v7795 = vadd.f32 0.0, %v7794
    %v7796 = vpop.f32.mrb[0].mxu0
    %v7797 = vadd.f32 0.0, %v7796
    %v7798 = vpop.f32.mrb[0].mxu0
    %v7799 = vadd.f32 0.0, %v7798
    %v7800 = vpop.f32.mrb[0].mxu0
    %v7801 = vadd.f32 0.0, %v7800
    %7802 = vdwg.mxu0
    %7803 = vmatprep.subr.bf16.mxu0 %v6505
    %7804 = vmatpush1.bf16.msra.mxu0 %v6504
    %7805 = vmatprep.subr.bf16.mxu0 %v6512
    %7806 = vmatpush1.bf16.msra.mxu0 %v6511
    %7807 = vmatprep.subr.bf16.mxu0 %v6519
    %7808 = vmatpush1.bf16.msra.mxu0 %v6518
    %7809 = vmatprep.subr.bf16.mxu0 %v6526
    %7810 = vmatpush1.bf16.msra.mxu0 %v6525
    %7811 = vmatprep.subr.bf16.mxu0 %v6533
    %7812 = vmatpush1.bf16.msra.mxu0 %v6532
    %7813 = vmatprep.subr.bf16.mxu0 %v6540
    %7814 = vmatpush1.bf16.msra.mxu0 %v6539
    %7815 = vmatprep.subr.bf16.mxu0 %v6547
    %7816 = vmatpush1.bf16.msra.mxu0 %v6546
    %7817 = vmatprep.subr.bf16.mxu0 %v6554
    %7818 = vmatpush1.bf16.msra.mxu0 %v6553
    %7819 = vmatprep.subr.bf16.mxu0 %v6561
    %7820 = vmatpush1.bf16.msra.mxu0 %v6560
    %7821 = vmatprep.subr.bf16.mxu0 %v6568
    %7822 = vmatpush1.bf16.msra.mxu0 %v6567
    %7823 = vmatprep.subr.bf16.mxu0 %v6575
    %7824 = vmatpush1.bf16.msra.mxu0 %v6574
    %7825 = vmatprep.subr.bf16.mxu0 %v6582
    %7826 = vmatpush1.bf16.msra.mxu0 %v6581
    %7827 = vmatprep.subr.bf16.mxu0 %v6589
    %7828 = vmatpush1.bf16.msra.mxu0 %v6588
    %7829 = vmatprep.subr.bf16.mxu0 %v6596
    %7830 = vmatpush1.bf16.msra.mxu0 %v6595
    %7831 = vmatprep.subr.bf16.mxu0 %v6603
    %7832 = vmatpush1.bf16.msra.mxu0 %v6602
    %7833 = vmatprep.subr.bf16.mxu0 %v6610
    %7834 = vmatpush1.bf16.msra.mxu0 %v6609
    %7835 = vmatprep.mubr.bf16.mxu0 %v6265
    %7836 = vmatmul.mubr.bf16.gmra.mrb[0].mxu0 %v6264
    %v7837 = vpop.f32.mrb[0].mxu0
    %v7838 = vadd.f32 %v7645, %v7837
    %v7839 = vpop.f32.mrb[0].mxu0
    %v7840 = vadd.f32 %v7647, %v7839
    %v7841 = vpop.f32.mrb[0].mxu0
    %v7842 = vadd.f32 %v7649, %v7841
    %v7843 = vpop.f32.mrb[0].mxu0
    %v7844 = vadd.f32 %v7651, %v7843
    %7845 = vmatprep.mubr.bf16.mxu0 %v6273
    %7846 = vmatmul.mubr.bf16.gmra.mrb[0].mxu0 %v6272
    %v7847 = vpop.f32.mrb[0].mxu0
    %v7848 = vadd.f32 %v7655, %v7847
    %v7849 = vpop.f32.mrb[0].mxu0
    %v7850 = vadd.f32 %v7657, %v7849
    %v7851 = vpop.f32.mrb[0].mxu0
    %v7852 = vadd.f32 %v7659, %v7851
    %v7853 = vpop.f32.mrb[0].mxu0
    %v7854 = vadd.f32 %v7661, %v7853
    %7855 = vmatprep.mubr.bf16.mxu0 %v6281
    %7856 = vmatmul.mubr.bf16.gmra.mrb[0].mxu0 %v6280
    %v7857 = vpop.f32.mrb[0].mxu0
    %v7858 = vadd.f32 %v7665, %v7857
    %v7859 = vpop.f32.mrb[0].mxu0
    %v7860 = vadd.f32 %v7667, %v7859
    %v7861 = vpop.f32.mrb[0].mxu0
    %v7862 = vadd.f32 %v7669, %v7861
    %v7863 = vpop.f32.mrb[0].mxu0
    %v7864 = vadd.f32 %v7671, %v7863
    %7865 = vmatprep.mubr.bf16.mxu0 %v6289
    %7866 = vmatmul.mubr.bf16.gmra.mrb[0].mxu0 %v6288
    %v7867 = vpop.f32.mrb[0].mxu0
    %v7868 = vadd.f32 %v7675, %v7867
    %v7869 = vpop.f32.mrb[0].mxu0
    %v7870 = vadd.f32 %v7677, %v7869
    %v7871 = vpop.f32.mrb[0].mxu0
    %v7872 = vadd.f32 %v7679, %v7871
    %v7873 = vpop.f32.mrb[0].mxu0
    %v7874 = vadd.f32 %v7681, %v7873
    %7875 = vmatprep.mubr.bf16.mxu0 %v6297
    %7876 = vmatmul.mubr.bf16.gmra.mrb[0].mxu0 %v6296
    %v7877 = vpop.f32.mrb[0].mxu0
    %v7878 = vadd.f32 %v7685, %v7877
    %v7879 = vpop.f32.mrb[0].mxu0
    %v7880 = vadd.f32 %v7687, %v7879
    %v7881 = vpop.f32.mrb[0].mxu0
    %v7882 = vadd.f32 %v7689, %v7881
    %v7883 = vpop.f32.mrb[0].mxu0
    %v7884 = vadd.f32 %v7691, %v7883
    %7885 = vmatprep.mubr.bf16.mxu0 %v6305
    %7886 = vmatmul.mubr.bf16.gmra.mrb[0].mxu0 %v6304
    %v7887 = vpop.f32.mrb[0].mxu0
    %v7888 = vadd.f32 %v7695, %v7887
    %v7889 = vpop.f32.mrb[0].mxu0
    %v7890 = vadd.f32 %v7697, %v7889
    %v7891 = vpop.f32.mrb[0].mxu0
    %v7892 = vadd.f32 %v7699, %v7891
    %v7893 = vpop.f32.mrb[0].mxu0
    %v7894 = vadd.f32 %v7701, %v7893
    %7895 = vmatprep.mubr.bf16.mxu0 %v6313
    %7896 = vmatmul.mubr.bf16.gmra.mrb[0].mxu0 %v6312
    %v7897 = vpop.f32.mrb[0].mxu0
    %v7898 = vadd.f32 %v7705, %v7897
    %v7899 = vpop.f32.mrb[0].mxu0
    %v7900 = vadd.f32 %v7707, %v7899
    %v7901 = vpop.f32.mrb[0].mxu0
    %v7902 = vadd.f32 %v7709, %v7901
    %v7903 = vpop.f32.mrb[0].mxu0
    %v7904 = vadd.f32 %v7711, %v7903
    %7905 = vmatprep.mubr.bf16.mxu0 %v6321
    %7906 = vmatmul.mubr.bf16.gmra.mrb[0].mxu0 %v6320
    %v7907 = vpop.f32.mrb[0].mxu0
    %v7908 = vadd.f32 %v7715, %v7907
    %v7909 = vpop.f32.mrb[0].mxu0
    %v7910 = vadd.f32 %v7717, %v7909
    %v7911 = vpop.f32.mrb[0].mxu0
    %v7912 = vadd.f32 %v7719, %v7911
    %v7913 = vpop.f32.mrb[0].mxu0
    %v7914 = vadd.f32 %v7721, %v7913
    %7915 = vmatprep.mubr.bf16.mxu0 %v6329
    %7916 = vmatmul.mubr.bf16.gmra.mrb[0].mxu0 %v6328
    %v7917 = vpop.f32.mrb[0].mxu0
    %v7918 = vadd.f32 %v7725, %v7917
    %v7919 = vpop.f32.mrb[0].mxu0
    %v7920 = vadd.f32 %v7727, %v7919
    %v7921 = vpop.f32.mrb[0].mxu0
    %v7922 = vadd.f32 %v7729, %v7921
    %v7923 = vpop.f32.mrb[0].mxu0
    %v7924 = vadd.f32 %v7731, %v7923
    %7925 = vmatprep.mubr.bf16.mxu0 %v6337
    %7926 = vmatmul.mubr.bf16.gmra.mrb[0].mxu0 %v6336
    %v7927 = vpop.f32.mrb[0].mxu0
    %v7928 = vadd.f32 %v7735, %v7927
    %v7929 = vpop.f32.mrb[0].mxu0
    %v7930 = vadd.f32 %v7737, %v7929
    %v7931 = vpop.f32.mrb[0].mxu0
    %v7932 = vadd.f32 %v7739, %v7931
    %v7933 = vpop.f32.mrb[0].mxu0
    %v7934 = vadd.f32 %v7741, %v7933
    %7935 = vmatprep.mubr.bf16.mxu0 %v6345
    %7936 = vmatmul.mubr.bf16.gmra.mrb[0].mxu0 %v6344
    %v7937 = vpop.f32.mrb[0].mxu0
    %v7938 = vadd.f32 %v7745, %v7937
    %v7939 = vpop.f32.mrb[0].mxu0
    %v7940 = vadd.f32 %v7747, %v7939
    %v7941 = vpop.f32.mrb[0].mxu0
    %v7942 = vadd.f32 %v7749, %v7941
    %v7943 = vpop.f32.mrb[0].mxu0
    %v7944 = vadd.f32 %v7751, %v7943
    %7945 = vmatprep.mubr.bf16.mxu0 %v6353
    %7946 = vmatmul.mubr.bf16.gmra.mrb[0].mxu0 %v6352
    %v7947 = vpop.f32.mrb[0].mxu0
    %v7948 = vadd.f32 %v7755, %v7947
    %v7949 = vpop.f32.mrb[0].mxu0
    %v7950 = vadd.f32 %v7757, %v7949
    %v7951 = vpop.f32.mrb[0].mxu0
    %v7952 = vadd.f32 %v7759, %v7951
    %v7953 = vpop.f32.mrb[0].mxu0
    %v7954 = vadd.f32 %v7761, %v7953
    %7955 = vmatprep.mubr.bf16.mxu0 %v6361
    %7956 = vmatmul.mubr.bf16.gmra.mrb[0].mxu0 %v6360
    %v7957 = vpop.f32.mrb[0].mxu0
    %v7958 = vadd.f32 %v7765, %v7957
    %v7959 = vpop.f32.mrb[0].mxu0
    %v7960 = vadd.f32 %v7767, %v7959
    %v7961 = vpop.f32.mrb[0].mxu0
    %v7962 = vadd.f32 %v7769, %v7961
    %v7963 = vpop.f32.mrb[0].mxu0
    %v7964 = vadd.f32 %v7771, %v7963
    %7965 = vmatprep.mubr.bf16.mxu0 %v6369
    %7966 = vmatmul.mubr.bf16.gmra.mrb[0].mxu0 %v6368
    %v7967 = vpop.f32.mrb[0].mxu0
    %v7968 = vadd.f32 %v7775, %v7967
    %v7969 = vpop.f32.mrb[0].mxu0
    %v7970 = vadd.f32 %v7777, %v7969
    %v7971 = vpop.f32.mrb[0].mxu0
    %v7972 = vadd.f32 %v7779, %v7971
    %v7973 = vpop.f32.mrb[0].mxu0
    %v7974 = vadd.f32 %v7781, %v7973
    %7975 = vmatprep.mubr.bf16.mxu0 %v6377
    %7976 = vmatmul.mubr.bf16.gmra.mrb[0].mxu0 %v6376
    %v7977 = vpop.f32.mrb[0].mxu0
    %v7978 = vadd.f32 %v7785, %v7977
    %v7979 = vpop.f32.mrb[0].mxu0
    %v7980 = vadd.f32 %v7787, %v7979
    %v7981 = vpop.f32.mrb[0].mxu0
    %v7982 = vadd.f32 %v7789, %v7981
    %v7983 = vpop.f32.mrb[0].mxu0
    %v7984 = vadd.f32 %v7791, %v7983
    %7985 = vmatprep.mubr.bf16.mxu0 %v6385
    %7986 = vmatmul.mubr.bf16.gmra.mrb[0].mxu0 %v6384
    %v7987 = vpop.f32.mrb[0].mxu0
    %v7988 = vadd.f32 %v7795, %v7987
    %v7989 = vpop.f32.mrb[0].mxu0
    %v7990 = vadd.f32 %v7797, %v7989
    %v7991 = vpop.f32.mrb[0].mxu0
    %v7992 = vadd.f32 %v7799, %v7991
    %v7993 = vpop.f32.mrb[0].mxu0
    %v7994 = vadd.f32 %v7801, %v7993
    %7995 = vdwg.mxu0
    %7996 = vmatprep.subr.bf16.mxu0 %v6617
    %7997 = vmatpush1.bf16.msra.mxu0 %v6616
    %7998 = vmatprep.subr.bf16.mxu0 %v6624
    %7999 = vmatpush1.bf16.msra.mxu0 %v6623
    %8000 = vmatprep.subr.bf16.mxu0 %v6631
    %8001 = vmatpush1.bf16.msra.mxu0 %v6630
    %8002 = vmatprep.subr.bf16.mxu0 %v6638
    %8003 = vmatpush1.bf16.msra.mxu0 %v6637
    %8004 = vmatprep.subr.bf16.mxu0 %v6645
    %8005 = vmatpush1.bf16.msra.mxu0 %v6644
    %8006 = vmatprep.subr.bf16.mxu0 %v6652
    %8007 = vmatpush1.bf16.msra.mxu0 %v6651
    %8008 = vmatprep.subr.bf16.mxu0 %v6659
    %8009 = vmatpush1.bf16.msra.mxu0 %v6658
    %8010 = vmatprep.subr.bf16.mxu0 %v6666
    %8011 = vmatpush1.bf16.msra.mxu0 %v6665
    %8012 = vmatprep.subr.bf16.mxu0 %v6673
    %8013 = vmatpush1.bf16.msra.mxu0 %v6672
    %8014 = vmatprep.subr.bf16.mxu0 %v6680
    %8015 = vmatpush1.bf16.msra.mxu0 %v6679
    %8016 = vmatprep.subr.bf16.mxu0 %v6687
    %8017 = vmatpush1.bf16.msra.mxu0 %v6686
    %8018 = vmatprep.subr.bf16.mxu0 %v6694
    %8019 = vmatpush1.bf16.msra.mxu0 %v6693
    %8020 = vmatprep.subr.bf16.mxu0 %v6701
    %8021 = vmatpush1.bf16.msra.mxu0 %v6700
    %8022 = vmatprep.subr.bf16.mxu0 %v6708
    %8023 = vmatpush1.bf16.msra.mxu0 %v6707
    %8024 = vmatprep.subr.bf16.mxu0 %v6715
    %8025 = vmatpush1.bf16.msra.mxu0 %v6714
    %8026 = vmatprep.subr.bf16.mxu0 %v6722
    %8027 = vmatpush1.bf16.msra.mxu0 %v6721
    %8028 = vmatprep.mubr.bf16.mxu0 %v6267
    %8029 = vmatmul.mubr.bf16.gmra.mrb[0].mxu0 %v6266
    %v8030 = vpop.f32.mrb[0].mxu0
    %v8031 = vadd.f32 %v7838, %v8030
    %v8032 = vpop.f32.mrb[0].mxu0
    %v8033 = vadd.f32 %v7840, %v8032
    %v8034 = vpop.f32.mrb[0].mxu0
    %v8035 = vadd.f32 %v7842, %v8034
    %v8036 = vpop.f32.mrb[0].mxu0
    %v8037 = vadd.f32 %v7844, %v8036
    %8038 = vmatprep.mubr.bf16.mxu0 %v6275
    %8039 = vmatmul.mubr.bf16.gmra.mrb[0].mxu0 %v6274
    %v8040 = vpop.f32.mrb[0].mxu0
    %v8041 = vadd.f32 %v7848, %v8040
    %v8042 = vpop.f32.mrb[0].mxu0
    %v8043 = vadd.f32 %v7850, %v8042
    %v8044 = vpop.f32.mrb[0].mxu0
    %v8045 = vadd.f32 %v7852, %v8044
    %v8046 = vpop.f32.mrb[0].mxu0
    %v8047 = vadd.f32 %v7854, %v8046
    %8048 = vmatprep.mubr.bf16.mxu0 %v6283
    %8049 = vmatmul.mubr.bf16.gmra.mrb[0].mxu0 %v6282
    %v8050 = vpop.f32.mrb[0].mxu0
    %v8051 = vadd.f32 %v7858, %v8050
    %v8052 = vpop.f32.mrb[0].mxu0
    %v8053 = vadd.f32 %v7860, %v8052
    %v8054 = vpop.f32.mrb[0].mxu0
    %v8055 = vadd.f32 %v7862, %v8054
    %v8056 = vpop.f32.mrb[0].mxu0
    %v8057 = vadd.f32 %v7864, %v8056
    %8058 = vmatprep.mubr.bf16.mxu0 %v6291
    %8059 = vmatmul.mubr.bf16.gmra.mrb[0].mxu0 %v6290
    %v8060 = vpop.f32.mrb[0].mxu0
    %v8061 = vadd.f32 %v7868, %v8060
    %v8062 = vpop.f32.mrb[0].mxu0
    %v8063 = vadd.f32 %v7870, %v8062
    %v8064 = vpop.f32.mrb[0].mxu0
    %v8065 = vadd.f32 %v7872, %v8064
    %v8066 = vpop.f32.mrb[0].mxu0
    %v8067 = vadd.f32 %v7874, %v8066
    %8068 = vmatprep.mubr.bf16.mxu0 %v6299
    %8069 = vmatmul.mubr.bf16.gmra.mrb[0].mxu0 %v6298
    %v8070 = vpop.f32.mrb[0].mxu0
    %v8071 = vadd.f32 %v7878, %v8070
    %v8072 = vpop.f32.mrb[0].mxu0
    %v8073 = vadd.f32 %v7880, %v8072
    %v8074 = vpop.f32.mrb[0].mxu0
    %v8075 = vadd.f32 %v7882, %v8074
    %v8076 = vpop.f32.mrb[0].mxu0
    %v8077 = vadd.f32 %v7884, %v8076
    %8078 = vmatprep.mubr.bf16.mxu0 %v6307
    %8079 = vmatmul.mubr.bf16.gmra.mrb[0].mxu0 %v6306
    %v8080 = vpop.f32.mrb[0].mxu0
    %v8081 = vadd.f32 %v7888, %v8080
    %v8082 = vpop.f32.mrb[0].mxu0
    %v8083 = vadd.f32 %v7890, %v8082
    %v8084 = vpop.f32.mrb[0].mxu0
    %v8085 = vadd.f32 %v7892, %v8084
    %v8086 = vpop.f32.mrb[0].mxu0
    %v8087 = vadd.f32 %v7894, %v8086
    %8088 = vmatprep.mubr.bf16.mxu0 %v6315
    %8089 = vmatmul.mubr.bf16.gmra.mrb[0].mxu0 %v6314
    %v8090 = vpop.f32.mrb[0].mxu0
    %v8091 = vadd.f32 %v7898, %v8090
    %v8092 = vpop.f32.mrb[0].mxu0
    %v8093 = vadd.f32 %v7900, %v8092
    %v8094 = vpop.f32.mrb[0].mxu0
    %v8095 = vadd.f32 %v7902, %v8094
    %v8096 = vpop.f32.mrb[0].mxu0
    %v8097 = vadd.f32 %v7904, %v8096
    %8098 = vmatprep.mubr.bf16.mxu0 %v6323
    %8099 = vmatmul.mubr.bf16.gmra.mrb[0].mxu0 %v6322
    %v8100 = vpop.f32.mrb[0].mxu0
    %v8101 = vadd.f32 %v7908, %v8100
    %v8102 = vpop.f32.mrb[0].mxu0
    %v8103 = vadd.f32 %v7910, %v8102
    %v8104 = vpop.f32.mrb[0].mxu0
    %v8105 = vadd.f32 %v7912, %v8104
    %v8106 = vpop.f32.mrb[0].mxu0
    %v8107 = vadd.f32 %v7914, %v8106
    %8108 = vmatprep.mubr.bf16.mxu0 %v6331
    %8109 = vmatmul.mubr.bf16.gmra.mrb[0].mxu0 %v6330
    %v8110 = vpop.f32.mrb[0].mxu0
    %v8111 = vadd.f32 %v7918, %v8110
    %v8112 = vpop.f32.mrb[0].mxu0
    %v8113 = vadd.f32 %v7920, %v8112
    %v8114 = vpop.f32.mrb[0].mxu0
    %v8115 = vadd.f32 %v7922, %v8114
    %v8116 = vpop.f32.mrb[0].mxu0
    %v8117 = vadd.f32 %v7924, %v8116
    %8118 = vmatprep.mubr.bf16.mxu0 %v6339
    %8119 = vmatmul.mubr.bf16.gmra.mrb[0].mxu0 %v6338
    %v8120 = vpop.f32.mrb[0].mxu0
    %v8121 = vadd.f32 %v7928, %v8120
    %v8122 = vpop.f32.mrb[0].mxu0
    %v8123 = vadd.f32 %v7930, %v8122
    %v8124 = vpop.f32.mrb[0].mxu0
    %v8125 = vadd.f32 %v7932, %v8124
    %v8126 = vpop.f32.mrb[0].mxu0
    %v8127 = vadd.f32 %v7934, %v8126
    %8128 = vmatprep.mubr.bf16.mxu0 %v6347
    %8129 = vmatmul.mubr.bf16.gmra.mrb[0].mxu0 %v6346
    %v8130 = vpop.f32.mrb[0].mxu0
    %v8131 = vadd.f32 %v7938, %v8130
    %v8132 = vpop.f32.mrb[0].mxu0
    %v8133 = vadd.f32 %v7940, %v8132
    %v8134 = vpop.f32.mrb[0].mxu0
    %v8135 = vadd.f32 %v7942, %v8134
    %v8136 = vpop.f32.mrb[0].mxu0
    %v8137 = vadd.f32 %v7944, %v8136
    %8138 = vmatprep.mubr.bf16.mxu0 %v6355
    %8139 = vmatmul.mubr.bf16.gmra.mrb[0].mxu0 %v6354
    %v8140 = vpop.f32.mrb[0].mxu0
    %v8141 = vadd.f32 %v7948, %v8140
    %v8142 = vpop.f32.mrb[0].mxu0
    %v8143 = vadd.f32 %v7950, %v8142
    %v8144 = vpop.f32.mrb[0].mxu0
    %v8145 = vadd.f32 %v7952, %v8144
    %v8146 = vpop.f32.mrb[0].mxu0
    %v8147 = vadd.f32 %v7954, %v8146
    %8148 = vmatprep.mubr.bf16.mxu0 %v6363
    %8149 = vmatmul.mubr.bf16.gmra.mrb[0].mxu0 %v6362
    %v8150 = vpop.f32.mrb[0].mxu0
    %v8151 = vadd.f32 %v7958, %v8150
    %v8152 = vpop.f32.mrb[0].mxu0
    %v8153 = vadd.f32 %v7960, %v8152
    %v8154 = vpop.f32.mrb[0].mxu0
    %v8155 = vadd.f32 %v7962, %v8154
    %v8156 = vpop.f32.mrb[0].mxu0
    %v8157 = vadd.f32 %v7964, %v8156
    %8158 = vmatprep.mubr.bf16.mxu0 %v6371
    %8159 = vmatmul.mubr.bf16.gmra.mrb[0].mxu0 %v6370
    %v8160 = vpop.f32.mrb[0].mxu0
    %v8161 = vadd.f32 %v7968, %v8160
    %v8162 = vpop.f32.mrb[0].mxu0
    %v8163 = vadd.f32 %v7970, %v8162
    %v8164 = vpop.f32.mrb[0].mxu0
    %v8165 = vadd.f32 %v7972, %v8164
    %v8166 = vpop.f32.mrb[0].mxu0
    %v8167 = vadd.f32 %v7974, %v8166
    %8168 = vmatprep.mubr.bf16.mxu0 %v6379
    %8169 = vmatmul.mubr.bf16.gmra.mrb[0].mxu0 %v6378
    %v8170 = vpop.f32.mrb[0].mxu0
    %v8171 = vadd.f32 %v7978, %v8170
    %v8172 = vpop.f32.mrb[0].mxu0
    %v8173 = vadd.f32 %v7980, %v8172
    %v8174 = vpop.f32.mrb[0].mxu0
    %v8175 = vadd.f32 %v7982, %v8174
    %v8176 = vpop.f32.mrb[0].mxu0
    %v8177 = vadd.f32 %v7984, %v8176
    %8178 = vmatprep.mubr.bf16.mxu0 %v6387
    %8179 = vmatmul.mubr.bf16.gmra.mrb[0].mxu0 %v6386
    %v8180 = vpop.f32.mrb[0].mxu0
    %v8181 = vadd.f32 %v7988, %v8180
    %v8182 = vpop.f32.mrb[0].mxu0
    %v8183 = vadd.f32 %v7990, %v8182
    %v8184 = vpop.f32.mrb[0].mxu0
    %v8185 = vadd.f32 %v7992, %v8184
    %v8186 = vpop.f32.mrb[0].mxu0
    %v8187 = vadd.f32 %v7994, %v8186
    %8188 = vdwg.mxu0
    %8189 = vmatprep.subr.bf16.mxu0 %v6729
    %8190 = vmatpush1.bf16.msra.mxu0 %v6728
    %8191 = vmatprep.subr.bf16.mxu0 %v6736
    %8192 = vmatpush1.bf16.msra.mxu0 %v6735
    %8193 = vmatprep.subr.bf16.mxu0 %v6743
    %8194 = vmatpush1.bf16.msra.mxu0 %v6742
    %8195 = vmatprep.subr.bf16.mxu0 %v6750
    %8196 = vmatpush1.bf16.msra.mxu0 %v6749
    %8197 = vmatprep.subr.bf16.mxu0 %v6757
    %8198 = vmatpush1.bf16.msra.mxu0 %v6756
    %8199 = vmatprep.subr.bf16.mxu0 %v6764
    %8200 = vmatpush1.bf16.msra.mxu0 %v6763
    %8201 = vmatprep.subr.bf16.mxu0 %v6771
    %8202 = vmatpush1.bf16.msra.mxu0 %v6770
    %8203 = vmatprep.subr.bf16.mxu0 %v6778
    %8204 = vmatpush1.bf16.msra.mxu0 %v6777
    %8205 = vmatprep.subr.bf16.mxu0 %v6785
    %8206 = vmatpush1.bf16.msra.mxu0 %v6784
    %8207 = vmatprep.subr.bf16.mxu0 %v6792
    %8208 = vmatpush1.bf16.msra.mxu0 %v6791
    %8209 = vmatprep.subr.bf16.mxu0 %v6799
    %8210 = vmatpush1.bf16.msra.mxu0 %v6798
    %8211 = vmatprep.subr.bf16.mxu0 %v6806
    %8212 = vmatpush1.bf16.msra.mxu0 %v6805
    %8213 = vmatprep.subr.bf16.mxu0 %v6813
    %8214 = vmatpush1.bf16.msra.mxu0 %v6812
    %8215 = vmatprep.subr.bf16.mxu0 %v6820
    %8216 = vmatpush1.bf16.msra.mxu0 %v6819
    %8217 = vmatprep.subr.bf16.mxu0 %v6827
    %8218 = vmatpush1.bf16.msra.mxu0 %v6826
    %8219 = vmatprep.subr.bf16.mxu0 %v6834
    %8220 = vmatpush1.bf16.msra.mxu0 %v6833
    %8221 = vmatprep.mubr.bf16.mxu0 %v6269
    %8222 = vmatmul.mubr.bf16.gmra.mrb[0].mxu0 %v6268
    %v8223 = vpop.f32.mrb[0].mxu0
    %v8224 = vadd.f32 %v8031, %v8223
    %v8225 = vpop.f32.mrb[0].mxu0
    %v8226 = vadd.f32 %v8033, %v8225
    %v8227 = vpop.f32.mrb[0].mxu0
    %v8228 = vadd.f32 %v8035, %v8227
    %v8229 = vpop.f32.mrb[0].mxu0
    %v8230 = vadd.f32 %v8037, %v8229
    %8231 = vmatprep.mubr.bf16.mxu0 %v6277
    %8232 = vmatmul.mubr.bf16.gmra.mrb[0].mxu0 %v6276
    %v8233 = vpop.f32.mrb[0].mxu0
    %v8234 = vadd.f32 %v8041, %v8233
    %v8235 = vpop.f32.mrb[0].mxu0
    %v8236 = vadd.f32 %v8043, %v8235
    %v8237 = vpop.f32.mrb[0].mxu0
    %v8238 = vadd.f32 %v8045, %v8237
    %v8239 = vpop.f32.mrb[0].mxu0
    %v8240 = vadd.f32 %v8047, %v8239
    %8241 = vmatprep.mubr.bf16.mxu0 %v6285
    %8242 = vmatmul.mubr.bf16.gmra.mrb[0].mxu0 %v6284
    %v8243 = vpop.f32.mrb[0].mxu0
    %v8244 = vadd.f32 %v8051, %v8243
    %v8245 = vpop.f32.mrb[0].mxu0
    %v8246 = vadd.f32 %v8053, %v8245
    %v8247 = vpop.f32.mrb[0].mxu0
    %v8248 = vadd.f32 %v8055, %v8247
    %v8249 = vpop.f32.mrb[0].mxu0
    %v8250 = vadd.f32 %v8057, %v8249
    %8251 = vmatprep.mubr.bf16.mxu0 %v6293
    %8252 = vmatmul.mubr.bf16.gmra.mrb[0].mxu0 %v6292
    %v8253 = vpop.f32.mrb[0].mxu0
    %v8254 = vadd.f32 %v8061, %v8253
    %v8255 = vpop.f32.mrb[0].mxu0
    %v8256 = vadd.f32 %v8063, %v8255
    %v8257 = vpop.f32.mrb[0].mxu0
    %v8258 = vadd.f32 %v8065, %v8257
    %v8259 = vpop.f32.mrb[0].mxu0
    %v8260 = vadd.f32 %v8067, %v8259
    %8261 = vmatprep.mubr.bf16.mxu0 %v6301
    %8262 = vmatmul.mubr.bf16.gmra.mrb[0].mxu0 %v6300
    %v8263 = vpop.f32.mrb[0].mxu0
    %v8264 = vadd.f32 %v8071, %v8263
    %v8265 = vpop.f32.mrb[0].mxu0
    %v8266 = vadd.f32 %v8073, %v8265
    %v8267 = vpop.f32.mrb[0].mxu0
    %v8268 = vadd.f32 %v8075, %v8267
    %v8269 = vpop.f32.mrb[0].mxu0
    %v8270 = vadd.f32 %v8077, %v8269
    %8271 = vmatprep.mubr.bf16.mxu0 %v6309
    %8272 = vmatmul.mubr.bf16.gmra.mrb[0].mxu0 %v6308
    %v8273 = vpop.f32.mrb[0].mxu0
    %v8274 = vadd.f32 %v8081, %v8273
    %v8275 = vpop.f32.mrb[0].mxu0
    %v8276 = vadd.f32 %v8083, %v8275
    %v8277 = vpop.f32.mrb[0].mxu0
    %v8278 = vadd.f32 %v8085, %v8277
    %v8279 = vpop.f32.mrb[0].mxu0
    %v8280 = vadd.f32 %v8087, %v8279
    %8281 = vmatprep.mubr.bf16.mxu0 %v6317
    %8282 = vmatmul.mubr.bf16.gmra.mrb[0].mxu0 %v6316
    %v8283 = vpop.f32.mrb[0].mxu0
    %v8284 = vadd.f32 %v8091, %v8283
    %v8285 = vpop.f32.mrb[0].mxu0
    %v8286 = vadd.f32 %v8093, %v8285
    %v8287 = vpop.f32.mrb[0].mxu0
    %v8288 = vadd.f32 %v8095, %v8287
    %v8289 = vpop.f32.mrb[0].mxu0
    %v8290 = vadd.f32 %v8097, %v8289
    %8291 = vmatprep.mubr.bf16.mxu0 %v6325
    %8292 = vmatmul.mubr.bf16.gmra.mrb[0].mxu0 %v6324
    %v8293 = vpop.f32.mrb[0].mxu0
    %v8294 = vadd.f32 %v8101, %v8293
    %v8295 = vpop.f32.mrb[0].mxu0
    %v8296 = vadd.f32 %v8103, %v8295
    %v8297 = vpop.f32.mrb[0].mxu0
    %v8298 = vadd.f32 %v8105, %v8297
    %v8299 = vpop.f32.mrb[0].mxu0
    %v8300 = vadd.f32 %v8107, %v8299
    %8301 = vmatprep.mubr.bf16.mxu0 %v6333
    %8302 = vmatmul.mubr.bf16.gmra.mrb[0].mxu0 %v6332
    %v8303 = vpop.f32.mrb[0].mxu0
    %v8304 = vadd.f32 %v8111, %v8303
    %v8305 = vpop.f32.mrb[0].mxu0
    %v8306 = vadd.f32 %v8113, %v8305
    %v8307 = vpop.f32.mrb[0].mxu0
    %v8308 = vadd.f32 %v8115, %v8307
    %v8309 = vpop.f32.mrb[0].mxu0
    %v8310 = vadd.f32 %v8117, %v8309
    %8311 = vmatprep.mubr.bf16.mxu0 %v6341
    %8312 = vmatmul.mubr.bf16.gmra.mrb[0].mxu0 %v6340
    %v8313 = vpop.f32.mrb[0].mxu0
    %v8314 = vadd.f32 %v8121, %v8313
    %v8315 = vpop.f32.mrb[0].mxu0
    %v8316 = vadd.f32 %v8123, %v8315
    %v8317 = vpop.f32.mrb[0].mxu0
    %v8318 = vadd.f32 %v8125, %v8317
    %v8319 = vpop.f32.mrb[0].mxu0
    %v8320 = vadd.f32 %v8127, %v8319
    %8321 = vmatprep.mubr.bf16.mxu0 %v6349
    %8322 = vmatmul.mubr.bf16.gmra.mrb[0].mxu0 %v6348
    %v8323 = vpop.f32.mrb[0].mxu0
    %v8324 = vadd.f32 %v8131, %v8323
    %v8325 = vpop.f32.mrb[0].mxu0
    %v8326 = vadd.f32 %v8133, %v8325
    %v8327 = vpop.f32.mrb[0].mxu0
    %v8328 = vadd.f32 %v8135, %v8327
    %v8329 = vpop.f32.mrb[0].mxu0
    %v8330 = vadd.f32 %v8137, %v8329
    %8331 = vmatprep.mubr.bf16.mxu0 %v6357
    %8332 = vmatmul.mubr.bf16.gmra.mrb[0].mxu0 %v6356
    %v8333 = vpop.f32.mrb[0].mxu0
    %v8334 = vadd.f32 %v8141, %v8333
    %v8335 = vpop.f32.mrb[0].mxu0
    %v8336 = vadd.f32 %v8143, %v8335
    %v8337 = vpop.f32.mrb[0].mxu0
    %v8338 = vadd.f32 %v8145, %v8337
    %v8339 = vpop.f32.mrb[0].mxu0
    %v8340 = vadd.f32 %v8147, %v8339
    %8341 = vmatprep.mubr.bf16.mxu0 %v6365
    %8342 = vmatmul.mubr.bf16.gmra.mrb[0].mxu0 %v6364
    %v8343 = vpop.f32.mrb[0].mxu0
    %v8344 = vadd.f32 %v8151, %v8343
    %v8345 = vpop.f32.mrb[0].mxu0
    %v8346 = vadd.f32 %v8153, %v8345
    %v8347 = vpop.f32.mrb[0].mxu0
    %v8348 = vadd.f32 %v8155, %v8347
    %v8349 = vpop.f32.mrb[0].mxu0
    %v8350 = vadd.f32 %v8157, %v8349
    %8351 = vmatprep.mubr.bf16.mxu0 %v6373
    %8352 = vmatmul.mubr.bf16.gmra.mrb[0].mxu0 %v6372
    %v8353 = vpop.f32.mrb[0].mxu0
    %v8354 = vadd.f32 %v8161, %v8353
    %v8355 = vpop.f32.mrb[0].mxu0
    %v8356 = vadd.f32 %v8163, %v8355
    %v8357 = vpop.f32.mrb[0].mxu0
    %v8358 = vadd.f32 %v8165, %v8357
    %v8359 = vpop.f32.mrb[0].mxu0
    %v8360 = vadd.f32 %v8167, %v8359
    %8361 = vmatprep.mubr.bf16.mxu0 %v6381
    %8362 = vmatmul.mubr.bf16.gmra.mrb[0].mxu0 %v6380
    %v8363 = vpop.f32.mrb[0].mxu0
    %v8364 = vadd.f32 %v8171, %v8363
    %v8365 = vpop.f32.mrb[0].mxu0
    %v8366 = vadd.f32 %v8173, %v8365
    %v8367 = vpop.f32.mrb[0].mxu0
    %v8368 = vadd.f32 %v8175, %v8367
    %v8369 = vpop.f32.mrb[0].mxu0
    %v8370 = vadd.f32 %v8177, %v8369
    %8371 = vmatprep.mubr.bf16.mxu0 %v6389
    %8372 = vmatmul.mubr.bf16.gmra.mrb[0].mxu0 %v6388
    %v8373 = vpop.f32.mrb[0].mxu0
    %v8374 = vadd.f32 %v8181, %v8373
    %v8375 = vpop.f32.mrb[0].mxu0
    %v8376 = vadd.f32 %v8183, %v8375
    %v8377 = vpop.f32.mrb[0].mxu0
    %v8378 = vadd.f32 %v8185, %v8377
    %v8379 = vpop.f32.mrb[0].mxu0
    %v8380 = vadd.f32 %v8187, %v8379
    %8381 = vdwg.mxu0
    %8382 = vmatprep.subr.bf16.mxu0 %v6395
    %8383 = vmatpush1.bf16.msra.mxu0 %v6394
    %8384 = vmatprep.subr.bf16.mxu0 %v6402
    %8385 = vmatpush1.bf16.msra.mxu0 %v6401
    %8386 = vmatprep.subr.bf16.mxu0 %v6409
    %8387 = vmatpush1.bf16.msra.mxu0 %v6408
    %8388 = vmatprep.subr.bf16.mxu0 %v6416
    %8389 = vmatpush1.bf16.msra.mxu0 %v6415
    %8390 = vmatprep.subr.bf16.mxu0 %v6423
    %8391 = vmatpush1.bf16.msra.mxu0 %v6422
    %8392 = vmatprep.subr.bf16.mxu0 %v6430
    %8393 = vmatpush1.bf16.msra.mxu0 %v6429
    %8394 = vmatprep.subr.bf16.mxu0 %v6437
    %8395 = vmatpush1.bf16.msra.mxu0 %v6436
    %8396 = vmatprep.subr.bf16.mxu0 %v6444
    %8397 = vmatpush1.bf16.msra.mxu0 %v6443
    %8398 = vmatprep.subr.bf16.mxu0 %v6451
    %8399 = vmatpush1.bf16.msra.mxu0 %v6450
    %8400 = vmatprep.subr.bf16.mxu0 %v6458
    %8401 = vmatpush1.bf16.msra.mxu0 %v6457
    %8402 = vmatprep.subr.bf16.mxu0 %v6465
    %8403 = vmatpush1.bf16.msra.mxu0 %v6464
    %8404 = vmatprep.subr.bf16.mxu0 %v6472
    %8405 = vmatpush1.bf16.msra.mxu0 %v6471
    %8406 = vmatprep.subr.bf16.mxu0 %v6479
    %8407 = vmatpush1.bf16.msra.mxu0 %v6478
    %8408 = vmatprep.subr.bf16.mxu0 %v6486
    %8409 = vmatpush1.bf16.msra.mxu0 %v6485
    %8410 = vmatprep.subr.bf16.mxu0 %v6493
    %8411 = vmatpush1.bf16.msra.mxu0 %v6492
    %8412 = vmatprep.subr.bf16.mxu0 %v6500
    %8413 = vmatpush1.bf16.msra.mxu0 %v6499
    %8414 = vmatprep.mubr.bf16.mxu0 %v6263
    %8415 = vmatmul.mubr.bf16.gmra.mrb[0].mxu0 %v6262
    %v8416 = vpop.f32.mrb[0].mxu0
    %v8417 = vadd.f32 0.0, %v8416
    %v8418 = vpop.f32.mrb[0].mxu0
    %v8419 = vadd.f32 0.0, %v8418
    %v8420 = vpop.f32.mrb[0].mxu0
    %v8421 = vadd.f32 0.0, %v8420
    %v8422 = vpop.f32.mrb[0].mxu0
    %v8423 = vadd.f32 0.0, %v8422
    %8424 = vmatprep.mubr.bf16.mxu0 %v6271
    %8425 = vmatmul.mubr.bf16.gmra.mrb[0].mxu0 %v6270
    %v8426 = vpop.f32.mrb[0].mxu0
    %v8427 = vadd.f32 0.0, %v8426
    %v8428 = vpop.f32.mrb[0].mxu0
    %v8429 = vadd.f32 0.0, %v8428
    %v8430 = vpop.f32.mrb[0].mxu0
    %v8431 = vadd.f32 0.0, %v8430
    %v8432 = vpop.f32.mrb[0].mxu0
    %v8433 = vadd.f32 0.0, %v8432
    %8434 = vmatprep.mubr.bf16.mxu0 %v6279
    %8435 = vmatmul.mubr.bf16.gmra.mrb[0].mxu0 %v6278
    %v8436 = vpop.f32.mrb[0].mxu0
    %v8437 = vadd.f32 0.0, %v8436
    %v8438 = vpop.f32.mrb[0].mxu0
    %v8439 = vadd.f32 0.0, %v8438
    %v8440 = vpop.f32.mrb[0].mxu0
    %v8441 = vadd.f32 0.0, %v8440
    %v8442 = vpop.f32.mrb[0].mxu0
    %v8443 = vadd.f32 0.0, %v8442
    %8444 = vmatprep.mubr.bf16.mxu0 %v6287
    %8445 = vmatmul.mubr.bf16.gmra.mrb[0].mxu0 %v6286
    %v8446 = vpop.f32.mrb[0].mxu0
    %v8447 = vadd.f32 0.0, %v8446
    %v8448 = vpop.f32.mrb[0].mxu0
    %v8449 = vadd.f32 0.0, %v8448
    %v8450 = vpop.f32.mrb[0].mxu0
    %v8451 = vadd.f32 0.0, %v8450
    %v8452 = vpop.f32.mrb[0].mxu0
    %v8453 = vadd.f32 0.0, %v8452
    %8454 = vmatprep.mubr.bf16.mxu0 %v6295
    %8455 = vmatmul.mubr.bf16.gmra.mrb[0].mxu0 %v6294
    %v8456 = vpop.f32.mrb[0].mxu0
    %v8457 = vadd.f32 0.0, %v8456
    %v8458 = vpop.f32.mrb[0].mxu0
    %v8459 = vadd.f32 0.0, %v8458
    %v8460 = vpop.f32.mrb[0].mxu0
    %v8461 = vadd.f32 0.0, %v8460
    %v8462 = vpop.f32.mrb[0].mxu0
    %v8463 = vadd.f32 0.0, %v8462
    %8464 = vmatprep.mubr.bf16.mxu0 %v6303
    %8465 = vmatmul.mubr.bf16.gmra.mrb[0].mxu0 %v6302
    %v8466 = vpop.f32.mrb[0].mxu0
    %v8467 = vadd.f32 0.0, %v8466
    %v8468 = vpop.f32.mrb[0].mxu0
    %v8469 = vadd.f32 0.0, %v8468
    %v8470 = vpop.f32.mrb[0].mxu0
    %v8471 = vadd.f32 0.0, %v8470
    %v8472 = vpop.f32.mrb[0].mxu0
    %v8473 = vadd.f32 0.0, %v8472
    %8474 = vmatprep.mubr.bf16.mxu0 %v6311
    %8475 = vmatmul.mubr.bf16.gmra.mrb[0].mxu0 %v6310
    %v8476 = vpop.f32.mrb[0].mxu0
    %v8477 = vadd.f32 0.0, %v8476
    %v8478 = vpop.f32.mrb[0].mxu0
    %v8479 = vadd.f32 0.0, %v8478
    %v8480 = vpop.f32.mrb[0].mxu0
    %v8481 = vadd.f32 0.0, %v8480
    %v8482 = vpop.f32.mrb[0].mxu0
    %v8483 = vadd.f32 0.0, %v8482
    %8484 = vmatprep.mubr.bf16.mxu0 %v6319
    %8485 = vmatmul.mubr.bf16.gmra.mrb[0].mxu0 %v6318
    %v8486 = vpop.f32.mrb[0].mxu0
    %v8487 = vadd.f32 0.0, %v8486
    %v8488 = vpop.f32.mrb[0].mxu0
    %v8489 = vadd.f32 0.0, %v8488
    %v8490 = vpop.f32.mrb[0].mxu0
    %v8491 = vadd.f32 0.0, %v8490
    %v8492 = vpop.f32.mrb[0].mxu0
    %v8493 = vadd.f32 0.0, %v8492
    %8494 = vmatprep.mubr.bf16.mxu0 %v6327
    %8495 = vmatmul.mubr.bf16.gmra.mrb[0].mxu0 %v6326
    %v8496 = vpop.f32.mrb[0].mxu0
    %v8497 = vadd.f32 0.0, %v8496
    %v8498 = vpop.f32.mrb[0].mxu0
    %v8499 = vadd.f32 0.0, %v8498
    %v8500 = vpop.f32.mrb[0].mxu0
    %v8501 = vadd.f32 0.0, %v8500
    %v8502 = vpop.f32.mrb[0].mxu0
    %v8503 = vadd.f32 0.0, %v8502
    %8504 = vmatprep.mubr.bf16.mxu0 %v6335
    %8505 = vmatmul.mubr.bf16.gmra.mrb[0].mxu0 %v6334
    %v8506 = vpop.f32.mrb[0].mxu0
    %v8507 = vadd.f32 0.0, %v8506
    %v8508 = vpop.f32.mrb[0].mxu0
    %v8509 = vadd.f32 0.0, %v8508
    %v8510 = vpop.f32.mrb[0].mxu0
    %v8511 = vadd.f32 0.0, %v8510
    %v8512 = vpop.f32.mrb[0].mxu0
    %v8513 = vadd.f32 0.0, %v8512
    %8514 = vmatprep.mubr.bf16.mxu0 %v6343
    %8515 = vmatmul.mubr.bf16.gmra.mrb[0].mxu0 %v6342
    %v8516 = vpop.f32.mrb[0].mxu0
    %v8517 = vadd.f32 0.0, %v8516
    %v8518 = vpop.f32.mrb[0].mxu0
    %v8519 = vadd.f32 0.0, %v8518
    %v8520 = vpop.f32.mrb[0].mxu0
    %v8521 = vadd.f32 0.0, %v8520
    %v8522 = vpop.f32.mrb[0].mxu0
    %v8523 = vadd.f32 0.0, %v8522
    %8524 = vmatprep.mubr.bf16.mxu0 %v6351
    %8525 = vmatmul.mubr.bf16.gmra.mrb[0].mxu0 %v6350
    %v8526 = vpop.f32.mrb[0].mxu0
    %v8527 = vadd.f32 0.0, %v8526
    %v8528 = vpop.f32.mrb[0].mxu0
    %v8529 = vadd.f32 0.0, %v8528
    %v8530 = vpop.f32.mrb[0].mxu0
    %v8531 = vadd.f32 0.0, %v8530
    %v8532 = vpop.f32.mrb[0].mxu0
    %v8533 = vadd.f32 0.0, %v8532
    %8534 = vmatprep.mubr.bf16.mxu0 %v6359
    %8535 = vmatmul.mubr.bf16.gmra.mrb[0].mxu0 %v6358
    %v8536 = vpop.f32.mrb[0].mxu0
    %v8537 = vadd.f32 0.0, %v8536
    %v8538 = vpop.f32.mrb[0].mxu0
    %v8539 = vadd.f32 0.0, %v8538
    %v8540 = vpop.f32.mrb[0].mxu0
    %v8541 = vadd.f32 0.0, %v8540
    %v8542 = vpop.f32.mrb[0].mxu0
    %v8543 = vadd.f32 0.0, %v8542
    %8544 = vmatprep.mubr.bf16.mxu0 %v6367
    %8545 = vmatmul.mubr.bf16.gmra.mrb[0].mxu0 %v6366
    %v8546 = vpop.f32.mrb[0].mxu0
    %v8547 = vadd.f32 0.0, %v8546
    %v8548 = vpop.f32.mrb[0].mxu0
    %v8549 = vadd.f32 0.0, %v8548
    %v8550 = vpop.f32.mrb[0].mxu0
    %v8551 = vadd.f32 0.0, %v8550
    %v8552 = vpop.f32.mrb[0].mxu0
    %v8553 = vadd.f32 0.0, %v8552
    %8554 = vmatprep.mubr.bf16.mxu0 %v6375
    %8555 = vmatmul.mubr.bf16.gmra.mrb[0].mxu0 %v6374
    %v8556 = vpop.f32.mrb[0].mxu0
    %v8557 = vadd.f32 0.0, %v8556
    %v8558 = vpop.f32.mrb[0].mxu0
    %v8559 = vadd.f32 0.0, %v8558
    %v8560 = vpop.f32.mrb[0].mxu0
    %v8561 = vadd.f32 0.0, %v8560
    %v8562 = vpop.f32.mrb[0].mxu0
    %v8563 = vadd.f32 0.0, %v8562
    %8564 = vmatprep.mubr.bf16.mxu0 %v6383
    %8565 = vmatmul.mubr.bf16.gmra.mrb[0].mxu0 %v6382
    %v8566 = vpop.f32.mrb[0].mxu0
    %v8567 = vadd.f32 0.0, %v8566
    %v8568 = vpop.f32.mrb[0].mxu0
    %v8569 = vadd.f32 0.0, %v8568
    %v8570 = vpop.f32.mrb[0].mxu0
    %v8571 = vadd.f32 0.0, %v8570
    %v8572 = vpop.f32.mrb[0].mxu0
    %v8573 = vadd.f32 0.0, %v8572
    %8574 = vdwg.mxu0
    %8575 = vmatprep.subr.bf16.mxu0 %v6507
    %8576 = vmatpush1.bf16.msra.mxu0 %v6506
    %8577 = vmatprep.subr.bf16.mxu0 %v6514
    %8578 = vmatpush1.bf16.msra.mxu0 %v6513
    %8579 = vmatprep.subr.bf16.mxu0 %v6521
    %8580 = vmatpush1.bf16.msra.mxu0 %v6520
    %8581 = vmatprep.subr.bf16.mxu0 %v6528
    %8582 = vmatpush1.bf16.msra.mxu0 %v6527
    %8583 = vmatprep.subr.bf16.mxu0 %v6535
    %8584 = vmatpush1.bf16.msra.mxu0 %v6534
    %8585 = vmatprep.subr.bf16.mxu0 %v6542
    %8586 = vmatpush1.bf16.msra.mxu0 %v6541
    %8587 = vmatprep.subr.bf16.mxu0 %v6549
    %8588 = vmatpush1.bf16.msra.mxu0 %v6548
    %8589 = vmatprep.subr.bf16.mxu0 %v6556
    %8590 = vmatpush1.bf16.msra.mxu0 %v6555
    %8591 = vmatprep.subr.bf16.mxu0 %v6563
    %8592 = vmatpush1.bf16.msra.mxu0 %v6562
    %8593 = vmatprep.subr.bf16.mxu0 %v6570
    %8594 = vmatpush1.bf16.msra.mxu0 %v6569
    %8595 = vmatprep.subr.bf16.mxu0 %v6577
    %8596 = vmatpush1.bf16.msra.mxu0 %v6576
    %8597 = vmatprep.subr.bf16.mxu0 %v6584
    %8598 = vmatpush1.bf16.msra.mxu0 %v6583
    %8599 = vmatprep.subr.bf16.mxu0 %v6591
    %8600 = vmatpush1.bf16.msra.mxu0 %v6590
    %8601 = vmatprep.subr.bf16.mxu0 %v6598
    %8602 = vmatpush1.bf16.msra.mxu0 %v6597
    %8603 = vmatprep.subr.bf16.mxu0 %v6605
    %8604 = vmatpush1.bf16.msra.mxu0 %v6604
    %8605 = vmatprep.subr.bf16.mxu0 %v6612
    %8606 = vmatpush1.bf16.msra.mxu0 %v6611
    %8607 = vmatprep.mubr.bf16.mxu0 %v6265
    %8608 = vmatmul.mubr.bf16.gmra.mrb[0].mxu0 %v6264
    %v8609 = vpop.f32.mrb[0].mxu0
    %v8610 = vadd.f32 %v8417, %v8609
    %v8611 = vpop.f32.mrb[0].mxu0
    %v8612 = vadd.f32 %v8419, %v8611
    %v8613 = vpop.f32.mrb[0].mxu0
    %v8614 = vadd.f32 %v8421, %v8613
    %v8615 = vpop.f32.mrb[0].mxu0
    %v8616 = vadd.f32 %v8423, %v8615
    %8617 = vmatprep.mubr.bf16.mxu0 %v6273
    %8618 = vmatmul.mubr.bf16.gmra.mrb[0].mxu0 %v6272
    %v8619 = vpop.f32.mrb[0].mxu0
    %v8620 = vadd.f32 %v8427, %v8619
    %v8621 = vpop.f32.mrb[0].mxu0
    %v8622 = vadd.f32 %v8429, %v8621
    %v8623 = vpop.f32.mrb[0].mxu0
    %v8624 = vadd.f32 %v8431, %v8623
    %v8625 = vpop.f32.mrb[0].mxu0
    %v8626 = vadd.f32 %v8433, %v8625
    %8627 = vmatprep.mubr.bf16.mxu0 %v6281
    %8628 = vmatmul.mubr.bf16.gmra.mrb[0].mxu0 %v6280
    %v8629 = vpop.f32.mrb[0].mxu0
    %v8630 = vadd.f32 %v8437, %v8629
    %v8631 = vpop.f32.mrb[0].mxu0
    %v8632 = vadd.f32 %v8439, %v8631
    %v8633 = vpop.f32.mrb[0].mxu0
    %v8634 = vadd.f32 %v8441, %v8633
    %v8635 = vpop.f32.mrb[0].mxu0
    %v8636 = vadd.f32 %v8443, %v8635
    %8637 = vmatprep.mubr.bf16.mxu0 %v6289
    %8638 = vmatmul.mubr.bf16.gmra.mrb[0].mxu0 %v6288
    %v8639 = vpop.f32.mrb[0].mxu0
    %v8640 = vadd.f32 %v8447, %v8639
    %v8641 = vpop.f32.mrb[0].mxu0
    %v8642 = vadd.f32 %v8449, %v8641
    %v8643 = vpop.f32.mrb[0].mxu0
    %v8644 = vadd.f32 %v8451, %v8643
    %v8645 = vpop.f32.mrb[0].mxu0
    %v8646 = vadd.f32 %v8453, %v8645
    %8647 = vmatprep.mubr.bf16.mxu0 %v6297
    %8648 = vmatmul.mubr.bf16.gmra.mrb[0].mxu0 %v6296
    %v8649 = vpop.f32.mrb[0].mxu0
    %v8650 = vadd.f32 %v8457, %v8649
    %v8651 = vpop.f32.mrb[0].mxu0
    %v8652 = vadd.f32 %v8459, %v8651
    %v8653 = vpop.f32.mrb[0].mxu0
    %v8654 = vadd.f32 %v8461, %v8653
    %v8655 = vpop.f32.mrb[0].mxu0
    %v8656 = vadd.f32 %v8463, %v8655
    %8657 = vmatprep.mubr.bf16.mxu0 %v6305
    %8658 = vmatmul.mubr.bf16.gmra.mrb[0].mxu0 %v6304
    %v8659 = vpop.f32.mrb[0].mxu0
    %v8660 = vadd.f32 %v8467, %v8659
    %v8661 = vpop.f32.mrb[0].mxu0
    %v8662 = vadd.f32 %v8469, %v8661
    %v8663 = vpop.f32.mrb[0].mxu0
    %v8664 = vadd.f32 %v8471, %v8663
    %v8665 = vpop.f32.mrb[0].mxu0
    %v8666 = vadd.f32 %v8473, %v8665
    %8667 = vmatprep.mubr.bf16.mxu0 %v6313
    %8668 = vmatmul.mubr.bf16.gmra.mrb[0].mxu0 %v6312
    %v8669 = vpop.f32.mrb[0].mxu0
    %v8670 = vadd.f32 %v8477, %v8669
    %v8671 = vpop.f32.mrb[0].mxu0
    %v8672 = vadd.f32 %v8479, %v8671
    %v8673 = vpop.f32.mrb[0].mxu0
    %v8674 = vadd.f32 %v8481, %v8673
    %v8675 = vpop.f32.mrb[0].mxu0
    %v8676 = vadd.f32 %v8483, %v8675
    %8677 = vmatprep.mubr.bf16.mxu0 %v6321
    %8678 = vmatmul.mubr.bf16.gmra.mrb[0].mxu0 %v6320
    %v8679 = vpop.f32.mrb[0].mxu0
    %v8680 = vadd.f32 %v8487, %v8679
    %v8681 = vpop.f32.mrb[0].mxu0
    %v8682 = vadd.f32 %v8489, %v8681
    %v8683 = vpop.f32.mrb[0].mxu0
    %v8684 = vadd.f32 %v8491, %v8683
    %v8685 = vpop.f32.mrb[0].mxu0
    %v8686 = vadd.f32 %v8493, %v8685
    %8687 = vmatprep.mubr.bf16.mxu0 %v6329
    %8688 = vmatmul.mubr.bf16.gmra.mrb[0].mxu0 %v6328
    %v8689 = vpop.f32.mrb[0].mxu0
    %v8690 = vadd.f32 %v8497, %v8689
    %v8691 = vpop.f32.mrb[0].mxu0
    %v8692 = vadd.f32 %v8499, %v8691
    %v8693 = vpop.f32.mrb[0].mxu0
    %v8694 = vadd.f32 %v8501, %v8693
    %v8695 = vpop.f32.mrb[0].mxu0
    %v8696 = vadd.f32 %v8503, %v8695
    %8697 = vmatprep.mubr.bf16.mxu0 %v6337
    %8698 = vmatmul.mubr.bf16.gmra.mrb[0].mxu0 %v6336
    %v8699 = vpop.f32.mrb[0].mxu0
    %v8700 = vadd.f32 %v8507, %v8699
    %v8701 = vpop.f32.mrb[0].mxu0
    %v8702 = vadd.f32 %v8509, %v8701
    %v8703 = vpop.f32.mrb[0].mxu0
    %v8704 = vadd.f32 %v8511, %v8703
    %v8705 = vpop.f32.mrb[0].mxu0
    %v8706 = vadd.f32 %v8513, %v8705
    %8707 = vmatprep.mubr.bf16.mxu0 %v6345
    %8708 = vmatmul.mubr.bf16.gmra.mrb[0].mxu0 %v6344
    %v8709 = vpop.f32.mrb[0].mxu0
    %v8710 = vadd.f32 %v8517, %v8709
    %v8711 = vpop.f32.mrb[0].mxu0
    %v8712 = vadd.f32 %v8519, %v8711
    %v8713 = vpop.f32.mrb[0].mxu0
    %v8714 = vadd.f32 %v8521, %v8713
    %v8715 = vpop.f32.mrb[0].mxu0
    %v8716 = vadd.f32 %v8523, %v8715
    %8717 = vmatprep.mubr.bf16.mxu0 %v6353
    %8718 = vmatmul.mubr.bf16.gmra.mrb[0].mxu0 %v6352
    %v8719 = vpop.f32.mrb[0].mxu0
    %v8720 = vadd.f32 %v8527, %v8719
    %v8721 = vpop.f32.mrb[0].mxu0
    %v8722 = vadd.f32 %v8529, %v8721
    %v8723 = vpop.f32.mrb[0].mxu0
    %v8724 = vadd.f32 %v8531, %v8723
    %v8725 = vpop.f32.mrb[0].mxu0
    %v8726 = vadd.f32 %v8533, %v8725
    %8727 = vmatprep.mubr.bf16.mxu0 %v6361
    %8728 = vmatmul.mubr.bf16.gmra.mrb[0].mxu0 %v6360
    %v8729 = vpop.f32.mrb[0].mxu0
    %v8730 = vadd.f32 %v8537, %v8729
    %v8731 = vpop.f32.mrb[0].mxu0
    %v8732 = vadd.f32 %v8539, %v8731
    %v8733 = vpop.f32.mrb[0].mxu0
    %v8734 = vadd.f32 %v8541, %v8733
    %v8735 = vpop.f32.mrb[0].mxu0
    %v8736 = vadd.f32 %v8543, %v8735
    %8737 = vmatprep.mubr.bf16.mxu0 %v6369
    %8738 = vmatmul.mubr.bf16.gmra.mrb[0].mxu0 %v6368
    %v8739 = vpop.f32.mrb[0].mxu0
    %v8740 = vadd.f32 %v8547, %v8739
    %v8741 = vpop.f32.mrb[0].mxu0
    %v8742 = vadd.f32 %v8549, %v8741
    %v8743 = vpop.f32.mrb[0].mxu0
    %v8744 = vadd.f32 %v8551, %v8743
    %v8745 = vpop.f32.mrb[0].mxu0
    %v8746 = vadd.f32 %v8553, %v8745
    %8747 = vmatprep.mubr.bf16.mxu0 %v6377
    %8748 = vmatmul.mubr.bf16.gmra.mrb[0].mxu0 %v6376
    %v8749 = vpop.f32.mrb[0].mxu0
    %v8750 = vadd.f32 %v8557, %v8749
    %v8751 = vpop.f32.mrb[0].mxu0
    %v8752 = vadd.f32 %v8559, %v8751
    %v8753 = vpop.f32.mrb[0].mxu0
    %v8754 = vadd.f32 %v8561, %v8753
    %v8755 = vpop.f32.mrb[0].mxu0
    %v8756 = vadd.f32 %v8563, %v8755
    %8757 = vmatprep.mubr.bf16.mxu0 %v6385
    %8758 = vmatmul.mubr.bf16.gmra.mrb[0].mxu0 %v6384
    %v8759 = vpop.f32.mrb[0].mxu0
    %v8760 = vadd.f32 %v8567, %v8759
    %v8761 = vpop.f32.mrb[0].mxu0
    %v8762 = vadd.f32 %v8569, %v8761
    %v8763 = vpop.f32.mrb[0].mxu0
    %v8764 = vadd.f32 %v8571, %v8763
    %v8765 = vpop.f32.mrb[0].mxu0
    %v8766 = vadd.f32 %v8573, %v8765
    %8767 = vdwg.mxu0
    %8768 = vmatprep.subr.bf16.mxu0 %v6619
    %8769 = vmatpush1.bf16.msra.mxu0 %v6618
    %8770 = vmatprep.subr.bf16.mxu0 %v6626
    %8771 = vmatpush1.bf16.msra.mxu0 %v6625
    %8772 = vmatprep.subr.bf16.mxu0 %v6633
    %8773 = vmatpush1.bf16.msra.mxu0 %v6632
    %8774 = vmatprep.subr.bf16.mxu0 %v6640
    %8775 = vmatpush1.bf16.msra.mxu0 %v6639
    %8776 = vmatprep.subr.bf16.mxu0 %v6647
    %8777 = vmatpush1.bf16.msra.mxu0 %v6646
    %8778 = vmatprep.subr.bf16.mxu0 %v6654
    %8779 = vmatpush1.bf16.msra.mxu0 %v6653
    %8780 = vmatprep.subr.bf16.mxu0 %v6661
    %8781 = vmatpush1.bf16.msra.mxu0 %v6660
    %8782 = vmatprep.subr.bf16.mxu0 %v6668
    %8783 = vmatpush1.bf16.msra.mxu0 %v6667
    %8784 = vmatprep.subr.bf16.mxu0 %v6675
    %8785 = vmatpush1.bf16.msra.mxu0 %v6674
    %8786 = vmatprep.subr.bf16.mxu0 %v6682
    %8787 = vmatpush1.bf16.msra.mxu0 %v6681
    %8788 = vmatprep.subr.bf16.mxu0 %v6689
    %8789 = vmatpush1.bf16.msra.mxu0 %v6688
    %8790 = vmatprep.subr.bf16.mxu0 %v6696
    %8791 = vmatpush1.bf16.msra.mxu0 %v6695
    %8792 = vmatprep.subr.bf16.mxu0 %v6703
    %8793 = vmatpush1.bf16.msra.mxu0 %v6702
    %8794 = vmatprep.subr.bf16.mxu0 %v6710
    %8795 = vmatpush1.bf16.msra.mxu0 %v6709
    %8796 = vmatprep.subr.bf16.mxu0 %v6717
    %8797 = vmatpush1.bf16.msra.mxu0 %v6716
    %8798 = vmatprep.subr.bf16.mxu0 %v6724
    %8799 = vmatpush1.bf16.msra.mxu0 %v6723
    %8800 = vmatprep.mubr.bf16.mxu0 %v6267
    %8801 = vmatmul.mubr.bf16.gmra.mrb[0].mxu0 %v6266
    %v8802 = vpop.f32.mrb[0].mxu0
    %v8803 = vadd.f32 %v8610, %v8802
    %v8804 = vpop.f32.mrb[0].mxu0
    %v8805 = vadd.f32 %v8612, %v8804
    %v8806 = vpop.f32.mrb[0].mxu0
    %v8807 = vadd.f32 %v8614, %v8806
    %v8808 = vpop.f32.mrb[0].mxu0
    %v8809 = vadd.f32 %v8616, %v8808
    %8810 = vmatprep.mubr.bf16.mxu0 %v6275
    %8811 = vmatmul.mubr.bf16.gmra.mrb[0].mxu0 %v6274
    %v8812 = vpop.f32.mrb[0].mxu0
    %v8813 = vadd.f32 %v8620, %v8812
    %v8814 = vpop.f32.mrb[0].mxu0
    %v8815 = vadd.f32 %v8622, %v8814
    %v8816 = vpop.f32.mrb[0].mxu0
    %v8817 = vadd.f32 %v8624, %v8816
    %v8818 = vpop.f32.mrb[0].mxu0
    %v8819 = vadd.f32 %v8626, %v8818
    %8820 = vmatprep.mubr.bf16.mxu0 %v6283
    %8821 = vmatmul.mubr.bf16.gmra.mrb[0].mxu0 %v6282
    %v8822 = vpop.f32.mrb[0].mxu0
    %v8823 = vadd.f32 %v8630, %v8822
    %v8824 = vpop.f32.mrb[0].mxu0
    %v8825 = vadd.f32 %v8632, %v8824
    %v8826 = vpop.f32.mrb[0].mxu0
    %v8827 = vadd.f32 %v8634, %v8826
    %v8828 = vpop.f32.mrb[0].mxu0
    %v8829 = vadd.f32 %v8636, %v8828
    %8830 = vmatprep.mubr.bf16.mxu0 %v6291
    %8831 = vmatmul.mubr.bf16.gmra.mrb[0].mxu0 %v6290
    %v8832 = vpop.f32.mrb[0].mxu0
    %v8833 = vadd.f32 %v8640, %v8832
    %v8834 = vpop.f32.mrb[0].mxu0
    %v8835 = vadd.f32 %v8642, %v8834
    %v8836 = vpop.f32.mrb[0].mxu0
    %v8837 = vadd.f32 %v8644, %v8836
    %v8838 = vpop.f32.mrb[0].mxu0
    %v8839 = vadd.f32 %v8646, %v8838
    %8840 = vmatprep.mubr.bf16.mxu0 %v6299
    %8841 = vmatmul.mubr.bf16.gmra.mrb[0].mxu0 %v6298
    %v8842 = vpop.f32.mrb[0].mxu0
    %v8843 = vadd.f32 %v8650, %v8842
    %v8844 = vpop.f32.mrb[0].mxu0
    %v8845 = vadd.f32 %v8652, %v8844
    %v8846 = vpop.f32.mrb[0].mxu0
    %v8847 = vadd.f32 %v8654, %v8846
    %v8848 = vpop.f32.mrb[0].mxu0
    %v8849 = vadd.f32 %v8656, %v8848
    %8850 = vmatprep.mubr.bf16.mxu0 %v6307
    %8851 = vmatmul.mubr.bf16.gmra.mrb[0].mxu0 %v6306
    %v8852 = vpop.f32.mrb[0].mxu0
    %v8853 = vadd.f32 %v8660, %v8852
    %v8854 = vpop.f32.mrb[0].mxu0
    %v8855 = vadd.f32 %v8662, %v8854
    %v8856 = vpop.f32.mrb[0].mxu0
    %v8857 = vadd.f32 %v8664, %v8856
    %v8858 = vpop.f32.mrb[0].mxu0
    %v8859 = vadd.f32 %v8666, %v8858
    %8860 = vmatprep.mubr.bf16.mxu0 %v6315
    %8861 = vmatmul.mubr.bf16.gmra.mrb[0].mxu0 %v6314
    %v8862 = vpop.f32.mrb[0].mxu0
    %v8863 = vadd.f32 %v8670, %v8862
    %v8864 = vpop.f32.mrb[0].mxu0
    %v8865 = vadd.f32 %v8672, %v8864
    %v8866 = vpop.f32.mrb[0].mxu0
    %v8867 = vadd.f32 %v8674, %v8866
    %v8868 = vpop.f32.mrb[0].mxu0
    %v8869 = vadd.f32 %v8676, %v8868
    %8870 = vmatprep.mubr.bf16.mxu0 %v6323
    %8871 = vmatmul.mubr.bf16.gmra.mrb[0].mxu0 %v6322
    %v8872 = vpop.f32.mrb[0].mxu0
    %v8873 = vadd.f32 %v8680, %v8872
    %v8874 = vpop.f32.mrb[0].mxu0
    %v8875 = vadd.f32 %v8682, %v8874
    %v8876 = vpop.f32.mrb[0].mxu0
    %v8877 = vadd.f32 %v8684, %v8876
    %v8878 = vpop.f32.mrb[0].mxu0
    %v8879 = vadd.f32 %v8686, %v8878
    %8880 = vmatprep.mubr.bf16.mxu0 %v6331
    %8881 = vmatmul.mubr.bf16.gmra.mrb[0].mxu0 %v6330
    %v8882 = vpop.f32.mrb[0].mxu0
    %v8883 = vadd.f32 %v8690, %v8882
    %v8884 = vpop.f32.mrb[0].mxu0
    %v8885 = vadd.f32 %v8692, %v8884
    %v8886 = vpop.f32.mrb[0].mxu0
    %v8887 = vadd.f32 %v8694, %v8886
    %v8888 = vpop.f32.mrb[0].mxu0
    %v8889 = vadd.f32 %v8696, %v8888
    %8890 = vmatprep.mubr.bf16.mxu0 %v6339
    %8891 = vmatmul.mubr.bf16.gmra.mrb[0].mxu0 %v6338
    %v8892 = vpop.f32.mrb[0].mxu0
    %v8893 = vadd.f32 %v8700, %v8892
    %v8894 = vpop.f32.mrb[0].mxu0
    %v8895 = vadd.f32 %v8702, %v8894
    %v8896 = vpop.f32.mrb[0].mxu0
    %v8897 = vadd.f32 %v8704, %v8896
    %v8898 = vpop.f32.mrb[0].mxu0
    %v8899 = vadd.f32 %v8706, %v8898
    %8900 = vmatprep.mubr.bf16.mxu0 %v6347
    %8901 = vmatmul.mubr.bf16.gmra.mrb[0].mxu0 %v6346
    %v8902 = vpop.f32.mrb[0].mxu0
    %v8903 = vadd.f32 %v8710, %v8902
    %v8904 = vpop.f32.mrb[0].mxu0
    %v8905 = vadd.f32 %v8712, %v8904
    %v8906 = vpop.f32.mrb[0].mxu0
    %v8907 = vadd.f32 %v8714, %v8906
    %v8908 = vpop.f32.mrb[0].mxu0
    %v8909 = vadd.f32 %v8716, %v8908
    %8910 = vmatprep.mubr.bf16.mxu0 %v6355
    %8911 = vmatmul.mubr.bf16.gmra.mrb[0].mxu0 %v6354
    %v8912 = vpop.f32.mrb[0].mxu0
    %v8913 = vadd.f32 %v8720, %v8912
    %v8914 = vpop.f32.mrb[0].mxu0
    %v8915 = vadd.f32 %v8722, %v8914
    %v8916 = vpop.f32.mrb[0].mxu0
    %v8917 = vadd.f32 %v8724, %v8916
    %v8918 = vpop.f32.mrb[0].mxu0
    %v8919 = vadd.f32 %v8726, %v8918
    %8920 = vmatprep.mubr.bf16.mxu0 %v6363
    %8921 = vmatmul.mubr.bf16.gmra.mrb[0].mxu0 %v6362
    %v8922 = vpop.f32.mrb[0].mxu0
    %v8923 = vadd.f32 %v8730, %v8922
    %v8924 = vpop.f32.mrb[0].mxu0
    %v8925 = vadd.f32 %v8732, %v8924
    %v8926 = vpop.f32.mrb[0].mxu0
    %v8927 = vadd.f32 %v8734, %v8926
    %v8928 = vpop.f32.mrb[0].mxu0
    %v8929 = vadd.f32 %v8736, %v8928
    %8930 = vmatprep.mubr.bf16.mxu0 %v6371
    %8931 = vmatmul.mubr.bf16.gmra.mrb[0].mxu0 %v6370
    %v8932 = vpop.f32.mrb[0].mxu0
    %v8933 = vadd.f32 %v8740, %v8932
    %v8934 = vpop.f32.mrb[0].mxu0
    %v8935 = vadd.f32 %v8742, %v8934
    %v8936 = vpop.f32.mrb[0].mxu0
    %v8937 = vadd.f32 %v8744, %v8936
    %v8938 = vpop.f32.mrb[0].mxu0
    %v8939 = vadd.f32 %v8746, %v8938
    %8940 = vmatprep.mubr.bf16.mxu0 %v6379
    %8941 = vmatmul.mubr.bf16.gmra.mrb[0].mxu0 %v6378
    %v8942 = vpop.f32.mrb[0].mxu0
    %v8943 = vadd.f32 %v8750, %v8942
    %v8944 = vpop.f32.mrb[0].mxu0
    %v8945 = vadd.f32 %v8752, %v8944
    %v8946 = vpop.f32.mrb[0].mxu0
    %v8947 = vadd.f32 %v8754, %v8946
    %v8948 = vpop.f32.mrb[0].mxu0
    %v8949 = vadd.f32 %v8756, %v8948
    %8950 = vmatprep.mubr.bf16.mxu0 %v6387
    %8951 = vmatmul.mubr.bf16.gmra.mrb[0].mxu0 %v6386
    %v8952 = vpop.f32.mrb[0].mxu0
    %v8953 = vadd.f32 %v8760, %v8952
    %v8954 = vpop.f32.mrb[0].mxu0
    %v8955 = vadd.f32 %v8762, %v8954
    %v8956 = vpop.f32.mrb[0].mxu0
    %v8957 = vadd.f32 %v8764, %v8956
    %v8958 = vpop.f32.mrb[0].mxu0
    %v8959 = vadd.f32 %v8766, %v8958
    %8960 = vdwg.mxu0
    %8961 = vmatprep.subr.bf16.mxu0 %v6731
    %8962 = vmatpush1.bf16.msra.mxu0 %v6730
    %8963 = vmatprep.subr.bf16.mxu0 %v6738
    %8964 = vmatpush1.bf16.msra.mxu0 %v6737
    %8965 = vmatprep.subr.bf16.mxu0 %v6745
    %8966 = vmatpush1.bf16.msra.mxu0 %v6744
    %8967 = vmatprep.subr.bf16.mxu0 %v6752
    %8968 = vmatpush1.bf16.msra.mxu0 %v6751
    %8969 = vmatprep.subr.bf16.mxu0 %v6759
    %8970 = vmatpush1.bf16.msra.mxu0 %v6758
    %8971 = vmatprep.subr.bf16.mxu0 %v6766
    %8972 = vmatpush1.bf16.msra.mxu0 %v6765
    %8973 = vmatprep.subr.bf16.mxu0 %v6773
    %8974 = vmatpush1.bf16.msra.mxu0 %v6772
    %8975 = vmatprep.subr.bf16.mxu0 %v6780
    %8976 = vmatpush1.bf16.msra.mxu0 %v6779
    %8977 = vmatprep.subr.bf16.mxu0 %v6787
    %8978 = vmatpush1.bf16.msra.mxu0 %v6786
    %8979 = vmatprep.subr.bf16.mxu0 %v6794
    %8980 = vmatpush1.bf16.msra.mxu0 %v6793
    %8981 = vmatprep.subr.bf16.mxu0 %v6801
    %8982 = vmatpush1.bf16.msra.mxu0 %v6800
    %8983 = vmatprep.subr.bf16.mxu0 %v6808
    %8984 = vmatpush1.bf16.msra.mxu0 %v6807
    %8985 = vmatprep.subr.bf16.mxu0 %v6815
    %8986 = vmatpush1.bf16.msra.mxu0 %v6814
    %8987 = vmatprep.subr.bf16.mxu0 %v6822
    %8988 = vmatpush1.bf16.msra.mxu0 %v6821
    %8989 = vmatprep.subr.bf16.mxu0 %v6829
    %8990 = vmatpush1.bf16.msra.mxu0 %v6828
    %8991 = vmatprep.subr.bf16.mxu0 %v6836
    %8992 = vmatpush1.bf16.msra.mxu0 %v6835
    %8993 = vmatprep.mubr.bf16.mxu0 %v6269
    %8994 = vmatmul.mubr.bf16.gmra.mrb[0].mxu0 %v6268
    %v8995 = vpop.f32.mrb[0].mxu0
    %v8996 = vadd.f32 %v8803, %v8995
    %v8997 = vpop.f32.mrb[0].mxu0
    %v8998 = vadd.f32 %v8805, %v8997
    %v8999 = vpop.f32.mrb[0].mxu0
    %v9000 = vadd.f32 %v8807, %v8999
    %v9001 = vpop.f32.mrb[0].mxu0
    %v9002 = vadd.f32 %v8809, %v9001
    %9003 = vmatprep.mubr.bf16.mxu0 %v6277
    %9004 = vmatmul.mubr.bf16.gmra.mrb[0].mxu0 %v6276
    %v9005 = vpop.f32.mrb[0].mxu0
    %v9006 = vadd.f32 %v8813, %v9005
    %v9007 = vpop.f32.mrb[0].mxu0
    %v9008 = vadd.f32 %v8815, %v9007
    %v9009 = vpop.f32.mrb[0].mxu0
    %v9010 = vadd.f32 %v8817, %v9009
    %v9011 = vpop.f32.mrb[0].mxu0
    %v9012 = vadd.f32 %v8819, %v9011
    %9013 = vmatprep.mubr.bf16.mxu0 %v6285
    %9014 = vmatmul.mubr.bf16.gmra.mrb[0].mxu0 %v6284
    %v9015 = vpop.f32.mrb[0].mxu0
    %v9016 = vadd.f32 %v8823, %v9015
    %v9017 = vpop.f32.mrb[0].mxu0
    %v9018 = vadd.f32 %v8825, %v9017
    %v9019 = vpop.f32.mrb[0].mxu0
    %v9020 = vadd.f32 %v8827, %v9019
    %v9021 = vpop.f32.mrb[0].mxu0
    %v9022 = vadd.f32 %v8829, %v9021
    %9023 = vmatprep.mubr.bf16.mxu0 %v6293
    %9024 = vmatmul.mubr.bf16.gmra.mrb[0].mxu0 %v6292
    %v9025 = vpop.f32.mrb[0].mxu0
    %v9026 = vadd.f32 %v8833, %v9025
    %v9027 = vpop.f32.mrb[0].mxu0
    %v9028 = vadd.f32 %v8835, %v9027
    %v9029 = vpop.f32.mrb[0].mxu0
    %v9030 = vadd.f32 %v8837, %v9029
    %v9031 = vpop.f32.mrb[0].mxu0
    %v9032 = vadd.f32 %v8839, %v9031
    %9033 = vmatprep.mubr.bf16.mxu0 %v6301
    %9034 = vmatmul.mubr.bf16.gmra.mrb[0].mxu0 %v6300
    %v9035 = vpop.f32.mrb[0].mxu0
    %v9036 = vadd.f32 %v8843, %v9035
    %v9037 = vpop.f32.mrb[0].mxu0
    %v9038 = vadd.f32 %v8845, %v9037
    %v9039 = vpop.f32.mrb[0].mxu0
    %v9040 = vadd.f32 %v8847, %v9039
    %v9041 = vpop.f32.mrb[0].mxu0
    %v9042 = vadd.f32 %v8849, %v9041
    %9043 = vmatprep.mubr.bf16.mxu0 %v6309
    %9044 = vmatmul.mubr.bf16.gmra.mrb[0].mxu0 %v6308
    %v9045 = vpop.f32.mrb[0].mxu0
    %v9046 = vadd.f32 %v8853, %v9045
    %v9047 = vpop.f32.mrb[0].mxu0
    %v9048 = vadd.f32 %v8855, %v9047
    %v9049 = vpop.f32.mrb[0].mxu0
    %v9050 = vadd.f32 %v8857, %v9049
    %v9051 = vpop.f32.mrb[0].mxu0
    %v9052 = vadd.f32 %v8859, %v9051
    %9053 = vmatprep.mubr.bf16.mxu0 %v6317
    %9054 = vmatmul.mubr.bf16.gmra.mrb[0].mxu0 %v6316
    %v9055 = vpop.f32.mrb[0].mxu0
    %v9056 = vadd.f32 %v8863, %v9055
    %v9057 = vpop.f32.mrb[0].mxu0
    %v9058 = vadd.f32 %v8865, %v9057
    %v9059 = vpop.f32.mrb[0].mxu0
    %v9060 = vadd.f32 %v8867, %v9059
    %v9061 = vpop.f32.mrb[0].mxu0
    %v9062 = vadd.f32 %v8869, %v9061
    %9063 = vmatprep.mubr.bf16.mxu0 %v6325
    %9064 = vmatmul.mubr.bf16.gmra.mrb[0].mxu0 %v6324
    %v9065 = vpop.f32.mrb[0].mxu0
    %v9066 = vadd.f32 %v8873, %v9065
    %v9067 = vpop.f32.mrb[0].mxu0
    %v9068 = vadd.f32 %v8875, %v9067
    %v9069 = vpop.f32.mrb[0].mxu0
    %v9070 = vadd.f32 %v8877, %v9069
    %v9071 = vpop.f32.mrb[0].mxu0
    %v9072 = vadd.f32 %v8879, %v9071
    %9073 = vmatprep.mubr.bf16.mxu0 %v6333
    %9074 = vmatmul.mubr.bf16.gmra.mrb[0].mxu0 %v6332
    %v9075 = vpop.f32.mrb[0].mxu0
    %v9076 = vadd.f32 %v8883, %v9075
    %v9077 = vpop.f32.mrb[0].mxu0
    %v9078 = vadd.f32 %v8885, %v9077
    %v9079 = vpop.f32.mrb[0].mxu0
    %v9080 = vadd.f32 %v8887, %v9079
    %v9081 = vpop.f32.mrb[0].mxu0
    %v9082 = vadd.f32 %v8889, %v9081
    %9083 = vmatprep.mubr.bf16.mxu0 %v6341
    %9084 = vmatmul.mubr.bf16.gmra.mrb[0].mxu0 %v6340
    %v9085 = vpop.f32.mrb[0].mxu0
    %v9086 = vadd.f32 %v8893, %v9085
    %v9087 = vpop.f32.mrb[0].mxu0
    %v9088 = vadd.f32 %v8895, %v9087
    %v9089 = vpop.f32.mrb[0].mxu0
    %v9090 = vadd.f32 %v8897, %v9089
    %v9091 = vpop.f32.mrb[0].mxu0
    %v9092 = vadd.f32 %v8899, %v9091
    %9093 = vmatprep.mubr.bf16.mxu0 %v6349
    %9094 = vmatmul.mubr.bf16.gmra.mrb[0].mxu0 %v6348
    %v9095 = vpop.f32.mrb[0].mxu0
    %v9096 = vadd.f32 %v8903, %v9095
    %v9097 = vpop.f32.mrb[0].mxu0
    %v9098 = vadd.f32 %v8905, %v9097
    %v9099 = vpop.f32.mrb[0].mxu0
    %v9100 = vadd.f32 %v8907, %v9099
    %v9101 = vpop.f32.mrb[0].mxu0
    %v9102 = vadd.f32 %v8909, %v9101
    %9103 = vmatprep.mubr.bf16.mxu0 %v6357
    %9104 = vmatmul.mubr.bf16.gmra.mrb[0].mxu0 %v6356
    %v9105 = vpop.f32.mrb[0].mxu0
    %v9106 = vadd.f32 %v8913, %v9105
    %v9107 = vpop.f32.mrb[0].mxu0
    %v9108 = vadd.f32 %v8915, %v9107
    %v9109 = vpop.f32.mrb[0].mxu0
    %v9110 = vadd.f32 %v8917, %v9109
    %v9111 = vpop.f32.mrb[0].mxu0
    %v9112 = vadd.f32 %v8919, %v9111
    %9113 = vmatprep.mubr.bf16.mxu0 %v6365
    %9114 = vmatmul.mubr.bf16.gmra.mrb[0].mxu0 %v6364
    %v9115 = vpop.f32.mrb[0].mxu0
    %v9116 = vadd.f32 %v8923, %v9115
    %v9117 = vpop.f32.mrb[0].mxu0
    %v9118 = vadd.f32 %v8925, %v9117
    %v9119 = vpop.f32.mrb[0].mxu0
    %v9120 = vadd.f32 %v8927, %v9119
    %v9121 = vpop.f32.mrb[0].mxu0
    %v9122 = vadd.f32 %v8929, %v9121
    %9123 = vmatprep.mubr.bf16.mxu0 %v6373
    %9124 = vmatmul.mubr.bf16.gmra.mrb[0].mxu0 %v6372
    %v9125 = vpop.f32.mrb[0].mxu0
    %v9126 = vadd.f32 %v8933, %v9125
    %v9127 = vpop.f32.mrb[0].mxu0
    %v9128 = vadd.f32 %v8935, %v9127
    %v9129 = vpop.f32.mrb[0].mxu0
    %v9130 = vadd.f32 %v8937, %v9129
    %v9131 = vpop.f32.mrb[0].mxu0
    %v9132 = vadd.f32 %v8939, %v9131
    %9133 = vmatprep.mubr.bf16.mxu0 %v6381
    %9134 = vmatmul.mubr.bf16.gmra.mrb[0].mxu0 %v6380
    %v9135 = vpop.f32.mrb[0].mxu0
    %v9136 = vadd.f32 %v8943, %v9135
    %v9137 = vpop.f32.mrb[0].mxu0
    %v9138 = vadd.f32 %v8945, %v9137
    %v9139 = vpop.f32.mrb[0].mxu0
    %v9140 = vadd.f32 %v8947, %v9139
    %v9141 = vpop.f32.mrb[0].mxu0
    %v9142 = vadd.f32 %v8949, %v9141
    %9143 = vmatprep.mubr.bf16.mxu0 %v6389
    %9144 = vmatmul.mubr.bf16.gmra.mrb[0].mxu0 %v6388
    %v9145 = vpop.f32.mrb[0].mxu0
    %v9146 = vadd.f32 %v8953, %v9145
    %v9147 = vpop.f32.mrb[0].mxu0
    %v9148 = vadd.f32 %v8955, %v9147
    %v9149 = vpop.f32.mrb[0].mxu0
    %v9150 = vadd.f32 %v8957, %v9149
    %v9151 = vpop.f32.mrb[0].mxu0
    %v9152 = vadd.f32 %v8959, %v9151
    %9153 = vdwg.mxu0
    %9154 = vmatprep.subr.bf16.mxu0 0
    %9155 = vmatpush1.bf16.msra.mxu0 %v6396
    %9156 = vmatprep.subr.bf16.mxu0 0
    %9157 = vmatpush1.bf16.msra.mxu0 %v6403
    %9158 = vmatprep.subr.bf16.mxu0 0
    %9159 = vmatpush1.bf16.msra.mxu0 %v6410
    %9160 = vmatprep.subr.bf16.mxu0 0
    %9161 = vmatpush1.bf16.msra.mxu0 %v6417
    %9162 = vmatprep.subr.bf16.mxu0 0
    %9163 = vmatpush1.bf16.msra.mxu0 %v6424
    %9164 = vmatprep.subr.bf16.mxu0 0
    %9165 = vmatpush1.bf16.msra.mxu0 %v6431
    %9166 = vmatprep.subr.bf16.mxu0 0
    %9167 = vmatpush1.bf16.msra.mxu0 %v6438
    %9168 = vmatprep.subr.bf16.mxu0 0
    %9169 = vmatpush1.bf16.msra.mxu0 %v6445
    %9170 = vmatprep.subr.bf16.mxu0 0
    %9171 = vmatpush1.bf16.msra.mxu0 %v6452
    %9172 = vmatprep.subr.bf16.mxu0 0
    %9173 = vmatpush1.bf16.msra.mxu0 %v6459
    %9174 = vmatprep.subr.bf16.mxu0 0
    %9175 = vmatpush1.bf16.msra.mxu0 %v6466
    %9176 = vmatprep.subr.bf16.mxu0 0
    %9177 = vmatpush1.bf16.msra.mxu0 %v6473
    %9178 = vmatprep.subr.bf16.mxu0 0
    %9179 = vmatpush1.bf16.msra.mxu0 %v6480
    %9180 = vmatprep.subr.bf16.mxu0 0
    %9181 = vmatpush1.bf16.msra.mxu0 %v6487
    %9182 = vmatprep.subr.bf16.mxu0 0
    %9183 = vmatpush1.bf16.msra.mxu0 %v6494
    %9184 = vmatprep.subr.bf16.mxu0 0
    %9185 = vmatpush1.bf16.msra.mxu0 %v6501
    %9186 = vmatprep.mubr.bf16.mxu0 %v6263
    %9187 = vmatmul.mubr.bf16.gmra.mrb[0].mxu0 %v6262
    %v9188 = vpop.f32.mrb[0].mxu0
    %v9189 = vadd.f32 0.0, %v9188
    %v9190 = vpop.f32.mrb[0].mxu0
    %v9191 = vpop.f32.mrb[0].mxu0
    %v9192 = vadd.f32 0.0, %v9191
    %v9193 = vpop.f32.mrb[0].mxu0
    %9194 = vmatprep.mubr.bf16.mxu0 %v6271
    %9195 = vmatmul.mubr.bf16.gmra.mrb[0].mxu0 %v6270
    %v9196 = vpop.f32.mrb[0].mxu0
    %v9197 = vadd.f32 0.0, %v9196
    %v9198 = vpop.f32.mrb[0].mxu0
    %v9199 = vpop.f32.mrb[0].mxu0
    %v9200 = vadd.f32 0.0, %v9199
    %v9201 = vpop.f32.mrb[0].mxu0
    %9202 = vmatprep.mubr.bf16.mxu0 %v6279
    %9203 = vmatmul.mubr.bf16.gmra.mrb[0].mxu0 %v6278
    %v9204 = vpop.f32.mrb[0].mxu0
    %v9205 = vadd.f32 0.0, %v9204
    %v9206 = vpop.f32.mrb[0].mxu0
    %v9207 = vpop.f32.mrb[0].mxu0
    %v9208 = vadd.f32 0.0, %v9207
    %v9209 = vpop.f32.mrb[0].mxu0
    %9210 = vmatprep.mubr.bf16.mxu0 %v6287
    %9211 = vmatmul.mubr.bf16.gmra.mrb[0].mxu0 %v6286
    %v9212 = vpop.f32.mrb[0].mxu0
    %v9213 = vadd.f32 0.0, %v9212
    %v9214 = vpop.f32.mrb[0].mxu0
    %v9215 = vpop.f32.mrb[0].mxu0
    %v9216 = vadd.f32 0.0, %v9215
    %v9217 = vpop.f32.mrb[0].mxu0
    %9218 = vmatprep.mubr.bf16.mxu0 %v6295
    %9219 = vmatmul.mubr.bf16.gmra.mrb[0].mxu0 %v6294
    %v9220 = vpop.f32.mrb[0].mxu0
    %v9221 = vadd.f32 0.0, %v9220
    %v9222 = vpop.f32.mrb[0].mxu0
    %v9223 = vpop.f32.mrb[0].mxu0
    %v9224 = vadd.f32 0.0, %v9223
    %v9225 = vpop.f32.mrb[0].mxu0
    %9226 = vmatprep.mubr.bf16.mxu0 %v6303
    %9227 = vmatmul.mubr.bf16.gmra.mrb[0].mxu0 %v6302
    %v9228 = vpop.f32.mrb[0].mxu0
    %v9229 = vadd.f32 0.0, %v9228
    %v9230 = vpop.f32.mrb[0].mxu0
    %v9231 = vpop.f32.mrb[0].mxu0
    %v9232 = vadd.f32 0.0, %v9231
    %v9233 = vpop.f32.mrb[0].mxu0
    %9234 = vmatprep.mubr.bf16.mxu0 %v6311
    %9235 = vmatmul.mubr.bf16.gmra.mrb[0].mxu0 %v6310
    %v9236 = vpop.f32.mrb[0].mxu0
    %v9237 = vadd.f32 0.0, %v9236
    %v9238 = vpop.f32.mrb[0].mxu0
    %v9239 = vpop.f32.mrb[0].mxu0
    %v9240 = vadd.f32 0.0, %v9239
    %v9241 = vpop.f32.mrb[0].mxu0
    %9242 = vmatprep.mubr.bf16.mxu0 %v6319
    %9243 = vmatmul.mubr.bf16.gmra.mrb[0].mxu0 %v6318
    %v9244 = vpop.f32.mrb[0].mxu0
    %v9245 = vadd.f32 0.0, %v9244
    %v9246 = vpop.f32.mrb[0].mxu0
    %v9247 = vpop.f32.mrb[0].mxu0
    %v9248 = vadd.f32 0.0, %v9247
    %v9249 = vpop.f32.mrb[0].mxu0
    %9250 = vmatprep.mubr.bf16.mxu0 %v6327
    %9251 = vmatmul.mubr.bf16.gmra.mrb[0].mxu0 %v6326
    %v9252 = vpop.f32.mrb[0].mxu0
    %v9253 = vadd.f32 0.0, %v9252
    %v9254 = vpop.f32.mrb[0].mxu0
    %v9255 = vpop.f32.mrb[0].mxu0
    %v9256 = vadd.f32 0.0, %v9255
    %v9257 = vpop.f32.mrb[0].mxu0
    %9258 = vmatprep.mubr.bf16.mxu0 %v6335
    %9259 = vmatmul.mubr.bf16.gmra.mrb[0].mxu0 %v6334
    %v9260 = vpop.f32.mrb[0].mxu0
    %v9261 = vadd.f32 0.0, %v9260
    %v9262 = vpop.f32.mrb[0].mxu0
    %v9263 = vpop.f32.mrb[0].mxu0
    %v9264 = vadd.f32 0.0, %v9263
    %v9265 = vpop.f32.mrb[0].mxu0
    %9266 = vmatprep.mubr.bf16.mxu0 %v6343
    %9267 = vmatmul.mubr.bf16.gmra.mrb[0].mxu0 %v6342
    %v9268 = vpop.f32.mrb[0].mxu0
    %v9269 = vadd.f32 0.0, %v9268
    %v9270 = vpop.f32.mrb[0].mxu0
    %v9271 = vpop.f32.mrb[0].mxu0
    %v9272 = vadd.f32 0.0, %v9271
    %v9273 = vpop.f32.mrb[0].mxu0
    %9274 = vmatprep.mubr.bf16.mxu0 %v6351
    %9275 = vmatmul.mubr.bf16.gmra.mrb[0].mxu0 %v6350
    %v9276 = vpop.f32.mrb[0].mxu0
    %v9277 = vadd.f32 0.0, %v9276
    %v9278 = vpop.f32.mrb[0].mxu0
    %v9279 = vpop.f32.mrb[0].mxu0
    %v9280 = vadd.f32 0.0, %v9279
    %v9281 = vpop.f32.mrb[0].mxu0
    %9282 = vmatprep.mubr.bf16.mxu0 %v6359
    %9283 = vmatmul.mubr.bf16.gmra.mrb[0].mxu0 %v6358
    %v9284 = vpop.f32.mrb[0].mxu0
    %v9285 = vadd.f32 0.0, %v9284
    %v9286 = vpop.f32.mrb[0].mxu0
    %v9287 = vpop.f32.mrb[0].mxu0
    %v9288 = vadd.f32 0.0, %v9287
    %v9289 = vpop.f32.mrb[0].mxu0
    %9290 = vmatprep.mubr.bf16.mxu0 %v6367
    %9291 = vmatmul.mubr.bf16.gmra.mrb[0].mxu0 %v6366
    %v9292 = vpop.f32.mrb[0].mxu0
    %v9293 = vadd.f32 0.0, %v9292
    %v9294 = vpop.f32.mrb[0].mxu0
    %v9295 = vpop.f32.mrb[0].mxu0
    %v9296 = vadd.f32 0.0, %v9295
    %v9297 = vpop.f32.mrb[0].mxu0
    %9298 = vmatprep.mubr.bf16.mxu0 %v6375
    %9299 = vmatmul.mubr.bf16.gmra.mrb[0].mxu0 %v6374
    %v9300 = vpop.f32.mrb[0].mxu0
    %v9301 = vadd.f32 0.0, %v9300
    %v9302 = vpop.f32.mrb[0].mxu0
    %v9303 = vpop.f32.mrb[0].mxu0
    %v9304 = vadd.f32 0.0, %v9303
    %v9305 = vpop.f32.mrb[0].mxu0
    %9306 = vmatprep.mubr.bf16.mxu0 %v6383
    %9307 = vmatmul.mubr.bf16.gmra.mrb[0].mxu0 %v6382
    %v9308 = vpop.f32.mrb[0].mxu0
    %v9309 = vadd.f32 0.0, %v9308
    %v9310 = vpop.f32.mrb[0].mxu0
    %v9311 = vpop.f32.mrb[0].mxu0
    %v9312 = vadd.f32 0.0, %v9311
    %v9313 = vpop.f32.mrb[0].mxu0
    %9314 = vdwg.mxu0
    %9315 = vmatprep.subr.bf16.mxu0 0
    %9316 = vmatpush1.bf16.msra.mxu0 %v6508
    %9317 = vmatprep.subr.bf16.mxu0 0
    %9318 = vmatpush1.bf16.msra.mxu0 %v6515
    %9319 = vmatprep.subr.bf16.mxu0 0
    %9320 = vmatpush1.bf16.msra.mxu0 %v6522
    %9321 = vmatprep.subr.bf16.mxu0 0
    %9322 = vmatpush1.bf16.msra.mxu0 %v6529
    %9323 = vmatprep.subr.bf16.mxu0 0
    %9324 = vmatpush1.bf16.msra.mxu0 %v6536
    %9325 = vmatprep.subr.bf16.mxu0 0
    %9326 = vmatpush1.bf16.msra.mxu0 %v6543
    %9327 = vmatprep.subr.bf16.mxu0 0
    %9328 = vmatpush1.bf16.msra.mxu0 %v6550
    %9329 = vmatprep.subr.bf16.mxu0 0
    %9330 = vmatpush1.bf16.msra.mxu0 %v6557
    %9331 = vmatprep.subr.bf16.mxu0 0
    %9332 = vmatpush1.bf16.msra.mxu0 %v6564
    %9333 = vmatprep.subr.bf16.mxu0 0
    %9334 = vmatpush1.bf16.msra.mxu0 %v6571
    %9335 = vmatprep.subr.bf16.mxu0 0
    %9336 = vmatpush1.bf16.msra.mxu0 %v6578
    %9337 = vmatprep.subr.bf16.mxu0 0
    %9338 = vmatpush1.bf16.msra.mxu0 %v6585
    %9339 = vmatprep.subr.bf16.mxu0 0
    %9340 = vmatpush1.bf16.msra.mxu0 %v6592
    %9341 = vmatprep.subr.bf16.mxu0 0
    %9342 = vmatpush1.bf16.msra.mxu0 %v6599
    %9343 = vmatprep.subr.bf16.mxu0 0
    %9344 = vmatpush1.bf16.msra.mxu0 %v6606
    %9345 = vmatprep.subr.bf16.mxu0 0
    %9346 = vmatpush1.bf16.msra.mxu0 %v6613
    %9347 = vmatprep.mubr.bf16.mxu0 %v6265
    %9348 = vmatmul.mubr.bf16.gmra.mrb[0].mxu0 %v6264
    %v9349 = vpop.f32.mrb[0].mxu0
    %v9350 = vadd.f32 %v9189, %v9349
    %v9351 = vpop.f32.mrb[0].mxu0
    %v9352 = vpop.f32.mrb[0].mxu0
    %v9353 = vadd.f32 %v9192, %v9352
    %v9354 = vpop.f32.mrb[0].mxu0
    %9355 = vmatprep.mubr.bf16.mxu0 %v6273
    %9356 = vmatmul.mubr.bf16.gmra.mrb[0].mxu0 %v6272
    %v9357 = vpop.f32.mrb[0].mxu0
    %v9358 = vadd.f32 %v9197, %v9357
    %v9359 = vpop.f32.mrb[0].mxu0
    %v9360 = vpop.f32.mrb[0].mxu0
    %v9361 = vadd.f32 %v9200, %v9360
    %v9362 = vpop.f32.mrb[0].mxu0
    %9363 = vmatprep.mubr.bf16.mxu0 %v6281
    %9364 = vmatmul.mubr.bf16.gmra.mrb[0].mxu0 %v6280
    %v9365 = vpop.f32.mrb[0].mxu0
    %v9366 = vadd.f32 %v9205, %v9365
    %v9367 = vpop.f32.mrb[0].mxu0
    %v9368 = vpop.f32.mrb[0].mxu0
    %v9369 = vadd.f32 %v9208, %v9368
    %v9370 = vpop.f32.mrb[0].mxu0
    %9371 = vmatprep.mubr.bf16.mxu0 %v6289
    %9372 = vmatmul.mubr.bf16.gmra.mrb[0].mxu0 %v6288
    %v9373 = vpop.f32.mrb[0].mxu0
    %v9374 = vadd.f32 %v9213, %v9373
    %v9375 = vpop.f32.mrb[0].mxu0
    %v9376 = vpop.f32.mrb[0].mxu0
    %v9377 = vadd.f32 %v9216, %v9376
    %v9378 = vpop.f32.mrb[0].mxu0
    %9379 = vmatprep.mubr.bf16.mxu0 %v6297
    %9380 = vmatmul.mubr.bf16.gmra.mrb[0].mxu0 %v6296
    %v9381 = vpop.f32.mrb[0].mxu0
    %v9382 = vadd.f32 %v9221, %v9381
    %v9383 = vpop.f32.mrb[0].mxu0
    %v9384 = vpop.f32.mrb[0].mxu0
    %v9385 = vadd.f32 %v9224, %v9384
    %v9386 = vpop.f32.mrb[0].mxu0
    %9387 = vmatprep.mubr.bf16.mxu0 %v6305
    %9388 = vmatmul.mubr.bf16.gmra.mrb[0].mxu0 %v6304
    %v9389 = vpop.f32.mrb[0].mxu0
    %v9390 = vadd.f32 %v9229, %v9389
    %v9391 = vpop.f32.mrb[0].mxu0
    %v9392 = vpop.f32.mrb[0].mxu0
    %v9393 = vadd.f32 %v9232, %v9392
    %v9394 = vpop.f32.mrb[0].mxu0
    %9395 = vmatprep.mubr.bf16.mxu0 %v6313
    %9396 = vmatmul.mubr.bf16.gmra.mrb[0].mxu0 %v6312
    %v9397 = vpop.f32.mrb[0].mxu0
    %v9398 = vadd.f32 %v9237, %v9397
    %v9399 = vpop.f32.mrb[0].mxu0
    %v9400 = vpop.f32.mrb[0].mxu0
    %v9401 = vadd.f32 %v9240, %v9400
    %v9402 = vpop.f32.mrb[0].mxu0
    %9403 = vmatprep.mubr.bf16.mxu0 %v6321
    %9404 = vmatmul.mubr.bf16.gmra.mrb[0].mxu0 %v6320
    %v9405 = vpop.f32.mrb[0].mxu0
    %v9406 = vadd.f32 %v9245, %v9405
    %v9407 = vpop.f32.mrb[0].mxu0
    %v9408 = vpop.f32.mrb[0].mxu0
    %v9409 = vadd.f32 %v9248, %v9408
    %v9410 = vpop.f32.mrb[0].mxu0
    %9411 = vmatprep.mubr.bf16.mxu0 %v6329
    %9412 = vmatmul.mubr.bf16.gmra.mrb[0].mxu0 %v6328
    %v9413 = vpop.f32.mrb[0].mxu0
    %v9414 = vadd.f32 %v9253, %v9413
    %v9415 = vpop.f32.mrb[0].mxu0
    %v9416 = vpop.f32.mrb[0].mxu0
    %v9417 = vadd.f32 %v9256, %v9416
    %v9418 = vpop.f32.mrb[0].mxu0
    %9419 = vmatprep.mubr.bf16.mxu0 %v6337
    %9420 = vmatmul.mubr.bf16.gmra.mrb[0].mxu0 %v6336
    %v9421 = vpop.f32.mrb[0].mxu0
    %v9422 = vadd.f32 %v9261, %v9421
    %v9423 = vpop.f32.mrb[0].mxu0
    %v9424 = vpop.f32.mrb[0].mxu0
    %v9425 = vadd.f32 %v9264, %v9424
    %v9426 = vpop.f32.mrb[0].mxu0
    %9427 = vmatprep.mubr.bf16.mxu0 %v6345
    %9428 = vmatmul.mubr.bf16.gmra.mrb[0].mxu0 %v6344
    %v9429 = vpop.f32.mrb[0].mxu0
    %v9430 = vadd.f32 %v9269, %v9429
    %v9431 = vpop.f32.mrb[0].mxu0
    %v9432 = vpop.f32.mrb[0].mxu0
    %v9433 = vadd.f32 %v9272, %v9432
    %v9434 = vpop.f32.mrb[0].mxu0
    %9435 = vmatprep.mubr.bf16.mxu0 %v6353
    %9436 = vmatmul.mubr.bf16.gmra.mrb[0].mxu0 %v6352
    %v9437 = vpop.f32.mrb[0].mxu0
    %v9438 = vadd.f32 %v9277, %v9437
    %v9439 = vpop.f32.mrb[0].mxu0
    %v9440 = vpop.f32.mrb[0].mxu0
    %v9441 = vadd.f32 %v9280, %v9440
    %v9442 = vpop.f32.mrb[0].mxu0
    %9443 = vmatprep.mubr.bf16.mxu0 %v6361
    %9444 = vmatmul.mubr.bf16.gmra.mrb[0].mxu0 %v6360
    %v9445 = vpop.f32.mrb[0].mxu0
    %v9446 = vadd.f32 %v9285, %v9445
    %v9447 = vpop.f32.mrb[0].mxu0
    %v9448 = vpop.f32.mrb[0].mxu0
    %v9449 = vadd.f32 %v9288, %v9448
    %v9450 = vpop.f32.mrb[0].mxu0
    %9451 = vmatprep.mubr.bf16.mxu0 %v6369
    %9452 = vmatmul.mubr.bf16.gmra.mrb[0].mxu0 %v6368
    %v9453 = vpop.f32.mrb[0].mxu0
    %v9454 = vadd.f32 %v9293, %v9453
    %v9455 = vpop.f32.mrb[0].mxu0
    %v9456 = vpop.f32.mrb[0].mxu0
    %v9457 = vadd.f32 %v9296, %v9456
    %v9458 = vpop.f32.mrb[0].mxu0
    %9459 = vmatprep.mubr.bf16.mxu0 %v6377
    %9460 = vmatmul.mubr.bf16.gmra.mrb[0].mxu0 %v6376
    %v9461 = vpop.f32.mrb[0].mxu0
    %v9462 = vadd.f32 %v9301, %v9461
    %v9463 = vpop.f32.mrb[0].mxu0
    %v9464 = vpop.f32.mrb[0].mxu0
    %v9465 = vadd.f32 %v9304, %v9464
    %v9466 = vpop.f32.mrb[0].mxu0
    %9467 = vmatprep.mubr.bf16.mxu0 %v6385
    %9468 = vmatmul.mubr.bf16.gmra.mrb[0].mxu0 %v6384
    %v9469 = vpop.f32.mrb[0].mxu0
    %v9470 = vadd.f32 %v9309, %v9469
    %v9471 = vpop.f32.mrb[0].mxu0
    %v9472 = vpop.f32.mrb[0].mxu0
    %v9473 = vadd.f32 %v9312, %v9472
    %v9474 = vpop.f32.mrb[0].mxu0
    %9475 = vdwg.mxu0
    %9476 = vmatprep.subr.bf16.mxu0 0
    %9477 = vmatpush1.bf16.msra.mxu0 %v6620
    %9478 = vmatprep.subr.bf16.mxu0 0
    %9479 = vmatpush1.bf16.msra.mxu0 %v6627
    %9480 = vmatprep.subr.bf16.mxu0 0
    %9481 = vmatpush1.bf16.msra.mxu0 %v6634
    %9482 = vmatprep.subr.bf16.mxu0 0
    %9483 = vmatpush1.bf16.msra.mxu0 %v6641
    %9484 = vmatprep.subr.bf16.mxu0 0
    %9485 = vmatpush1.bf16.msra.mxu0 %v6648
    %9486 = vmatprep.subr.bf16.mxu0 0
    %9487 = vmatpush1.bf16.msra.mxu0 %v6655
    %9488 = vmatprep.subr.bf16.mxu0 0
    %9489 = vmatpush1.bf16.msra.mxu0 %v6662
    %9490 = vmatprep.subr.bf16.mxu0 0
    %9491 = vmatpush1.bf16.msra.mxu0 %v6669
    %9492 = vmatprep.subr.bf16.mxu0 0
    %9493 = vmatpush1.bf16.msra.mxu0 %v6676
    %9494 = vmatprep.subr.bf16.mxu0 0
    %9495 = vmatpush1.bf16.msra.mxu0 %v6683
    %9496 = vmatprep.subr.bf16.mxu0 0
    %9497 = vmatpush1.bf16.msra.mxu0 %v6690
    %9498 = vmatprep.subr.bf16.mxu0 0
    %9499 = vmatpush1.bf16.msra.mxu0 %v6697
    %9500 = vmatprep.subr.bf16.mxu0 0
    %9501 = vmatpush1.bf16.msra.mxu0 %v6704
    %9502 = vmatprep.subr.bf16.mxu0 0
    %9503 = vmatpush1.bf16.msra.mxu0 %v6711
    %9504 = vmatprep.subr.bf16.mxu0 0
    %9505 = vmatpush1.bf16.msra.mxu0 %v6718
    %9506 = vmatprep.subr.bf16.mxu0 0
    %9507 = vmatpush1.bf16.msra.mxu0 %v6725
    %9508 = vmatprep.mubr.bf16.mxu0 %v6267
    %9509 = vmatmul.mubr.bf16.gmra.mrb[0].mxu0 %v6266
    %v9510 = vpop.f32.mrb[0].mxu0
    %v9511 = vadd.f32 %v9350, %v9510
    %v9512 = vpop.f32.mrb[0].mxu0
    %v9513 = vpop.f32.mrb[0].mxu0
    %v9514 = vadd.f32 %v9353, %v9513
    %v9515 = vpop.f32.mrb[0].mxu0
    %9516 = vmatprep.mubr.bf16.mxu0 %v6275
    %9517 = vmatmul.mubr.bf16.gmra.mrb[0].mxu0 %v6274
    %v9518 = vpop.f32.mrb[0].mxu0
    %v9519 = vadd.f32 %v9358, %v9518
    %v9520 = vpop.f32.mrb[0].mxu0
    %v9521 = vpop.f32.mrb[0].mxu0
    %v9522 = vadd.f32 %v9361, %v9521
    %v9523 = vpop.f32.mrb[0].mxu0
    %9524 = vmatprep.mubr.bf16.mxu0 %v6283
    %9525 = vmatmul.mubr.bf16.gmra.mrb[0].mxu0 %v6282
    %v9526 = vpop.f32.mrb[0].mxu0
    %v9527 = vadd.f32 %v9366, %v9526
    %v9528 = vpop.f32.mrb[0].mxu0
    %v9529 = vpop.f32.mrb[0].mxu0
    %v9530 = vadd.f32 %v9369, %v9529
    %v9531 = vpop.f32.mrb[0].mxu0
    %9532 = vmatprep.mubr.bf16.mxu0 %v6291
    %9533 = vmatmul.mubr.bf16.gmra.mrb[0].mxu0 %v6290
    %v9534 = vpop.f32.mrb[0].mxu0
    %v9535 = vadd.f32 %v9374, %v9534
    %v9536 = vpop.f32.mrb[0].mxu0
    %v9537 = vpop.f32.mrb[0].mxu0
    %v9538 = vadd.f32 %v9377, %v9537
    %v9539 = vpop.f32.mrb[0].mxu0
    %9540 = vmatprep.mubr.bf16.mxu0 %v6299
    %9541 = vmatmul.mubr.bf16.gmra.mrb[0].mxu0 %v6298
    %v9542 = vpop.f32.mrb[0].mxu0
    %v9543 = vadd.f32 %v9382, %v9542
    %v9544 = vpop.f32.mrb[0].mxu0
    %v9545 = vpop.f32.mrb[0].mxu0
    %v9546 = vadd.f32 %v9385, %v9545
    %v9547 = vpop.f32.mrb[0].mxu0
    %9548 = vmatprep.mubr.bf16.mxu0 %v6307
    %9549 = vmatmul.mubr.bf16.gmra.mrb[0].mxu0 %v6306
    %v9550 = vpop.f32.mrb[0].mxu0
    %v9551 = vadd.f32 %v9390, %v9550
    %v9552 = vpop.f32.mrb[0].mxu0
    %v9553 = vpop.f32.mrb[0].mxu0
    %v9554 = vadd.f32 %v9393, %v9553
    %v9555 = vpop.f32.mrb[0].mxu0
    %9556 = vmatprep.mubr.bf16.mxu0 %v6315
    %9557 = vmatmul.mubr.bf16.gmra.mrb[0].mxu0 %v6314
    %v9558 = vpop.f32.mrb[0].mxu0
    %v9559 = vadd.f32 %v9398, %v9558
    %v9560 = vpop.f32.mrb[0].mxu0
    %v9561 = vpop.f32.mrb[0].mxu0
    %v9562 = vadd.f32 %v9401, %v9561
    %v9563 = vpop.f32.mrb[0].mxu0
    %9564 = vmatprep.mubr.bf16.mxu0 %v6323
    %9565 = vmatmul.mubr.bf16.gmra.mrb[0].mxu0 %v6322
    %v9566 = vpop.f32.mrb[0].mxu0
    %v9567 = vadd.f32 %v9406, %v9566
    %v9568 = vpop.f32.mrb[0].mxu0
    %v9569 = vpop.f32.mrb[0].mxu0
    %v9570 = vadd.f32 %v9409, %v9569
    %v9571 = vpop.f32.mrb[0].mxu0
    %9572 = vmatprep.mubr.bf16.mxu0 %v6331
    %9573 = vmatmul.mubr.bf16.gmra.mrb[0].mxu0 %v6330
    %v9574 = vpop.f32.mrb[0].mxu0
    %v9575 = vadd.f32 %v9414, %v9574
    %v9576 = vpop.f32.mrb[0].mxu0
    %v9577 = vpop.f32.mrb[0].mxu0
    %v9578 = vadd.f32 %v9417, %v9577
    %v9579 = vpop.f32.mrb[0].mxu0
    %9580 = vmatprep.mubr.bf16.mxu0 %v6339
    %9581 = vmatmul.mubr.bf16.gmra.mrb[0].mxu0 %v6338
    %v9582 = vpop.f32.mrb[0].mxu0
    %v9583 = vadd.f32 %v9422, %v9582
    %v9584 = vpop.f32.mrb[0].mxu0
    %v9585 = vpop.f32.mrb[0].mxu0
    %v9586 = vadd.f32 %v9425, %v9585
    %v9587 = vpop.f32.mrb[0].mxu0
    %9588 = vmatprep.mubr.bf16.mxu0 %v6347
    %9589 = vmatmul.mubr.bf16.gmra.mrb[0].mxu0 %v6346
    %v9590 = vpop.f32.mrb[0].mxu0
    %v9591 = vadd.f32 %v9430, %v9590
    %v9592 = vpop.f32.mrb[0].mxu0
    %v9593 = vpop.f32.mrb[0].mxu0
    %v9594 = vadd.f32 %v9433, %v9593
    %v9595 = vpop.f32.mrb[0].mxu0
    %9596 = vmatprep.mubr.bf16.mxu0 %v6355
    %9597 = vmatmul.mubr.bf16.gmra.mrb[0].mxu0 %v6354
    %v9598 = vpop.f32.mrb[0].mxu0
    %v9599 = vadd.f32 %v9438, %v9598
    %v9600 = vpop.f32.mrb[0].mxu0
    %v9601 = vpop.f32.mrb[0].mxu0
    %v9602 = vadd.f32 %v9441, %v9601
    %v9603 = vpop.f32.mrb[0].mxu0
    %9604 = vmatprep.mubr.bf16.mxu0 %v6363
    %9605 = vmatmul.mubr.bf16.gmra.mrb[0].mxu0 %v6362
    %v9606 = vpop.f32.mrb[0].mxu0
    %v9607 = vadd.f32 %v9446, %v9606
    %v9608 = vpop.f32.mrb[0].mxu0
    %v9609 = vpop.f32.mrb[0].mxu0
    %v9610 = vadd.f32 %v9449, %v9609
    %v9611 = vpop.f32.mrb[0].mxu0
    %9612 = vmatprep.mubr.bf16.mxu0 %v6371
    %9613 = vmatmul.mubr.bf16.gmra.mrb[0].mxu0 %v6370
    %v9614 = vpop.f32.mrb[0].mxu0
    %v9615 = vadd.f32 %v9454, %v9614
    %v9616 = vpop.f32.mrb[0].mxu0
    %v9617 = vpop.f32.mrb[0].mxu0
    %v9618 = vadd.f32 %v9457, %v9617
    %v9619 = vpop.f32.mrb[0].mxu0
    %9620 = vmatprep.mubr.bf16.mxu0 %v6379
    %9621 = vmatmul.mubr.bf16.gmra.mrb[0].mxu0 %v6378
    %v9622 = vpop.f32.mrb[0].mxu0
    %v9623 = vadd.f32 %v9462, %v9622
    %v9624 = vpop.f32.mrb[0].mxu0
    %v9625 = vpop.f32.mrb[0].mxu0
    %v9626 = vadd.f32 %v9465, %v9625
    %v9627 = vpop.f32.mrb[0].mxu0
    %9628 = vmatprep.mubr.bf16.mxu0 %v6387
    %9629 = vmatmul.mubr.bf16.gmra.mrb[0].mxu0 %v6386
    %v9630 = vpop.f32.mrb[0].mxu0
    %v9631 = vadd.f32 %v9470, %v9630
    %v9632 = vpop.f32.mrb[0].mxu0
    %v9633 = vpop.f32.mrb[0].mxu0
    %v9634 = vadd.f32 %v9473, %v9633
    %v9635 = vpop.f32.mrb[0].mxu0
    %9636 = vdwg.mxu0
    %9637 = vmatprep.subr.bf16.mxu0 0
    %9638 = vmatpush1.bf16.msra.mxu0 %v6732
    %9639 = vmatprep.subr.bf16.mxu0 0
    %9640 = vmatpush1.bf16.msra.mxu0 %v6739
    %9641 = vmatprep.subr.bf16.mxu0 0
    %9642 = vmatpush1.bf16.msra.mxu0 %v6746
    %9643 = vmatprep.subr.bf16.mxu0 0
    %9644 = vmatpush1.bf16.msra.mxu0 %v6753
    %9645 = vmatprep.subr.bf16.mxu0 0
    %9646 = vmatpush1.bf16.msra.mxu0 %v6760
    %9647 = vmatprep.subr.bf16.mxu0 0
    %9648 = vmatpush1.bf16.msra.mxu0 %v6767
    %9649 = vmatprep.subr.bf16.mxu0 0
    %9650 = vmatpush1.bf16.msra.mxu0 %v6774
    %9651 = vmatprep.subr.bf16.mxu0 0
    %9652 = vmatpush1.bf16.msra.mxu0 %v6781
    %9653 = vmatprep.subr.bf16.mxu0 0
    %9654 = vmatpush1.bf16.msra.mxu0 %v6788
    %9655 = vmatprep.subr.bf16.mxu0 0
    %9656 = vmatpush1.bf16.msra.mxu0 %v6795
    %9657 = vmatprep.subr.bf16.mxu0 0
    %9658 = vmatpush1.bf16.msra.mxu0 %v6802
    %9659 = vmatprep.subr.bf16.mxu0 0
    %9660 = vmatpush1.bf16.msra.mxu0 %v6809
    %9661 = vmatprep.subr.bf16.mxu0 0
    %9662 = vmatpush1.bf16.msra.mxu0 %v6816
    %9663 = vmatprep.subr.bf16.mxu0 0
    %9664 = vmatpush1.bf16.msra.mxu0 %v6823
    %9665 = vmatprep.subr.bf16.mxu0 0
    %9666 = vmatpush1.bf16.msra.mxu0 %v6830
    %9667 = vmatprep.subr.bf16.mxu0 0
    %9668 = vmatpush1.bf16.msra.mxu0 %v6837
    %9669 = vmatprep.mubr.bf16.mxu0 %v6269
    %9670 = vmatmul.mubr.bf16.gmra.mrb[0].mxu0 %v6268
    %v9671 = vpop.f32.mrb[0].mxu0
    %v9672 = vadd.f32 %v9511, %v9671
    %v9673 = vpop.f32.mrb[0].mxu0
    %v9674 = vpop.f32.mrb[0].mxu0
    %v9675 = vadd.f32 %v9514, %v9674
    %v9676 = vpop.f32.mrb[0].mxu0
    %9677 = vmatprep.mubr.bf16.mxu0 %v6277
    %9678 = vmatmul.mubr.bf16.gmra.mrb[0].mxu0 %v6276
    %v9679 = vpop.f32.mrb[0].mxu0
    %v9680 = vadd.f32 %v9519, %v9679
    %v9681 = vpop.f32.mrb[0].mxu0
    %v9682 = vpop.f32.mrb[0].mxu0
    %v9683 = vadd.f32 %v9522, %v9682
    %v9684 = vpop.f32.mrb[0].mxu0
    %9685 = vmatprep.mubr.bf16.mxu0 %v6285
    %9686 = vmatmul.mubr.bf16.gmra.mrb[0].mxu0 %v6284
    %v9687 = vpop.f32.mrb[0].mxu0
    %v9688 = vadd.f32 %v9527, %v9687
    %v9689 = vpop.f32.mrb[0].mxu0
    %v9690 = vpop.f32.mrb[0].mxu0
    %v9691 = vadd.f32 %v9530, %v9690
    %v9692 = vpop.f32.mrb[0].mxu0
    %9693 = vmatprep.mubr.bf16.mxu0 %v6293
    %9694 = vmatmul.mubr.bf16.gmra.mrb[0].mxu0 %v6292
    %v9695 = vpop.f32.mrb[0].mxu0
    %v9696 = vadd.f32 %v9535, %v9695
    %v9697 = vpop.f32.mrb[0].mxu0
    %v9698 = vpop.f32.mrb[0].mxu0
    %v9699 = vadd.f32 %v9538, %v9698
    %v9700 = vpop.f32.mrb[0].mxu0
    %9701 = vmatprep.mubr.bf16.mxu0 %v6301
    %9702 = vmatmul.mubr.bf16.gmra.mrb[0].mxu0 %v6300
    %v9703 = vpop.f32.mrb[0].mxu0
    %v9704 = vadd.f32 %v9543, %v9703
    %v9705 = vpop.f32.mrb[0].mxu0
    %v9706 = vpop.f32.mrb[0].mxu0
    %v9707 = vadd.f32 %v9546, %v9706
    %v9708 = vpop.f32.mrb[0].mxu0
    %9709 = vmatprep.mubr.bf16.mxu0 %v6309
    %9710 = vmatmul.mubr.bf16.gmra.mrb[0].mxu0 %v6308
    %v9711 = vpop.f32.mrb[0].mxu0
    %v9712 = vadd.f32 %v9551, %v9711
    %v9713 = vpop.f32.mrb[0].mxu0
    %v9714 = vpop.f32.mrb[0].mxu0
    %v9715 = vadd.f32 %v9554, %v9714
    %v9716 = vpop.f32.mrb[0].mxu0
    %9717 = vmatprep.mubr.bf16.mxu0 %v6317
    %9718 = vmatmul.mubr.bf16.gmra.mrb[0].mxu0 %v6316
    %v9719 = vpop.f32.mrb[0].mxu0
    %v9720 = vadd.f32 %v9559, %v9719
    %v9721 = vpop.f32.mrb[0].mxu0
    %v9722 = vpop.f32.mrb[0].mxu0
    %v9723 = vadd.f32 %v9562, %v9722
    %v9724 = vpop.f32.mrb[0].mxu0
    %9725 = vmatprep.mubr.bf16.mxu0 %v6325
    %9726 = vmatmul.mubr.bf16.gmra.mrb[0].mxu0 %v6324
    %v9727 = vpop.f32.mrb[0].mxu0
    %v9728 = vadd.f32 %v9567, %v9727
    %v9729 = vpop.f32.mrb[0].mxu0
    %v9730 = vpop.f32.mrb[0].mxu0
    %v9731 = vadd.f32 %v9570, %v9730
    %v9732 = vpop.f32.mrb[0].mxu0
    %9733 = vmatprep.mubr.bf16.mxu0 %v6333
    %9734 = vmatmul.mubr.bf16.gmra.mrb[0].mxu0 %v6332
    %v9735 = vpop.f32.mrb[0].mxu0
    %v9736 = vadd.f32 %v9575, %v9735
    %v9737 = vpop.f32.mrb[0].mxu0
    %v9738 = vpop.f32.mrb[0].mxu0
    %v9739 = vadd.f32 %v9578, %v9738
    %v9740 = vpop.f32.mrb[0].mxu0
    %9741 = vmatprep.mubr.bf16.mxu0 %v6341
    %9742 = vmatmul.mubr.bf16.gmra.mrb[0].mxu0 %v6340
    %v9743 = vpop.f32.mrb[0].mxu0
    %v9744 = vadd.f32 %v9583, %v9743
    %v9745 = vpop.f32.mrb[0].mxu0
    %v9746 = vpop.f32.mrb[0].mxu0
    %v9747 = vadd.f32 %v9586, %v9746
    %v9748 = vpop.f32.mrb[0].mxu0
    %9749 = vmatprep.mubr.bf16.mxu0 %v6349
    %9750 = vmatmul.mubr.bf16.gmra.mrb[0].mxu0 %v6348
    %v9751 = vpop.f32.mrb[0].mxu0
    %v9752 = vadd.f32 %v9591, %v9751
    %v9753 = vpop.f32.mrb[0].mxu0
    %v9754 = vpop.f32.mrb[0].mxu0
    %v9755 = vadd.f32 %v9594, %v9754
    %v9756 = vpop.f32.mrb[0].mxu0
    %9757 = vmatprep.mubr.bf16.mxu0 %v6357
    %9758 = vmatmul.mubr.bf16.gmra.mrb[0].mxu0 %v6356
    %v9759 = vpop.f32.mrb[0].mxu0
    %v9760 = vadd.f32 %v9599, %v9759
    %v9761 = vpop.f32.mrb[0].mxu0
    %v9762 = vpop.f32.mrb[0].mxu0
    %v9763 = vadd.f32 %v9602, %v9762
    %v9764 = vpop.f32.mrb[0].mxu0
    %9765 = vmatprep.mubr.bf16.mxu0 %v6365
    %9766 = vmatmul.mubr.bf16.gmra.mrb[0].mxu0 %v6364
    %v9767 = vpop.f32.mrb[0].mxu0
    %v9768 = vadd.f32 %v9607, %v9767
    %v9769 = vpop.f32.mrb[0].mxu0
    %v9770 = vpop.f32.mrb[0].mxu0
    %v9771 = vadd.f32 %v9610, %v9770
    %v9772 = vpop.f32.mrb[0].mxu0
    %9773 = vmatprep.mubr.bf16.mxu0 %v6373
    %9774 = vmatmul.mubr.bf16.gmra.mrb[0].mxu0 %v6372
    %v9775 = vpop.f32.mrb[0].mxu0
    %v9776 = vadd.f32 %v9615, %v9775
    %v9777 = vpop.f32.mrb[0].mxu0
    %v9778 = vpop.f32.mrb[0].mxu0
    %v9779 = vadd.f32 %v9618, %v9778
    %v9780 = vpop.f32.mrb[0].mxu0
    %9781 = vmatprep.mubr.bf16.mxu0 %v6381
    %9782 = vmatmul.mubr.bf16.gmra.mrb[0].mxu0 %v6380
    %v9783 = vpop.f32.mrb[0].mxu0
    %v9784 = vadd.f32 %v9623, %v9783
    %v9785 = vpop.f32.mrb[0].mxu0
    %v9786 = vpop.f32.mrb[0].mxu0
    %v9787 = vadd.f32 %v9626, %v9786
    %v9788 = vpop.f32.mrb[0].mxu0
    %9789 = vmatprep.mubr.bf16.mxu0 %v6389
    %9790 = vmatmul.mubr.bf16.gmra.mrb[0].mxu0 %v6388
    %v9791 = vpop.f32.mrb[0].mxu0
    %v9792 = vadd.f32 %v9631, %v9791
    %v9793 = vpop.f32.mrb[0].mxu0
    %v9794 = vpop.f32.mrb[0].mxu0
    %v9795 = vadd.f32 %v9634, %v9794
    %v9796 = vpop.f32.mrb[0].mxu0
    %9797 = vdwg.mxu0
    %v9798 = vld [vmem:[#allocation17] sm:$0x7f]
    %v9800 = vlaneseq
    %v9801 = vshrl.u32 %v9800, 7
    %v9802 = vsub.s32 0, %v9801
    %v9803 = vrot.slane %v9798, %v9802
    %v9804 = vlaneseq
    %v9805 = vshrl.u32 %v9804, 7
    %v9806 = vsub.s32 1, %v9805
    %v9807 = vrot.slane %v9798, %v9806
    %v9808 = vlaneseq
    %v9809 = vshrl.u32 %v9808, 7
    %v9810 = vsub.s32 2, %v9809
    %v9811 = vrot.slane %v9798, %v9810
    %v9812 = vlaneseq
    %v9813 = vshrl.u32 %v9812, 7
    %v9814 = vsub.s32 3, %v9813
    %v9815 = vrot.slane %v9798, %v9814
    %v9816 = vlaneseq
    %v9817 = vshrl.u32 %v9816, 7
    %v9818 = vsub.s32 4, %v9817
    %v9819 = vrot.slane %v9798, %v9818
    %v9820 = vlaneseq
    %v9821 = vshrl.u32 %v9820, 7
    %v9822 = vsub.s32 5, %v9821
    %v9823 = vrot.slane %v9798, %v9822
    %v9824 = vlaneseq
    %v9825 = vshrl.u32 %v9824, 7
    %v9826 = vsub.s32 6, %v9825
    %v9827 = vrot.slane %v9798, %v9826
    %v9835 = vadd.f32 %v7452, %v9803
    %v9836 = vadd.f32 %v7454, %v9807
    %v9837 = vadd.f32 %v8224, %v9811
    %v9838 = vadd.f32 %v8226, %v9815
    %v9839 = vadd.f32 %v8996, %v9819
    %v9840 = vadd.f32 %v8998, %v9823
    %v9841 = vadd.f32 %v9672, %v9827
    %v9842 = vadd.f32 %v7456, %v9803
    %v9843 = vadd.f32 %v7458, %v9807
    %v9844 = vadd.f32 %v8228, %v9811
    %v9845 = vadd.f32 %v8230, %v9815
    %v9846 = vadd.f32 %v9000, %v9819
    %v9847 = vadd.f32 %v9002, %v9823
    %v9848 = vadd.f32 %v9675, %v9827
    %v9849 = vadd.f32 %v7462, %v9803
    %v9850 = vadd.f32 %v7464, %v9807
    %v9851 = vadd.f32 %v8234, %v9811
    %v9852 = vadd.f32 %v8236, %v9815
    %v9853 = vadd.f32 %v9006, %v9819
    %v9854 = vadd.f32 %v9008, %v9823
    %v9855 = vadd.f32 %v9680, %v9827
    %v9856 = vadd.f32 %v7466, %v9803
    %v9857 = vadd.f32 %v7468, %v9807
    %v9858 = vadd.f32 %v8238, %v9811
    %v9859 = vadd.f32 %v8240, %v9815
    %v9860 = vadd.f32 %v9010, %v9819
    %v9861 = vadd.f32 %v9012, %v9823
    %v9862 = vadd.f32 %v9683, %v9827
    %v9863 = vadd.f32 %v7472, %v9803
    %v9864 = vadd.f32 %v7474, %v9807
    %v9865 = vadd.f32 %v8244, %v9811
    %v9866 = vadd.f32 %v8246, %v9815
    %v9867 = vadd.f32 %v9016, %v9819
    %v9868 = vadd.f32 %v9018, %v9823
    %v9869 = vadd.f32 %v9688, %v9827
    %v9870 = vadd.f32 %v7476, %v9803
    %v9871 = vadd.f32 %v7478, %v9807
    %v9872 = vadd.f32 %v8248, %v9811
    %v9873 = vadd.f32 %v8250, %v9815
    %v9874 = vadd.f32 %v9020, %v9819
    %v9875 = vadd.f32 %v9022, %v9823
    %v9876 = vadd.f32 %v9691, %v9827
    %v9877 = vadd.f32 %v7482, %v9803
    %v9878 = vadd.f32 %v7484, %v9807
    %v9879 = vadd.f32 %v8254, %v9811
    %v9880 = vadd.f32 %v8256, %v9815
    %v9881 = vadd.f32 %v9026, %v9819
    %v9882 = vadd.f32 %v9028, %v9823
    %v9883 = vadd.f32 %v9696, %v9827
    %v9884 = vadd.f32 %v7486, %v9803
    %v9885 = vadd.f32 %v7488, %v9807
    %v9886 = vadd.f32 %v8258, %v9811
    %v9887 = vadd.f32 %v8260, %v9815
    %v9888 = vadd.f32 %v9030, %v9819
    %v9889 = vadd.f32 %v9032, %v9823
    %v9890 = vadd.f32 %v9699, %v9827
    %v9891 = vadd.f32 %v7492, %v9803
    %v9892 = vadd.f32 %v7494, %v9807
    %v9893 = vadd.f32 %v8264, %v9811
    %v9894 = vadd.f32 %v8266, %v9815
    %v9895 = vadd.f32 %v9036, %v9819
    %v9896 = vadd.f32 %v9038, %v9823
    %v9897 = vadd.f32 %v9704, %v9827
    %v9898 = vadd.f32 %v7496, %v9803
    %v9899 = vadd.f32 %v7498, %v9807
    %v9900 = vadd.f32 %v8268, %v9811
    %v9901 = vadd.f32 %v8270, %v9815
    %v9902 = vadd.f32 %v9040, %v9819
    %v9903 = vadd.f32 %v9042, %v9823
    %v9904 = vadd.f32 %v9707, %v9827
    %v9905 = vadd.f32 %v7502, %v9803
    %v9906 = vadd.f32 %v7504, %v9807
    %v9907 = vadd.f32 %v8274, %v9811
    %v9908 = vadd.f32 %v8276, %v9815
    %v9909 = vadd.f32 %v9046, %v9819
    %v9910 = vadd.f32 %v9048, %v9823
    %v9911 = vadd.f32 %v9712, %v9827
    %v9912 = vadd.f32 %v7506, %v9803
    %v9913 = vadd.f32 %v7508, %v9807
    %v9914 = vadd.f32 %v8278, %v9811
    %v9915 = vadd.f32 %v8280, %v9815
    %v9916 = vadd.f32 %v9050, %v9819
    %v9917 = vadd.f32 %v9052, %v9823
    %v9918 = vadd.f32 %v9715, %v9827
    %v9919 = vadd.f32 %v7512, %v9803
    %v9920 = vadd.f32 %v7514, %v9807
    %v9921 = vadd.f32 %v8284, %v9811
    %v9922 = vadd.f32 %v8286, %v9815
    %v9923 = vadd.f32 %v9056, %v9819
    %v9924 = vadd.f32 %v9058, %v9823
    %v9925 = vadd.f32 %v9720, %v9827
    %v9926 = vadd.f32 %v7516, %v9803
    %v9927 = vadd.f32 %v7518, %v9807
    %v9928 = vadd.f32 %v8288, %v9811
    %v9929 = vadd.f32 %v8290, %v9815
    %v9930 = vadd.f32 %v9060, %v9819
    %v9931 = vadd.f32 %v9062, %v9823
    %v9932 = vadd.f32 %v9723, %v9827
    %v9933 = vadd.f32 %v7522, %v9803
    %v9934 = vadd.f32 %v7524, %v9807
    %v9935 = vadd.f32 %v8294, %v9811
    %v9936 = vadd.f32 %v8296, %v9815
    %v9937 = vadd.f32 %v9066, %v9819
    %v9938 = vadd.f32 %v9068, %v9823
    %v9939 = vadd.f32 %v9728, %v9827
    %v9940 = vadd.f32 %v7526, %v9803
    %v9941 = vadd.f32 %v7528, %v9807
    %v9942 = vadd.f32 %v8298, %v9811
    %v9943 = vadd.f32 %v8300, %v9815
    %v9944 = vadd.f32 %v9070, %v9819
    %v9945 = vadd.f32 %v9072, %v9823
    %v9946 = vadd.f32 %v9731, %v9827
    %v9947 = vadd.f32 %v7532, %v9803
    %v9948 = vadd.f32 %v7534, %v9807
    %v9949 = vadd.f32 %v8304, %v9811
    %v9950 = vadd.f32 %v8306, %v9815
    %v9951 = vadd.f32 %v9076, %v9819
    %v9952 = vadd.f32 %v9078, %v9823
    %v9953 = vadd.f32 %v9736, %v9827
    %v9954 = vadd.f32 %v7536, %v9803
    %v9955 = vadd.f32 %v7538, %v9807
    %v9956 = vadd.f32 %v8308, %v9811
    %v9957 = vadd.f32 %v8310, %v9815
    %v9958 = vadd.f32 %v9080, %v9819
    %v9959 = vadd.f32 %v9082, %v9823
    %v9960 = vadd.f32 %v9739, %v9827
    %v9961 = vadd.f32 %v7542, %v9803
    %v9962 = vadd.f32 %v7544, %v9807
    %v9963 = vadd.f32 %v8314, %v9811
    %v9964 = vadd.f32 %v8316, %v9815
    %v9965 = vadd.f32 %v9086, %v9819
    %v9966 = vadd.f32 %v9088, %v9823
    %v9967 = vadd.f32 %v9744, %v9827
    %v9968 = vadd.f32 %v7546, %v9803
    %v9969 = vadd.f32 %v7548, %v9807
    %v9970 = vadd.f32 %v8318, %v9811
    %v9971 = vadd.f32 %v8320, %v9815
    %v9972 = vadd.f32 %v9090, %v9819
    %v9973 = vadd.f32 %v9092, %v9823
    %v9974 = vadd.f32 %v9747, %v9827
    %v9975 = vadd.f32 %v7552, %v9803
    %v9976 = vadd.f32 %v7554, %v9807
    %v9977 = vadd.f32 %v8324, %v9811
    %v9978 = vadd.f32 %v8326, %v9815
    %v9979 = vadd.f32 %v9096, %v9819
    %v9980 = vadd.f32 %v9098, %v9823
    %v9981 = vadd.f32 %v9752, %v9827
    %v9982 = vadd.f32 %v7556, %v9803
    %v9983 = vadd.f32 %v7558, %v9807
    %v9984 = vadd.f32 %v8328, %v9811
    %v9985 = vadd.f32 %v8330, %v9815
    %v9986 = vadd.f32 %v9100, %v9819
    %v9987 = vadd.f32 %v9102, %v9823
    %v9988 = vadd.f32 %v9755, %v9827
    %v9989 = vadd.f32 %v7562, %v9803
    %v9990 = vadd.f32 %v7564, %v9807
    %v9991 = vadd.f32 %v8334, %v9811
    %v9992 = vadd.f32 %v8336, %v9815
    %v9993 = vadd.f32 %v9106, %v9819
    %v9994 = vadd.f32 %v9108, %v9823
    %v9995 = vadd.f32 %v9760, %v9827
    %v9996 = vadd.f32 %v7566, %v9803
    %v9997 = vadd.f32 %v7568, %v9807
    %v9998 = vadd.f32 %v8338, %v9811
    %v9999 = vadd.f32 %v8340, %v9815
    %v10000 = vadd.f32 %v9110, %v9819
    %v10001 = vadd.f32 %v9112, %v9823
    %v10002 = vadd.f32 %v9763, %v9827
    %v10003 = vadd.f32 %v7572, %v9803
    %v10004 = vadd.f32 %v7574, %v9807
    %v10005 = vadd.f32 %v8344, %v9811
    %v10006 = vadd.f32 %v8346, %v9815
    %v10007 = vadd.f32 %v9116, %v9819
    %v10008 = vadd.f32 %v9118, %v9823
    %v10009 = vadd.f32 %v9768, %v9827
    %v10010 = vadd.f32 %v7576, %v9803
    %v10011 = vadd.f32 %v7578, %v9807
    %v10012 = vadd.f32 %v8348, %v9811
    %v10013 = vadd.f32 %v8350, %v9815
    %v10014 = vadd.f32 %v9120, %v9819
    %v10015 = vadd.f32 %v9122, %v9823
    %v10016 = vadd.f32 %v9771, %v9827
    %v10017 = vadd.f32 %v7582, %v9803
    %v10018 = vadd.f32 %v7584, %v9807
    %v10019 = vadd.f32 %v8354, %v9811
    %v10020 = vadd.f32 %v8356, %v9815
    %v10021 = vadd.f32 %v9126, %v9819
    %v10022 = vadd.f32 %v9128, %v9823
    %v10023 = vadd.f32 %v9776, %v9827
    %v10024 = vadd.f32 %v7586, %v9803
    %v10025 = vadd.f32 %v7588, %v9807
    %v10026 = vadd.f32 %v8358, %v9811
    %v10027 = vadd.f32 %v8360, %v9815
    %v10028 = vadd.f32 %v9130, %v9819
    %v10029 = vadd.f32 %v9132, %v9823
    %v10030 = vadd.f32 %v9779, %v9827
    %v10031 = vadd.f32 %v7592, %v9803
    %v10032 = vadd.f32 %v7594, %v9807
    %v10033 = vadd.f32 %v8364, %v9811
    %v10034 = vadd.f32 %v8366, %v9815
    %v10035 = vadd.f32 %v9136, %v9819
    %v10036 = vadd.f32 %v9138, %v9823
    %v10037 = vadd.f32 %v9784, %v9827
    %v10038 = vadd.f32 %v7596, %v9803
    %v10039 = vadd.f32 %v7598, %v9807
    %v10040 = vadd.f32 %v8368, %v9811
    %v10041 = vadd.f32 %v8370, %v9815
    %v10042 = vadd.f32 %v9140, %v9819
    %v10043 = vadd.f32 %v9142, %v9823
    %v10044 = vadd.f32 %v9787, %v9827
    %v10045 = vadd.f32 %v7602, %v9803
    %v10046 = vadd.f32 %v7604, %v9807
    %v10047 = vadd.f32 %v8374, %v9811
    %v10048 = vadd.f32 %v8376, %v9815
    %v10049 = vadd.f32 %v9146, %v9819
    %v10050 = vadd.f32 %v9148, %v9823
    %v10051 = vadd.f32 %v9792, %v9827
    %v10052 = vadd.f32 %v7606, %v9803
    %v10053 = vadd.f32 %v7608, %v9807
    %v10054 = vadd.f32 %v8378, %v9811
    %v10055 = vadd.f32 %v8380, %v9815
    %v10056 = vadd.f32 %v9150, %v9819
    %v10057 = vadd.f32 %v9152, %v9823
    %v10058 = vadd.f32 %v9795, %v9827
    %v10059 = vtanh.pop %v9835
    %v10060 = vtanh.pop %v9836
    %v10061 = vtanh.pop %v9837
    %v10062 = vtanh.pop %v9838
    %v10063 = vtanh.pop %v9839
    %v10064 = vtanh.pop %v9840
    %v10065 = vtanh.pop %v9841
    %v10066 = vtanh.pop %v9842
    %v10067 = vtanh.pop %v9843
    %v10068 = vtanh.pop %v9844
    %v10069 = vtanh.pop %v9845
    %v10070 = vtanh.pop %v9846
    %v10071 = vtanh.pop %v9847
    %v10072 = vtanh.pop %v9848
    %v10073 = vtanh.pop %v9849
    %v10074 = vtanh.pop %v9850
    %v10075 = vtanh.pop %v9851
    %v10076 = vtanh.pop %v9852
    %v10077 = vtanh.pop %v9853
    %v10078 = vtanh.pop %v9854
    %v10079 = vtanh.pop %v9855
    %v10080 = vtanh.pop %v9856
    %v10081 = vtanh.pop %v9857
    %v10082 = vtanh.pop %v9858
    %v10083 = vtanh.pop %v9859
    %v10084 = vtanh.pop %v9860
    %v10085 = vtanh.pop %v9861
    %v10086 = vtanh.pop %v9862
    %v10087 = vtanh.pop %v9863
    %v10088 = vtanh.pop %v9864
    %v10089 = vtanh.pop %v9865
    %v10090 = vtanh.pop %v9866
    %v10091 = vtanh.pop %v9867
    %v10092 = vtanh.pop %v9868
    %v10093 = vtanh.pop %v9869
    %v10094 = vtanh.pop %v9870
    %v10095 = vtanh.pop %v9871
    %v10096 = vtanh.pop %v9872
    %v10097 = vtanh.pop %v9873
    %v10098 = vtanh.pop %v9874
    %v10099 = vtanh.pop %v9875
    %v10100 = vtanh.pop %v9876
    %v10101 = vtanh.pop %v9877
    %v10102 = vtanh.pop %v9878
    %v10103 = vtanh.pop %v9879
    %v10104 = vtanh.pop %v9880
    %v10105 = vtanh.pop %v9881
    %v10106 = vtanh.pop %v9882
    %v10107 = vtanh.pop %v9883
    %v10108 = vtanh.pop %v9884
    %v10109 = vtanh.pop %v9885
    %v10110 = vtanh.pop %v9886
    %v10111 = vtanh.pop %v9887
    %v10112 = vtanh.pop %v9888
    %v10113 = vtanh.pop %v9889
    %v10114 = vtanh.pop %v9890
    %v10115 = vtanh.pop %v9891
    %v10116 = vtanh.pop %v9892
    %v10117 = vtanh.pop %v9893
    %v10118 = vtanh.pop %v9894
    %v10119 = vtanh.pop %v9895
    %v10120 = vtanh.pop %v9896
    %v10121 = vtanh.pop %v9897
    %v10122 = vtanh.pop %v9898
    %v10123 = vtanh.pop %v9899
    %v10124 = vtanh.pop %v9900
    %v10125 = vtanh.pop %v9901
    %v10126 = vtanh.pop %v9902
    %v10127 = vtanh.pop %v9903
    %v10128 = vtanh.pop %v9904
    %v10129 = vtanh.pop %v9905
    %v10130 = vtanh.pop %v9906
    %v10131 = vtanh.pop %v9907
    %v10132 = vtanh.pop %v9908
    %v10133 = vtanh.pop %v9909
    %v10134 = vtanh.pop %v9910
    %v10135 = vtanh.pop %v9911
    %v10136 = vtanh.pop %v9912
    %v10137 = vtanh.pop %v9913
    %v10138 = vtanh.pop %v9914
    %v10139 = vtanh.pop %v9915
    %v10140 = vtanh.pop %v9916
    %v10141 = vtanh.pop %v9917
    %v10142 = vtanh.pop %v9918
    %v10143 = vtanh.pop %v9919
    %v10144 = vtanh.pop %v9920
    %v10145 = vtanh.pop %v9921
    %v10146 = vtanh.pop %v9922
    %v10147 = vtanh.pop %v9923
    %v10148 = vtanh.pop %v9924
    %v10149 = vtanh.pop %v9925
    %v10150 = vtanh.pop %v9926
    %v10151 = vtanh.pop %v9927
    %v10152 = vtanh.pop %v9928
    %v10153 = vtanh.pop %v9929
    %v10154 = vtanh.pop %v9930
    %v10155 = vtanh.pop %v9931
    %v10156 = vtanh.pop %v9932
    %v10157 = vtanh.pop %v9933
    %v10158 = vtanh.pop %v9934
    %v10159 = vtanh.pop %v9935
    %v10160 = vtanh.pop %v9936
    %v10161 = vtanh.pop %v9937
    %v10162 = vtanh.pop %v9938
    %v10163 = vtanh.pop %v9939
    %v10164 = vtanh.pop %v9940
    %v10165 = vtanh.pop %v9941
    %v10166 = vtanh.pop %v9942
    %v10167 = vtanh.pop %v9943
    %v10168 = vtanh.pop %v9944
    %v10169 = vtanh.pop %v9945
    %v10170 = vtanh.pop %v9946
    %v10171 = vtanh.pop %v9947
    %v10172 = vtanh.pop %v9948
    %v10173 = vtanh.pop %v9949
    %v10174 = vtanh.pop %v9950
    %v10175 = vtanh.pop %v9951
    %v10176 = vtanh.pop %v9952
    %v10177 = vtanh.pop %v9953
    %v10178 = vtanh.pop %v9954
    %v10179 = vtanh.pop %v9955
    %v10180 = vtanh.pop %v9956
    %v10181 = vtanh.pop %v9957
    %v10182 = vtanh.pop %v9958
    %v10183 = vtanh.pop %v9959
    %v10184 = vtanh.pop %v9960
    %v10185 = vtanh.pop %v9961
    %v10186 = vtanh.pop %v9962
    %v10187 = vtanh.pop %v9963
    %v10188 = vtanh.pop %v9964
    %v10189 = vtanh.pop %v9965
    %v10190 = vtanh.pop %v9966
    %v10191 = vtanh.pop %v9967
    %v10192 = vtanh.pop %v9968
    %v10193 = vtanh.pop %v9969
    %v10194 = vtanh.pop %v9970
    %v10195 = vtanh.pop %v9971
    %v10196 = vtanh.pop %v9972
    %v10197 = vtanh.pop %v9973
    %v10198 = vtanh.pop %v9974
    %v10199 = vtanh.pop %v9975
    %v10200 = vtanh.pop %v9976
    %v10201 = vtanh.pop %v9977
    %v10202 = vtanh.pop %v9978
    %v10203 = vtanh.pop %v9979
    %v10204 = vtanh.pop %v9980
    %v10205 = vtanh.pop %v9981
    %v10206 = vtanh.pop %v9982
    %v10207 = vtanh.pop %v9983
    %v10208 = vtanh.pop %v9984
    %v10209 = vtanh.pop %v9985
    %v10210 = vtanh.pop %v9986
    %v10211 = vtanh.pop %v9987
    %v10212 = vtanh.pop %v9988
    %v10213 = vtanh.pop %v9989
    %v10214 = vtanh.pop %v9990
    %v10215 = vtanh.pop %v9991
    %v10216 = vtanh.pop %v9992
    %v10217 = vtanh.pop %v9993
    %v10218 = vtanh.pop %v9994
    %v10219 = vtanh.pop %v9995
    %v10220 = vtanh.pop %v9996
    %v10221 = vtanh.pop %v9997
    %v10222 = vtanh.pop %v9998
    %v10223 = vtanh.pop %v9999
    %v10224 = vtanh.pop %v10000
    %v10225 = vtanh.pop %v10001
    %v10226 = vtanh.pop %v10002
    %v10227 = vtanh.pop %v10003
    %v10228 = vtanh.pop %v10004
    %v10229 = vtanh.pop %v10005
    %v10230 = vtanh.pop %v10006
    %v10231 = vtanh.pop %v10007
    %v10232 = vtanh.pop %v10008
    %v10233 = vtanh.pop %v10009
    %v10234 = vtanh.pop %v10010
    %v10235 = vtanh.pop %v10011
    %v10236 = vtanh.pop %v10012
    %v10237 = vtanh.pop %v10013
    %v10238 = vtanh.pop %v10014
    %v10239 = vtanh.pop %v10015
    %v10240 = vtanh.pop %v10016
    %v10241 = vtanh.pop %v10017
    %v10242 = vtanh.pop %v10018
    %v10243 = vtanh.pop %v10019
    %v10244 = vtanh.pop %v10020
    %v10245 = vtanh.pop %v10021
    %v10246 = vtanh.pop %v10022
    %v10247 = vtanh.pop %v10023
    %v10248 = vtanh.pop %v10024
    %v10249 = vtanh.pop %v10025
    %v10250 = vtanh.pop %v10026
    %v10251 = vtanh.pop %v10027
    %v10252 = vtanh.pop %v10028
    %v10253 = vtanh.pop %v10029
    %v10254 = vtanh.pop %v10030
    %v10255 = vtanh.pop %v10031
    %v10256 = vtanh.pop %v10032
    %v10257 = vtanh.pop %v10033
    %v10258 = vtanh.pop %v10034
    %v10259 = vtanh.pop %v10035
    %v10260 = vtanh.pop %v10036
    %v10261 = vtanh.pop %v10037
    %v10262 = vtanh.pop %v10038
    %v10263 = vtanh.pop %v10039
    %v10264 = vtanh.pop %v10040
    %v10265 = vtanh.pop %v10041
    %v10266 = vtanh.pop %v10042
    %v10267 = vtanh.pop %v10043
    %v10268 = vtanh.pop %v10044
    %v10269 = vtanh.pop %v10045
    %v10270 = vtanh.pop %v10046
    %v10271 = vtanh.pop %v10047
    %v10272 = vtanh.pop %v10048
    %v10273 = vtanh.pop %v10049
    %v10274 = vtanh.pop %v10050
    %v10275 = vtanh.pop %v10051
    %v10276 = vtanh.pop %v10052
    %v10277 = vtanh.pop %v10053
    %v10278 = vtanh.pop %v10054
    %v10279 = vtanh.pop %v10055
    %v10280 = vtanh.pop %v10056
    %v10281 = vtanh.pop %v10057
    %v10282 = vtanh.pop %v10058
    %10283 = vst [vmem:[%s12] sm:$0xff] %v10059
    %10284 = vst [vmem:[%s12 + $0x8] sm:$0xff] %v10060
    %10285 = vst [vmem:[%s12 + $0x10] sm:$0xff] %v10061
    %10286 = vst [vmem:[%s12 + $0x18] sm:$0xff] %v10062
    %10287 = vst [vmem:[%s12 + $0x20] sm:$0xff] %v10063
    %10288 = vst [vmem:[%s12 + $0x28] sm:$0xff] %v10064
    %vm10289 = vcmask 130048
    %10290 = vst.msk [vmem:[%s12 + $0x30] sm:$0xff] %vm10289, %v10065
    %10291 = vst [vmem:[%s12 + $0x38] sm:$0xff] %v10066
    %10292 = vst [vmem:[%s12 + $0x40] sm:$0xff] %v10067
    %10293 = vst [vmem:[%s12 + $0x48] sm:$0xff] %v10068
    %10294 = vst [vmem:[%s12 + $0x50] sm:$0xff] %v10069
    %10295 = vst [vmem:[%s12 + $0x58] sm:$0xff] %v10070
    %10296 = vst [vmem:[%s12 + $0x60] sm:$0xff] %v10071
    %10297 = vst.msk [vmem:[%s12 + $0x68] sm:$0xff] %vm10289, %v10072
    %10298 = vst [vmem:[%s12 + $0x70] sm:$0xff] %v10073
    %10299 = vst [vmem:[%s12 + $0x78] sm:$0xff] %v10074
    %10300 = vst [vmem:[%s12 + $0x80] sm:$0xff] %v10075
    %10301 = vst [vmem:[%s12 + $0x88] sm:$0xff] %v10076
    %10302 = vst [vmem:[%s12 + $0x90] sm:$0xff] %v10077
    %10303 = vst [vmem:[%s12 + $0x98] sm:$0xff] %v10078
    %10304 = vst.msk [vmem:[%s12 + $0xa0] sm:$0xff] %vm10289, %v10079
    %10305 = vst [vmem:[%s12 + $0xa8] sm:$0xff] %v10080
    %10306 = vst [vmem:[%s12 + $0xb0] sm:$0xff] %v10081
    %10307 = vst [vmem:[%s12 + $0xb8] sm:$0xff] %v10082
    %10308 = vst [vmem:[%s12 + $0xc0] sm:$0xff] %v10083
    %10309 = vst [vmem:[%s12 + $0xc8] sm:$0xff] %v10084
    %10310 = vst [vmem:[%s12 + $0xd0] sm:$0xff] %v10085
    %10311 = vst.msk [vmem:[%s12 + $0xd8] sm:$0xff] %vm10289, %v10086
    %10312 = vst [vmem:[%s12 + $0xe0] sm:$0xff] %v10087
    %10313 = vst [vmem:[%s12 + $0xe8] sm:$0xff] %v10088
    %10314 = vst [vmem:[%s12 + $0xf0] sm:$0xff] %v10089
    %10315 = vst [vmem:[%s12 + $0xf8] sm:$0xff] %v10090
    %10316 = vst [vmem:[%s12 + $0x100] sm:$0xff] %v10091
    %10317 = vst [vmem:[%s12 + $0x108] sm:$0xff] %v10092
    %10318 = vst.msk [vmem:[%s12 + $0x110] sm:$0xff] %vm10289, %v10093
    %10319 = vst [vmem:[%s12 + $0x118] sm:$0xff] %v10094
    %10320 = vst [vmem:[%s12 + $0x120] sm:$0xff] %v10095
    %10321 = vst [vmem:[%s12 + $0x128] sm:$0xff] %v10096
    %10322 = vst [vmem:[%s12 + $0x130] sm:$0xff] %v10097
    %10323 = vst [vmem:[%s12 + $0x138] sm:$0xff] %v10098
    %10324 = vst [vmem:[%s12 + $0x140] sm:$0xff] %v10099
    %10325 = vst.msk [vmem:[%s12 + $0x148] sm:$0xff] %vm10289, %v10100
    %10326 = vst [vmem:[%s12 + $0x150] sm:$0xff] %v10101
    %10327 = vst [vmem:[%s12 + $0x158] sm:$0xff] %v10102
    %10328 = vst [vmem:[%s12 + $0x160] sm:$0xff] %v10103
    %10329 = vst [vmem:[%s12 + $0x168] sm:$0xff] %v10104
    %10330 = vst [vmem:[%s12 + $0x170] sm:$0xff] %v10105
    %10331 = vst [vmem:[%s12 + $0x178] sm:$0xff] %v10106
    %10332 = vst.msk [vmem:[%s12 + $0x180] sm:$0xff] %vm10289, %v10107
    %10333 = vst [vmem:[%s12 + $0x188] sm:$0xff] %v10108
    %10334 = vst [vmem:[%s12 + $0x190] sm:$0xff] %v10109
    %10335 = vst [vmem:[%s12 + $0x198] sm:$0xff] %v10110
    %10336 = vst [vmem:[%s12 + $0x1a0] sm:$0xff] %v10111
    %10337 = vst [vmem:[%s12 + $0x1a8] sm:$0xff] %v10112
    %10338 = vst [vmem:[%s12 + $0x1b0] sm:$0xff] %v10113
    %10339 = vst.msk [vmem:[%s12 + $0x1b8] sm:$0xff] %vm10289, %v10114
    %10340 = vst [vmem:[%s12 + $0x1c0] sm:$0xff] %v10115
    %10341 = vst [vmem:[%s12 + $0x1c8] sm:$0xff] %v10116
    %10342 = vst [vmem:[%s12 + $0x1d0] sm:$0xff] %v10117
    %10343 = vst [vmem:[%s12 + $0x1d8] sm:$0xff] %v10118
    %10344 = vst [vmem:[%s12 + $0x1e0] sm:$0xff] %v10119
    %10345 = vst [vmem:[%s12 + $0x1e8] sm:$0xff] %v10120
    %10346 = vst.msk [vmem:[%s12 + $0x1f0] sm:$0xff] %vm10289, %v10121
    %10347 = vst [vmem:[%s12 + $0x1f8] sm:$0xff] %v10122
    %10348 = vst [vmem:[%s12 + $0x200] sm:$0xff] %v10123
    %10349 = vst [vmem:[%s12 + $0x208] sm:$0xff] %v10124
    %10350 = vst [vmem:[%s12 + $0x210] sm:$0xff] %v10125
    %10351 = vst [vmem:[%s12 + $0x218] sm:$0xff] %v10126
    %10352 = vst [vmem:[%s12 + $0x220] sm:$0xff] %v10127
    %10353 = vst.msk [vmem:[%s12 + $0x228] sm:$0xff] %vm10289, %v10128
    %10354 = vst [vmem:[%s12 + $0x230] sm:$0xff] %v10129
    %10355 = vst [vmem:[%s12 + $0x238] sm:$0xff] %v10130
    %10356 = vst [vmem:[%s12 + $0x240] sm:$0xff] %v10131
    %10357 = vst [vmem:[%s12 + $0x248] sm:$0xff] %v10132
    %10358 = vst [vmem:[%s12 + $0x250] sm:$0xff] %v10133
    %10359 = vst [vmem:[%s12 + $0x258] sm:$0xff] %v10134
    %10360 = vst.msk [vmem:[%s12 + $0x260] sm:$0xff] %vm10289, %v10135
    %10361 = vst [vmem:[%s12 + $0x268] sm:$0xff] %v10136
    %10362 = vst [vmem:[%s12 + $0x270] sm:$0xff] %v10137
    %10363 = vst [vmem:[%s12 + $0x278] sm:$0xff] %v10138
    %10364 = vst [vmem:[%s12 + $0x280] sm:$0xff] %v10139
    %10365 = vst [vmem:[%s12 + $0x288] sm:$0xff] %v10140
    %10366 = vst [vmem:[%s12 + $0x290] sm:$0xff] %v10141
    %10367 = vst.msk [vmem:[%s12 + $0x298] sm:$0xff] %vm10289, %v10142
    %10368 = vst [vmem:[%s12 + $0x2a0] sm:$0xff] %v10143
    %10369 = vst [vmem:[%s12 + $0x2a8] sm:$0xff] %v10144
    %10370 = vst [vmem:[%s12 + $0x2b0] sm:$0xff] %v10145
    %10371 = vst [vmem:[%s12 + $0x2b8] sm:$0xff] %v10146
    %10372 = vst [vmem:[%s12 + $0x2c0] sm:$0xff] %v10147
    %10373 = vst [vmem:[%s12 + $0x2c8] sm:$0xff] %v10148
    %10374 = vst.msk [vmem:[%s12 + $0x2d0] sm:$0xff] %vm10289, %v10149
    %10375 = vst [vmem:[%s12 + $0x2d8] sm:$0xff] %v10150
    %10376 = vst [vmem:[%s12 + $0x2e0] sm:$0xff] %v10151
    %10377 = vst [vmem:[%s12 + $0x2e8] sm:$0xff] %v10152
    %10378 = vst [vmem:[%s12 + $0x2f0] sm:$0xff] %v10153
    %10379 = vst [vmem:[%s12 + $0x2f8] sm:$0xff] %v10154
    %10380 = vst [vmem:[%s12 + $0x300] sm:$0xff] %v10155
    %10381 = vst.msk [vmem:[%s12 + $0x308] sm:$0xff] %vm10289, %v10156
    %10382 = vst [vmem:[%s12 + $0x310] sm:$0xff] %v10157
    %10383 = vst [vmem:[%s12 + $0x318] sm:$0xff] %v10158
    %10384 = vst [vmem:[%s12 + $0x320] sm:$0xff] %v10159
    %10385 = vst [vmem:[%s12 + $0x328] sm:$0xff] %v10160
    %10386 = vst [vmem:[%s12 + $0x330] sm:$0xff] %v10161
    %10387 = vst [vmem:[%s12 + $0x338] sm:$0xff] %v10162
    %10388 = vst.msk [vmem:[%s12 + $0x340] sm:$0xff] %vm10289, %v10163
    %10389 = vst [vmem:[%s12 + $0x348] sm:$0xff] %v10164
    %10390 = vst [vmem:[%s12 + $0x350] sm:$0xff] %v10165
    %10391 = vst [vmem:[%s12 + $0x358] sm:$0xff] %v10166
    %10392 = vst [vmem:[%s12 + $0x360] sm:$0xff] %v10167
    %10393 = vst [vmem:[%s12 + $0x368] sm:$0xff] %v10168
    %10394 = vst [vmem:[%s12 + $0x370] sm:$0xff] %v10169
    %10395 = vst.msk [vmem:[%s12 + $0x378] sm:$0xff] %vm10289, %v10170
    %10396 = vst [vmem:[%s12 + $0x380] sm:$0xff] %v10171
    %10397 = vst [vmem:[%s12 + $0x388] sm:$0xff] %v10172
    %10398 = vst [vmem:[%s12 + $0x390] sm:$0xff] %v10173
    %10399 = vst [vmem:[%s12 + $0x398] sm:$0xff] %v10174
    %10400 = vst [vmem:[%s12 + $0x3a0] sm:$0xff] %v10175
    %10401 = vst [vmem:[%s12 + $0x3a8] sm:$0xff] %v10176
    %10402 = vst.msk [vmem:[%s12 + $0x3b0] sm:$0xff] %vm10289, %v10177
    %10403 = vst [vmem:[%s12 + $0x3b8] sm:$0xff] %v10178
    %10404 = vst [vmem:[%s12 + $0x3c0] sm:$0xff] %v10179
    %10405 = vst [vmem:[%s12 + $0x3c8] sm:$0xff] %v10180
    %10406 = vst [vmem:[%s12 + $0x3d0] sm:$0xff] %v10181
    %10407 = vst [vmem:[%s12 + $0x3d8] sm:$0xff] %v10182
    %10408 = vst [vmem:[%s12 + $0x3e0] sm:$0xff] %v10183
    %10409 = vst.msk [vmem:[%s12 + $0x3e8] sm:$0xff] %vm10289, %v10184
    %10410 = vst [vmem:[%s12 + $0x3f0] sm:$0xff] %v10185
    %10411 = vst [vmem:[%s12 + $0x3f8] sm:$0xff] %v10186
    %10412 = vst [vmem:[%s12 + $0x400] sm:$0xff] %v10187
    %10413 = vst [vmem:[%s12 + $0x408] sm:$0xff] %v10188
    %10414 = vst [vmem:[%s12 + $0x410] sm:$0xff] %v10189
    %10415 = vst [vmem:[%s12 + $0x418] sm:$0xff] %v10190
    %10416 = vst.msk [vmem:[%s12 + $0x420] sm:$0xff] %vm10289, %v10191
    %10417 = vst [vmem:[%s12 + $0x428] sm:$0xff] %v10192
    %10418 = vst [vmem:[%s12 + $0x430] sm:$0xff] %v10193
    %10419 = vst [vmem:[%s12 + $0x438] sm:$0xff] %v10194
    %10420 = vst [vmem:[%s12 + $0x440] sm:$0xff] %v10195
    %10421 = vst [vmem:[%s12 + $0x448] sm:$0xff] %v10196
    %10422 = vst [vmem:[%s12 + $0x450] sm:$0xff] %v10197
    %10423 = vst.msk [vmem:[%s12 + $0x458] sm:$0xff] %vm10289, %v10198
    %10424 = vst [vmem:[%s12 + $0x460] sm:$0xff] %v10199
    %10425 = vst [vmem:[%s12 + $0x468] sm:$0xff] %v10200
    %10426 = vst [vmem:[%s12 + $0x470] sm:$0xff] %v10201
    %10427 = vst [vmem:[%s12 + $0x478] sm:$0xff] %v10202
    %10428 = vst [vmem:[%s12 + $0x480] sm:$0xff] %v10203
    %10429 = vst [vmem:[%s12 + $0x488] sm:$0xff] %v10204
    %10430 = vst.msk [vmem:[%s12 + $0x490] sm:$0xff] %vm10289, %v10205
    %10431 = vst [vmem:[%s12 + $0x498] sm:$0xff] %v10206
    %10432 = vst [vmem:[%s12 + $0x4a0] sm:$0xff] %v10207
    %10433 = vst [vmem:[%s12 + $0x4a8] sm:$0xff] %v10208
    %10434 = vst [vmem:[%s12 + $0x4b0] sm:$0xff] %v10209
    %10435 = vst [vmem:[%s12 + $0x4b8] sm:$0xff] %v10210
    %10436 = vst [vmem:[%s12 + $0x4c0] sm:$0xff] %v10211
    %10437 = vst.msk [vmem:[%s12 + $0x4c8] sm:$0xff] %vm10289, %v10212
    %10438 = vst [vmem:[%s12 + $0x4d0] sm:$0xff] %v10213
    %10439 = vst [vmem:[%s12 + $0x4d8] sm:$0xff] %v10214
    %10440 = vst [vmem:[%s12 + $0x4e0] sm:$0xff] %v10215
    %10441 = vst [vmem:[%s12 + $0x4e8] sm:$0xff] %v10216
    %10442 = vst [vmem:[%s12 + $0x4f0] sm:$0xff] %v10217
    %10443 = vst [vmem:[%s12 + $0x4f8] sm:$0xff] %v10218
    %10444 = vst.msk [vmem:[%s12 + $0x500] sm:$0xff] %vm10289, %v10219
    %10445 = vst [vmem:[%s12 + $0x508] sm:$0xff] %v10220
    %10446 = vst [vmem:[%s12 + $0x510] sm:$0xff] %v10221
    %10447 = vst [vmem:[%s12 + $0x518] sm:$0xff] %v10222
    %10448 = vst [vmem:[%s12 + $0x520] sm:$0xff] %v10223
    %10449 = vst [vmem:[%s12 + $0x528] sm:$0xff] %v10224
    %10450 = vst [vmem:[%s12 + $0x530] sm:$0xff] %v10225
    %10451 = vst.msk [vmem:[%s12 + $0x538] sm:$0xff] %vm10289, %v10226
    %10452 = vst [vmem:[%s12 + $0x540] sm:$0xff] %v10227
    %10453 = vst [vmem:[%s12 + $0x548] sm:$0xff] %v10228
    %10454 = vst [vmem:[%s12 + $0x550] sm:$0xff] %v10229
    %10455 = vst [vmem:[%s12 + $0x558] sm:$0xff] %v10230
    %10456 = vst [vmem:[%s12 + $0x560] sm:$0xff] %v10231
    %10457 = vst [vmem:[%s12 + $0x568] sm:$0xff] %v10232
    %10458 = vst.msk [vmem:[%s12 + $0x570] sm:$0xff] %vm10289, %v10233
    %10459 = vst [vmem:[%s12 + $0x578] sm:$0xff] %v10234
    %10460 = vst [vmem:[%s12 + $0x580] sm:$0xff] %v10235
    %10461 = vst [vmem:[%s12 + $0x588] sm:$0xff] %v10236
    %10462 = vst [vmem:[%s12 + $0x590] sm:$0xff] %v10237
    %10463 = vst [vmem:[%s12 + $0x598] sm:$0xff] %v10238
    %10464 = vst [vmem:[%s12 + $0x5a0] sm:$0xff] %v10239
    %10465 = vst.msk [vmem:[%s12 + $0x5a8] sm:$0xff] %vm10289, %v10240
    %10466 = vst [vmem:[%s12 + $0x5b0] sm:$0xff] %v10241
    %10467 = vst [vmem:[%s12 + $0x5b8] sm:$0xff] %v10242
    %10468 = vst [vmem:[%s12 + $0x5c0] sm:$0xff] %v10243
    %10469 = vst [vmem:[%s12 + $0x5c8] sm:$0xff] %v10244
    %10470 = vst [vmem:[%s12 + $0x5d0] sm:$0xff] %v10245
    %10471 = vst [vmem:[%s12 + $0x5d8] sm:$0xff] %v10246
    %10472 = vst.msk [vmem:[%s12 + $0x5e0] sm:$0xff] %vm10289, %v10247
    %10473 = vst [vmem:[%s12 + $0x5e8] sm:$0xff] %v10248
    %10474 = vst [vmem:[%s12 + $0x5f0] sm:$0xff] %v10249
    %10475 = vst [vmem:[%s12 + $0x5f8] sm:$0xff] %v10250
    %10476 = vst [vmem:[%s12 + $0x600] sm:$0xff] %v10251
    %10477 = vst [vmem:[%s12 + $0x608] sm:$0xff] %v10252
    %10478 = vst [vmem:[%s12 + $0x610] sm:$0xff] %v10253
    %10479 = vst.msk [vmem:[%s12 + $0x618] sm:$0xff] %vm10289, %v10254
    %10480 = vst [vmem:[%s12 + $0x620] sm:$0xff] %v10255
    %10481 = vst [vmem:[%s12 + $0x628] sm:$0xff] %v10256
    %10482 = vst [vmem:[%s12 + $0x630] sm:$0xff] %v10257
    %10483 = vst [vmem:[%s12 + $0x638] sm:$0xff] %v10258
    %10484 = vst [vmem:[%s12 + $0x640] sm:$0xff] %v10259
    %10485 = vst [vmem:[%s12 + $0x648] sm:$0xff] %v10260
    %10486 = vst.msk [vmem:[%s12 + $0x650] sm:$0xff] %vm10289, %v10261
    %10487 = vst [vmem:[%s12 + $0x658] sm:$0xff] %v10262
    %10488 = vst [vmem:[%s12 + $0x660] sm:$0xff] %v10263
    %10489 = vst [vmem:[%s12 + $0x668] sm:$0xff] %v10264
    %10490 = vst [vmem:[%s12 + $0x670] sm:$0xff] %v10265
    %10491 = vst [vmem:[%s12 + $0x678] sm:$0xff] %v10266
    %10492 = vst [vmem:[%s12 + $0x680] sm:$0xff] %v10267
    %10493 = vst.msk [vmem:[%s12 + $0x688] sm:$0xff] %vm10289, %v10268
    %10494 = vst [vmem:[%s12 + $0x690] sm:$0xff] %v10269
    %10495 = vst [vmem:[%s12 + $0x698] sm:$0xff] %v10270
    %10496 = vst [vmem:[%s12 + $0x6a0] sm:$0xff] %v10271
    %10497 = vst [vmem:[%s12 + $0x6a8] sm:$0xff] %v10272
    %10498 = vst [vmem:[%s12 + $0x6b0] sm:$0xff] %v10273
    %10499 = vst [vmem:[%s12 + $0x6b8] sm:$0xff] %v10274
    %10500 = vst.msk [vmem:[%s12 + $0x6c0] sm:$0xff] %vm10289, %v10275
    %10501 = vst [vmem:[%s12 + $0x6c8] sm:$0xff] %v10276
    %10502 = vst [vmem:[%s12 + $0x6d0] sm:$0xff] %v10277
    %10503 = vst [vmem:[%s12 + $0x6d8] sm:$0xff] %v10278
    %10504 = vst [vmem:[%s12 + $0x6e0] sm:$0xff] %v10279
    %10505 = vst [vmem:[%s12 + $0x6e8] sm:$0xff] %v10280
    %10506 = vst [vmem:[%s12 + $0x6f0] sm:$0xff] %v10281
    %10507 = vst.msk [vmem:[%s12 + $0x6f8] sm:$0xff] %vm10289, %v10282
    // Predicated region
    $region62: #{generator_forward.1} parent=1 // pred_check
      _
    $region63: #{generator_forward.1} parent=1 // pred_check_branch
      %10509 = sbr.rel (0) target = $region65
    $region64: #{generator_forward.1} parent=1 // pred_region
      _
    $region65: #{generator_forward.1} parent=1 // pred_fallthru
      _
    // Predicated region
    $region66: #{generator_forward.1} parent=1 // pred_check
      _
    $region67: #{generator_forward.1} parent=1 // pred_check_branch
      %10511 = sbr.rel (0) target = $region69
    $region68: #{generator_forward.1} parent=1 // pred_region
      _
    $region69: #{generator_forward.1} parent=1 // pred_fallthru
      _
    %10512 = vsyncpa [#allocation8], 1
    %10513 = vsyncpa [#allocation10], 1
    %10514 = vsyncpa [#allocation13], 1
    %10515 = vsyncpa [#allocation16], 1
  %10516 = vsyncmov [#allocation6]
  %s10517 = vpop.sfrf %10516
  %p10518 = scmp.eq.s32.totalorder %s10517, 0
  %p10519 = pneg %p10518
  %10521 = shalt.err (%p10519)
  %s10522 = scalar_lea.sflag [#allocation6], 1
  %10523 = vsyncmov %s10522
  %s10524 = vpop.sfrf %10523
  %p10525 = scmp.eq.s32.totalorder %s10524, 0
  %p10526 = pneg %p10525
  %10528 = shalt.err (%p10526)
  %s10529 = scalar_lea.sflag [#allocation6], 2
  %10530 = vsyncmov %s10529
  %s10531 = vpop.sfrf %10530
  %p10532 = scmp.eq.s32.totalorder %s10531, 0
  %p10533 = pneg %p10532
  %10535 = shalt.err (%p10533)
  %s10536 = scalar_lea.sflag [#allocation6], 3
  %10537 = vsyncmov %s10536
  %s10538 = vpop.sfrf %10537
  %p10539 = scmp.eq.s32.totalorder %s10538, 0
  %p10540 = pneg %p10539
  %10542 = shalt.err (%p10540)

</llo_original>
